<compile_context>
chip_gen: v7x
topology: tpu7x:2x2x1
jax: 0.10.0
libtpu: 0.0.40
codegen_flags: <defaults>
</compile_context>

<pallas_src>
import numpy as np
import jax
import jax.numpy as jnp
from jax import lax
from jax.experimental import pallas as pl
from jax.experimental.pallas import tpu as pltpu

HIDDEN = 50                # nn.LSTM hidden_size
HP = 128                   # lane-padded hidden width (one lane tile)
GP = 4 * HP                # padded gate width per direction (i,f,g,o each HP)
EMB_DIM = 200              # nn.Embedding embedding_dim
SUBLANE = 8                # f32 sublane tile
STATIC_UNROLL_MAX = 16     # fully unroll the time loop up to this length


# --------------------------------------------------------------------------
# Fused kernel: BiLSTM1 -> BiLSTM2, all activations resident in VMEM.
# --------------------------------------------------------------------------
def _make_fused_kernel(T, B_pad):
    assert B_pad % SUBLANE == 0

    def recurrence(gin_ref, whh, out_ref):
        """One BiLSTM layer over precomputed gate inputs.

        gin_ref: (T, B_pad, 2*GP) f32  x@W_ih + b, lanes = [fwd 512 | rev 512]
        whh:     (2*HP, 2*GP)    bf16  block-diagonal hidden->gate weights
        out_ref: (T, B_pad, 2*HP)      hidden states, lanes = [fwd 128 | rev 128]
        """
        h0 = jnp.zeros((B_pad, 2 * HP), jnp.bfloat16)   # [h_fwd | h_rev] (lanes)
        c0 = jnp.zeros((2 * B_pad, HP), jnp.float32)    # [c_fwd ; c_rev] (sublanes)

        def step(t, carry):
            h, c = carry
            tr = T - 1 - t
            # One bf16 MXU issue per step for BOTH directions (block-diag W_hh).
            g_rec = jnp.dot(h, whh, preferred_element_type=jnp.float32)  # (B_pad, 2*GP)
            g_f = gin_ref[t, :, 0:GP] + g_rec[:, 0:GP]
            g_r = gin_ref[tr, :, GP:2 * GP] + g_rec[:, GP:2 * GP]
            # Stack fwd/rev along sublanes -> each nonlinearity issued once/step.
            g = jnp.concatenate([g_f, g_r], axis=0)                      # (2*B_pad, GP)
            i = jax.nn.sigmoid(g[:, 0 * HP:1 * HP])
            f = jax.nn.sigmoid(g[:, 1 * HP:2 * HP])
            gg = jnp.tanh(g[:, 2 * HP:3 * HP])
            o = jax.nn.sigmoid(g[:, 3 * HP:4 * HP])
            c_new = f * c + i * gg                                        # f32
            h_new = o * jnp.tanh(c_new)                                   # (2*B_pad, HP)
            h_f = h_new[0:B_pad]
            h_r = h_new[B_pad:2 * B_pad]
            # 128-lane-dense, 8-sublane-aligned stores via leading-axis indexing.
            out_ref[t, :, 0:HP] = h_f.astype(out_ref.dtype)
            out_ref[tr, :, HP:2 * HP] = h_r.astype(out_ref.dtype)
            h_next = jnp.concatenate([h_f, h_r], axis=-1).astype(jnp.bfloat16)
            return h_next, c_new

        if T <= STATIC_UNROLL_MAX:
            carry = (h0, c0)
            for t in range(T):                 # short seq: full static unroll
                carry = step(t, carry)
        else:
            # Longer sequences: bounded live ranges, small unroll for the LLO.
            lax.fori_loop(0, T, step, (h0, c0), unroll=2)

    def kernel(x_ref,                              # (T*B_pad, EMB_DIM) bf16
               w_in1_ref, b_in1_ref, whh1_ref,     # layer-1 weights
               w_in2_ref, b_in2_ref, whh2_ref,     # layer-2 weights
               out2_ref,                           # (T, B_pad, 2*HP) f32
               gin_ref, h1_ref):                   # VMEM scratch
        # ---- layer 1: ONE hoisted bf16 input-projection matmul, bias folded ----
        gin_ref[...] = (jnp.dot(x_ref[...], w_in1_ref[...],
                                preferred_element_type=jnp.float32)
                        + b_in1_ref[...]).reshape(T, B_pad, 2 * GP)
        recurrence(gin_ref, whh1_ref[...], h1_ref)      # W_hh hoisted (read once)
        # ---- layer 2: same, consuming layer-1 hidden states kept in VMEM ----
        h1_2d = h1_ref[...].reshape(T * B_pad, 2 * HP).astype(jnp.bfloat16)
        gin_ref[...] = (jnp.dot(h1_2d, w_in2_ref[...],
                                preferred_element_type=jnp.float32)
                        + b_in2_ref[...]).reshape(T, B_pad, 2 * GP)
        recurrence(gin_ref, whh2_ref[...], out2_ref)
        # NOTE: torch's forward also computes `self.linear(second_x)` but never
        # returns it (dead code) — dropped here per the performance review.

    return kernel


def _fused_forward(x2d, packed, T, B_pad):
    vmem = pl.BlockSpec(memory_space=pltpu.MemorySpace.VMEM)
    # TODO(synk): for large batches, add a grid over B_pad blocks with
    # dimension_semantics=("parallel",) to use v7x's second TensorCore; at
    # B_pad=8 a batch grid would be a single point, so it is omitted here.
    return pl.pallas_call(
        _make_fused_kernel(T, B_pad),
        out_shape=jax.ShapeDtypeStruct((T, B_pad, 2 * HP), jnp.float32),
        in_specs=[vmem] * 7,
        out_specs=vmem,
        scratch_shapes=[pltpu.VMEM((T, B_pad, 2 * GP), jnp.float32),   # gate slab
                        pltpu.VMEM((T, B_pad, 2 * HP), jnp.float32)],  # layer-1 h
        compiler_params=pltpu.CompilerParams(
            vmem_limit_bytes=32 * 1024 * 1024),
    )(x2d,
      packed["w_in1"], packed["b_in1"], packed["whh1"],
      packed["w_in2"], packed["b_in2"], packed["whh2"])


@jax.jit
def word_extract_forward(x_ids, packed):
    T, B = x_ids.shape                                     # static at trace time
    B_pad = max(SUBLANE, ((B + SUBLANE - 1) // SUBLANE) * SUBLANE)
    x_pad = jnp.pad(x_ids, ((0, 0), (0, B_pad - B)))       # pad batch with id 0
    # Embedding gather stays in plain JAX (data-dependent HBM gather), in bf16.
    w_x = jnp.take(packed["embedding"], x_pad.reshape(T * B_pad), axis=0)
    out2 = _fused_forward(w_x, packed, T, B_pad)           # (T, B_pad, 2*HP) f32
    # Strip batch + lane padding: fwd features at [0:H], rev at [HP:HP+H].
    return jnp.concatenate([out2[:, :B, 0:HIDDEN],
                            out2[:, :B, HP:HP + HIDDEN]], axis=-1)


# --------------------------------------------------------------------------
# Parameter construction (raw PyTorch layout) and lane-aligned bf16 packing.
# --------------------------------------------------------------------------
def make_bilstm_params(key, input_size, hidden):
    """Raw PyTorch-layout bidirectional LSTM params (gate order i, f, g, o)."""
    ks = jax.random.split(key, 8)
    s = 1.0 / np.sqrt(hidden)

    def u(k, shape):
        return jax.random.uniform(k, shape, jnp.float32, -s, s)

    p = {}
    for d, off in (("f", 0), ("r", 4)):
        p[f"wih_{d}"] = u(ks[off + 0], (4 * hidden, input_size))
        p[f"whh_{d}"] = u(ks[off + 1], (4 * hidden, hidden))
        p[f"bih_{d}"] = u(ks[off + 2], (4 * hidden,))
        p[f"bhh_{d}"] = u(ks[off + 3], (4 * hidden,))
    return p


def _pad_gate_cols(w_t):
    """(Din, 4H) -> (Din, GP): each H-wide gate block zero-padded to HP cols."""
    blocks = [jnp.pad(w_t[:, k * HIDDEN:(k + 1) * HIDDEN],
                      ((0, 0), (0, HP - HIDDEN))) for k in range(4)]
    return jnp.concatenate(blocks, axis=1)


def _pad_gate_bias(b):
    blocks = [jnp.pad(b[k * HIDDEN:(k + 1) * HIDDEN], (0, HP - HIDDEN))
              for k in range(4)]
    return jnp.concatenate(blocks)


def _pad_hidden_rows(w_t):
    """(2H, N) -> (2*HP, N): fwd features to rows 0:H, rev to rows HP:HP+H."""
    top = jnp.pad(w_t[0:HIDDEN], ((0, HP - HIDDEN), (0, 0)))
    bot = jnp.pad(w_t[HIDDEN:2 * HIDDEN], ((0, HP - HIDDEN), (0, 0)))
    return jnp.concatenate([top, bot], axis=0)


def _check_padding_invariant(packed):
    """Padded gate lanes of every weight slab and bias must be exactly zero,
    otherwise the padded lanes of h/c stop being zero and contaminate the real
    gates through W_hh.  Runs eagerly on concrete arrays (do not jit packing)."""
    for name in ("w_in1", "whh1", "w_in2", "whh2", "b_in1", "b_in2"):
        a = np.asarray(packed[name].astype(jnp.float32))
        a = a.reshape(a.shape[0], 2, 4, HP)              # (rows, dir, gate, HP)
        assert np.all(a[..., HIDDEN:] == 0.0), f"nonzero padding lanes in {name}"


def pack_word_extract_params(p1, p2, embedding_matrix):
    """Pad/stack raw params into the lane-aligned bf16 layout the kernel expects."""

    def layer1_in(p):                                    # (200, 2*GP)
        return jnp.concatenate([_pad_gate_cols(p["wih_f"].T),
                                _pad_gate_cols(p["wih_r"].T)], axis=1)

    def layer2_in(p):                                    # (2*HP, 2*GP)
        wf = _pad_hidden_rows(_pad_gate_cols(p["wih_f"].T))
        wr = _pad_hidden_rows(_pad_gate_cols(p["wih_r"].T))
        return jnp.concatenate([wf, wr], axis=1)

    def layer_bias(p):                                   # (1, 2*GP), kept f32
        return jnp.concatenate(
            [_pad_gate_bias(p["bih_f"] + p["bhh_f"]),
             _pad_gate_bias(p["bih_r"] + p["bhh_r"])]).reshape(1, 2 * GP)

    def layer_whh(p):                                    # (2*HP, 2*GP) block-diag
        def one(whh):
            w = _pad_gate_cols(whh.T)                    # (H, GP)
            return jnp.pad(w, ((0, HP - HIDDEN), (0, 0)))   # (HP, GP)
        wf, wr = one(p["whh_f"]), one(p["whh_r"])
        z = jnp.zeros((HP, GP), jnp.float32)
        return jnp.concatenate(
            [jnp.concatenate([wf, z], axis=1),
             jnp.concatenate([z, wr], axis=1)], axis=0)

    bf16 = jnp.bfloat16
    packed = {
        "embedding": embedding_matrix.astype(bf16),
        "w_in1": layer1_in(p1).astype(bf16), "b_in1": layer_bias(p1),
        "whh1": layer_whh(p1).astype(bf16),
        "w_in2": layer2_in(p2).astype(bf16), "b_in2": layer_bias(p2),
        "whh2": layer_whh(p2).astype(bf16),
    }
    _check_padding_invariant(packed)
    return packed


# --------------------------------------------------------------------------
# Pure-JAX f32 reference (lax.scan) for correctness check.
# --------------------------------------------------------------------------
def _lstm_dir_ref(x_seq, wih, whh, b_ih, b_hh, reverse):
    H = whh.shape[1]
    wih_t, whh_t = wih.T, whh.T
    b = (b_ih + b_hh)[None, :]

    def step(carry, x_t):
        h, c = carry
        g = x_t @ wih_t + h @ whh_t + b
        i = jax.nn.sigmoid(g[:, 0:H])
        f = jax.nn.sigmoid(g[:, H:2 * H])
        gg = jnp.tanh(g[:, 2 * H:3 * H])
        o = jax.nn.sigmoid(g[:, 3 * H:4 * H])
        c = f * c + i * gg
        h = o * jnp.tanh(c)
        return (h, c), h

    if reverse:
        x_seq = x_seq[::-1]
    Bsz = x_seq.shape[1]
    init = (jnp.zeros((Bsz, H), jnp.float32), jnp.zeros((Bsz, H), jnp.float32))
    _, hs = lax.scan(step, init, x_seq)
    return hs[::-1] if reverse else hs


def bilstm_ref(x, p):
    fwd = _lstm_dir_ref(x, p["wih_f"], p["whh_f"], p["bih_f"], p["bhh_f"], False)
    rev = _lstm_dir_ref(x, p["wih_r"], p["whh_r"], p["bih_r"], p["bhh_r"], True)
    return jnp.concatenate([fwd, rev], axis=-1)


def word_extract_reference(x_ids, embedding_matrix, p1, p2):
    w_x = jnp.take(embedding_matrix, x_ids, axis=0)
    return bilstm_ref(bilstm_ref(w_x, p1), p2)


if __name__ == "__main__":
    key = jax.random.PRNGKey(0)
    T, B, VOCAB = 8, 2, 30
    k_emb, k_x, k_l1, k_l2 = jax.random.split(key, 4)

    embedding_matrix = jax.random.normal(k_emb, (VOCAB, EMB_DIM), jnp.float32)
    x_ids = jax.random.randint(k_x, (T, B), 0, VOCAB, jnp.int32)

    p1 = make_bilstm_params(k_l1, EMB_DIM, HIDDEN)       # lstm1: 200 -> 2*50
    p2 = make_bilstm_params(k_l2, 2 * HIDDEN, HIDDEN)    # lstm2: 100 -> 2*50
    # The module's nn.Linear(100, 4) head is dead code in forward() (its output
    # is never returned), so no linear parameters are packed or computed.

    packed = pack_word_extract_params(p1, p2, embedding_matrix)

    second_x = word_extract_forward(x_ids, packed)
    second_x = jax.block_until_ready(second_x)
    assert second_x.shape == (T, B, 2 * HIDDEN)

    # f32 lax.scan reference; tolerance accounts for the kernel's bf16 weights,
    # bf16 matmul LHS operands and bf16 embedding table (f32 accumulation).
    ref = word_extract_reference(x_ids, embedding_matrix, p1, p2)
    np.testing.assert_allclose(np.asarray(second_x), np.asarray(ref),
                               rtol=4e-2, atol=4e-2)
    print("KERNEL_OK")
</pallas_src>

<mosaic_0001>
module attributes {stable_mosaic.version = 11 : i64} {
  func.func @kernel(%arg0: memref<64x200xbf16, #tpu.memory_space<vmem>>, %arg1: memref<200x1024xbf16, #tpu.memory_space<vmem>>, %arg2: memref<1x1024xf32, #tpu.memory_space<vmem>>, %arg3: memref<256x1024xbf16, #tpu.memory_space<vmem>>, %arg4: memref<256x1024xbf16, #tpu.memory_space<vmem>>, %arg5: memref<1x1024xf32, #tpu.memory_space<vmem>>, %arg6: memref<256x1024xbf16, #tpu.memory_space<vmem>>, %arg7: memref<8x8x256xf32, #tpu.memory_space<vmem>>, %arg8: memref<8x8x1024xf32, #tpu.memory_space<vmem>>, %arg9: memref<8x8x256xf32, #tpu.memory_space<vmem>>) attributes {dimension_semantics = [], scalar_prefetch = 0 : i64, scratch_operands = 2 : i64, tpu.core_type = #tpu.core_type<tc>} {
    %c0 = arith.constant 0 : index
    %c0_0 = arith.constant 0 : index
    %0 = vector.load %arg0[%c0, %c0_0] : memref<64x200xbf16, #tpu.memory_space<vmem>>, vector<64x200xbf16>
    %c0_1 = arith.constant 0 : index
    %c0_2 = arith.constant 0 : index
    %1 = vector.load %arg1[%c0_1, %c0_2] : memref<200x1024xbf16, #tpu.memory_space<vmem>>, vector<200x1024xbf16>
    %cst = arith.constant dense<0.000000e+00> : vector<64x1024xf32>
    %2 = tpu.matmul %0, %1, %cst {dimension_numbers = #tpu.dot_dimension_numbers<[1], [0], [0], [1], [0, 0, 1, 1], [], []>} : vector<64x200xbf16>, vector<200x1024xbf16>, vector<64x1024xf32> -> vector<64x1024xf32>
    %c0_3 = arith.constant 0 : index
    %c0_4 = arith.constant 0 : index
    %3 = vector.load %arg2[%c0_3, %c0_4] : memref<1x1024xf32, #tpu.memory_space<vmem>>, vector<1x1024xf32>
    %4 = vector.broadcast %3 : vector<1x1024xf32> to vector<64x1024xf32>
    %5 = arith.addf %2, %4 : vector<64x1024xf32>
    %6 = vector.shape_cast %5 : vector<64x1024xf32> to vector<8x8x1024xf32>
    %c0_5 = arith.constant 0 : index
    %c0_6 = arith.constant 0 : index
    %c0_7 = arith.constant 0 : index
    %7 = vector.load %arg8[%c0_5, %c0_6, %c0_7] : memref<8x8x1024xf32, #tpu.memory_space<vmem>>, vector<8x8x1024xf32>
    tpu.vector_store %arg8[%c0_5, %c0_6, %c0_7], %6 {strides = array<i32>} : memref<8x8x1024xf32, #tpu.memory_space<vmem>>, vector<8x8x1024xf32>,
    %c0_8 = arith.constant 0 : index
    %c0_9 = arith.constant 0 : index
    %8 = vector.load %arg3[%c0_8, %c0_9] : memref<256x1024xbf16, #tpu.memory_space<vmem>>, vector<256x1024xbf16>
    %cst_10 = arith.constant 0.000000e+00 : bf16
    %9 = vector.broadcast %cst_10 : bf16 to vector<8x256xbf16>
    %cst_11 = arith.constant 0.000000e+00 : f32
    %10 = vector.broadcast %cst_11 : f32 to vector<16x128xf32>
    %cst_12 = arith.constant dense<0.000000e+00> : vector<8x1024xf32>
    %11 = tpu.matmul %9, %8, %cst_12 {dimension_numbers = #tpu.dot_dimension_numbers<[1], [0], [0], [1], [0, 0, 1, 1], [], []>} : vector<8x256xbf16>, vector<256x1024xbf16>, vector<8x1024xf32> -> vector<8x1024xf32>
    %c0_13 = arith.constant 0 : index
    %c0_14 = arith.constant 0 : index
    %c0_15 = arith.constant 0 : index
    %12 = vector.load %arg8[%c0_13, %c0_14, %c0_15] : memref<8x8x1024xf32, #tpu.memory_space<vmem>>, vector<1x8x512xf32>
    %13 = vector.shape_cast %12 : vector<1x8x512xf32> to vector<8x512xf32>
    %14 = vector.extract_strided_slice %11 {offsets = [0, 0], sizes = [8, 512], strides = [1, 1]} : vector<8x1024xf32> to vector<8x512xf32>
    %15 = arith.addf %13, %14 : vector<8x512xf32>
    %c7 = arith.constant 7 : index
    %c0_16 = arith.constant 0 : index
    %c512 = arith.constant 512 : index
    %16 = vector.load %arg8[%c7, %c0_16, %c512] : memref<8x8x1024xf32, #tpu.memory_space<vmem>>, vector<1x8x512xf32>
    %17 = vector.shape_cast %16 : vector<1x8x512xf32> to vector<8x512xf32>
    %18 = vector.extract_strided_slice %11 {offsets = [0, 512], sizes = [8, 512], strides = [1, 1]} : vector<8x1024xf32> to vector<8x512xf32>
    %19 = arith.addf %17, %18 : vector<8x512xf32>
    %20 = tpu.concatenate %15, %19 in 0 : vector<8x512xf32>, vector<8x512xf32> -> vector<16x512xf32>
    %21 = vector.extract_strided_slice %20 {offsets = [0, 0], sizes = [16, 128], strides = [1, 1]} : vector<16x512xf32> to vector<16x128xf32>
    %22 = arith.negf %21 : vector<16x128xf32>
    %23 = math.exp %22 : vector<16x128xf32>
    %cst_17 = arith.constant 1.000000e+00 : f32
    %24 = vector.broadcast %cst_17 : f32 to vector<16x128xf32>
    %25 = arith.addf %24, %23 : vector<16x128xf32>
    %26 = arith.divf %24, %25 : vector<16x128xf32>
    %27 = vector.extract_strided_slice %20 {offsets = [0, 128], sizes = [16, 128], strides = [1, 1]} : vector<16x512xf32> to vector<16x128xf32>
    %28 = arith.negf %27 : vector<16x128xf32>
    %29 = math.exp %28 : vector<16x128xf32>
    %cst_18 = arith.constant 1.000000e+00 : f32
    %30 = vector.broadcast %cst_18 : f32 to vector<16x128xf32>
    %31 = arith.addf %30, %29 : vector<16x128xf32>
    %32 = arith.divf %30, %31 : vector<16x128xf32>
    %33 = vector.extract_strided_slice %20 {offsets = [0, 256], sizes = [16, 128], strides = [1, 1]} : vector<16x512xf32> to vector<16x128xf32>
    %34 = math.tanh %33 : vector<16x128xf32>
    %35 = vector.extract_strided_slice %20 {offsets = [0, 384], sizes = [16, 128], strides = [1, 1]} : vector<16x512xf32> to vector<16x128xf32>
    %36 = arith.negf %35 : vector<16x128xf32>
    %37 = math.exp %36 : vector<16x128xf32>
    %cst_19 = arith.constant 1.000000e+00 : f32
    %38 = vector.broadcast %cst_19 : f32 to vector<16x128xf32>
    %39 = arith.addf %38, %37 : vector<16x128xf32>
    %40 = arith.divf %38, %39 : vector<16x128xf32>
    %41 = arith.mulf %32, %10 : vector<16x128xf32>
    %42 = arith.mulf %26, %34 : vector<16x128xf32>
    %43 = arith.addf %41, %42 : vector<16x128xf32>
    %44 = math.tanh %43 : vector<16x128xf32>
    %45 = arith.mulf %40, %44 : vector<16x128xf32>
    %46 = vector.extract_strided_slice %45 {offsets = [0, 0], sizes = [8, 128], strides = [1, 1]} : vector<16x128xf32> to vector<8x128xf32>
    %47 = vector.extract_strided_slice %45 {offsets = [8, 0], sizes = [8, 128], strides = [1, 1]} : vector<16x128xf32> to vector<8x128xf32>
    %c0_20 = arith.constant 0 : index
    %c0_21 = arith.constant 0 : index
    %c0_22 = arith.constant 0 : index
    %48 = vector.load %arg9[%c0_20, %c0_21, %c0_22] : memref<8x8x256xf32, #tpu.memory_space<vmem>>, vector<1x8x128xf32>
    %49 = vector.shape_cast %48 : vector<1x8x128xf32> to vector<8x128xf32>
    %50 = vector.shape_cast %46 : vector<8x128xf32> to vector<1x8x128xf32>
    tpu.vector_store %arg9[%c0_20, %c0_21, %c0_22], %50 {strides = array<i32>} : memref<8x8x256xf32, #tpu.memory_space<vmem>>, vector<1x8x128xf32>,
    %c7_23 = arith.constant 7 : index
    %c0_24 = arith.constant 0 : index
    %c128 = arith.constant 128 : index
    %51 = vector.load %arg9[%c7_23, %c0_24, %c128] : memref<8x8x256xf32, #tpu.memory_space<vmem>>, vector<1x8x128xf32>
    %52 = vector.shape_cast %51 : vector<1x8x128xf32> to vector<8x128xf32>
    %53 = vector.shape_cast %47 : vector<8x128xf32> to vector<1x8x128xf32>
    tpu.vector_store %arg9[%c7_23, %c0_24, %c128], %53 {strides = array<i32>} : memref<8x8x256xf32, #tpu.memory_space<vmem>>, vector<1x8x128xf32>,
    %54 = tpu.concatenate %46, %47 in 1 : vector<8x128xf32>, vector<8x128xf32> -> vector<8x256xf32>
    %55 = arith.truncf %54 : vector<8x256xf32> to vector<8x256xbf16>
    %cst_25 = arith.constant dense<0.000000e+00> : vector<8x1024xf32>
    %56 = tpu.matmul %55, %8, %cst_25 {dimension_numbers = #tpu.dot_dimension_numbers<[1], [0], [0], [1], [0, 0, 1, 1], [], []>} : vector<8x256xbf16>, vector<256x1024xbf16>, vector<8x1024xf32> -> vector<8x1024xf32>
    %c1 = arith.constant 1 : index
    %c0_26 = arith.constant 0 : index
    %c0_27 = arith.constant 0 : index
    %57 = vector.load %arg8[%c1, %c0_26, %c0_27] : memref<8x8x1024xf32, #tpu.memory_space<vmem>>, vector<1x8x512xf32>
    %58 = vector.shape_cast %57 : vector<1x8x512xf32> to vector<8x512xf32>
    %59 = vector.extract_strided_slice %56 {offsets = [0, 0], sizes = [8, 512], strides = [1, 1]} : vector<8x1024xf32> to vector<8x512xf32>
    %60 = arith.addf %58, %59 : vector<8x512xf32>
    %c6 = arith.constant 6 : index
    %c0_28 = arith.constant 0 : index
    %c512_29 = arith.constant 512 : index
    %61 = vector.load %arg8[%c6, %c0_28, %c512_29] : memref<8x8x1024xf32, #tpu.memory_space<vmem>>, vector<1x8x512xf32>
    %62 = vector.shape_cast %61 : vector<1x8x512xf32> to vector<8x512xf32>
    %63 = vector.extract_strided_slice %56 {offsets = [0, 512], sizes = [8, 512], strides = [1, 1]} : vector<8x1024xf32> to vector<8x512xf32>
    %64 = arith.addf %62, %63 : vector<8x512xf32>
    %65 = tpu.concatenate %60, %64 in 0 : vector<8x512xf32>, vector<8x512xf32> -> vector<16x512xf32>
    %66 = vector.extract_strided_slice %65 {offsets = [0, 0], sizes = [16, 128], strides = [1, 1]} : vector<16x512xf32> to vector<16x128xf32>
    %67 = arith.negf %66 : vector<16x128xf32>
    %68 = math.exp %67 : vector<16x128xf32>
    %cst_30 = arith.constant 1.000000e+00 : f32
    %69 = vector.broadcast %cst_30 : f32 to vector<16x128xf32>
    %70 = arith.addf %69, %68 : vector<16x128xf32>
    %71 = arith.divf %69, %70 : vector<16x128xf32>
    %72 = vector.extract_strided_slice %65 {offsets = [0, 128], sizes = [16, 128], strides = [1, 1]} : vector<16x512xf32> to vector<16x128xf32>
    %73 = arith.negf %72 : vector<16x128xf32>
    %74 = math.exp %73 : vector<16x128xf32>
    %cst_31 = arith.constant 1.000000e+00 : f32
    %75 = vector.broadcast %cst_31 : f32 to vector<16x128xf32>
    %76 = arith.addf %75, %74 : vector<16x128xf32>
    %77 = arith.divf %75, %76 : vector<16x128xf32>
    %78 = vector.extract_strided_slice %65 {offsets = [0, 256], sizes = [16, 128], strides = [1, 1]} : vector<16x512xf32> to vector<16x128xf32>
    %79 = math.tanh %78 : vector<16x128xf32>
    %80 = vector.extract_strided_slice %65 {offsets = [0, 384], sizes = [16, 128], strides = [1, 1]} : vector<16x512xf32> to vector<16x128xf32>
    %81 = arith.negf %80 : vector<16x128xf32>
    %82 = math.exp %81 : vector<16x128xf32>
    %cst_32 = arith.constant 1.000000e+00 : f32
    %83 = vector.broadcast %cst_32 : f32 to vector<16x128xf32>
    %84 = arith.addf %83, %82 : vector<16x128xf32>
    %85 = arith.divf %83, %84 : vector<16x128xf32>
    %86 = arith.mulf %77, %43 : vector<16x128xf32>
    %87 = arith.mulf %71, %79 : vector<16x128xf32>
    %88 = arith.addf %86, %87 : vector<16x128xf32>
    %89 = math.tanh %88 : vector<16x128xf32>
    %90 = arith.mulf %85, %89 : vector<16x128xf32>
    %91 = vector.extract_strided_slice %90 {offsets = [0, 0], sizes = [8, 128], strides = [1, 1]} : vector<16x128xf32> to vector<8x128xf32>
    %92 = vector.extract_strided_slice %90 {offsets = [8, 0], sizes = [8, 128], strides = [1, 1]} : vector<16x128xf32> to vector<8x128xf32>
    %c1_33 = arith.constant 1 : index
    %c0_34 = arith.constant 0 : index
    %c0_35 = arith.constant 0 : index
    %93 = vector.load %arg9[%c1_33, %c0_34, %c0_35] : memref<8x8x256xf32, #tpu.memory_space<vmem>>, vector<1x8x128xf32>
    %94 = vector.shape_cast %93 : vector<1x8x128xf32> to vector<8x128xf32>
    %95 = vector.shape_cast %91 : vector<8x128xf32> to vector<1x8x128xf32>
    tpu.vector_store %arg9[%c1_33, %c0_34, %c0_35], %95 {strides = array<i32>} : memref<8x8x256xf32, #tpu.memory_space<vmem>>, vector<1x8x128xf32>,
    %c6_36 = arith.constant 6 : index
    %c0_37 = arith.constant 0 : index
    %c128_38 = arith.constant 128 : index
    %96 = vector.load %arg9[%c6_36, %c0_37, %c128_38] : memref<8x8x256xf32, #tpu.memory_space<vmem>>, vector<1x8x128xf32>
    %97 = vector.shape_cast %96 : vector<1x8x128xf32> to vector<8x128xf32>
    %98 = vector.shape_cast %92 : vector<8x128xf32> to vector<1x8x128xf32>
    tpu.vector_store %arg9[%c6_36, %c0_37, %c128_38], %98 {strides = array<i32>} : memref<8x8x256xf32, #tpu.memory_space<vmem>>, vector<1x8x128xf32>,
    %99 = tpu.concatenate %91, %92 in 1 : vector<8x128xf32>, vector<8x128xf32> -> vector<8x256xf32>
    %100 = arith.truncf %99 : vector<8x256xf32> to vector<8x256xbf16>
    %cst_39 = arith.constant dense<0.000000e+00> : vector<8x1024xf32>
    %101 = tpu.matmul %100, %8, %cst_39 {dimension_numbers = #tpu.dot_dimension_numbers<[1], [0], [0], [1], [0, 0, 1, 1], [], []>} : vector<8x256xbf16>, vector<256x1024xbf16>, vector<8x1024xf32> -> vector<8x1024xf32>
    %c2 = arith.constant 2 : index
    %c0_40 = arith.constant 0 : index
    %c0_41 = arith.constant 0 : index
    %102 = vector.load %arg8[%c2, %c0_40, %c0_41] : memref<8x8x1024xf32, #tpu.memory_space<vmem>>, vector<1x8x512xf32>
    %103 = vector.shape_cast %102 : vector<1x8x512xf32> to vector<8x512xf32>
    %104 = vector.extract_strided_slice %101 {offsets = [0, 0], sizes = [8, 512], strides = [1, 1]} : vector<8x1024xf32> to vector<8x512xf32>
    %105 = arith.addf %103, %104 : vector<8x512xf32>
    %c5 = arith.constant 5 : index
    %c0_42 = arith.constant 0 : index
    %c512_43 = arith.constant 512 : index
    %106 = vector.load %arg8[%c5, %c0_42, %c512_43] : memref<8x8x1024xf32, #tpu.memory_space<vmem>>, vector<1x8x512xf32>
    %107 = vector.shape_cast %106 : vector<1x8x512xf32> to vector<8x512xf32>
    %108 = vector.extract_strided_slice %101 {offsets = [0, 512], sizes = [8, 512], strides = [1, 1]} : vector<8x1024xf32> to vector<8x512xf32>
    %109 = arith.addf %107, %108 : vector<8x512xf32>
    %110 = tpu.concatenate %105, %109 in 0 : vector<8x512xf32>, vector<8x512xf32> -> vector<16x512xf32>
    %111 = vector.extract_strided_slice %110 {offsets = [0, 0], sizes = [16, 128], strides = [1, 1]} : vector<16x512xf32> to vector<16x128xf32>
    %112 = arith.negf %111 : vector<16x128xf32>
    %113 = math.exp %112 : vector<16x128xf32>
    %cst_44 = arith.constant 1.000000e+00 : f32
    %114 = vector.broadcast %cst_44 : f32 to vector<16x128xf32>
    %115 = arith.addf %114, %113 : vector<16x128xf32>
    %116 = arith.divf %114, %115 : vector<16x128xf32>
    %117 = vector.extract_strided_slice %110 {offsets = [0, 128], sizes = [16, 128], strides = [1, 1]} : vector<16x512xf32> to vector<16x128xf32>
    %118 = arith.negf %117 : vector<16x128xf32>
    %119 = math.exp %118 : vector<16x128xf32>
    %cst_45 = arith.constant 1.000000e+00 : f32
    %120 = vector.broadcast %cst_45 : f32 to vector<16x128xf32>
    %121 = arith.addf %120, %119 : vector<16x128xf32>
    %122 = arith.divf %120, %121 : vector<16x128xf32>
    %123 = vector.extract_strided_slice %110 {offsets = [0, 256], sizes = [16, 128], strides = [1, 1]} : vector<16x512xf32> to vector<16x128xf32>
    %124 = math.tanh %123 : vector<16x128xf32>
    %125 = vector.extract_strided_slice %110 {offsets = [0, 384], sizes = [16, 128], strides = [1, 1]} : vector<16x512xf32> to vector<16x128xf32>
    %126 = arith.negf %125 : vector<16x128xf32>
    %127 = math.exp %126 : vector<16x128xf32>
    %cst_46 = arith.constant 1.000000e+00 : f32
    %128 = vector.broadcast %cst_46 : f32 to vector<16x128xf32>
    %129 = arith.addf %128, %127 : vector<16x128xf32>
    %130 = arith.divf %128, %129 : vector<16x128xf32>
    %131 = arith.mulf %122, %88 : vector<16x128xf32>
    %132 = arith.mulf %116, %124 : vector<16x128xf32>
    %133 = arith.addf %131, %132 : vector<16x128xf32>
    %134 = math.tanh %133 : vector<16x128xf32>
    %135 = arith.mulf %130, %134 : vector<16x128xf32>
    %136 = vector.extract_strided_slice %135 {offsets = [0, 0], sizes = [8, 128], strides = [1, 1]} : vector<16x128xf32> to vector<8x128xf32>
    %137 = vector.extract_strided_slice %135 {offsets = [8, 0], sizes = [8, 128], strides = [1, 1]} : vector<16x128xf32> to vector<8x128xf32>
    %c2_47 = arith.constant 2 : index
    %c0_48 = arith.constant 0 : index
    %c0_49 = arith.constant 0 : index
    %138 = vector.load %arg9[%c2_47, %c0_48, %c0_49] : memref<8x8x256xf32, #tpu.memory_space<vmem>>, vector<1x8x128xf32>
    %139 = vector.shape_cast %138 : vector<1x8x128xf32> to vector<8x128xf32>
    %140 = vector.shape_cast %136 : vector<8x128xf32> to vector<1x8x128xf32>
    tpu.vector_store %arg9[%c2_47, %c0_48, %c0_49], %140 {strides = array<i32>} : memref<8x8x256xf32, #tpu.memory_space<vmem>>, vector<1x8x128xf32>,
    %c5_50 = arith.constant 5 : index
    %c0_51 = arith.constant 0 : index
    %c128_52 = arith.constant 128 : index
    %141 = vector.load %arg9[%c5_50, %c0_51, %c128_52] : memref<8x8x256xf32, #tpu.memory_space<vmem>>, vector<1x8x128xf32>
    %142 = vector.shape_cast %141 : vector<1x8x128xf32> to vector<8x128xf32>
    %143 = vector.shape_cast %137 : vector<8x128xf32> to vector<1x8x128xf32>
    tpu.vector_store %arg9[%c5_50, %c0_51, %c128_52], %143 {strides = array<i32>} : memref<8x8x256xf32, #tpu.memory_space<vmem>>, vector<1x8x128xf32>,
    %144 = tpu.concatenate %136, %137 in 1 : vector<8x128xf32>, vector<8x128xf32> -> vector<8x256xf32>
    %145 = arith.truncf %144 : vector<8x256xf32> to vector<8x256xbf16>
    %cst_53 = arith.constant dense<0.000000e+00> : vector<8x1024xf32>
    %146 = tpu.matmul %145, %8, %cst_53 {dimension_numbers = #tpu.dot_dimension_numbers<[1], [0], [0], [1], [0, 0, 1, 1], [], []>} : vector<8x256xbf16>, vector<256x1024xbf16>, vector<8x1024xf32> -> vector<8x1024xf32>
    %c3 = arith.constant 3 : index
    %c0_54 = arith.constant 0 : index
    %c0_55 = arith.constant 0 : index
    %147 = vector.load %arg8[%c3, %c0_54, %c0_55] : memref<8x8x1024xf32, #tpu.memory_space<vmem>>, vector<1x8x512xf32>
    %148 = vector.shape_cast %147 : vector<1x8x512xf32> to vector<8x512xf32>
    %149 = vector.extract_strided_slice %146 {offsets = [0, 0], sizes = [8, 512], strides = [1, 1]} : vector<8x1024xf32> to vector<8x512xf32>
    %150 = arith.addf %148, %149 : vector<8x512xf32>
    %c4 = arith.constant 4 : index
    %c0_56 = arith.constant 0 : index
    %c512_57 = arith.constant 512 : index
    %151 = vector.load %arg8[%c4, %c0_56, %c512_57] : memref<8x8x1024xf32, #tpu.memory_space<vmem>>, vector<1x8x512xf32>
    %152 = vector.shape_cast %151 : vector<1x8x512xf32> to vector<8x512xf32>
    %153 = vector.extract_strided_slice %146 {offsets = [0, 512], sizes = [8, 512], strides = [1, 1]} : vector<8x1024xf32> to vector<8x512xf32>
    %154 = arith.addf %152, %153 : vector<8x512xf32>
    %155 = tpu.concatenate %150, %154 in 0 : vector<8x512xf32>, vector<8x512xf32> -> vector<16x512xf32>
    %156 = vector.extract_strided_slice %155 {offsets = [0, 0], sizes = [16, 128], strides = [1, 1]} : vector<16x512xf32> to vector<16x128xf32>
    %157 = arith.negf %156 : vector<16x128xf32>
    %158 = math.exp %157 : vector<16x128xf32>
    %cst_58 = arith.constant 1.000000e+00 : f32
    %159 = vector.broadcast %cst_58 : f32 to vector<16x128xf32>
    %160 = arith.addf %159, %158 : vector<16x128xf32>
    %161 = arith.divf %159, %160 : vector<16x128xf32>
    %162 = vector.extract_strided_slice %155 {offsets = [0, 128], sizes = [16, 128], strides = [1, 1]} : vector<16x512xf32> to vector<16x128xf32>
    %163 = arith.negf %162 : vector<16x128xf32>
    %164 = math.exp %163 : vector<16x128xf32>
    %cst_59 = arith.constant 1.000000e+00 : f32
    %165 = vector.broadcast %cst_59 : f32 to vector<16x128xf32>
    %166 = arith.addf %165, %164 : vector<16x128xf32>
    %167 = arith.divf %165, %166 : vector<16x128xf32>
    %168 = vector.extract_strided_slice %155 {offsets = [0, 256], sizes = [16, 128], strides = [1, 1]} : vector<16x512xf32> to vector<16x128xf32>
    %169 = math.tanh %168 : vector<16x128xf32>
    %170 = vector.extract_strided_slice %155 {offsets = [0, 384], sizes = [16, 128], strides = [1, 1]} : vector<16x512xf32> to vector<16x128xf32>
    %171 = arith.negf %170 : vector<16x128xf32>
    %172 = math.exp %171 : vector<16x128xf32>
    %cst_60 = arith.constant 1.000000e+00 : f32
    %173 = vector.broadcast %cst_60 : f32 to vector<16x128xf32>
    %174 = arith.addf %173, %172 : vector<16x128xf32>
    %175 = arith.divf %173, %174 : vector<16x128xf32>
    %176 = arith.mulf %167, %133 : vector<16x128xf32>
    %177 = arith.mulf %161, %169 : vector<16x128xf32>
    %178 = arith.addf %176, %177 : vector<16x128xf32>
    %179 = math.tanh %178 : vector<16x128xf32>
    %180 = arith.mulf %175, %179 : vector<16x128xf32>
    %181 = vector.extract_strided_slice %180 {offsets = [0, 0], sizes = [8, 128], strides = [1, 1]} : vector<16x128xf32> to vector<8x128xf32>
    %182 = vector.extract_strided_slice %180 {offsets = [8, 0], sizes = [8, 128], strides = [1, 1]} : vector<16x128xf32> to vector<8x128xf32>
    %c3_61 = arith.constant 3 : index
    %c0_62 = arith.constant 0 : index
    %c0_63 = arith.constant 0 : index
    %183 = vector.load %arg9[%c3_61, %c0_62, %c0_63] : memref<8x8x256xf32, #tpu.memory_space<vmem>>, vector<1x8x128xf32>
    %184 = vector.shape_cast %183 : vector<1x8x128xf32> to vector<8x128xf32>
    %185 = vector.shape_cast %181 : vector<8x128xf32> to vector<1x8x128xf32>
    tpu.vector_store %arg9[%c3_61, %c0_62, %c0_63], %185 {strides = array<i32>} : memref<8x8x256xf32, #tpu.memory_space<vmem>>, vector<1x8x128xf32>,
    %c4_64 = arith.constant 4 : index
    %c0_65 = arith.constant 0 : index
    %c128_66 = arith.constant 128 : index
    %186 = vector.load %arg9[%c4_64, %c0_65, %c128_66] : memref<8x8x256xf32, #tpu.memory_space<vmem>>, vector<1x8x128xf32>
    %187 = vector.shape_cast %186 : vector<1x8x128xf32> to vector<8x128xf32>
    %188 = vector.shape_cast %182 : vector<8x128xf32> to vector<1x8x128xf32>
    tpu.vector_store %arg9[%c4_64, %c0_65, %c128_66], %188 {strides = array<i32>} : memref<8x8x256xf32, #tpu.memory_space<vmem>>, vector<1x8x128xf32>,
    %189 = tpu.concatenate %181, %182 in 1 : vector<8x128xf32>, vector<8x128xf32> -> vector<8x256xf32>
    %190 = arith.truncf %189 : vector<8x256xf32> to vector<8x256xbf16>
    %cst_67 = arith.constant dense<0.000000e+00> : vector<8x1024xf32>
    %191 = tpu.matmul %190, %8, %cst_67 {dimension_numbers = #tpu.dot_dimension_numbers<[1], [0], [0], [1], [0, 0, 1, 1], [], []>} : vector<8x256xbf16>, vector<256x1024xbf16>, vector<8x1024xf32> -> vector<8x1024xf32>
    %c4_68 = arith.constant 4 : index
    %c0_69 = arith.constant 0 : index
    %c0_70 = arith.constant 0 : index
    %192 = vector.load %arg8[%c4_68, %c0_69, %c0_70] : memref<8x8x1024xf32, #tpu.memory_space<vmem>>, vector<1x8x512xf32>
    %193 = vector.shape_cast %192 : vector<1x8x512xf32> to vector<8x512xf32>
    %194 = vector.extract_strided_slice %191 {offsets = [0, 0], sizes = [8, 512], strides = [1, 1]} : vector<8x1024xf32> to vector<8x512xf32>
    %195 = arith.addf %193, %194 : vector<8x512xf32>
    %c3_71 = arith.constant 3 : index
    %c0_72 = arith.constant 0 : index
    %c512_73 = arith.constant 512 : index
    %196 = vector.load %arg8[%c3_71, %c0_72, %c512_73] : memref<8x8x1024xf32, #tpu.memory_space<vmem>>, vector<1x8x512xf32>
    %197 = vector.shape_cast %196 : vector<1x8x512xf32> to vector<8x512xf32>
    %198 = vector.extract_strided_slice %191 {offsets = [0, 512], sizes = [8, 512], strides = [1, 1]} : vector<8x1024xf32> to vector<8x512xf32>
    %199 = arith.addf %197, %198 : vector<8x512xf32>
    %200 = tpu.concatenate %195, %199 in 0 : vector<8x512xf32>, vector<8x512xf32> -> vector<16x512xf32>
    %201 = vector.extract_strided_slice %200 {offsets = [0, 0], sizes = [16, 128], strides = [1, 1]} : vector<16x512xf32> to vector<16x128xf32>
    %202 = arith.negf %201 : vector<16x128xf32>
    %203 = math.exp %202 : vector<16x128xf32>
    %cst_74 = arith.constant 1.000000e+00 : f32
    %204 = vector.broadcast %cst_74 : f32 to vector<16x128xf32>
    %205 = arith.addf %204, %203 : vector<16x128xf32>
    %206 = arith.divf %204, %205 : vector<16x128xf32>
    %207 = vector.extract_strided_slice %200 {offsets = [0, 128], sizes = [16, 128], strides = [1, 1]} : vector<16x512xf32> to vector<16x128xf32>
    %208 = arith.negf %207 : vector<16x128xf32>
    %209 = math.exp %208 : vector<16x128xf32>
    %cst_75 = arith.constant 1.000000e+00 : f32
    %210 = vector.broadcast %cst_75 : f32 to vector<16x128xf32>
    %211 = arith.addf %210, %209 : vector<16x128xf32>
    %212 = arith.divf %210, %211 : vector<16x128xf32>
    %213 = vector.extract_strided_slice %200 {offsets = [0, 256], sizes = [16, 128], strides = [1, 1]} : vector<16x512xf32> to vector<16x128xf32>
    %214 = math.tanh %213 : vector<16x128xf32>
    %215 = vector.extract_strided_slice %200 {offsets = [0, 384], sizes = [16, 128], strides = [1, 1]} : vector<16x512xf32> to vector<16x128xf32>
    %216 = arith.negf %215 : vector<16x128xf32>
    %217 = math.exp %216 : vector<16x128xf32>
    %cst_76 = arith.constant 1.000000e+00 : f32
    %218 = vector.broadcast %cst_76 : f32 to vector<16x128xf32>
    %219 = arith.addf %218, %217 : vector<16x128xf32>
    %220 = arith.divf %218, %219 : vector<16x128xf32>
    %221 = arith.mulf %212, %178 : vector<16x128xf32>
    %222 = arith.mulf %206, %214 : vector<16x128xf32>
    %223 = arith.addf %221, %222 : vector<16x128xf32>
    %224 = math.tanh %223 : vector<16x128xf32>
    %225 = arith.mulf %220, %224 : vector<16x128xf32>
    %226 = vector.extract_strided_slice %225 {offsets = [0, 0], sizes = [8, 128], strides = [1, 1]} : vector<16x128xf32> to vector<8x128xf32>
    %227 = vector.extract_strided_slice %225 {offsets = [8, 0], sizes = [8, 128], strides = [1, 1]} : vector<16x128xf32> to vector<8x128xf32>
    %c4_77 = arith.constant 4 : index
    %c0_78 = arith.constant 0 : index
    %c0_79 = arith.constant 0 : index
    %228 = vector.load %arg9[%c4_77, %c0_78, %c0_79] : memref<8x8x256xf32, #tpu.memory_space<vmem>>, vector<1x8x128xf32>
    %229 = vector.shape_cast %228 : vector<1x8x128xf32> to vector<8x128xf32>
    %230 = vector.shape_cast %226 : vector<8x128xf32> to vector<1x8x128xf32>
    tpu.vector_store %arg9[%c4_77, %c0_78, %c0_79], %230 {strides = array<i32>} : memref<8x8x256xf32, #tpu.memory_space<vmem>>, vector<1x8x128xf32>,
    %c3_80 = arith.constant 3 : index
    %c0_81 = arith.constant 0 : index
    %c128_82 = arith.constant 128 : index
    %231 = vector.load %arg9[%c3_80, %c0_81, %c128_82] : memref<8x8x256xf32, #tpu.memory_space<vmem>>, vector<1x8x128xf32>
    %232 = vector.shape_cast %231 : vector<1x8x128xf32> to vector<8x128xf32>
    %233 = vector.shape_cast %227 : vector<8x128xf32> to vector<1x8x128xf32>
    tpu.vector_store %arg9[%c3_80, %c0_81, %c128_82], %233 {strides = array<i32>} : memref<8x8x256xf32, #tpu.memory_space<vmem>>, vector<1x8x128xf32>,
    %234 = tpu.concatenate %226, %227 in 1 : vector<8x128xf32>, vector<8x128xf32> -> vector<8x256xf32>
    %235 = arith.truncf %234 : vector<8x256xf32> to vector<8x256xbf16>
    %cst_83 = arith.constant dense<0.000000e+00> : vector<8x1024xf32>
    %236 = tpu.matmul %235, %8, %cst_83 {dimension_numbers = #tpu.dot_dimension_numbers<[1], [0], [0], [1], [0, 0, 1, 1], [], []>} : vector<8x256xbf16>, vector<256x1024xbf16>, vector<8x1024xf32> -> vector<8x1024xf32>
    %c5_84 = arith.constant 5 : index
    %c0_85 = arith.constant 0 : index
    %c0_86 = arith.constant 0 : index
    %237 = vector.load %arg8[%c5_84, %c0_85, %c0_86] : memref<8x8x1024xf32, #tpu.memory_space<vmem>>, vector<1x8x512xf32>
    %238 = vector.shape_cast %237 : vector<1x8x512xf32> to vector<8x512xf32>
    %239 = vector.extract_strided_slice %236 {offsets = [0, 0], sizes = [8, 512], strides = [1, 1]} : vector<8x1024xf32> to vector<8x512xf32>
    %240 = arith.addf %238, %239 : vector<8x512xf32>
    %c2_87 = arith.constant 2 : index
    %c0_88 = arith.constant 0 : index
    %c512_89 = arith.constant 512 : index
    %241 = vector.load %arg8[%c2_87, %c0_88, %c512_89] : memref<8x8x1024xf32, #tpu.memory_space<vmem>>, vector<1x8x512xf32>
    %242 = vector.shape_cast %241 : vector<1x8x512xf32> to vector<8x512xf32>
    %243 = vector.extract_strided_slice %236 {offsets = [0, 512], sizes = [8, 512], strides = [1, 1]} : vector<8x1024xf32> to vector<8x512xf32>
    %244 = arith.addf %242, %243 : vector<8x512xf32>
    %245 = tpu.concatenate %240, %244 in 0 : vector<8x512xf32>, vector<8x512xf32> -> vector<16x512xf32>
    %246 = vector.extract_strided_slice %245 {offsets = [0, 0], sizes = [16, 128], strides = [1, 1]} : vector<16x512xf32> to vector<16x128xf32>
    %247 = arith.negf %246 : vector<16x128xf32>
    %248 = math.exp %247 : vector<16x128xf32>
    %cst_90 = arith.constant 1.000000e+00 : f32
    %249 = vector.broadcast %cst_90 : f32 to vector<16x128xf32>
    %250 = arith.addf %249, %248 : vector<16x128xf32>
    %251 = arith.divf %249, %250 : vector<16x128xf32>
    %252 = vector.extract_strided_slice %245 {offsets = [0, 128], sizes = [16, 128], strides = [1, 1]} : vector<16x512xf32> to vector<16x128xf32>
    %253 = arith.negf %252 : vector<16x128xf32>
    %254 = math.exp %253 : vector<16x128xf32>
    %cst_91 = arith.constant 1.000000e+00 : f32
    %255 = vector.broadcast %cst_91 : f32 to vector<16x128xf32>
    %256 = arith.addf %255, %254 : vector<16x128xf32>
    %257 = arith.divf %255, %256 : vector<16x128xf32>
    %258 = vector.extract_strided_slice %245 {offsets = [0, 256], sizes = [16, 128], strides = [1, 1]} : vector<16x512xf32> to vector<16x128xf32>
    %259 = math.tanh %258 : vector<16x128xf32>
    %260 = vector.extract_strided_slice %245 {offsets = [0, 384], sizes = [16, 128], strides = [1, 1]} : vector<16x512xf32> to vector<16x128xf32>
    %261 = arith.negf %260 : vector<16x128xf32>
    %262 = math.exp %261 : vector<16x128xf32>
    %cst_92 = arith.constant 1.000000e+00 : f32
    %263 = vector.broadcast %cst_92 : f32 to vector<16x128xf32>
    %264 = arith.addf %263, %262 : vector<16x128xf32>
    %265 = arith.divf %263, %264 : vector<16x128xf32>
    %266 = arith.mulf %257, %223 : vector<16x128xf32>
    %267 = arith.mulf %251, %259 : vector<16x128xf32>
    %268 = arith.addf %266, %267 : vector<16x128xf32>
    %269 = math.tanh %268 : vector<16x128xf32>
    %270 = arith.mulf %265, %269 : vector<16x128xf32>
    %271 = vector.extract_strided_slice %270 {offsets = [0, 0], sizes = [8, 128], strides = [1, 1]} : vector<16x128xf32> to vector<8x128xf32>
    %272 = vector.extract_strided_slice %270 {offsets = [8, 0], sizes = [8, 128], strides = [1, 1]} : vector<16x128xf32> to vector<8x128xf32>
    %c5_93 = arith.constant 5 : index
    %c0_94 = arith.constant 0 : index
    %c0_95 = arith.constant 0 : index
    %273 = vector.load %arg9[%c5_93, %c0_94, %c0_95] : memref<8x8x256xf32, #tpu.memory_space<vmem>>, vector<1x8x128xf32>
    %274 = vector.shape_cast %273 : vector<1x8x128xf32> to vector<8x128xf32>
    %275 = vector.shape_cast %271 : vector<8x128xf32> to vector<1x8x128xf32>
    tpu.vector_store %arg9[%c5_93, %c0_94, %c0_95], %275 {strides = array<i32>} : memref<8x8x256xf32, #tpu.memory_space<vmem>>, vector<1x8x128xf32>,
    %c2_96 = arith.constant 2 : index
    %c0_97 = arith.constant 0 : index
    %c128_98 = arith.constant 128 : index
    %276 = vector.load %arg9[%c2_96, %c0_97, %c128_98] : memref<8x8x256xf32, #tpu.memory_space<vmem>>, vector<1x8x128xf32>
    %277 = vector.shape_cast %276 : vector<1x8x128xf32> to vector<8x128xf32>
    %278 = vector.shape_cast %272 : vector<8x128xf32> to vector<1x8x128xf32>
    tpu.vector_store %arg9[%c2_96, %c0_97, %c128_98], %278 {strides = array<i32>} : memref<8x8x256xf32, #tpu.memory_space<vmem>>, vector<1x8x128xf32>,
    %279 = tpu.concatenate %271, %272 in 1 : vector<8x128xf32>, vector<8x128xf32> -> vector<8x256xf32>
    %280 = arith.truncf %279 : vector<8x256xf32> to vector<8x256xbf16>
    %cst_99 = arith.constant dense<0.000000e+00> : vector<8x1024xf32>
    %281 = tpu.matmul %280, %8, %cst_99 {dimension_numbers = #tpu.dot_dimension_numbers<[1], [0], [0], [1], [0, 0, 1, 1], [], []>} : vector<8x256xbf16>, vector<256x1024xbf16>, vector<8x1024xf32> -> vector<8x1024xf32>
    %c6_100 = arith.constant 6 : index
    %c0_101 = arith.constant 0 : index
    %c0_102 = arith.constant 0 : index
    %282 = vector.load %arg8[%c6_100, %c0_101, %c0_102] : memref<8x8x1024xf32, #tpu.memory_space<vmem>>, vector<1x8x512xf32>
    %283 = vector.shape_cast %282 : vector<1x8x512xf32> to vector<8x512xf32>
    %284 = vector.extract_strided_slice %281 {offsets = [0, 0], sizes = [8, 512], strides = [1, 1]} : vector<8x1024xf32> to vector<8x512xf32>
    %285 = arith.addf %283, %284 : vector<8x512xf32>
    %c1_103 = arith.constant 1 : index
    %c0_104 = arith.constant 0 : index
    %c512_105 = arith.constant 512 : index
    %286 = vector.load %arg8[%c1_103, %c0_104, %c512_105] : memref<8x8x1024xf32, #tpu.memory_space<vmem>>, vector<1x8x512xf32>
    %287 = vector.shape_cast %286 : vector<1x8x512xf32> to vector<8x512xf32>
    %288 = vector.extract_strided_slice %281 {offsets = [0, 512], sizes = [8, 512], strides = [1, 1]} : vector<8x1024xf32> to vector<8x512xf32>
    %289 = arith.addf %287, %288 : vector<8x512xf32>
    %290 = tpu.concatenate %285, %289 in 0 : vector<8x512xf32>, vector<8x512xf32> -> vector<16x512xf32>
    %291 = vector.extract_strided_slice %290 {offsets = [0, 0], sizes = [16, 128], strides = [1, 1]} : vector<16x512xf32> to vector<16x128xf32>
    %292 = arith.negf %291 : vector<16x128xf32>
    %293 = math.exp %292 : vector<16x128xf32>
    %cst_106 = arith.constant 1.000000e+00 : f32
    %294 = vector.broadcast %cst_106 : f32 to vector<16x128xf32>
    %295 = arith.addf %294, %293 : vector<16x128xf32>
    %296 = arith.divf %294, %295 : vector<16x128xf32>
    %297 = vector.extract_strided_slice %290 {offsets = [0, 128], sizes = [16, 128], strides = [1, 1]} : vector<16x512xf32> to vector<16x128xf32>
    %298 = arith.negf %297 : vector<16x128xf32>
    %299 = math.exp %298 : vector<16x128xf32>
    %cst_107 = arith.constant 1.000000e+00 : f32
    %300 = vector.broadcast %cst_107 : f32 to vector<16x128xf32>
    %301 = arith.addf %300, %299 : vector<16x128xf32>
    %302 = arith.divf %300, %301 : vector<16x128xf32>
    %303 = vector.extract_strided_slice %290 {offsets = [0, 256], sizes = [16, 128], strides = [1, 1]} : vector<16x512xf32> to vector<16x128xf32>
    %304 = math.tanh %303 : vector<16x128xf32>
    %305 = vector.extract_strided_slice %290 {offsets = [0, 384], sizes = [16, 128], strides = [1, 1]} : vector<16x512xf32> to vector<16x128xf32>
    %306 = arith.negf %305 : vector<16x128xf32>
    %307 = math.exp %306 : vector<16x128xf32>
    %cst_108 = arith.constant 1.000000e+00 : f32
    %308 = vector.broadcast %cst_108 : f32 to vector<16x128xf32>
    %309 = arith.addf %308, %307 : vector<16x128xf32>
    %310 = arith.divf %308, %309 : vector<16x128xf32>
    %311 = arith.mulf %302, %268 : vector<16x128xf32>
    %312 = arith.mulf %296, %304 : vector<16x128xf32>
    %313 = arith.addf %311, %312 : vector<16x128xf32>
    %314 = math.tanh %313 : vector<16x128xf32>
    %315 = arith.mulf %310, %314 : vector<16x128xf32>
    %316 = vector.extract_strided_slice %315 {offsets = [0, 0], sizes = [8, 128], strides = [1, 1]} : vector<16x128xf32> to vector<8x128xf32>
    %317 = vector.extract_strided_slice %315 {offsets = [8, 0], sizes = [8, 128], strides = [1, 1]} : vector<16x128xf32> to vector<8x128xf32>
    %c6_109 = arith.constant 6 : index
    %c0_110 = arith.constant 0 : index
    %c0_111 = arith.constant 0 : index
    %318 = vector.load %arg9[%c6_109, %c0_110, %c0_111] : memref<8x8x256xf32, #tpu.memory_space<vmem>>, vector<1x8x128xf32>
    %319 = vector.shape_cast %318 : vector<1x8x128xf32> to vector<8x128xf32>
    %320 = vector.shape_cast %316 : vector<8x128xf32> to vector<1x8x128xf32>
    tpu.vector_store %arg9[%c6_109, %c0_110, %c0_111], %320 {strides = array<i32>} : memref<8x8x256xf32, #tpu.memory_space<vmem>>, vector<1x8x128xf32>,
    %c1_112 = arith.constant 1 : index
    %c0_113 = arith.constant 0 : index
    %c128_114 = arith.constant 128 : index
    %321 = vector.load %arg9[%c1_112, %c0_113, %c128_114] : memref<8x8x256xf32, #tpu.memory_space<vmem>>, vector<1x8x128xf32>
    %322 = vector.shape_cast %321 : vector<1x8x128xf32> to vector<8x128xf32>
    %323 = vector.shape_cast %317 : vector<8x128xf32> to vector<1x8x128xf32>
    tpu.vector_store %arg9[%c1_112, %c0_113, %c128_114], %323 {strides = array<i32>} : memref<8x8x256xf32, #tpu.memory_space<vmem>>, vector<1x8x128xf32>,
    %324 = tpu.concatenate %316, %317 in 1 : vector<8x128xf32>, vector<8x128xf32> -> vector<8x256xf32>
    %325 = arith.truncf %324 : vector<8x256xf32> to vector<8x256xbf16>
    %cst_115 = arith.constant dense<0.000000e+00> : vector<8x1024xf32>
    %326 = tpu.matmul %325, %8, %cst_115 {dimension_numbers = #tpu.dot_dimension_numbers<[1], [0], [0], [1], [0, 0, 1, 1], [], []>} : vector<8x256xbf16>, vector<256x1024xbf16>, vector<8x1024xf32> -> vector<8x1024xf32>
    %c7_116 = arith.constant 7 : index
    %c0_117 = arith.constant 0 : index
    %c0_118 = arith.constant 0 : index
    %327 = vector.load %arg8[%c7_116, %c0_117, %c0_118] : memref<8x8x1024xf32, #tpu.memory_space<vmem>>, vector<1x8x512xf32>
    %328 = vector.shape_cast %327 : vector<1x8x512xf32> to vector<8x512xf32>
    %329 = vector.extract_strided_slice %326 {offsets = [0, 0], sizes = [8, 512], strides = [1, 1]} : vector<8x1024xf32> to vector<8x512xf32>
    %330 = arith.addf %328, %329 : vector<8x512xf32>
    %c0_119 = arith.constant 0 : index
    %c0_120 = arith.constant 0 : index
    %c512_121 = arith.constant 512 : index
    %331 = vector.load %arg8[%c0_119, %c0_120, %c512_121] : memref<8x8x1024xf32, #tpu.memory_space<vmem>>, vector<1x8x512xf32>
    %332 = vector.shape_cast %331 : vector<1x8x512xf32> to vector<8x512xf32>
    %333 = vector.extract_strided_slice %326 {offsets = [0, 512], sizes = [8, 512], strides = [1, 1]} : vector<8x1024xf32> to vector<8x512xf32>
    %334 = arith.addf %332, %333 : vector<8x512xf32>
    %335 = tpu.concatenate %330, %334 in 0 : vector<8x512xf32>, vector<8x512xf32> -> vector<16x512xf32>
    %336 = vector.extract_strided_slice %335 {offsets = [0, 0], sizes = [16, 128], strides = [1, 1]} : vector<16x512xf32> to vector<16x128xf32>
    %337 = arith.negf %336 : vector<16x128xf32>
    %338 = math.exp %337 : vector<16x128xf32>
    %cst_122 = arith.constant 1.000000e+00 : f32
    %339 = vector.broadcast %cst_122 : f32 to vector<16x128xf32>
    %340 = arith.addf %339, %338 : vector<16x128xf32>
    %341 = arith.divf %339, %340 : vector<16x128xf32>
    %342 = vector.extract_strided_slice %335 {offsets = [0, 128], sizes = [16, 128], strides = [1, 1]} : vector<16x512xf32> to vector<16x128xf32>
    %343 = arith.negf %342 : vector<16x128xf32>
    %344 = math.exp %343 : vector<16x128xf32>
    %cst_123 = arith.constant 1.000000e+00 : f32
    %345 = vector.broadcast %cst_123 : f32 to vector<16x128xf32>
    %346 = arith.addf %345, %344 : vector<16x128xf32>
    %347 = arith.divf %345, %346 : vector<16x128xf32>
    %348 = vector.extract_strided_slice %335 {offsets = [0, 256], sizes = [16, 128], strides = [1, 1]} : vector<16x512xf32> to vector<16x128xf32>
    %349 = math.tanh %348 : vector<16x128xf32>
    %350 = vector.extract_strided_slice %335 {offsets = [0, 384], sizes = [16, 128], strides = [1, 1]} : vector<16x512xf32> to vector<16x128xf32>
    %351 = arith.negf %350 : vector<16x128xf32>
    %352 = math.exp %351 : vector<16x128xf32>
    %cst_124 = arith.constant 1.000000e+00 : f32
    %353 = vector.broadcast %cst_124 : f32 to vector<16x128xf32>
    %354 = arith.addf %353, %352 : vector<16x128xf32>
    %355 = arith.divf %353, %354 : vector<16x128xf32>
    %356 = arith.mulf %347, %313 : vector<16x128xf32>
    %357 = arith.mulf %341, %349 : vector<16x128xf32>
    %358 = arith.addf %356, %357 : vector<16x128xf32>
    %359 = math.tanh %358 : vector<16x128xf32>
    %360 = arith.mulf %355, %359 : vector<16x128xf32>
    %361 = vector.extract_strided_slice %360 {offsets = [0, 0], sizes = [8, 128], strides = [1, 1]} : vector<16x128xf32> to vector<8x128xf32>
    %362 = vector.extract_strided_slice %360 {offsets = [8, 0], sizes = [8, 128], strides = [1, 1]} : vector<16x128xf32> to vector<8x128xf32>
    %c7_125 = arith.constant 7 : index
    %c0_126 = arith.constant 0 : index
    %c0_127 = arith.constant 0 : index
    %363 = vector.load %arg9[%c7_125, %c0_126, %c0_127] : memref<8x8x256xf32, #tpu.memory_space<vmem>>, vector<1x8x128xf32>
    %364 = vector.shape_cast %363 : vector<1x8x128xf32> to vector<8x128xf32>
    %365 = vector.shape_cast %361 : vector<8x128xf32> to vector<1x8x128xf32>
    tpu.vector_store %arg9[%c7_125, %c0_126, %c0_127], %365 {strides = array<i32>} : memref<8x8x256xf32, #tpu.memory_space<vmem>>, vector<1x8x128xf32>,
    %c0_128 = arith.constant 0 : index
    %c0_129 = arith.constant 0 : index
    %c128_130 = arith.constant 128 : index
    %366 = vector.load %arg9[%c0_128, %c0_129, %c128_130] : memref<8x8x256xf32, #tpu.memory_space<vmem>>, vector<1x8x128xf32>
    %367 = vector.shape_cast %366 : vector<1x8x128xf32> to vector<8x128xf32>
    %368 = vector.shape_cast %362 : vector<8x128xf32> to vector<1x8x128xf32>
    tpu.vector_store %arg9[%c0_128, %c0_129, %c128_130], %368 {strides = array<i32>} : memref<8x8x256xf32, #tpu.memory_space<vmem>>, vector<1x8x128xf32>,
    %c0_131 = arith.constant 0 : index
    %c0_132 = arith.constant 0 : index
    %c0_133 = arith.constant 0 : index
    %369 = vector.load %arg9[%c0_131, %c0_132, %c0_133] : memref<8x8x256xf32, #tpu.memory_space<vmem>>, vector<8x8x256xf32>
    %370 = vector.shape_cast %369 : vector<8x8x256xf32> to vector<64x256xf32>
    %371 = arith.truncf %370 : vector<64x256xf32> to vector<64x256xbf16>
    %c0_134 = arith.constant 0 : index
    %c0_135 = arith.constant 0 : index
    %372 = vector.load %arg4[%c0_134, %c0_135] : memref<256x1024xbf16, #tpu.memory_space<vmem>>, vector<256x1024xbf16>
    %cst_136 = arith.constant dense<0.000000e+00> : vector<64x1024xf32>
    %373 = tpu.matmul %371, %372, %cst_136 {dimension_numbers = #tpu.dot_dimension_numbers<[1], [0], [0], [1], [0, 0, 1, 1], [], []>} : vector<64x256xbf16>, vector<256x1024xbf16>, vector<64x1024xf32> -> vector<64x1024xf32>
    %c0_137 = arith.constant 0 : index
    %c0_138 = arith.constant 0 : index
    %374 = vector.load %arg5[%c0_137, %c0_138] : memref<1x1024xf32, #tpu.memory_space<vmem>>, vector<1x1024xf32>
    %375 = vector.broadcast %374 : vector<1x1024xf32> to vector<64x1024xf32>
    %376 = arith.addf %373, %375 : vector<64x1024xf32>
    %377 = vector.shape_cast %376 : vector<64x1024xf32> to vector<8x8x1024xf32>
    %c0_139 = arith.constant 0 : index
    %c0_140 = arith.constant 0 : index
    %c0_141 = arith.constant 0 : index
    %378 = vector.load %arg8[%c0_139, %c0_140, %c0_141] : memref<8x8x1024xf32, #tpu.memory_space<vmem>>, vector<8x8x1024xf32>
    tpu.vector_store %arg8[%c0_139, %c0_140, %c0_141], %377 {strides = array<i32>} : memref<8x8x1024xf32, #tpu.memory_space<vmem>>, vector<8x8x1024xf32>,
    %c0_142 = arith.constant 0 : index
    %c0_143 = arith.constant 0 : index
    %379 = vector.load %arg6[%c0_142, %c0_143] : memref<256x1024xbf16, #tpu.memory_space<vmem>>, vector<256x1024xbf16>
    %cst_144 = arith.constant 0.000000e+00 : bf16
    %380 = vector.broadcast %cst_144 : bf16 to vector<8x256xbf16>
    %cst_145 = arith.constant 0.000000e+00 : f32
    %381 = vector.broadcast %cst_145 : f32 to vector<16x128xf32>
    %cst_146 = arith.constant dense<0.000000e+00> : vector<8x1024xf32>
    %382 = tpu.matmul %380, %379, %cst_146 {dimension_numbers = #tpu.dot_dimension_numbers<[1], [0], [0], [1], [0, 0, 1, 1], [], []>} : vector<8x256xbf16>, vector<256x1024xbf16>, vector<8x1024xf32> -> vector<8x1024xf32>
    %c0_147 = arith.constant 0 : index
    %c0_148 = arith.constant 0 : index
    %c0_149 = arith.constant 0 : index
    %383 = vector.load %arg8[%c0_147, %c0_148, %c0_149] : memref<8x8x1024xf32, #tpu.memory_space<vmem>>, vector<1x8x512xf32>
    %384 = vector.shape_cast %383 : vector<1x8x512xf32> to vector<8x512xf32>
    %385 = vector.extract_strided_slice %382 {offsets = [0, 0], sizes = [8, 512], strides = [1, 1]} : vector<8x1024xf32> to vector<8x512xf32>
    %386 = arith.addf %384, %385 : vector<8x512xf32>
    %c7_150 = arith.constant 7 : index
    %c0_151 = arith.constant 0 : index
    %c512_152 = arith.constant 512 : index
    %387 = vector.load %arg8[%c7_150, %c0_151, %c512_152] : memref<8x8x1024xf32, #tpu.memory_space<vmem>>, vector<1x8x512xf32>
    %388 = vector.shape_cast %387 : vector<1x8x512xf32> to vector<8x512xf32>
    %389 = vector.extract_strided_slice %382 {offsets = [0, 512], sizes = [8, 512], strides = [1, 1]} : vector<8x1024xf32> to vector<8x512xf32>
    %390 = arith.addf %388, %389 : vector<8x512xf32>
    %391 = tpu.concatenate %386, %390 in 0 : vector<8x512xf32>, vector<8x512xf32> -> vector<16x512xf32>
    %392 = vector.extract_strided_slice %391 {offsets = [0, 0], sizes = [16, 128], strides = [1, 1]} : vector<16x512xf32> to vector<16x128xf32>
    %393 = arith.negf %392 : vector<16x128xf32>
    %394 = math.exp %393 : vector<16x128xf32>
    %cst_153 = arith.constant 1.000000e+00 : f32
    %395 = vector.broadcast %cst_153 : f32 to vector<16x128xf32>
    %396 = arith.addf %395, %394 : vector<16x128xf32>
    %397 = arith.divf %395, %396 : vector<16x128xf32>
    %398 = vector.extract_strided_slice %391 {offsets = [0, 128], sizes = [16, 128], strides = [1, 1]} : vector<16x512xf32> to vector<16x128xf32>
    %399 = arith.negf %398 : vector<16x128xf32>
    %400 = math.exp %399 : vector<16x128xf32>
    %cst_154 = arith.constant 1.000000e+00 : f32
    %401 = vector.broadcast %cst_154 : f32 to vector<16x128xf32>
    %402 = arith.addf %401, %400 : vector<16x128xf32>
    %403 = arith.divf %401, %402 : vector<16x128xf32>
    %404 = vector.extract_strided_slice %391 {offsets = [0, 256], sizes = [16, 128], strides = [1, 1]} : vector<16x512xf32> to vector<16x128xf32>
    %405 = math.tanh %404 : vector<16x128xf32>
    %406 = vector.extract_strided_slice %391 {offsets = [0, 384], sizes = [16, 128], strides = [1, 1]} : vector<16x512xf32> to vector<16x128xf32>
    %407 = arith.negf %406 : vector<16x128xf32>
    %408 = math.exp %407 : vector<16x128xf32>
    %cst_155 = arith.constant 1.000000e+00 : f32
    %409 = vector.broadcast %cst_155 : f32 to vector<16x128xf32>
    %410 = arith.addf %409, %408 : vector<16x128xf32>
    %411 = arith.divf %409, %410 : vector<16x128xf32>
    %412 = arith.mulf %403, %381 : vector<16x128xf32>
    %413 = arith.mulf %397, %405 : vector<16x128xf32>
    %414 = arith.addf %412, %413 : vector<16x128xf32>
    %415 = math.tanh %414 : vector<16x128xf32>
    %416 = arith.mulf %411, %415 : vector<16x128xf32>
    %417 = vector.extract_strided_slice %416 {offsets = [0, 0], sizes = [8, 128], strides = [1, 1]} : vector<16x128xf32> to vector<8x128xf32>
    %418 = vector.extract_strided_slice %416 {offsets = [8, 0], sizes = [8, 128], strides = [1, 1]} : vector<16x128xf32> to vector<8x128xf32>
    %c0_156 = arith.constant 0 : index
    %c0_157 = arith.constant 0 : index
    %c0_158 = arith.constant 0 : index
    %419 = vector.load %arg7[%c0_156, %c0_157, %c0_158] : memref<8x8x256xf32, #tpu.memory_space<vmem>>, vector<1x8x128xf32>
    %420 = vector.shape_cast %419 : vector<1x8x128xf32> to vector<8x128xf32>
    %421 = vector.shape_cast %417 : vector<8x128xf32> to vector<1x8x128xf32>
    tpu.vector_store %arg7[%c0_156, %c0_157, %c0_158], %421 {strides = array<i32>} : memref<8x8x256xf32, #tpu.memory_space<vmem>>, vector<1x8x128xf32>,
    %c7_159 = arith.constant 7 : index
    %c0_160 = arith.constant 0 : index
    %c128_161 = arith.constant 128 : index
    %422 = vector.load %arg7[%c7_159, %c0_160, %c128_161] : memref<8x8x256xf32, #tpu.memory_space<vmem>>, vector<1x8x128xf32>
    %423 = vector.shape_cast %422 : vector<1x8x128xf32> to vector<8x128xf32>
    %424 = vector.shape_cast %418 : vector<8x128xf32> to vector<1x8x128xf32>
    tpu.vector_store %arg7[%c7_159, %c0_160, %c128_161], %424 {strides = array<i32>} : memref<8x8x256xf32, #tpu.memory_space<vmem>>, vector<1x8x128xf32>,
    %425 = tpu.concatenate %417, %418 in 1 : vector<8x128xf32>, vector<8x128xf32> -> vector<8x256xf32>
    %426 = arith.truncf %425 : vector<8x256xf32> to vector<8x256xbf16>
    %cst_162 = arith.constant dense<0.000000e+00> : vector<8x1024xf32>
    %427 = tpu.matmul %426, %379, %cst_162 {dimension_numbers = #tpu.dot_dimension_numbers<[1], [0], [0], [1], [0, 0, 1, 1], [], []>} : vector<8x256xbf16>, vector<256x1024xbf16>, vector<8x1024xf32> -> vector<8x1024xf32>
    %c1_163 = arith.constant 1 : index
    %c0_164 = arith.constant 0 : index
    %c0_165 = arith.constant 0 : index
    %428 = vector.load %arg8[%c1_163, %c0_164, %c0_165] : memref<8x8x1024xf32, #tpu.memory_space<vmem>>, vector<1x8x512xf32>
    %429 = vector.shape_cast %428 : vector<1x8x512xf32> to vector<8x512xf32>
    %430 = vector.extract_strided_slice %427 {offsets = [0, 0], sizes = [8, 512], strides = [1, 1]} : vector<8x1024xf32> to vector<8x512xf32>
    %431 = arith.addf %429, %430 : vector<8x512xf32>
    %c6_166 = arith.constant 6 : index
    %c0_167 = arith.constant 0 : index
    %c512_168 = arith.constant 512 : index
    %432 = vector.load %arg8[%c6_166, %c0_167, %c512_168] : memref<8x8x1024xf32, #tpu.memory_space<vmem>>, vector<1x8x512xf32>
    %433 = vector.shape_cast %432 : vector<1x8x512xf32> to vector<8x512xf32>
    %434 = vector.extract_strided_slice %427 {offsets = [0, 512], sizes = [8, 512], strides = [1, 1]} : vector<8x1024xf32> to vector<8x512xf32>
    %435 = arith.addf %433, %434 : vector<8x512xf32>
    %436 = tpu.concatenate %431, %435 in 0 : vector<8x512xf32>, vector<8x512xf32> -> vector<16x512xf32>
    %437 = vector.extract_strided_slice %436 {offsets = [0, 0], sizes = [16, 128], strides = [1, 1]} : vector<16x512xf32> to vector<16x128xf32>
    %438 = arith.negf %437 : vector<16x128xf32>
    %439 = math.exp %438 : vector<16x128xf32>
    %cst_169 = arith.constant 1.000000e+00 : f32
    %440 = vector.broadcast %cst_169 : f32 to vector<16x128xf32>
    %441 = arith.addf %440, %439 : vector<16x128xf32>
    %442 = arith.divf %440, %441 : vector<16x128xf32>
    %443 = vector.extract_strided_slice %436 {offsets = [0, 128], sizes = [16, 128], strides = [1, 1]} : vector<16x512xf32> to vector<16x128xf32>
    %444 = arith.negf %443 : vector<16x128xf32>
    %445 = math.exp %444 : vector<16x128xf32>
    %cst_170 = arith.constant 1.000000e+00 : f32
    %446 = vector.broadcast %cst_170 : f32 to vector<16x128xf32>
    %447 = arith.addf %446, %445 : vector<16x128xf32>
    %448 = arith.divf %446, %447 : vector<16x128xf32>
    %449 = vector.extract_strided_slice %436 {offsets = [0, 256], sizes = [16, 128], strides = [1, 1]} : vector<16x512xf32> to vector<16x128xf32>
    %450 = math.tanh %449 : vector<16x128xf32>
    %451 = vector.extract_strided_slice %436 {offsets = [0, 384], sizes = [16, 128], strides = [1, 1]} : vector<16x512xf32> to vector<16x128xf32>
    %452 = arith.negf %451 : vector<16x128xf32>
    %453 = math.exp %452 : vector<16x128xf32>
    %cst_171 = arith.constant 1.000000e+00 : f32
    %454 = vector.broadcast %cst_171 : f32 to vector<16x128xf32>
    %455 = arith.addf %454, %453 : vector<16x128xf32>
    %456 = arith.divf %454, %455 : vector<16x128xf32>
    %457 = arith.mulf %448, %414 : vector<16x128xf32>
    %458 = arith.mulf %442, %450 : vector<16x128xf32>
    %459 = arith.addf %457, %458 : vector<16x128xf32>
    %460 = math.tanh %459 : vector<16x128xf32>
    %461 = arith.mulf %456, %460 : vector<16x128xf32>
    %462 = vector.extract_strided_slice %461 {offsets = [0, 0], sizes = [8, 128], strides = [1, 1]} : vector<16x128xf32> to vector<8x128xf32>
    %463 = vector.extract_strided_slice %461 {offsets = [8, 0], sizes = [8, 128], strides = [1, 1]} : vector<16x128xf32> to vector<8x128xf32>
    %c1_172 = arith.constant 1 : index
    %c0_173 = arith.constant 0 : index
    %c0_174 = arith.constant 0 : index
    %464 = vector.load %arg7[%c1_172, %c0_173, %c0_174] : memref<8x8x256xf32, #tpu.memory_space<vmem>>, vector<1x8x128xf32>
    %465 = vector.shape_cast %464 : vector<1x8x128xf32> to vector<8x128xf32>
    %466 = vector.shape_cast %462 : vector<8x128xf32> to vector<1x8x128xf32>
    tpu.vector_store %arg7[%c1_172, %c0_173, %c0_174], %466 {strides = array<i32>} : memref<8x8x256xf32, #tpu.memory_space<vmem>>, vector<1x8x128xf32>,
    %c6_175 = arith.constant 6 : index
    %c0_176 = arith.constant 0 : index
    %c128_177 = arith.constant 128 : index
    %467 = vector.load %arg7[%c6_175, %c0_176, %c128_177] : memref<8x8x256xf32, #tpu.memory_space<vmem>>, vector<1x8x128xf32>
    %468 = vector.shape_cast %467 : vector<1x8x128xf32> to vector<8x128xf32>
    %469 = vector.shape_cast %463 : vector<8x128xf32> to vector<1x8x128xf32>
    tpu.vector_store %arg7[%c6_175, %c0_176, %c128_177], %469 {strides = array<i32>} : memref<8x8x256xf32, #tpu.memory_space<vmem>>, vector<1x8x128xf32>,
    %470 = tpu.concatenate %462, %463 in 1 : vector<8x128xf32>, vector<8x128xf32> -> vector<8x256xf32>
    %471 = arith.truncf %470 : vector<8x256xf32> to vector<8x256xbf16>
    %cst_178 = arith.constant dense<0.000000e+00> : vector<8x1024xf32>
    %472 = tpu.matmul %471, %379, %cst_178 {dimension_numbers = #tpu.dot_dimension_numbers<[1], [0], [0], [1], [0, 0, 1, 1], [], []>} : vector<8x256xbf16>, vector<256x1024xbf16>, vector<8x1024xf32> -> vector<8x1024xf32>
    %c2_179 = arith.constant 2 : index
    %c0_180 = arith.constant 0 : index
    %c0_181 = arith.constant 0 : index
    %473 = vector.load %arg8[%c2_179, %c0_180, %c0_181] : memref<8x8x1024xf32, #tpu.memory_space<vmem>>, vector<1x8x512xf32>
    %474 = vector.shape_cast %473 : vector<1x8x512xf32> to vector<8x512xf32>
    %475 = vector.extract_strided_slice %472 {offsets = [0, 0], sizes = [8, 512], strides = [1, 1]} : vector<8x1024xf32> to vector<8x512xf32>
    %476 = arith.addf %474, %475 : vector<8x512xf32>
    %c5_182 = arith.constant 5 : index
    %c0_183 = arith.constant 0 : index
    %c512_184 = arith.constant 512 : index
    %477 = vector.load %arg8[%c5_182, %c0_183, %c512_184] : memref<8x8x1024xf32, #tpu.memory_space<vmem>>, vector<1x8x512xf32>
    %478 = vector.shape_cast %477 : vector<1x8x512xf32> to vector<8x512xf32>
    %479 = vector.extract_strided_slice %472 {offsets = [0, 512], sizes = [8, 512], strides = [1, 1]} : vector<8x1024xf32> to vector<8x512xf32>
    %480 = arith.addf %478, %479 : vector<8x512xf32>
    %481 = tpu.concatenate %476, %480 in 0 : vector<8x512xf32>, vector<8x512xf32> -> vector<16x512xf32>
    %482 = vector.extract_strided_slice %481 {offsets = [0, 0], sizes = [16, 128], strides = [1, 1]} : vector<16x512xf32> to vector<16x128xf32>
    %483 = arith.negf %482 : vector<16x128xf32>
    %484 = math.exp %483 : vector<16x128xf32>
    %cst_185 = arith.constant 1.000000e+00 : f32
    %485 = vector.broadcast %cst_185 : f32 to vector<16x128xf32>
    %486 = arith.addf %485, %484 : vector<16x128xf32>
    %487 = arith.divf %485, %486 : vector<16x128xf32>
    %488 = vector.extract_strided_slice %481 {offsets = [0, 128], sizes = [16, 128], strides = [1, 1]} : vector<16x512xf32> to vector<16x128xf32>
    %489 = arith.negf %488 : vector<16x128xf32>
    %490 = math.exp %489 : vector<16x128xf32>
    %cst_186 = arith.constant 1.000000e+00 : f32
    %491 = vector.broadcast %cst_186 : f32 to vector<16x128xf32>
    %492 = arith.addf %491, %490 : vector<16x128xf32>
    %493 = arith.divf %491, %492 : vector<16x128xf32>
    %494 = vector.extract_strided_slice %481 {offsets = [0, 256], sizes = [16, 128], strides = [1, 1]} : vector<16x512xf32> to vector<16x128xf32>
    %495 = math.tanh %494 : vector<16x128xf32>
    %496 = vector.extract_strided_slice %481 {offsets = [0, 384], sizes = [16, 128], strides = [1, 1]} : vector<16x512xf32> to vector<16x128xf32>
    %497 = arith.negf %496 : vector<16x128xf32>
    %498 = math.exp %497 : vector<16x128xf32>
    %cst_187 = arith.constant 1.000000e+00 : f32
    %499 = vector.broadcast %cst_187 : f32 to vector<16x128xf32>
    %500 = arith.addf %499, %498 : vector<16x128xf32>
    %501 = arith.divf %499, %500 : vector<16x128xf32>
    %502 = arith.mulf %493, %459 : vector<16x128xf32>
    %503 = arith.mulf %487, %495 : vector<16x128xf32>
    %504 = arith.addf %502, %503 : vector<16x128xf32>
    %505 = math.tanh %504 : vector<16x128xf32>
    %506 = arith.mulf %501, %505 : vector<16x128xf32>
    %507 = vector.extract_strided_slice %506 {offsets = [0, 0], sizes = [8, 128], strides = [1, 1]} : vector<16x128xf32> to vector<8x128xf32>
    %508 = vector.extract_strided_slice %506 {offsets = [8, 0], sizes = [8, 128], strides = [1, 1]} : vector<16x128xf32> to vector<8x128xf32>
    %c2_188 = arith.constant 2 : index
    %c0_189 = arith.constant 0 : index
    %c0_190 = arith.constant 0 : index
    %509 = vector.load %arg7[%c2_188, %c0_189, %c0_190] : memref<8x8x256xf32, #tpu.memory_space<vmem>>, vector<1x8x128xf32>
    %510 = vector.shape_cast %509 : vector<1x8x128xf32> to vector<8x128xf32>
    %511 = vector.shape_cast %507 : vector<8x128xf32> to vector<1x8x128xf32>
    tpu.vector_store %arg7[%c2_188, %c0_189, %c0_190], %511 {strides = array<i32>} : memref<8x8x256xf32, #tpu.memory_space<vmem>>, vector<1x8x128xf32>,
    %c5_191 = arith.constant 5 : index
    %c0_192 = arith.constant 0 : index
    %c128_193 = arith.constant 128 : index
    %512 = vector.load %arg7[%c5_191, %c0_192, %c128_193] : memref<8x8x256xf32, #tpu.memory_space<vmem>>, vector<1x8x128xf32>
    %513 = vector.shape_cast %512 : vector<1x8x128xf32> to vector<8x128xf32>
    %514 = vector.shape_cast %508 : vector<8x128xf32> to vector<1x8x128xf32>
    tpu.vector_store %arg7[%c5_191, %c0_192, %c128_193], %514 {strides = array<i32>} : memref<8x8x256xf32, #tpu.memory_space<vmem>>, vector<1x8x128xf32>,
    %515 = tpu.concatenate %507, %508 in 1 : vector<8x128xf32>, vector<8x128xf32> -> vector<8x256xf32>
    %516 = arith.truncf %515 : vector<8x256xf32> to vector<8x256xbf16>
    %cst_194 = arith.constant dense<0.000000e+00> : vector<8x1024xf32>
    %517 = tpu.matmul %516, %379, %cst_194 {dimension_numbers = #tpu.dot_dimension_numbers<[1], [0], [0], [1], [0, 0, 1, 1], [], []>} : vector<8x256xbf16>, vector<256x1024xbf16>, vector<8x1024xf32> -> vector<8x1024xf32>
    %c3_195 = arith.constant 3 : index
    %c0_196 = arith.constant 0 : index
    %c0_197 = arith.constant 0 : index
    %518 = vector.load %arg8[%c3_195, %c0_196, %c0_197] : memref<8x8x1024xf32, #tpu.memory_space<vmem>>, vector<1x8x512xf32>
    %519 = vector.shape_cast %518 : vector<1x8x512xf32> to vector<8x512xf32>
    %520 = vector.extract_strided_slice %517 {offsets = [0, 0], sizes = [8, 512], strides = [1, 1]} : vector<8x1024xf32> to vector<8x512xf32>
    %521 = arith.addf %519, %520 : vector<8x512xf32>
    %c4_198 = arith.constant 4 : index
    %c0_199 = arith.constant 0 : index
    %c512_200 = arith.constant 512 : index
    %522 = vector.load %arg8[%c4_198, %c0_199, %c512_200] : memref<8x8x1024xf32, #tpu.memory_space<vmem>>, vector<1x8x512xf32>
    %523 = vector.shape_cast %522 : vector<1x8x512xf32> to vector<8x512xf32>
    %524 = vector.extract_strided_slice %517 {offsets = [0, 512], sizes = [8, 512], strides = [1, 1]} : vector<8x1024xf32> to vector<8x512xf32>
    %525 = arith.addf %523, %524 : vector<8x512xf32>
    %526 = tpu.concatenate %521, %525 in 0 : vector<8x512xf32>, vector<8x512xf32> -> vector<16x512xf32>
    %527 = vector.extract_strided_slice %526 {offsets = [0, 0], sizes = [16, 128], strides = [1, 1]} : vector<16x512xf32> to vector<16x128xf32>
    %528 = arith.negf %527 : vector<16x128xf32>
    %529 = math.exp %528 : vector<16x128xf32>
    %cst_201 = arith.constant 1.000000e+00 : f32
    %530 = vector.broadcast %cst_201 : f32 to vector<16x128xf32>
    %531 = arith.addf %530, %529 : vector<16x128xf32>
    %532 = arith.divf %530, %531 : vector<16x128xf32>
    %533 = vector.extract_strided_slice %526 {offsets = [0, 128], sizes = [16, 128], strides = [1, 1]} : vector<16x512xf32> to vector<16x128xf32>
    %534 = arith.negf %533 : vector<16x128xf32>
    %535 = math.exp %534 : vector<16x128xf32>
    %cst_202 = arith.constant 1.000000e+00 : f32
    %536 = vector.broadcast %cst_202 : f32 to vector<16x128xf32>
    %537 = arith.addf %536, %535 : vector<16x128xf32>
    %538 = arith.divf %536, %537 : vector<16x128xf32>
    %539 = vector.extract_strided_slice %526 {offsets = [0, 256], sizes = [16, 128], strides = [1, 1]} : vector<16x512xf32> to vector<16x128xf32>
    %540 = math.tanh %539 : vector<16x128xf32>
    %541 = vector.extract_strided_slice %526 {offsets = [0, 384], sizes = [16, 128], strides = [1, 1]} : vector<16x512xf32> to vector<16x128xf32>
    %542 = arith.negf %541 : vector<16x128xf32>
    %543 = math.exp %542 : vector<16x128xf32>
    %cst_203 = arith.constant 1.000000e+00 : f32
    %544 = vector.broadcast %cst_203 : f32 to vector<16x128xf32>
    %545 = arith.addf %544, %543 : vector<16x128xf32>
    %546 = arith.divf %544, %545 : vector<16x128xf32>
    %547 = arith.mulf %538, %504 : vector<16x128xf32>
    %548 = arith.mulf %532, %540 : vector<16x128xf32>
    %549 = arith.addf %547, %548 : vector<16x128xf32>
    %550 = math.tanh %549 : vector<16x128xf32>
    %551 = arith.mulf %546, %550 : vector<16x128xf32>
    %552 = vector.extract_strided_slice %551 {offsets = [0, 0], sizes = [8, 128], strides = [1, 1]} : vector<16x128xf32> to vector<8x128xf32>
    %553 = vector.extract_strided_slice %551 {offsets = [8, 0], sizes = [8, 128], strides = [1, 1]} : vector<16x128xf32> to vector<8x128xf32>
    %c3_204 = arith.constant 3 : index
    %c0_205 = arith.constant 0 : index
    %c0_206 = arith.constant 0 : index
    %554 = vector.load %arg7[%c3_204, %c0_205, %c0_206] : memref<8x8x256xf32, #tpu.memory_space<vmem>>, vector<1x8x128xf32>
    %555 = vector.shape_cast %554 : vector<1x8x128xf32> to vector<8x128xf32>
    %556 = vector.shape_cast %552 : vector<8x128xf32> to vector<1x8x128xf32>
    tpu.vector_store %arg7[%c3_204, %c0_205, %c0_206], %556 {strides = array<i32>} : memref<8x8x256xf32, #tpu.memory_space<vmem>>, vector<1x8x128xf32>,
    %c4_207 = arith.constant 4 : index
    %c0_208 = arith.constant 0 : index
    %c128_209 = arith.constant 128 : index
    %557 = vector.load %arg7[%c4_207, %c0_208, %c128_209] : memref<8x8x256xf32, #tpu.memory_space<vmem>>, vector<1x8x128xf32>
    %558 = vector.shape_cast %557 : vector<1x8x128xf32> to vector<8x128xf32>
    %559 = vector.shape_cast %553 : vector<8x128xf32> to vector<1x8x128xf32>
    tpu.vector_store %arg7[%c4_207, %c0_208, %c128_209], %559 {strides = array<i32>} : memref<8x8x256xf32, #tpu.memory_space<vmem>>, vector<1x8x128xf32>,
    %560 = tpu.concatenate %552, %553 in 1 : vector<8x128xf32>, vector<8x128xf32> -> vector<8x256xf32>
    %561 = arith.truncf %560 : vector<8x256xf32> to vector<8x256xbf16>
    %cst_210 = arith.constant dense<0.000000e+00> : vector<8x1024xf32>
    %562 = tpu.matmul %561, %379, %cst_210 {dimension_numbers = #tpu.dot_dimension_numbers<[1], [0], [0], [1], [0, 0, 1, 1], [], []>} : vector<8x256xbf16>, vector<256x1024xbf16>, vector<8x1024xf32> -> vector<8x1024xf32>
    %c4_211 = arith.constant 4 : index
    %c0_212 = arith.constant 0 : index
    %c0_213 = arith.constant 0 : index
    %563 = vector.load %arg8[%c4_211, %c0_212, %c0_213] : memref<8x8x1024xf32, #tpu.memory_space<vmem>>, vector<1x8x512xf32>
    %564 = vector.shape_cast %563 : vector<1x8x512xf32> to vector<8x512xf32>
    %565 = vector.extract_strided_slice %562 {offsets = [0, 0], sizes = [8, 512], strides = [1, 1]} : vector<8x1024xf32> to vector<8x512xf32>
    %566 = arith.addf %564, %565 : vector<8x512xf32>
    %c3_214 = arith.constant 3 : index
    %c0_215 = arith.constant 0 : index
    %c512_216 = arith.constant 512 : index
    %567 = vector.load %arg8[%c3_214, %c0_215, %c512_216] : memref<8x8x1024xf32, #tpu.memory_space<vmem>>, vector<1x8x512xf32>
    %568 = vector.shape_cast %567 : vector<1x8x512xf32> to vector<8x512xf32>
    %569 = vector.extract_strided_slice %562 {offsets = [0, 512], sizes = [8, 512], strides = [1, 1]} : vector<8x1024xf32> to vector<8x512xf32>
    %570 = arith.addf %568, %569 : vector<8x512xf32>
    %571 = tpu.concatenate %566, %570 in 0 : vector<8x512xf32>, vector<8x512xf32> -> vector<16x512xf32>
    %572 = vector.extract_strided_slice %571 {offsets = [0, 0], sizes = [16, 128], strides = [1, 1]} : vector<16x512xf32> to vector<16x128xf32>
    %573 = arith.negf %572 : vector<16x128xf32>
    %574 = math.exp %573 : vector<16x128xf32>
    %cst_217 = arith.constant 1.000000e+00 : f32
    %575 = vector.broadcast %cst_217 : f32 to vector<16x128xf32>
    %576 = arith.addf %575, %574 : vector<16x128xf32>
    %577 = arith.divf %575, %576 : vector<16x128xf32>
    %578 = vector.extract_strided_slice %571 {offsets = [0, 128], sizes = [16, 128], strides = [1, 1]} : vector<16x512xf32> to vector<16x128xf32>
    %579 = arith.negf %578 : vector<16x128xf32>
    %580 = math.exp %579 : vector<16x128xf32>
    %cst_218 = arith.constant 1.000000e+00 : f32
    %581 = vector.broadcast %cst_218 : f32 to vector<16x128xf32>
    %582 = arith.addf %581, %580 : vector<16x128xf32>
    %583 = arith.divf %581, %582 : vector<16x128xf32>
    %584 = vector.extract_strided_slice %571 {offsets = [0, 256], sizes = [16, 128], strides = [1, 1]} : vector<16x512xf32> to vector<16x128xf32>
    %585 = math.tanh %584 : vector<16x128xf32>
    %586 = vector.extract_strided_slice %571 {offsets = [0, 384], sizes = [16, 128], strides = [1, 1]} : vector<16x512xf32> to vector<16x128xf32>
    %587 = arith.negf %586 : vector<16x128xf32>
    %588 = math.exp %587 : vector<16x128xf32>
    %cst_219 = arith.constant 1.000000e+00 : f32
    %589 = vector.broadcast %cst_219 : f32 to vector<16x128xf32>
    %590 = arith.addf %589, %588 : vector<16x128xf32>
    %591 = arith.divf %589, %590 : vector<16x128xf32>
    %592 = arith.mulf %583, %549 : vector<16x128xf32>
    %593 = arith.mulf %577, %585 : vector<16x128xf32>
    %594 = arith.addf %592, %593 : vector<16x128xf32>
    %595 = math.tanh %594 : vector<16x128xf32>
    %596 = arith.mulf %591, %595 : vector<16x128xf32>
    %597 = vector.extract_strided_slice %596 {offsets = [0, 0], sizes = [8, 128], strides = [1, 1]} : vector<16x128xf32> to vector<8x128xf32>
    %598 = vector.extract_strided_slice %596 {offsets = [8, 0], sizes = [8, 128], strides = [1, 1]} : vector<16x128xf32> to vector<8x128xf32>
    %c4_220 = arith.constant 4 : index
    %c0_221 = arith.constant 0 : index
    %c0_222 = arith.constant 0 : index
    %599 = vector.load %arg7[%c4_220, %c0_221, %c0_222] : memref<8x8x256xf32, #tpu.memory_space<vmem>>, vector<1x8x128xf32>
    %600 = vector.shape_cast %599 : vector<1x8x128xf32> to vector<8x128xf32>
    %601 = vector.shape_cast %597 : vector<8x128xf32> to vector<1x8x128xf32>
    tpu.vector_store %arg7[%c4_220, %c0_221, %c0_222], %601 {strides = array<i32>} : memref<8x8x256xf32, #tpu.memory_space<vmem>>, vector<1x8x128xf32>,
    %c3_223 = arith.constant 3 : index
    %c0_224 = arith.constant 0 : index
    %c128_225 = arith.constant 128 : index
    %602 = vector.load %arg7[%c3_223, %c0_224, %c128_225] : memref<8x8x256xf32, #tpu.memory_space<vmem>>, vector<1x8x128xf32>
    %603 = vector.shape_cast %602 : vector<1x8x128xf32> to vector<8x128xf32>
    %604 = vector.shape_cast %598 : vector<8x128xf32> to vector<1x8x128xf32>
    tpu.vector_store %arg7[%c3_223, %c0_224, %c128_225], %604 {strides = array<i32>} : memref<8x8x256xf32, #tpu.memory_space<vmem>>, vector<1x8x128xf32>,
    %605 = tpu.concatenate %597, %598 in 1 : vector<8x128xf32>, vector<8x128xf32> -> vector<8x256xf32>
    %606 = arith.truncf %605 : vector<8x256xf32> to vector<8x256xbf16>
    %cst_226 = arith.constant dense<0.000000e+00> : vector<8x1024xf32>
    %607 = tpu.matmul %606, %379, %cst_226 {dimension_numbers = #tpu.dot_dimension_numbers<[1], [0], [0], [1], [0, 0, 1, 1], [], []>} : vector<8x256xbf16>, vector<256x1024xbf16>, vector<8x1024xf32> -> vector<8x1024xf32>
    %c5_227 = arith.constant 5 : index
    %c0_228 = arith.constant 0 : index
    %c0_229 = arith.constant 0 : index
    %608 = vector.load %arg8[%c5_227, %c0_228, %c0_229] : memref<8x8x1024xf32, #tpu.memory_space<vmem>>, vector<1x8x512xf32>
    %609 = vector.shape_cast %608 : vector<1x8x512xf32> to vector<8x512xf32>
    %610 = vector.extract_strided_slice %607 {offsets = [0, 0], sizes = [8, 512], strides = [1, 1]} : vector<8x1024xf32> to vector<8x512xf32>
    %611 = arith.addf %609, %610 : vector<8x512xf32>
    %c2_230 = arith.constant 2 : index
    %c0_231 = arith.constant 0 : index
    %c512_232 = arith.constant 512 : index
    %612 = vector.load %arg8[%c2_230, %c0_231, %c512_232] : memref<8x8x1024xf32, #tpu.memory_space<vmem>>, vector<1x8x512xf32>
    %613 = vector.shape_cast %612 : vector<1x8x512xf32> to vector<8x512xf32>
    %614 = vector.extract_strided_slice %607 {offsets = [0, 512], sizes = [8, 512], strides = [1, 1]} : vector<8x1024xf32> to vector<8x512xf32>
    %615 = arith.addf %613, %614 : vector<8x512xf32>
    %616 = tpu.concatenate %611, %615 in 0 : vector<8x512xf32>, vector<8x512xf32> -> vector<16x512xf32>
    %617 = vector.extract_strided_slice %616 {offsets = [0, 0], sizes = [16, 128], strides = [1, 1]} : vector<16x512xf32> to vector<16x128xf32>
    %618 = arith.negf %617 : vector<16x128xf32>
    %619 = math.exp %618 : vector<16x128xf32>
    %cst_233 = arith.constant 1.000000e+00 : f32
    %620 = vector.broadcast %cst_233 : f32 to vector<16x128xf32>
    %621 = arith.addf %620, %619 : vector<16x128xf32>
    %622 = arith.divf %620, %621 : vector<16x128xf32>
    %623 = vector.extract_strided_slice %616 {offsets = [0, 128], sizes = [16, 128], strides = [1, 1]} : vector<16x512xf32> to vector<16x128xf32>
    %624 = arith.negf %623 : vector<16x128xf32>
    %625 = math.exp %624 : vector<16x128xf32>
    %cst_234 = arith.constant 1.000000e+00 : f32
    %626 = vector.broadcast %cst_234 : f32 to vector<16x128xf32>
    %627 = arith.addf %626, %625 : vector<16x128xf32>
    %628 = arith.divf %626, %627 : vector<16x128xf32>
    %629 = vector.extract_strided_slice %616 {offsets = [0, 256], sizes = [16, 128], strides = [1, 1]} : vector<16x512xf32> to vector<16x128xf32>
    %630 = math.tanh %629 : vector<16x128xf32>
    %631 = vector.extract_strided_slice %616 {offsets = [0, 384], sizes = [16, 128], strides = [1, 1]} : vector<16x512xf32> to vector<16x128xf32>
    %632 = arith.negf %631 : vector<16x128xf32>
    %633 = math.exp %632 : vector<16x128xf32>
    %cst_235 = arith.constant 1.000000e+00 : f32
    %634 = vector.broadcast %cst_235 : f32 to vector<16x128xf32>
    %635 = arith.addf %634, %633 : vector<16x128xf32>
    %636 = arith.divf %634, %635 : vector<16x128xf32>
    %637 = arith.mulf %628, %594 : vector<16x128xf32>
    %638 = arith.mulf %622, %630 : vector<16x128xf32>
    %639 = arith.addf %637, %638 : vector<16x128xf32>
    %640 = math.tanh %639 : vector<16x128xf32>
    %641 = arith.mulf %636, %640 : vector<16x128xf32>
    %642 = vector.extract_strided_slice %641 {offsets = [0, 0], sizes = [8, 128], strides = [1, 1]} : vector<16x128xf32> to vector<8x128xf32>
    %643 = vector.extract_strided_slice %641 {offsets = [8, 0], sizes = [8, 128], strides = [1, 1]} : vector<16x128xf32> to vector<8x128xf32>
    %c5_236 = arith.constant 5 : index
    %c0_237 = arith.constant 0 : index
    %c0_238 = arith.constant 0 : index
    %644 = vector.load %arg7[%c5_236, %c0_237, %c0_238] : memref<8x8x256xf32, #tpu.memory_space<vmem>>, vector<1x8x128xf32>
    %645 = vector.shape_cast %644 : vector<1x8x128xf32> to vector<8x128xf32>
    %646 = vector.shape_cast %642 : vector<8x128xf32> to vector<1x8x128xf32>
    tpu.vector_store %arg7[%c5_236, %c0_237, %c0_238], %646 {strides = array<i32>} : memref<8x8x256xf32, #tpu.memory_space<vmem>>, vector<1x8x128xf32>,
    %c2_239 = arith.constant 2 : index
    %c0_240 = arith.constant 0 : index
    %c128_241 = arith.constant 128 : index
    %647 = vector.load %arg7[%c2_239, %c0_240, %c128_241] : memref<8x8x256xf32, #tpu.memory_space<vmem>>, vector<1x8x128xf32>
    %648 = vector.shape_cast %647 : vector<1x8x128xf32> to vector<8x128xf32>
    %649 = vector.shape_cast %643 : vector<8x128xf32> to vector<1x8x128xf32>
    tpu.vector_store %arg7[%c2_239, %c0_240, %c128_241], %649 {strides = array<i32>} : memref<8x8x256xf32, #tpu.memory_space<vmem>>, vector<1x8x128xf32>,
    %650 = tpu.concatenate %642, %643 in 1 : vector<8x128xf32>, vector<8x128xf32> -> vector<8x256xf32>
    %651 = arith.truncf %650 : vector<8x256xf32> to vector<8x256xbf16>
    %cst_242 = arith.constant dense<0.000000e+00> : vector<8x1024xf32>
    %652 = tpu.matmul %651, %379, %cst_242 {dimension_numbers = #tpu.dot_dimension_numbers<[1], [0], [0], [1], [0, 0, 1, 1], [], []>} : vector<8x256xbf16>, vector<256x1024xbf16>, vector<8x1024xf32> -> vector<8x1024xf32>
    %c6_243 = arith.constant 6 : index
    %c0_244 = arith.constant 0 : index
    %c0_245 = arith.constant 0 : index
    %653 = vector.load %arg8[%c6_243, %c0_244, %c0_245] : memref<8x8x1024xf32, #tpu.memory_space<vmem>>, vector<1x8x512xf32>
    %654 = vector.shape_cast %653 : vector<1x8x512xf32> to vector<8x512xf32>
    %655 = vector.extract_strided_slice %652 {offsets = [0, 0], sizes = [8, 512], strides = [1, 1]} : vector<8x1024xf32> to vector<8x512xf32>
    %656 = arith.addf %654, %655 : vector<8x512xf32>
    %c1_246 = arith.constant 1 : index
    %c0_247 = arith.constant 0 : index
    %c512_248 = arith.constant 512 : index
    %657 = vector.load %arg8[%c1_246, %c0_247, %c512_248] : memref<8x8x1024xf32, #tpu.memory_space<vmem>>, vector<1x8x512xf32>
    %658 = vector.shape_cast %657 : vector<1x8x512xf32> to vector<8x512xf32>
    %659 = vector.extract_strided_slice %652 {offsets = [0, 512], sizes = [8, 512], strides = [1, 1]} : vector<8x1024xf32> to vector<8x512xf32>
    %660 = arith.addf %658, %659 : vector<8x512xf32>
    %661 = tpu.concatenate %656, %660 in 0 : vector<8x512xf32>, vector<8x512xf32> -> vector<16x512xf32>
    %662 = vector.extract_strided_slice %661 {offsets = [0, 0], sizes = [16, 128], strides = [1, 1]} : vector<16x512xf32> to vector<16x128xf32>
    %663 = arith.negf %662 : vector<16x128xf32>
    %664 = math.exp %663 : vector<16x128xf32>
    %cst_249 = arith.constant 1.000000e+00 : f32
    %665 = vector.broadcast %cst_249 : f32 to vector<16x128xf32>
    %666 = arith.addf %665, %664 : vector<16x128xf32>
    %667 = arith.divf %665, %666 : vector<16x128xf32>
    %668 = vector.extract_strided_slice %661 {offsets = [0, 128], sizes = [16, 128], strides = [1, 1]} : vector<16x512xf32> to vector<16x128xf32>
    %669 = arith.negf %668 : vector<16x128xf32>
    %670 = math.exp %669 : vector<16x128xf32>
    %cst_250 = arith.constant 1.000000e+00 : f32
    %671 = vector.broadcast %cst_250 : f32 to vector<16x128xf32>
    %672 = arith.addf %671, %670 : vector<16x128xf32>
    %673 = arith.divf %671, %672 : vector<16x128xf32>
    %674 = vector.extract_strided_slice %661 {offsets = [0, 256], sizes = [16, 128], strides = [1, 1]} : vector<16x512xf32> to vector<16x128xf32>
    %675 = math.tanh %674 : vector<16x128xf32>
    %676 = vector.extract_strided_slice %661 {offsets = [0, 384], sizes = [16, 128], strides = [1, 1]} : vector<16x512xf32> to vector<16x128xf32>
    %677 = arith.negf %676 : vector<16x128xf32>
    %678 = math.exp %677 : vector<16x128xf32>
    %cst_251 = arith.constant 1.000000e+00 : f32
    %679 = vector.broadcast %cst_251 : f32 to vector<16x128xf32>
    %680 = arith.addf %679, %678 : vector<16x128xf32>
    %681 = arith.divf %679, %680 : vector<16x128xf32>
    %682 = arith.mulf %673, %639 : vector<16x128xf32>
    %683 = arith.mulf %667, %675 : vector<16x128xf32>
    %684 = arith.addf %682, %683 : vector<16x128xf32>
    %685 = math.tanh %684 : vector<16x128xf32>
    %686 = arith.mulf %681, %685 : vector<16x128xf32>
    %687 = vector.extract_strided_slice %686 {offsets = [0, 0], sizes = [8, 128], strides = [1, 1]} : vector<16x128xf32> to vector<8x128xf32>
    %688 = vector.extract_strided_slice %686 {offsets = [8, 0], sizes = [8, 128], strides = [1, 1]} : vector<16x128xf32> to vector<8x128xf32>
    %c6_252 = arith.constant 6 : index
    %c0_253 = arith.constant 0 : index
    %c0_254 = arith.constant 0 : index
    %689 = vector.load %arg7[%c6_252, %c0_253, %c0_254] : memref<8x8x256xf32, #tpu.memory_space<vmem>>, vector<1x8x128xf32>
    %690 = vector.shape_cast %689 : vector<1x8x128xf32> to vector<8x128xf32>
    %691 = vector.shape_cast %687 : vector<8x128xf32> to vector<1x8x128xf32>
    tpu.vector_store %arg7[%c6_252, %c0_253, %c0_254], %691 {strides = array<i32>} : memref<8x8x256xf32, #tpu.memory_space<vmem>>, vector<1x8x128xf32>,
    %c1_255 = arith.constant 1 : index
    %c0_256 = arith.constant 0 : index
    %c128_257 = arith.constant 128 : index
    %692 = vector.load %arg7[%c1_255, %c0_256, %c128_257] : memref<8x8x256xf32, #tpu.memory_space<vmem>>, vector<1x8x128xf32>
    %693 = vector.shape_cast %692 : vector<1x8x128xf32> to vector<8x128xf32>
    %694 = vector.shape_cast %688 : vector<8x128xf32> to vector<1x8x128xf32>
    tpu.vector_store %arg7[%c1_255, %c0_256, %c128_257], %694 {strides = array<i32>} : memref<8x8x256xf32, #tpu.memory_space<vmem>>, vector<1x8x128xf32>,
    %695 = tpu.concatenate %687, %688 in 1 : vector<8x128xf32>, vector<8x128xf32> -> vector<8x256xf32>
    %696 = arith.truncf %695 : vector<8x256xf32> to vector<8x256xbf16>
    %cst_258 = arith.constant dense<0.000000e+00> : vector<8x1024xf32>
    %697 = tpu.matmul %696, %379, %cst_258 {dimension_numbers = #tpu.dot_dimension_numbers<[1], [0], [0], [1], [0, 0, 1, 1], [], []>} : vector<8x256xbf16>, vector<256x1024xbf16>, vector<8x1024xf32> -> vector<8x1024xf32>
    %c7_259 = arith.constant 7 : index
    %c0_260 = arith.constant 0 : index
    %c0_261 = arith.constant 0 : index
    %698 = vector.load %arg8[%c7_259, %c0_260, %c0_261] : memref<8x8x1024xf32, #tpu.memory_space<vmem>>, vector<1x8x512xf32>
    %699 = vector.shape_cast %698 : vector<1x8x512xf32> to vector<8x512xf32>
    %700 = vector.extract_strided_slice %697 {offsets = [0, 0], sizes = [8, 512], strides = [1, 1]} : vector<8x1024xf32> to vector<8x512xf32>
    %701 = arith.addf %699, %700 : vector<8x512xf32>
    %c0_262 = arith.constant 0 : index
    %c0_263 = arith.constant 0 : index
    %c512_264 = arith.constant 512 : index
    %702 = vector.load %arg8[%c0_262, %c0_263, %c512_264] : memref<8x8x1024xf32, #tpu.memory_space<vmem>>, vector<1x8x512xf32>
    %703 = vector.shape_cast %702 : vector<1x8x512xf32> to vector<8x512xf32>
    %704 = vector.extract_strided_slice %697 {offsets = [0, 512], sizes = [8, 512], strides = [1, 1]} : vector<8x1024xf32> to vector<8x512xf32>
    %705 = arith.addf %703, %704 : vector<8x512xf32>
    %706 = tpu.concatenate %701, %705 in 0 : vector<8x512xf32>, vector<8x512xf32> -> vector<16x512xf32>
    %707 = vector.extract_strided_slice %706 {offsets = [0, 0], sizes = [16, 128], strides = [1, 1]} : vector<16x512xf32> to vector<16x128xf32>
    %708 = arith.negf %707 : vector<16x128xf32>
    %709 = math.exp %708 : vector<16x128xf32>
    %cst_265 = arith.constant 1.000000e+00 : f32
    %710 = vector.broadcast %cst_265 : f32 to vector<16x128xf32>
    %711 = arith.addf %710, %709 : vector<16x128xf32>
    %712 = arith.divf %710, %711 : vector<16x128xf32>
    %713 = vector.extract_strided_slice %706 {offsets = [0, 128], sizes = [16, 128], strides = [1, 1]} : vector<16x512xf32> to vector<16x128xf32>
    %714 = arith.negf %713 : vector<16x128xf32>
    %715 = math.exp %714 : vector<16x128xf32>
    %cst_266 = arith.constant 1.000000e+00 : f32
    %716 = vector.broadcast %cst_266 : f32 to vector<16x128xf32>
    %717 = arith.addf %716, %715 : vector<16x128xf32>
    %718 = arith.divf %716, %717 : vector<16x128xf32>
    %719 = vector.extract_strided_slice %706 {offsets = [0, 256], sizes = [16, 128], strides = [1, 1]} : vector<16x512xf32> to vector<16x128xf32>
    %720 = math.tanh %719 : vector<16x128xf32>
    %721 = vector.extract_strided_slice %706 {offsets = [0, 384], sizes = [16, 128], strides = [1, 1]} : vector<16x512xf32> to vector<16x128xf32>
    %722 = arith.negf %721 : vector<16x128xf32>
    %723 = math.exp %722 : vector<16x128xf32>
    %cst_267 = arith.constant 1.000000e+00 : f32
    %724 = vector.broadcast %cst_267 : f32 to vector<16x128xf32>
    %725 = arith.addf %724, %723 : vector<16x128xf32>
    %726 = arith.divf %724, %725 : vector<16x128xf32>
    %727 = arith.mulf %718, %684 : vector<16x128xf32>
    %728 = arith.mulf %712, %720 : vector<16x128xf32>
    %729 = arith.addf %727, %728 : vector<16x128xf32>
    %730 = math.tanh %729 : vector<16x128xf32>
    %731 = arith.mulf %726, %730 : vector<16x128xf32>
    %732 = vector.extract_strided_slice %731 {offsets = [0, 0], sizes = [8, 128], strides = [1, 1]} : vector<16x128xf32> to vector<8x128xf32>
    %733 = vector.extract_strided_slice %731 {offsets = [8, 0], sizes = [8, 128], strides = [1, 1]} : vector<16x128xf32> to vector<8x128xf32>
    %c7_268 = arith.constant 7 : index
    %c0_269 = arith.constant 0 : index
    %c0_270 = arith.constant 0 : index
    %734 = vector.load %arg7[%c7_268, %c0_269, %c0_270] : memref<8x8x256xf32, #tpu.memory_space<vmem>>, vector<1x8x128xf32>
    %735 = vector.shape_cast %734 : vector<1x8x128xf32> to vector<8x128xf32>
    %736 = vector.shape_cast %732 : vector<8x128xf32> to vector<1x8x128xf32>
    tpu.vector_store %arg7[%c7_268, %c0_269, %c0_270], %736 {strides = array<i32>} : memref<8x8x256xf32, #tpu.memory_space<vmem>>, vector<1x8x128xf32>,
    %c0_271 = arith.constant 0 : index
    %c0_272 = arith.constant 0 : index
    %c128_273 = arith.constant 128 : index
    %737 = vector.load %arg7[%c0_271, %c0_272, %c128_273] : memref<8x8x256xf32, #tpu.memory_space<vmem>>, vector<1x8x128xf32>
    %738 = vector.shape_cast %737 : vector<1x8x128xf32> to vector<8x128xf32>
    %739 = vector.shape_cast %733 : vector<8x128xf32> to vector<1x8x128xf32>
    tpu.vector_store %arg7[%c0_271, %c0_272, %c128_273], %739 {strides = array<i32>} : memref<8x8x256xf32, #tpu.memory_space<vmem>>, vector<1x8x128xf32>,
    return
  }
}

</mosaic_0001>

<llo_original>
// kernel: word_extract_forward.1
$region0: #{word_extract_forward.1}
  #allocation0 [shape = 'u32[]', space=smem, size = 0x4, offset = 0x4, fixed_abs, tag = 'smem constant byte address 0x4 - core index']
  #allocation1 [shape = 'u32[144,128]{1,0:T(1,128)}', space=vmem, size = 0x12000, scoped, tag = 'internal scratch']
  #allocation2 [shape = 'f32[8,8,1024]{2,1,0:T(8,128)}', space=vmem, size = 0x40000, scoped, tag = 'scratch operand']
  #allocation3 [shape = 'f32[8,8,256]{2,1,0:T(8,128)}', space=vmem, size = 0x10000, scoped, tag = 'scratch operand']
  %s0 = inlined_call_operand.vmem [shape: bf16[64,200], index: 0, kind: input, shape index: {}]
  %s1 = inlined_call_operand.hbm [shape: bf16[200,1024], index: 1, kind: input, shape index: {}]
  %s2 = inlined_call_operand.vmem [shape: f32[1,1024], index: 2, kind: input, shape index: {}]
  %s3 = inlined_call_operand.hbm [shape: bf16[256,1024], index: 3, kind: input, shape index: {}]
  %s4 = inlined_call_operand.hbm [shape: bf16[256,1024], index: 4, kind: input, shape index: {}]
  %s5 = inlined_call_operand.vmem [shape: f32[1,1024], index: 5, kind: input, shape index: {}]
  %s6 = inlined_call_operand.hbm [shape: bf16[256,1024], index: 6, kind: input, shape index: {}]
  %s7 = inlined_call_operand.vmem [shape: f32[8,8,256], index: 7, kind: output, shape index: {}]
  %s8 = sld [smem:[#allocation0]]
  $region54: #{word_extract_forward.1} parent=0
    _
  %s10 = ssub.s32 1, %s8
  %s11 = scalar_select 0, %s10, %s8
  $region1: #{word_extract_forward.1} parent=0
    #allocation4 [shape = 'u8[409600]{0}', space=vmem, size = 0x64000, scoped, tag = 'input window, operand 1, single buffered']
    #allocation5 [shape = 's32[1]{0}', space=sflag, size = 0x4, scoped, tag = 'scoped memory for word_extract_forward.1']
    #allocation6 [shape = 'u8[524288]{0}', space=vmem, size = 0x80000, scoped, tag = 'input window, operand 3, single buffered']
    #allocation7 [shape = 's32[1]{0}', space=sflag, size = 0x4, scoped, tag = 'scoped memory for word_extract_forward.1']
    #allocation8 [shape = 'u8[524288]{0}', space=vmem, size = 0x80000, scoped, tag = 'input window, operand 4, single buffered']
    #allocation9 [shape = 'u8[524288]{0}', space=vmem, size = 0x80000, scoped, tag = 'input window, operand 6, single buffered']
    #allocation10 [shape = 's32[1]{0}', space=sflag, size = 0x4, scoped, tag = 'scoped memory for word_extract_forward.1']
    %12 = vsyncpa [#allocation5], 0
    %13 = vsyncpa [#allocation7], 0
    %14 = vsyncpa [#allocation10], 0
    // Predicated region
    $region2: #{word_extract_forward.1} parent=1 // pred_check
      _
    $region3: #{word_extract_forward.1} parent=1 // pred_check_branch
      %16 = sbr.rel (0) target = $region5
    $region4: #{word_extract_forward.1} parent=1 // pred_region
      _
    $region5: #{word_extract_forward.1} parent=1 // pred_fallthru
      _
    // Predicated region
    $region6: #{word_extract_forward.1} parent=1 // pred_check
      _
    $region7: #{word_extract_forward.1} parent=1 // pred_check_branch
      %18 = sbr.rel (0) target = $region9
    $region8: #{word_extract_forward.1} parent=1 // pred_region
      %s20 = ssub.s32 12800, 12800
      %21 = vsyncadd [#allocation5], %s20
      %s22 = sshll.u32 [#allocation4], 4
      %s23 = int_to_ptr.vmem [resolvable:$true] %s22
      %28 = dma.hbm_to_vmem [thread:$0]  %s1, 12800, %s23, [#allocation5], 512, 512, 32
    $region9: #{word_extract_forward.1} parent=1 // pred_fallthru
      _
    // Predicated region
    $region10: #{word_extract_forward.1} parent=1 // pred_check
      _
    $region11: #{word_extract_forward.1} parent=1 // pred_check_branch
      %30 = sbr.rel (0) target = $region13
    $region12: #{word_extract_forward.1} parent=1 // pred_region
      _
    $region13: #{word_extract_forward.1} parent=1 // pred_fallthru
      _
    // Predicated region
    $region14: #{word_extract_forward.1} parent=1 // pred_check
      _
    $region15: #{word_extract_forward.1} parent=1 // pred_check_branch
      %32 = sbr.rel (0) target = $region17
    $region16: #{word_extract_forward.1} parent=1 // pred_region
      %s34 = ssub.s32 16384, 16384
      %35 = vsyncadd [#allocation7], %s34
      %s36 = sshll.u32 [#allocation6], 4
      %s37 = int_to_ptr.vmem [resolvable:$true] %s36
      %42 = dma.hbm_to_vmem [thread:$0]  %s3, 16384, %s37, [#allocation7], 512, 512, 32
    $region17: #{word_extract_forward.1} parent=1 // pred_fallthru
      _
    // Predicated region
    $region18: #{word_extract_forward.1} parent=1 // pred_check
      _
    $region19: #{word_extract_forward.1} parent=1 // pred_check_branch
      %44 = sbr.rel (0) target = $region21
    $region20: #{word_extract_forward.1} parent=1 // pred_region
      %s46 = ssub.s32 16384, 16384
      %47 = vsyncadd [#allocation7], %s46
      %s48 = sshll.u32 [#allocation8], 4
      %s49 = int_to_ptr.vmem [resolvable:$true] %s48
      %54 = dma.hbm_to_vmem [thread:$0]  %s4, 16384, %s49, [#allocation7], 512, 512, 32
    $region21: #{word_extract_forward.1} parent=1 // pred_fallthru
      _
    // Predicated region
    $region22: #{word_extract_forward.1} parent=1 // pred_check
      _
    $region23: #{word_extract_forward.1} parent=1 // pred_check_branch
      %56 = sbr.rel (0) target = $region25
    $region24: #{word_extract_forward.1} parent=1 // pred_region
      _
    $region25: #{word_extract_forward.1} parent=1 // pred_fallthru
      _
    // Predicated region
    $region26: #{word_extract_forward.1} parent=1 // pred_check
      _
    $region27: #{word_extract_forward.1} parent=1 // pred_check_branch
      %58 = sbr.rel (0) target = $region29
    $region28: #{word_extract_forward.1} parent=1 // pred_region
      %s60 = ssub.s32 16384, 16384
      %61 = vsyncadd [#allocation10], %s60
      %s62 = sshll.u32 [#allocation9], 4
      %s63 = int_to_ptr.vmem [resolvable:$true] %s62
      %68 = dma.hbm_to_vmem [thread:$0]  %s6, 16384, %s63, [#allocation10], 512, 512, 32
    $region29: #{word_extract_forward.1} parent=1 // pred_fallthru
      _
    // Predicated region
    $region30: #{word_extract_forward.1} parent=1 // pred_check
      _
    $region31: #{word_extract_forward.1} parent=1 // pred_check_branch
      %70 = sbr.rel (0) target = $region33
    $region32: #{word_extract_forward.1} parent=1 // pred_region
      %71 = dma.done [#allocation5], 12800
    $region33: #{word_extract_forward.1} parent=1 // pred_fallthru
      _
    // Predicated region
    $region34: #{word_extract_forward.1} parent=1 // pred_check
      _
    $region35: #{word_extract_forward.1} parent=1 // pred_check_branch
      %73 = sbr.rel (0) target = $region37
    $region36: #{word_extract_forward.1} parent=1 // pred_region
      %74 = dma.done [#allocation7], 16384
    $region37: #{word_extract_forward.1} parent=1 // pred_fallthru
      _
    // Predicated region
    $region38: #{word_extract_forward.1} parent=1 // pred_check
      _
    $region39: #{word_extract_forward.1} parent=1 // pred_check_branch
      %76 = sbr.rel (0) target = $region41
    $region40: #{word_extract_forward.1} parent=1 // pred_region
      %77 = dma.done [#allocation7], 16384
    $region41: #{word_extract_forward.1} parent=1 // pred_fallthru
      _
    // Predicated region
    $region42: #{word_extract_forward.1} parent=1 // pred_check
      _
    $region43: #{word_extract_forward.1} parent=1 // pred_check_branch
      %79 = sbr.rel (0) target = $region45
    $region44: #{word_extract_forward.1} parent=1 // pred_region
      %80 = dma.done [#allocation10], 16384
    $region45: #{word_extract_forward.1} parent=1 // pred_fallthru
      _
    %v82 = vld [vmem:[%s0] sm:$0xff]
    %v83 = vld [vmem:[%s0 + $0x8] sm:$0xff]
    %v84 = vld [vmem:[%s0 + $0x10] sm:$0xff]
    %v85 = vld [vmem:[%s0 + $0x18] sm:$0xff]
    %v86 = vld [vmem:[%s0 + $0x20] sm:$0xff]
    %v87 = vld [vmem:[%s0 + $0x28] sm:$0xff]
    %v88 = vld [vmem:[%s0 + $0x30] sm:$0xff]
    %v89 = vld [vmem:[%s0 + $0x38] sm:$0xff]
    %v90 = vld [vmem:[#allocation4] sm:$0xff]
    %v91 = vld [vmem:[#allocation4 + $0x8] sm:$0xff]
    %v92 = vld [vmem:[#allocation4 + $0x10] sm:$0xff]
    %v93 = vld [vmem:[#allocation4 + $0x18] sm:$0xff]
    %v94 = vld [vmem:[#allocation4 + $0x20] sm:$0xff]
    %v95 = vld [vmem:[#allocation4 + $0x28] sm:$0xff]
    %v96 = vld [vmem:[#allocation4 + $0x30] sm:$0xff]
    %v97 = vld [vmem:[#allocation4 + $0x38] sm:$0xff]
    %v98 = vld [vmem:[#allocation4 + $0x40] sm:$0xff]
    %v99 = vld [vmem:[#allocation4 + $0x48] sm:$0xff]
    %v100 = vld [vmem:[#allocation4 + $0x50] sm:$0xff]
    %v101 = vld [vmem:[#allocation4 + $0x58] sm:$0xff]
    %v102 = vld [vmem:[#allocation4 + $0x60] sm:$0xff]
    %v103 = vld [vmem:[#allocation4 + $0x68] sm:$0xff]
    %v104 = vld [vmem:[#allocation4 + $0x70] sm:$0xff]
    %v105 = vld [vmem:[#allocation4 + $0x78] sm:$0xff]
    %v106 = vld [vmem:[#allocation4 + $0x80] sm:$0xff]
    %v107 = vld [vmem:[#allocation4 + $0x88] sm:$0xff]
    %v108 = vld [vmem:[#allocation4 + $0x90] sm:$0xff]
    %v109 = vld [vmem:[#allocation4 + $0x98] sm:$0xff]
    %v110 = vld [vmem:[#allocation4 + $0xa0] sm:$0xff]
    %v111 = vld [vmem:[#allocation4 + $0xa8] sm:$0xff]
    %v112 = vld [vmem:[#allocation4 + $0xb0] sm:$0xff]
    %v113 = vld [vmem:[#allocation4 + $0xb8] sm:$0xff]
    %v114 = vld [vmem:[#allocation4 + $0xc0] sm:$0xff]
    %v115 = vld [vmem:[#allocation4 + $0xc8] sm:$0xff]
    %v116 = vld [vmem:[#allocation4 + $0xd0] sm:$0xff]
    %v117 = vld [vmem:[#allocation4 + $0xd8] sm:$0xff]
    %v118 = vld [vmem:[#allocation4 + $0xe0] sm:$0xff]
    %v119 = vld [vmem:[#allocation4 + $0xe8] sm:$0xff]
    %v120 = vld [vmem:[#allocation4 + $0xf0] sm:$0xff]
    %v121 = vld [vmem:[#allocation4 + $0xf8] sm:$0xff]
    %v122 = vld [vmem:[#allocation4 + $0x100] sm:$0xff]
    %v123 = vld [vmem:[#allocation4 + $0x108] sm:$0xff]
    %v124 = vld [vmem:[#allocation4 + $0x110] sm:$0xff]
    %v125 = vld [vmem:[#allocation4 + $0x118] sm:$0xff]
    %v126 = vld [vmem:[#allocation4 + $0x120] sm:$0xff]
    %v127 = vld [vmem:[#allocation4 + $0x128] sm:$0xff]
    %v128 = vld [vmem:[#allocation4 + $0x130] sm:$0xff]
    %v129 = vld [vmem:[#allocation4 + $0x138] sm:$0xff]
    %v130 = vld [vmem:[#allocation4 + $0x140] sm:$0xff]
    %v131 = vld [vmem:[#allocation4 + $0x148] sm:$0xff]
    %v132 = vld [vmem:[#allocation4 + $0x150] sm:$0xff]
    %v133 = vld [vmem:[#allocation4 + $0x158] sm:$0xff]
    %v134 = vld [vmem:[#allocation4 + $0x160] sm:$0xff]
    %v135 = vld [vmem:[#allocation4 + $0x168] sm:$0xff]
    %v136 = vld [vmem:[#allocation4 + $0x170] sm:$0xff]
    %v137 = vld [vmem:[#allocation4 + $0x178] sm:$0xff]
    %v138 = vld [vmem:[#allocation4 + $0x180] sm:$0xff]
    %v139 = vld [vmem:[#allocation4 + $0x188] sm:$0xff]
    %v140 = vld [vmem:[#allocation4 + $0x190] sm:$0xff]
    %v141 = vld [vmem:[#allocation4 + $0x198] sm:$0xff]
    %v142 = vld [vmem:[#allocation4 + $0x1a0] sm:$0xff]
    %v143 = vld [vmem:[#allocation4 + $0x1a8] sm:$0xff]
    %v144 = vld [vmem:[#allocation4 + $0x1b0] sm:$0xff]
    %v145 = vld [vmem:[#allocation4 + $0x1b8] sm:$0xff]
    %v146 = vld [vmem:[#allocation4 + $0x1c0] sm:$0xff]
    %v147 = vld [vmem:[#allocation4 + $0x1c8] sm:$0xff]
    %v148 = vld [vmem:[#allocation4 + $0x1d0] sm:$0xff]
    %v149 = vld [vmem:[#allocation4 + $0x1d8] sm:$0xff]
    %v150 = vld [vmem:[#allocation4 + $0x1e0] sm:$0xff]
    %v151 = vld [vmem:[#allocation4 + $0x1e8] sm:$0xff]
    %v152 = vld [vmem:[#allocation4 + $0x1f0] sm:$0xff]
    %v153 = vld [vmem:[#allocation4 + $0x1f8] sm:$0xff]
    %v154 = vld [vmem:[#allocation4 + $0x200] sm:$0xff]
    %v155 = vld [vmem:[#allocation4 + $0x208] sm:$0xff]
    %v156 = vld [vmem:[#allocation4 + $0x210] sm:$0xff]
    %v157 = vld [vmem:[#allocation4 + $0x218] sm:$0xff]
    %v158 = vld [vmem:[#allocation4 + $0x220] sm:$0xff]
    %v159 = vld [vmem:[#allocation4 + $0x228] sm:$0xff]
    %v160 = vld [vmem:[#allocation4 + $0x230] sm:$0xff]
    %v161 = vld [vmem:[#allocation4 + $0x238] sm:$0xff]
    %v162 = vld [vmem:[#allocation4 + $0x240] sm:$0xff]
    %v163 = vld [vmem:[#allocation4 + $0x248] sm:$0xff]
    %v164 = vld [vmem:[#allocation4 + $0x250] sm:$0xff]
    %v165 = vld [vmem:[#allocation4 + $0x258] sm:$0xff]
    %v166 = vld [vmem:[#allocation4 + $0x260] sm:$0xff]
    %v167 = vld [vmem:[#allocation4 + $0x268] sm:$0xff]
    %v168 = vld [vmem:[#allocation4 + $0x270] sm:$0xff]
    %v169 = vld [vmem:[#allocation4 + $0x278] sm:$0xff]
    %v170 = vld [vmem:[#allocation4 + $0x280] sm:$0xff]
    %v171 = vld [vmem:[#allocation4 + $0x288] sm:$0xff]
    %v172 = vld [vmem:[#allocation4 + $0x290] sm:$0xff]
    %v173 = vld [vmem:[#allocation4 + $0x298] sm:$0xff]
    %v174 = vld [vmem:[#allocation4 + $0x2a0] sm:$0xff]
    %v175 = vld [vmem:[#allocation4 + $0x2a8] sm:$0xff]
    %v176 = vld [vmem:[#allocation4 + $0x2b0] sm:$0xff]
    %v177 = vld [vmem:[#allocation4 + $0x2b8] sm:$0xff]
    %v178 = vld [vmem:[#allocation4 + $0x2c0] sm:$0xff]
    %v179 = vld [vmem:[#allocation4 + $0x2c8] sm:$0xff]
    %v180 = vld [vmem:[#allocation4 + $0x2d0] sm:$0xff]
    %v181 = vld [vmem:[#allocation4 + $0x2d8] sm:$0xff]
    %v182 = vld [vmem:[#allocation4 + $0x2e0] sm:$0xff]
    %v183 = vld [vmem:[#allocation4 + $0x2e8] sm:$0xff]
    %v184 = vld [vmem:[#allocation4 + $0x2f0] sm:$0xff]
    %v185 = vld [vmem:[#allocation4 + $0x2f8] sm:$0xff]
    %v186 = vld [vmem:[#allocation4 + $0x300] sm:$0xff]
    %v187 = vld [vmem:[#allocation4 + $0x308] sm:$0xff]
    %v188 = vld [vmem:[#allocation4 + $0x310] sm:$0xff]
    %v189 = vld [vmem:[#allocation4 + $0x318] sm:$0xff]
    %v190 = vld [vmem:[%s2] sm:$0xff]
    %v192 = vlaneseq
    %v193 = vshrl.u32 %v192, 7
    %v194 = vsub.s32 0, %v193
    %v195 = vrot.slane %v190, %v194
    %v196 = vlaneseq
    %v197 = vshrl.u32 %v196, 7
    %v198 = vsub.s32 1, %v197
    %v199 = vrot.slane %v190, %v198
    %v200 = vlaneseq
    %v201 = vshrl.u32 %v200, 7
    %v202 = vsub.s32 2, %v201
    %v203 = vrot.slane %v190, %v202
    %v204 = vlaneseq
    %v205 = vshrl.u32 %v204, 7
    %v206 = vsub.s32 3, %v205
    %v207 = vrot.slane %v190, %v206
    %v208 = vlaneseq
    %v209 = vshrl.u32 %v208, 7
    %v210 = vsub.s32 4, %v209
    %v211 = vrot.slane %v190, %v210
    %v212 = vlaneseq
    %v213 = vshrl.u32 %v212, 7
    %v214 = vsub.s32 5, %v213
    %v215 = vrot.slane %v190, %v214
    %v216 = vlaneseq
    %v217 = vshrl.u32 %v216, 7
    %v218 = vsub.s32 6, %v217
    %v219 = vrot.slane %v190, %v218
    %v220 = vlaneseq
    %v221 = vshrl.u32 %v220, 7
    %v222 = vsub.s32 7, %v221
    %v223 = vrot.slane %v190, %v222
    %v240 = vunpack.c.l.b16 %v82
    %v241 = vunpack.c.h.b16 %v82
    %v242 = vunpack.c.l.b16 %v83
    %v243 = vunpack.c.h.b16 %v83
    %v244 = vunpack.c.l.b16 %v84
    %v245 = vunpack.c.h.b16 %v84
    %v246 = vunpack.c.l.b16 %v85
    %v247 = vunpack.c.h.b16 %v85
    %v248 = vunpack.c.l.b16 %v86
    %v249 = vunpack.c.h.b16 %v86
    %v250 = vunpack.c.l.b16 %v87
    %v251 = vunpack.c.h.b16 %v87
    %v252 = vunpack.c.l.b16 %v88
    %v253 = vunpack.c.h.b16 %v88
    %v254 = vunpack.c.l.b16 %v89
    %v255 = vunpack.c.h.b16 %v89
    %v256 = vpack.c.b16 %v242, %v240
    %v257 = vpack.c.b16 %v243, %v241
    %v258 = vpack.c.b16 %v246, %v244
    %v259 = vpack.c.b16 %v247, %v245
    %v260 = vpack.c.b16 %v250, %v248
    %v261 = vpack.c.b16 %v251, %v249
    %v262 = vpack.c.b16 %v254, %v252
    %v263 = vpack.c.b16 %v255, %v253
    %v368 = vunpack.c.l.b16 %v90
    %v369 = vunpack.c.h.b16 %v90
    %v370 = vunpack.c.l.b16 %v91
    %v371 = vunpack.c.h.b16 %v91
    %v372 = vunpack.c.l.b16 %v92
    %v373 = vunpack.c.h.b16 %v92
    %v374 = vunpack.c.l.b16 %v93
    %v375 = vunpack.c.h.b16 %v93
    %v376 = vunpack.c.l.b16 %v94
    %v377 = vunpack.c.h.b16 %v94
    %v378 = vunpack.c.l.b16 %v95
    %v379 = vunpack.c.h.b16 %v95
    %v380 = vunpack.c.l.b16 %v96
    %v381 = vunpack.c.h.b16 %v96
    %v382 = vunpack.c.l.b16 %v97
    %v383 = vunpack.c.h.b16 %v97
    %v384 = vunpack.c.l.b16 %v98
    %v385 = vunpack.c.h.b16 %v98
    %v386 = vunpack.c.l.b16 %v99
    %v387 = vunpack.c.h.b16 %v99
    %v388 = vunpack.c.l.b16 %v100
    %v389 = vunpack.c.h.b16 %v100
    %v390 = vunpack.c.l.b16 %v101
    %v391 = vunpack.c.h.b16 %v101
    %v392 = vunpack.c.l.b16 %v102
    %v393 = vunpack.c.h.b16 %v102
    %v394 = vunpack.c.l.b16 %v103
    %v395 = vunpack.c.h.b16 %v103
    %v396 = vunpack.c.l.b16 %v104
    %v397 = vunpack.c.h.b16 %v104
    %v398 = vunpack.c.l.b16 %v105
    %v399 = vunpack.c.h.b16 %v105
    %v400 = vunpack.c.l.b16 %v106
    %v401 = vunpack.c.h.b16 %v106
    %v402 = vunpack.c.l.b16 %v107
    %v403 = vunpack.c.h.b16 %v107
    %v404 = vunpack.c.l.b16 %v108
    %v405 = vunpack.c.h.b16 %v108
    %v406 = vunpack.c.l.b16 %v109
    %v407 = vunpack.c.h.b16 %v109
    %v408 = vunpack.c.l.b16 %v110
    %v409 = vunpack.c.h.b16 %v110
    %v410 = vunpack.c.l.b16 %v111
    %v411 = vunpack.c.h.b16 %v111
    %v412 = vunpack.c.l.b16 %v112
    %v413 = vunpack.c.h.b16 %v112
    %v414 = vunpack.c.l.b16 %v113
    %v415 = vunpack.c.h.b16 %v113
    %v416 = vunpack.c.l.b16 %v114
    %v417 = vunpack.c.h.b16 %v114
    %v418 = vunpack.c.l.b16 %v115
    %v419 = vunpack.c.h.b16 %v115
    %v420 = vunpack.c.l.b16 %v116
    %v421 = vunpack.c.h.b16 %v116
    %v422 = vunpack.c.l.b16 %v117
    %v423 = vunpack.c.h.b16 %v117
    %v424 = vunpack.c.l.b16 %v118
    %v425 = vunpack.c.h.b16 %v118
    %v426 = vunpack.c.l.b16 %v119
    %v427 = vunpack.c.h.b16 %v119
    %v428 = vunpack.c.l.b16 %v120
    %v429 = vunpack.c.h.b16 %v120
    %v430 = vunpack.c.l.b16 %v121
    %v431 = vunpack.c.h.b16 %v121
    %v432 = vunpack.c.l.b16 %v122
    %v433 = vunpack.c.h.b16 %v122
    %v434 = vunpack.c.l.b16 %v123
    %v435 = vunpack.c.h.b16 %v123
    %v436 = vunpack.c.l.b16 %v124
    %v437 = vunpack.c.h.b16 %v124
    %v438 = vunpack.c.l.b16 %v125
    %v439 = vunpack.c.h.b16 %v125
    %v440 = vunpack.c.l.b16 %v126
    %v441 = vunpack.c.h.b16 %v126
    %v442 = vunpack.c.l.b16 %v127
    %v443 = vunpack.c.h.b16 %v127
    %v444 = vunpack.c.l.b16 %v128
    %v445 = vunpack.c.h.b16 %v128
    %v446 = vunpack.c.l.b16 %v129
    %v447 = vunpack.c.h.b16 %v129
    %v448 = vunpack.c.l.b16 %v130
    %v449 = vunpack.c.h.b16 %v130
    %v450 = vunpack.c.l.b16 %v131
    %v451 = vunpack.c.h.b16 %v131
    %v452 = vunpack.c.l.b16 %v132
    %v453 = vunpack.c.h.b16 %v132
    %v454 = vunpack.c.l.b16 %v133
    %v455 = vunpack.c.h.b16 %v133
    %v456 = vunpack.c.l.b16 %v134
    %v457 = vunpack.c.h.b16 %v134
    %v458 = vunpack.c.l.b16 %v135
    %v459 = vunpack.c.h.b16 %v135
    %v460 = vunpack.c.l.b16 %v136
    %v461 = vunpack.c.h.b16 %v136
    %v462 = vunpack.c.l.b16 %v137
    %v463 = vunpack.c.h.b16 %v137
    %v464 = vunpack.c.l.b16 %v138
    %v465 = vunpack.c.h.b16 %v138
    %v466 = vunpack.c.l.b16 %v139
    %v467 = vunpack.c.h.b16 %v139
    %v468 = vunpack.c.l.b16 %v140
    %v469 = vunpack.c.h.b16 %v140
    %v470 = vunpack.c.l.b16 %v141
    %v471 = vunpack.c.h.b16 %v141
    %v472 = vunpack.c.l.b16 %v142
    %v473 = vunpack.c.h.b16 %v142
    %v474 = vunpack.c.l.b16 %v143
    %v475 = vunpack.c.h.b16 %v143
    %v476 = vunpack.c.l.b16 %v144
    %v477 = vunpack.c.h.b16 %v144
    %v478 = vunpack.c.l.b16 %v145
    %v479 = vunpack.c.h.b16 %v145
    %v480 = vunpack.c.l.b16 %v146
    %v481 = vunpack.c.h.b16 %v146
    %v482 = vunpack.c.l.b16 %v147
    %v483 = vunpack.c.h.b16 %v147
    %v484 = vunpack.c.l.b16 %v148
    %v485 = vunpack.c.h.b16 %v148
    %v486 = vunpack.c.l.b16 %v149
    %v487 = vunpack.c.h.b16 %v149
    %v488 = vunpack.c.l.b16 %v150
    %v489 = vunpack.c.h.b16 %v150
    %v490 = vunpack.c.l.b16 %v151
    %v491 = vunpack.c.h.b16 %v151
    %v492 = vunpack.c.l.b16 %v152
    %v493 = vunpack.c.h.b16 %v152
    %v494 = vunpack.c.l.b16 %v153
    %v495 = vunpack.c.h.b16 %v153
    %v496 = vunpack.c.l.b16 %v154
    %v497 = vunpack.c.h.b16 %v154
    %v498 = vunpack.c.l.b16 %v155
    %v499 = vunpack.c.h.b16 %v155
    %v500 = vunpack.c.l.b16 %v156
    %v501 = vunpack.c.h.b16 %v156
    %v502 = vunpack.c.l.b16 %v157
    %v503 = vunpack.c.h.b16 %v157
    %v504 = vunpack.c.l.b16 %v158
    %v505 = vunpack.c.h.b16 %v158
    %v506 = vunpack.c.l.b16 %v159
    %v507 = vunpack.c.h.b16 %v159
    %v508 = vunpack.c.l.b16 %v160
    %v509 = vunpack.c.h.b16 %v160
    %v510 = vunpack.c.l.b16 %v161
    %v511 = vunpack.c.h.b16 %v161
    %v512 = vunpack.c.l.b16 %v162
    %v513 = vunpack.c.h.b16 %v162
    %v514 = vunpack.c.l.b16 %v163
    %v515 = vunpack.c.h.b16 %v163
    %v516 = vunpack.c.l.b16 %v164
    %v517 = vunpack.c.h.b16 %v164
    %v518 = vunpack.c.l.b16 %v165
    %v519 = vunpack.c.h.b16 %v165
    %v520 = vunpack.c.l.b16 %v166
    %v521 = vunpack.c.h.b16 %v166
    %v522 = vunpack.c.l.b16 %v167
    %v523 = vunpack.c.h.b16 %v167
    %v524 = vunpack.c.l.b16 %v168
    %v525 = vunpack.c.h.b16 %v168
    %v526 = vunpack.c.l.b16 %v169
    %v527 = vunpack.c.h.b16 %v169
    %v528 = vunpack.c.l.b16 %v170
    %v529 = vunpack.c.h.b16 %v170
    %v530 = vunpack.c.l.b16 %v171
    %v531 = vunpack.c.h.b16 %v171
    %v532 = vunpack.c.l.b16 %v172
    %v533 = vunpack.c.h.b16 %v172
    %v534 = vunpack.c.l.b16 %v173
    %v535 = vunpack.c.h.b16 %v173
    %v536 = vunpack.c.l.b16 %v174
    %v537 = vunpack.c.h.b16 %v174
    %v538 = vunpack.c.l.b16 %v175
    %v539 = vunpack.c.h.b16 %v175
    %v540 = vunpack.c.l.b16 %v176
    %v541 = vunpack.c.h.b16 %v176
    %v542 = vunpack.c.l.b16 %v177
    %v543 = vunpack.c.h.b16 %v177
    %v544 = vunpack.c.l.b16 %v178
    %v545 = vunpack.c.h.b16 %v178
    %v546 = vunpack.c.l.b16 %v179
    %v547 = vunpack.c.h.b16 %v179
    %v548 = vunpack.c.l.b16 %v180
    %v549 = vunpack.c.h.b16 %v180
    %v550 = vunpack.c.l.b16 %v181
    %v551 = vunpack.c.h.b16 %v181
    %v552 = vunpack.c.l.b16 %v182
    %v553 = vunpack.c.h.b16 %v182
    %v554 = vunpack.c.l.b16 %v183
    %v555 = vunpack.c.h.b16 %v183
    %v556 = vunpack.c.l.b16 %v184
    %v557 = vunpack.c.h.b16 %v184
    %v558 = vunpack.c.l.b16 %v185
    %v559 = vunpack.c.h.b16 %v185
    %v560 = vunpack.c.l.b16 %v186
    %v561 = vunpack.c.h.b16 %v186
    %v562 = vunpack.c.l.b16 %v187
    %v563 = vunpack.c.h.b16 %v187
    %v564 = vunpack.c.l.b16 %v188
    %v565 = vunpack.c.h.b16 %v188
    %v566 = vunpack.c.l.b16 %v189
    %v567 = vunpack.c.h.b16 %v189
    %v568 = vpack.c.b16 %v376, %v368
    %v569 = vpack.c.b16 %v377, %v369
    %v570 = vpack.c.b16 %v378, %v370
    %v571 = vpack.c.b16 %v379, %v371
    %v572 = vpack.c.b16 %v380, %v372
    %v573 = vpack.c.b16 %v381, %v373
    %v574 = vpack.c.b16 %v382, %v374
    %v575 = vpack.c.b16 %v383, %v375
    %v576 = vpack.c.b16 %v392, %v384
    %v577 = vpack.c.b16 %v393, %v385
    %v578 = vpack.c.b16 %v394, %v386
    %v579 = vpack.c.b16 %v395, %v387
    %v580 = vpack.c.b16 %v396, %v388
    %v581 = vpack.c.b16 %v397, %v389
    %v582 = vpack.c.b16 %v398, %v390
    %v583 = vpack.c.b16 %v399, %v391
    %v584 = vpack.c.b16 %v408, %v400
    %v585 = vpack.c.b16 %v409, %v401
    %v586 = vpack.c.b16 %v410, %v402
    %v587 = vpack.c.b16 %v411, %v403
    %v588 = vpack.c.b16 %v412, %v404
    %v589 = vpack.c.b16 %v413, %v405
    %v590 = vpack.c.b16 %v414, %v406
    %v591 = vpack.c.b16 %v415, %v407
    %v592 = vpack.c.b16 %v424, %v416
    %v593 = vpack.c.b16 %v425, %v417
    %v594 = vpack.c.b16 %v426, %v418
    %v595 = vpack.c.b16 %v427, %v419
    %v596 = vpack.c.b16 %v428, %v420
    %v597 = vpack.c.b16 %v429, %v421
    %v598 = vpack.c.b16 %v430, %v422
    %v599 = vpack.c.b16 %v431, %v423
    %v600 = vpack.c.b16 %v440, %v432
    %v601 = vpack.c.b16 %v441, %v433
    %v602 = vpack.c.b16 %v442, %v434
    %v603 = vpack.c.b16 %v443, %v435
    %v604 = vpack.c.b16 %v444, %v436
    %v605 = vpack.c.b16 %v445, %v437
    %v606 = vpack.c.b16 %v446, %v438
    %v607 = vpack.c.b16 %v447, %v439
    %v608 = vpack.c.b16 %v456, %v448
    %v609 = vpack.c.b16 %v457, %v449
    %v610 = vpack.c.b16 %v458, %v450
    %v611 = vpack.c.b16 %v459, %v451
    %v612 = vpack.c.b16 %v460, %v452
    %v613 = vpack.c.b16 %v461, %v453
    %v614 = vpack.c.b16 %v462, %v454
    %v615 = vpack.c.b16 %v463, %v455
    %v616 = vpack.c.b16 %v472, %v464
    %v617 = vpack.c.b16 %v473, %v465
    %v618 = vpack.c.b16 %v474, %v466
    %v619 = vpack.c.b16 %v475, %v467
    %v620 = vpack.c.b16 %v476, %v468
    %v621 = vpack.c.b16 %v477, %v469
    %v622 = vpack.c.b16 %v478, %v470
    %v623 = vpack.c.b16 %v479, %v471
    %v624 = vpack.c.b16 %v488, %v480
    %v625 = vpack.c.b16 %v489, %v481
    %v626 = vpack.c.b16 %v490, %v482
    %v627 = vpack.c.b16 %v491, %v483
    %v628 = vpack.c.b16 %v492, %v484
    %v629 = vpack.c.b16 %v493, %v485
    %v630 = vpack.c.b16 %v494, %v486
    %v631 = vpack.c.b16 %v495, %v487
    %v632 = vpack.c.b16 %v504, %v496
    %v633 = vpack.c.b16 %v505, %v497
    %v634 = vpack.c.b16 %v506, %v498
    %v635 = vpack.c.b16 %v507, %v499
    %v636 = vpack.c.b16 %v508, %v500
    %v637 = vpack.c.b16 %v509, %v501
    %v638 = vpack.c.b16 %v510, %v502
    %v639 = vpack.c.b16 %v511, %v503
    %v640 = vpack.c.b16 %v520, %v512
    %v641 = vpack.c.b16 %v521, %v513
    %v642 = vpack.c.b16 %v522, %v514
    %v643 = vpack.c.b16 %v523, %v515
    %v644 = vpack.c.b16 %v524, %v516
    %v645 = vpack.c.b16 %v525, %v517
    %v646 = vpack.c.b16 %v526, %v518
    %v647 = vpack.c.b16 %v527, %v519
    %v648 = vpack.c.b16 %v536, %v528
    %v649 = vpack.c.b16 %v537, %v529
    %v650 = vpack.c.b16 %v538, %v530
    %v651 = vpack.c.b16 %v539, %v531
    %v652 = vpack.c.b16 %v540, %v532
    %v653 = vpack.c.b16 %v541, %v533
    %v654 = vpack.c.b16 %v542, %v534
    %v655 = vpack.c.b16 %v543, %v535
    %v656 = vpack.c.b16 %v552, %v544
    %v657 = vpack.c.b16 %v553, %v545
    %v658 = vpack.c.b16 %v554, %v546
    %v659 = vpack.c.b16 %v555, %v547
    %v660 = vpack.c.b16 %v556, %v548
    %v661 = vpack.c.b16 %v557, %v549
    %v662 = vpack.c.b16 %v558, %v550
    %v663 = vpack.c.b16 %v559, %v551
    %v664 = vpack.c.b16 %v560, %v560
    %v665 = vpack.c.b16 %v561, %v561
    %v666 = vpack.c.b16 %v562, %v562
    %v667 = vpack.c.b16 %v563, %v563
    %v668 = vpack.c.b16 %v564, %v564
    %v669 = vpack.c.b16 %v565, %v565
    %v670 = vpack.c.b16 %v566, %v566
    %v671 = vpack.c.b16 %v567, %v567
    %vm768 = vcmask 588800
    %v770 = vsel %vm768, %v257, 0
    %v773 = vsel %vm768, %v259, 0
    %v776 = vsel %vm768, %v261, 0
    %v779 = vsel %vm768, %v263, 0
    %vm781 = vcmask 1043456
    %v783 = vsel %vm781, %v664, 0
    %v786 = vsel %vm781, %v665, 0
    %v789 = vsel %vm781, %v666, 0
    %v792 = vsel %vm781, %v667, 0
    %v795 = vsel %vm781, %v668, 0
    %v798 = vsel %vm781, %v669, 0
    %v801 = vsel %vm781, %v670, 0
    %v804 = vsel %vm781, %v671, 0
    %806 = vmatprep.subr.bf16.mxu0 %v569
    %807 = vmatpush1.bf16.msra.mxu0 %v568
    %808 = vmatprep.subr.bf16.mxu0 %v577
    %809 = vmatpush1.bf16.msra.mxu0 %v576
    %810 = vmatprep.subr.bf16.mxu0 %v585
    %811 = vmatpush1.bf16.msra.mxu0 %v584
    %812 = vmatprep.subr.bf16.mxu0 %v593
    %813 = vmatpush1.bf16.msra.mxu0 %v592
    %814 = vmatprep.subr.bf16.mxu0 %v601
    %815 = vmatpush1.bf16.msra.mxu0 %v600
    %816 = vmatprep.subr.bf16.mxu0 %v609
    %817 = vmatpush1.bf16.msra.mxu0 %v608
    %818 = vmatprep.subr.bf16.mxu0 %v617
    %819 = vmatpush1.bf16.msra.mxu0 %v616
    %820 = vmatprep.subr.bf16.mxu0 %v625
    %821 = vmatpush1.bf16.msra.mxu0 %v624
    %822 = vmatprep.subr.bf16.mxu0 %v633
    %823 = vmatpush1.bf16.msra.mxu0 %v632
    %824 = vmatprep.subr.bf16.mxu0 %v641
    %825 = vmatpush1.bf16.msra.mxu0 %v640
    %826 = vmatprep.subr.bf16.mxu0 %v649
    %827 = vmatpush1.bf16.msra.mxu0 %v648
    %828 = vmatprep.subr.bf16.mxu0 %v657
    %829 = vmatpush1.bf16.msra.mxu0 %v656
    %830 = vmatprep.subr.bf16.mxu0 %v786
    %831 = vmatpush1.bf16.msra.mxu0 %v783
    %832 = vmatprep.subr.bf16.mxu0 0
    %833 = vmatpush1.bf16.msra.mxu0 0
    %834 = vmatprep.subr.bf16.mxu0 0
    %835 = vmatpush1.bf16.msra.mxu0 0
    %836 = vmatprep.subr.bf16.mxu0 0
    %837 = vmatpush1.bf16.msra.mxu0 0
    %838 = vmatprep.mubr.bf16.mxu0 %v770
    %839 = vmatmul.mubr.bf16.gmra.mrb[0].mxu0 %v256
    %v840 = vpop.f32.mrb[0].mxu0
    %v841 = vadd.f32 %v195, %v840
    %v842 = vpop.f32.mrb[0].mxu0
    %v843 = vadd.f32 %v199, %v842
    %v844 = vpop.f32.mrb[0].mxu0
    %v845 = vadd.f32 %v195, %v844
    %v846 = vpop.f32.mrb[0].mxu0
    %v847 = vadd.f32 %v199, %v846
    %848 = vmatprep.mubr.bf16.mxu0 %v773
    %849 = vmatmul.mubr.bf16.gmra.mrb[0].mxu0 %v258
    %v850 = vpop.f32.mrb[0].mxu0
    %v851 = vadd.f32 %v195, %v850
    %v852 = vpop.f32.mrb[0].mxu0
    %v853 = vadd.f32 %v199, %v852
    %v854 = vpop.f32.mrb[0].mxu0
    %v855 = vadd.f32 %v195, %v854
    %v856 = vpop.f32.mrb[0].mxu0
    %v857 = vadd.f32 %v199, %v856
    %858 = vmatprep.mubr.bf16.mxu0 %v776
    %859 = vmatmul.mubr.bf16.gmra.mrb[0].mxu0 %v260
    %v860 = vpop.f32.mrb[0].mxu0
    %v861 = vadd.f32 %v195, %v860
    %v862 = vpop.f32.mrb[0].mxu0
    %v863 = vadd.f32 %v199, %v862
    %v864 = vpop.f32.mrb[0].mxu0
    %v865 = vadd.f32 %v195, %v864
    %v866 = vpop.f32.mrb[0].mxu0
    %v867 = vadd.f32 %v199, %v866
    %868 = vmatprep.mubr.bf16.mxu0 %v779
    %869 = vmatmul.mubr.bf16.gmra.mrb[0].mxu0 %v262
    %v870 = vpop.f32.mrb[0].mxu0
    %v871 = vadd.f32 %v195, %v870
    %v872 = vpop.f32.mrb[0].mxu0
    %v873 = vadd.f32 %v199, %v872
    %v874 = vpop.f32.mrb[0].mxu0
    %v875 = vadd.f32 %v195, %v874
    %v876 = vpop.f32.mrb[0].mxu0
    %v877 = vadd.f32 %v199, %v876
    %878 = vdwg.mxu0
    %879 = vmatprep.subr.bf16.mxu0 %v571
    %880 = vmatpush1.bf16.msra.mxu0 %v570
    %881 = vmatprep.subr.bf16.mxu0 %v579
    %882 = vmatpush1.bf16.msra.mxu0 %v578
    %883 = vmatprep.subr.bf16.mxu0 %v587
    %884 = vmatpush1.bf16.msra.mxu0 %v586
    %885 = vmatprep.subr.bf16.mxu0 %v595
    %886 = vmatpush1.bf16.msra.mxu0 %v594
    %887 = vmatprep.subr.bf16.mxu0 %v603
    %888 = vmatpush1.bf16.msra.mxu0 %v602
    %889 = vmatprep.subr.bf16.mxu0 %v611
    %890 = vmatpush1.bf16.msra.mxu0 %v610
    %891 = vmatprep.subr.bf16.mxu0 %v619
    %892 = vmatpush1.bf16.msra.mxu0 %v618
    %893 = vmatprep.subr.bf16.mxu0 %v627
    %894 = vmatpush1.bf16.msra.mxu0 %v626
    %895 = vmatprep.subr.bf16.mxu0 %v635
    %896 = vmatpush1.bf16.msra.mxu0 %v634
    %897 = vmatprep.subr.bf16.mxu0 %v643
    %898 = vmatpush1.bf16.msra.mxu0 %v642
    %899 = vmatprep.subr.bf16.mxu0 %v651
    %900 = vmatpush1.bf16.msra.mxu0 %v650
    %901 = vmatprep.subr.bf16.mxu0 %v659
    %902 = vmatpush1.bf16.msra.mxu0 %v658
    %903 = vmatprep.subr.bf16.mxu0 %v792
    %904 = vmatpush1.bf16.msra.mxu0 %v789
    %905 = vmatprep.subr.bf16.mxu0 0
    %906 = vmatpush1.bf16.msra.mxu0 0
    %907 = vmatprep.subr.bf16.mxu0 0
    %908 = vmatpush1.bf16.msra.mxu0 0
    %909 = vmatprep.subr.bf16.mxu0 0
    %910 = vmatpush1.bf16.msra.mxu0 0
    %911 = vmatprep.mubr.bf16.mxu0 %v770
    %912 = vmatmul.mubr.bf16.gmra.mrb[0].mxu0 %v256
    %v913 = vpop.f32.mrb[0].mxu0
    %v914 = vadd.f32 %v203, %v913
    %v915 = vpop.f32.mrb[0].mxu0
    %v916 = vadd.f32 %v207, %v915
    %v917 = vpop.f32.mrb[0].mxu0
    %v918 = vadd.f32 %v203, %v917
    %v919 = vpop.f32.mrb[0].mxu0
    %v920 = vadd.f32 %v207, %v919
    %921 = vmatprep.mubr.bf16.mxu0 %v773
    %922 = vmatmul.mubr.bf16.gmra.mrb[0].mxu0 %v258
    %v923 = vpop.f32.mrb[0].mxu0
    %v924 = vadd.f32 %v203, %v923
    %v925 = vpop.f32.mrb[0].mxu0
    %v926 = vadd.f32 %v207, %v925
    %v927 = vpop.f32.mrb[0].mxu0
    %v928 = vadd.f32 %v203, %v927
    %v929 = vpop.f32.mrb[0].mxu0
    %v930 = vadd.f32 %v207, %v929
    %931 = vmatprep.mubr.bf16.mxu0 %v776
    %932 = vmatmul.mubr.bf16.gmra.mrb[0].mxu0 %v260
    %v933 = vpop.f32.mrb[0].mxu0
    %v934 = vadd.f32 %v203, %v933
    %v935 = vpop.f32.mrb[0].mxu0
    %v936 = vadd.f32 %v207, %v935
    %v937 = vpop.f32.mrb[0].mxu0
    %v938 = vadd.f32 %v203, %v937
    %v939 = vpop.f32.mrb[0].mxu0
    %v940 = vadd.f32 %v207, %v939
    %941 = vmatprep.mubr.bf16.mxu0 %v779
    %942 = vmatmul.mubr.bf16.gmra.mrb[0].mxu0 %v262
    %v943 = vpop.f32.mrb[0].mxu0
    %v944 = vadd.f32 %v203, %v943
    %v945 = vpop.f32.mrb[0].mxu0
    %v946 = vadd.f32 %v207, %v945
    %v947 = vpop.f32.mrb[0].mxu0
    %v948 = vadd.f32 %v203, %v947
    %v949 = vpop.f32.mrb[0].mxu0
    %v950 = vadd.f32 %v207, %v949
    %951 = vdwg.mxu0
    %952 = vmatprep.subr.bf16.mxu0 %v573
    %953 = vmatpush1.bf16.msra.mxu0 %v572
    %954 = vmatprep.subr.bf16.mxu0 %v581
    %955 = vmatpush1.bf16.msra.mxu0 %v580
    %956 = vmatprep.subr.bf16.mxu0 %v589
    %957 = vmatpush1.bf16.msra.mxu0 %v588
    %958 = vmatprep.subr.bf16.mxu0 %v597
    %959 = vmatpush1.bf16.msra.mxu0 %v596
    %960 = vmatprep.subr.bf16.mxu0 %v605
    %961 = vmatpush1.bf16.msra.mxu0 %v604
    %962 = vmatprep.subr.bf16.mxu0 %v613
    %963 = vmatpush1.bf16.msra.mxu0 %v612
    %964 = vmatprep.subr.bf16.mxu0 %v621
    %965 = vmatpush1.bf16.msra.mxu0 %v620
    %966 = vmatprep.subr.bf16.mxu0 %v629
    %967 = vmatpush1.bf16.msra.mxu0 %v628
    %968 = vmatprep.subr.bf16.mxu0 %v637
    %969 = vmatpush1.bf16.msra.mxu0 %v636
    %970 = vmatprep.subr.bf16.mxu0 %v645
    %971 = vmatpush1.bf16.msra.mxu0 %v644
    %972 = vmatprep.subr.bf16.mxu0 %v653
    %973 = vmatpush1.bf16.msra.mxu0 %v652
    %974 = vmatprep.subr.bf16.mxu0 %v661
    %975 = vmatpush1.bf16.msra.mxu0 %v660
    %976 = vmatprep.subr.bf16.mxu0 %v798
    %977 = vmatpush1.bf16.msra.mxu0 %v795
    %978 = vmatprep.subr.bf16.mxu0 0
    %979 = vmatpush1.bf16.msra.mxu0 0
    %980 = vmatprep.subr.bf16.mxu0 0
    %981 = vmatpush1.bf16.msra.mxu0 0
    %982 = vmatprep.subr.bf16.mxu0 0
    %983 = vmatpush1.bf16.msra.mxu0 0
    %984 = vmatprep.mubr.bf16.mxu0 %v770
    %985 = vmatmul.mubr.bf16.gmra.mrb[0].mxu0 %v256
    %v986 = vpop.f32.mrb[0].mxu0
    %v987 = vadd.f32 %v211, %v986
    %v988 = vpop.f32.mrb[0].mxu0
    %v989 = vadd.f32 %v215, %v988
    %v990 = vpop.f32.mrb[0].mxu0
    %v991 = vadd.f32 %v211, %v990
    %v992 = vpop.f32.mrb[0].mxu0
    %v993 = vadd.f32 %v215, %v992
    %994 = vmatprep.mubr.bf16.mxu0 %v773
    %995 = vmatmul.mubr.bf16.gmra.mrb[0].mxu0 %v258
    %v996 = vpop.f32.mrb[0].mxu0
    %v997 = vadd.f32 %v211, %v996
    %v998 = vpop.f32.mrb[0].mxu0
    %v999 = vadd.f32 %v215, %v998
    %v1000 = vpop.f32.mrb[0].mxu0
    %v1001 = vadd.f32 %v211, %v1000
    %v1002 = vpop.f32.mrb[0].mxu0
    %v1003 = vadd.f32 %v215, %v1002
    %1004 = vmatprep.mubr.bf16.mxu0 %v776
    %1005 = vmatmul.mubr.bf16.gmra.mrb[0].mxu0 %v260
    %v1006 = vpop.f32.mrb[0].mxu0
    %v1007 = vadd.f32 %v211, %v1006
    %v1008 = vpop.f32.mrb[0].mxu0
    %v1009 = vadd.f32 %v215, %v1008
    %v1010 = vpop.f32.mrb[0].mxu0
    %v1011 = vadd.f32 %v211, %v1010
    %v1012 = vpop.f32.mrb[0].mxu0
    %v1013 = vadd.f32 %v215, %v1012
    %1014 = vmatprep.mubr.bf16.mxu0 %v779
    %1015 = vmatmul.mubr.bf16.gmra.mrb[0].mxu0 %v262
    %v1016 = vpop.f32.mrb[0].mxu0
    %v1017 = vadd.f32 %v211, %v1016
    %v1018 = vpop.f32.mrb[0].mxu0
    %v1019 = vadd.f32 %v215, %v1018
    %v1020 = vpop.f32.mrb[0].mxu0
    %v1021 = vadd.f32 %v211, %v1020
    %v1022 = vpop.f32.mrb[0].mxu0
    %v1023 = vadd.f32 %v215, %v1022
    %1024 = vdwg.mxu0
    %1025 = vmatprep.subr.bf16.mxu0 %v575
    %1026 = vmatpush1.bf16.msra.mxu0 %v574
    %1027 = vmatprep.subr.bf16.mxu0 %v583
    %1028 = vmatpush1.bf16.msra.mxu0 %v582
    %1029 = vmatprep.subr.bf16.mxu0 %v591
    %1030 = vmatpush1.bf16.msra.mxu0 %v590
    %1031 = vmatprep.subr.bf16.mxu0 %v599
    %1032 = vmatpush1.bf16.msra.mxu0 %v598
    %1033 = vmatprep.subr.bf16.mxu0 %v607
    %1034 = vmatpush1.bf16.msra.mxu0 %v606
    %1035 = vmatprep.subr.bf16.mxu0 %v615
    %1036 = vmatpush1.bf16.msra.mxu0 %v614
    %1037 = vmatprep.subr.bf16.mxu0 %v623
    %1038 = vmatpush1.bf16.msra.mxu0 %v622
    %1039 = vmatprep.subr.bf16.mxu0 %v631
    %1040 = vmatpush1.bf16.msra.mxu0 %v630
    %1041 = vmatprep.subr.bf16.mxu0 %v639
    %1042 = vmatpush1.bf16.msra.mxu0 %v638
    %1043 = vmatprep.subr.bf16.mxu0 %v647
    %1044 = vmatpush1.bf16.msra.mxu0 %v646
    %1045 = vmatprep.subr.bf16.mxu0 %v655
    %1046 = vmatpush1.bf16.msra.mxu0 %v654
    %1047 = vmatprep.subr.bf16.mxu0 %v663
    %1048 = vmatpush1.bf16.msra.mxu0 %v662
    %1049 = vmatprep.subr.bf16.mxu0 %v804
    %1050 = vmatpush1.bf16.msra.mxu0 %v801
    %1051 = vmatprep.subr.bf16.mxu0 0
    %1052 = vmatpush1.bf16.msra.mxu0 0
    %1053 = vmatprep.subr.bf16.mxu0 0
    %1054 = vmatpush1.bf16.msra.mxu0 0
    %1055 = vmatprep.subr.bf16.mxu0 0
    %1056 = vmatpush1.bf16.msra.mxu0 0
    %1057 = vmatprep.mubr.bf16.mxu0 %v770
    %1058 = vmatmul.mubr.bf16.gmra.mrb[0].mxu0 %v256
    %v1059 = vpop.f32.mrb[0].mxu0
    %v1060 = vadd.f32 %v219, %v1059
    %v1061 = vpop.f32.mrb[0].mxu0
    %v1062 = vadd.f32 %v223, %v1061
    %v1063 = vpop.f32.mrb[0].mxu0
    %v1064 = vadd.f32 %v219, %v1063
    %v1065 = vpop.f32.mrb[0].mxu0
    %v1066 = vadd.f32 %v223, %v1065
    %1067 = vmatprep.mubr.bf16.mxu0 %v773
    %1068 = vmatmul.mubr.bf16.gmra.mrb[0].mxu0 %v258
    %v1069 = vpop.f32.mrb[0].mxu0
    %v1070 = vadd.f32 %v219, %v1069
    %v1071 = vpop.f32.mrb[0].mxu0
    %v1072 = vadd.f32 %v223, %v1071
    %v1073 = vpop.f32.mrb[0].mxu0
    %v1074 = vadd.f32 %v219, %v1073
    %v1075 = vpop.f32.mrb[0].mxu0
    %v1076 = vadd.f32 %v223, %v1075
    %1077 = vmatprep.mubr.bf16.mxu0 %v776
    %1078 = vmatmul.mubr.bf16.gmra.mrb[0].mxu0 %v260
    %v1079 = vpop.f32.mrb[0].mxu0
    %v1080 = vadd.f32 %v219, %v1079
    %v1081 = vpop.f32.mrb[0].mxu0
    %v1082 = vadd.f32 %v223, %v1081
    %v1083 = vpop.f32.mrb[0].mxu0
    %v1084 = vadd.f32 %v219, %v1083
    %v1085 = vpop.f32.mrb[0].mxu0
    %v1086 = vadd.f32 %v223, %v1085
    %1087 = vmatprep.mubr.bf16.mxu0 %v779
    %1088 = vmatmul.mubr.bf16.gmra.mrb[0].mxu0 %v262
    %v1089 = vpop.f32.mrb[0].mxu0
    %v1090 = vadd.f32 %v219, %v1089
    %v1091 = vpop.f32.mrb[0].mxu0
    %v1092 = vadd.f32 %v223, %v1091
    %v1093 = vpop.f32.mrb[0].mxu0
    %v1094 = vadd.f32 %v219, %v1093
    %v1095 = vpop.f32.mrb[0].mxu0
    %v1096 = vadd.f32 %v223, %v1095
    %1097 = vdwg.mxu0
    %1098 = vst [vmem:[#allocation2] sm:$0xff] %v841
    %1099 = vst [vmem:[#allocation2 + $0x8] sm:$0xff] %v843
    %1100 = vst [vmem:[#allocation2 + $0x10] sm:$0xff] %v914
    %1101 = vst [vmem:[#allocation2 + $0x18] sm:$0xff] %v916
    %1102 = vst [vmem:[#allocation2 + $0x20] sm:$0xff] %v987
    %1103 = vst [vmem:[#allocation2 + $0x28] sm:$0xff] %v989
    %1104 = vst [vmem:[#allocation2 + $0x30] sm:$0xff] %v1060
    %1105 = vst [vmem:[#allocation2 + $0x38] sm:$0xff] %v1062
    %1106 = vst [vmem:[#allocation2 + $0x40] sm:$0xff] %v845
    %1107 = vst [vmem:[#allocation2 + $0x48] sm:$0xff] %v847
    %1108 = vst [vmem:[#allocation2 + $0x50] sm:$0xff] %v918
    %1109 = vst [vmem:[#allocation2 + $0x58] sm:$0xff] %v920
    %1110 = vst [vmem:[#allocation2 + $0x60] sm:$0xff] %v991
    %1111 = vst [vmem:[#allocation2 + $0x68] sm:$0xff] %v993
    %1112 = vst [vmem:[#allocation2 + $0x70] sm:$0xff] %v1064
    %1113 = vst [vmem:[#allocation2 + $0x78] sm:$0xff] %v1066
    %1114 = vst [vmem:[#allocation2 + $0x80] sm:$0xff] %v851
    %1115 = vst [vmem:[#allocation2 + $0x88] sm:$0xff] %v853
    %1116 = vst [vmem:[#allocation2 + $0x90] sm:$0xff] %v924
    %1117 = vst [vmem:[#allocation2 + $0x98] sm:$0xff] %v926
    %1118 = vst [vmem:[#allocation2 + $0xa0] sm:$0xff] %v997
    %1119 = vst [vmem:[#allocation2 + $0xa8] sm:$0xff] %v999
    %1120 = vst [vmem:[#allocation2 + $0xb0] sm:$0xff] %v1070
    %1121 = vst [vmem:[#allocation2 + $0xb8] sm:$0xff] %v1072
    %1122 = vst [vmem:[#allocation2 + $0xc0] sm:$0xff] %v855
    %1123 = vst [vmem:[#allocation2 + $0xc8] sm:$0xff] %v857
    %1124 = vst [vmem:[#allocation2 + $0xd0] sm:$0xff] %v928
    %1125 = vst [vmem:[#allocation2 + $0xd8] sm:$0xff] %v930
    %1126 = vst [vmem:[#allocation2 + $0xe0] sm:$0xff] %v1001
    %1127 = vst [vmem:[#allocation2 + $0xe8] sm:$0xff] %v1003
    %1128 = vst [vmem:[#allocation2 + $0xf0] sm:$0xff] %v1074
    %1129 = vst [vmem:[#allocation2 + $0xf8] sm:$0xff] %v1076
    %1130 = vst [vmem:[#allocation2 + $0x100] sm:$0xff] %v861
    %1131 = vst [vmem:[#allocation2 + $0x108] sm:$0xff] %v863
    %1132 = vst [vmem:[#allocation2 + $0x110] sm:$0xff] %v934
    %1133 = vst [vmem:[#allocation2 + $0x118] sm:$0xff] %v936
    %1134 = vst [vmem:[#allocation2 + $0x120] sm:$0xff] %v1007
    %1135 = vst [vmem:[#allocation2 + $0x128] sm:$0xff] %v1009
    %1136 = vst [vmem:[#allocation2 + $0x130] sm:$0xff] %v1080
    %1137 = vst [vmem:[#allocation2 + $0x138] sm:$0xff] %v1082
    %1138 = vst [vmem:[#allocation2 + $0x140] sm:$0xff] %v865
    %1139 = vst [vmem:[#allocation2 + $0x148] sm:$0xff] %v867
    %1140 = vst [vmem:[#allocation2 + $0x150] sm:$0xff] %v938
    %1141 = vst [vmem:[#allocation2 + $0x158] sm:$0xff] %v940
    %1142 = vst [vmem:[#allocation2 + $0x160] sm:$0xff] %v1011
    %1143 = vst [vmem:[#allocation2 + $0x168] sm:$0xff] %v1013
    %1144 = vst [vmem:[#allocation2 + $0x170] sm:$0xff] %v1084
    %1145 = vst [vmem:[#allocation2 + $0x178] sm:$0xff] %v1086
    %1146 = vst [vmem:[#allocation2 + $0x180] sm:$0xff] %v871
    %1147 = vst [vmem:[#allocation2 + $0x188] sm:$0xff] %v873
    %1148 = vst [vmem:[#allocation2 + $0x190] sm:$0xff] %v944
    %1149 = vst [vmem:[#allocation2 + $0x198] sm:$0xff] %v946
    %1150 = vst [vmem:[#allocation2 + $0x1a0] sm:$0xff] %v1017
    %1151 = vst [vmem:[#allocation2 + $0x1a8] sm:$0xff] %v1019
    %1152 = vst [vmem:[#allocation2 + $0x1b0] sm:$0xff] %v1090
    %1153 = vst [vmem:[#allocation2 + $0x1b8] sm:$0xff] %v1092
    %1154 = vst [vmem:[#allocation2 + $0x1c0] sm:$0xff] %v875
    %1155 = vst [vmem:[#allocation2 + $0x1c8] sm:$0xff] %v877
    %1156 = vst [vmem:[#allocation2 + $0x1d0] sm:$0xff] %v948
    %1157 = vst [vmem:[#allocation2 + $0x1d8] sm:$0xff] %v950
    %1158 = vst [vmem:[#allocation2 + $0x1e0] sm:$0xff] %v1021
    %1159 = vst [vmem:[#allocation2 + $0x1e8] sm:$0xff] %v1023
    %1160 = vst [vmem:[#allocation2 + $0x1f0] sm:$0xff] %v1094
    %1161 = vst [vmem:[#allocation2 + $0x1f8] sm:$0xff] %v1096
    %v1162 = vld [vmem:[#allocation6] sm:$0xff]
    %v1163 = vld [vmem:[#allocation6 + $0x8] sm:$0xff]
    %v1164 = vld [vmem:[#allocation6 + $0x10] sm:$0xff]
    %v1165 = vld [vmem:[#allocation6 + $0x18] sm:$0xff]
    %v1166 = vld [vmem:[#allocation6 + $0x20] sm:$0xff]
    %v1167 = vld [vmem:[#allocation6 + $0x28] sm:$0xff]
    %v1168 = vld [vmem:[#allocation6 + $0x30] sm:$0xff]
    %v1169 = vld [vmem:[#allocation6 + $0x38] sm:$0xff]
    %v1170 = vld [vmem:[#allocation6 + $0x40] sm:$0xff]
    %v1171 = vld [vmem:[#allocation6 + $0x48] sm:$0xff]
    %v1172 = vld [vmem:[#allocation6 + $0x50] sm:$0xff]
    %v1173 = vld [vmem:[#allocation6 + $0x58] sm:$0xff]
    %v1174 = vld [vmem:[#allocation6 + $0x60] sm:$0xff]
    %v1175 = vld [vmem:[#allocation6 + $0x68] sm:$0xff]
    %v1176 = vld [vmem:[#allocation6 + $0x70] sm:$0xff]
    %v1177 = vld [vmem:[#allocation6 + $0x78] sm:$0xff]
    %v1178 = vld [vmem:[#allocation6 + $0x80] sm:$0xff]
    %v1179 = vld [vmem:[#allocation6 + $0x88] sm:$0xff]
    %v1180 = vld [vmem:[#allocation6 + $0x90] sm:$0xff]
    %v1181 = vld [vmem:[#allocation6 + $0x98] sm:$0xff]
    %v1182 = vld [vmem:[#allocation6 + $0xa0] sm:$0xff]
    %v1183 = vld [vmem:[#allocation6 + $0xa8] sm:$0xff]
    %v1184 = vld [vmem:[#allocation6 + $0xb0] sm:$0xff]
    %v1185 = vld [vmem:[#allocation6 + $0xb8] sm:$0xff]
    %v1186 = vld [vmem:[#allocation6 + $0xc0] sm:$0xff]
    %v1187 = vld [vmem:[#allocation6 + $0xc8] sm:$0xff]
    %v1188 = vld [vmem:[#allocation6 + $0xd0] sm:$0xff]
    %v1189 = vld [vmem:[#allocation6 + $0xd8] sm:$0xff]
    %v1190 = vld [vmem:[#allocation6 + $0xe0] sm:$0xff]
    %v1191 = vld [vmem:[#allocation6 + $0xe8] sm:$0xff]
    %v1192 = vld [vmem:[#allocation6 + $0xf0] sm:$0xff]
    %v1193 = vld [vmem:[#allocation6 + $0xf8] sm:$0xff]
    %v1194 = vld [vmem:[#allocation6 + $0x100] sm:$0xff]
    %v1195 = vld [vmem:[#allocation6 + $0x108] sm:$0xff]
    %v1196 = vld [vmem:[#allocation6 + $0x110] sm:$0xff]
    %v1197 = vld [vmem:[#allocation6 + $0x118] sm:$0xff]
    %v1198 = vld [vmem:[#allocation6 + $0x120] sm:$0xff]
    %v1199 = vld [vmem:[#allocation6 + $0x128] sm:$0xff]
    %v1200 = vld [vmem:[#allocation6 + $0x130] sm:$0xff]
    %v1201 = vld [vmem:[#allocation6 + $0x138] sm:$0xff]
    %v1202 = vld [vmem:[#allocation6 + $0x140] sm:$0xff]
    %v1203 = vld [vmem:[#allocation6 + $0x148] sm:$0xff]
    %v1204 = vld [vmem:[#allocation6 + $0x150] sm:$0xff]
    %v1205 = vld [vmem:[#allocation6 + $0x158] sm:$0xff]
    %v1206 = vld [vmem:[#allocation6 + $0x160] sm:$0xff]
    %v1207 = vld [vmem:[#allocation6 + $0x168] sm:$0xff]
    %v1208 = vld [vmem:[#allocation6 + $0x170] sm:$0xff]
    %v1209 = vld [vmem:[#allocation6 + $0x178] sm:$0xff]
    %v1210 = vld [vmem:[#allocation6 + $0x180] sm:$0xff]
    %v1211 = vld [vmem:[#allocation6 + $0x188] sm:$0xff]
    %v1212 = vld [vmem:[#allocation6 + $0x190] sm:$0xff]
    %v1213 = vld [vmem:[#allocation6 + $0x198] sm:$0xff]
    %v1214 = vld [vmem:[#allocation6 + $0x1a0] sm:$0xff]
    %v1215 = vld [vmem:[#allocation6 + $0x1a8] sm:$0xff]
    %v1216 = vld [vmem:[#allocation6 + $0x1b0] sm:$0xff]
    %v1217 = vld [vmem:[#allocation6 + $0x1b8] sm:$0xff]
    %v1218 = vld [vmem:[#allocation6 + $0x1c0] sm:$0xff]
    %v1219 = vld [vmem:[#allocation6 + $0x1c8] sm:$0xff]
    %v1220 = vld [vmem:[#allocation6 + $0x1d0] sm:$0xff]
    %v1221 = vld [vmem:[#allocation6 + $0x1d8] sm:$0xff]
    %v1222 = vld [vmem:[#allocation6 + $0x1e0] sm:$0xff]
    %v1223 = vld [vmem:[#allocation6 + $0x1e8] sm:$0xff]
    %v1224 = vld [vmem:[#allocation6 + $0x1f0] sm:$0xff]
    %v1225 = vld [vmem:[#allocation6 + $0x1f8] sm:$0xff]
    %v1226 = vld [vmem:[#allocation6 + $0x200] sm:$0xff]
    %v1227 = vld [vmem:[#allocation6 + $0x208] sm:$0xff]
    %v1228 = vld [vmem:[#allocation6 + $0x210] sm:$0xff]
    %v1229 = vld [vmem:[#allocation6 + $0x218] sm:$0xff]
    %v1230 = vld [vmem:[#allocation6 + $0x220] sm:$0xff]
    %v1231 = vld [vmem:[#allocation6 + $0x228] sm:$0xff]
    %v1232 = vld [vmem:[#allocation6 + $0x230] sm:$0xff]
    %v1233 = vld [vmem:[#allocation6 + $0x238] sm:$0xff]
    %v1234 = vld [vmem:[#allocation6 + $0x240] sm:$0xff]
    %v1235 = vld [vmem:[#allocation6 + $0x248] sm:$0xff]
    %v1236 = vld [vmem:[#allocation6 + $0x250] sm:$0xff]
    %v1237 = vld [vmem:[#allocation6 + $0x258] sm:$0xff]
    %v1238 = vld [vmem:[#allocation6 + $0x260] sm:$0xff]
    %v1239 = vld [vmem:[#allocation6 + $0x268] sm:$0xff]
    %v1240 = vld [vmem:[#allocation6 + $0x270] sm:$0xff]
    %v1241 = vld [vmem:[#allocation6 + $0x278] sm:$0xff]
    %v1242 = vld [vmem:[#allocation6 + $0x280] sm:$0xff]
    %v1243 = vld [vmem:[#allocation6 + $0x288] sm:$0xff]
    %v1244 = vld [vmem:[#allocation6 + $0x290] sm:$0xff]
    %v1245 = vld [vmem:[#allocation6 + $0x298] sm:$0xff]
    %v1246 = vld [vmem:[#allocation6 + $0x2a0] sm:$0xff]
    %v1247 = vld [vmem:[#allocation6 + $0x2a8] sm:$0xff]
    %v1248 = vld [vmem:[#allocation6 + $0x2b0] sm:$0xff]
    %v1249 = vld [vmem:[#allocation6 + $0x2b8] sm:$0xff]
    %v1250 = vld [vmem:[#allocation6 + $0x2c0] sm:$0xff]
    %v1251 = vld [vmem:[#allocation6 + $0x2c8] sm:$0xff]
    %v1252 = vld [vmem:[#allocation6 + $0x2d0] sm:$0xff]
    %v1253 = vld [vmem:[#allocation6 + $0x2d8] sm:$0xff]
    %v1254 = vld [vmem:[#allocation6 + $0x2e0] sm:$0xff]
    %v1255 = vld [vmem:[#allocation6 + $0x2e8] sm:$0xff]
    %v1256 = vld [vmem:[#allocation6 + $0x2f0] sm:$0xff]
    %v1257 = vld [vmem:[#allocation6 + $0x2f8] sm:$0xff]
    %v1258 = vld [vmem:[#allocation6 + $0x300] sm:$0xff]
    %v1259 = vld [vmem:[#allocation6 + $0x308] sm:$0xff]
    %v1260 = vld [vmem:[#allocation6 + $0x310] sm:$0xff]
    %v1261 = vld [vmem:[#allocation6 + $0x318] sm:$0xff]
    %v1262 = vld [vmem:[#allocation6 + $0x320] sm:$0xff]
    %v1263 = vld [vmem:[#allocation6 + $0x328] sm:$0xff]
    %v1264 = vld [vmem:[#allocation6 + $0x330] sm:$0xff]
    %v1265 = vld [vmem:[#allocation6 + $0x338] sm:$0xff]
    %v1266 = vld [vmem:[#allocation6 + $0x340] sm:$0xff]
    %v1267 = vld [vmem:[#allocation6 + $0x348] sm:$0xff]
    %v1268 = vld [vmem:[#allocation6 + $0x350] sm:$0xff]
    %v1269 = vld [vmem:[#allocation6 + $0x358] sm:$0xff]
    %v1270 = vld [vmem:[#allocation6 + $0x360] sm:$0xff]
    %v1271 = vld [vmem:[#allocation6 + $0x368] sm:$0xff]
    %v1272 = vld [vmem:[#allocation6 + $0x370] sm:$0xff]
    %v1273 = vld [vmem:[#allocation6 + $0x378] sm:$0xff]
    %v1274 = vld [vmem:[#allocation6 + $0x380] sm:$0xff]
    %v1275 = vld [vmem:[#allocation6 + $0x388] sm:$0xff]
    %v1276 = vld [vmem:[#allocation6 + $0x390] sm:$0xff]
    %v1277 = vld [vmem:[#allocation6 + $0x398] sm:$0xff]
    %v1278 = vld [vmem:[#allocation6 + $0x3a0] sm:$0xff]
    %v1279 = vld [vmem:[#allocation6 + $0x3a8] sm:$0xff]
    %v1280 = vld [vmem:[#allocation6 + $0x3b0] sm:$0xff]
    %v1281 = vld [vmem:[#allocation6 + $0x3b8] sm:$0xff]
    %v1282 = vld [vmem:[#allocation6 + $0x3c0] sm:$0xff]
    %v1283 = vld [vmem:[#allocation6 + $0x3c8] sm:$0xff]
    %v1284 = vld [vmem:[#allocation6 + $0x3d0] sm:$0xff]
    %v1285 = vld [vmem:[#allocation6 + $0x3d8] sm:$0xff]
    %v1286 = vld [vmem:[#allocation6 + $0x3e0] sm:$0xff]
    %v1287 = vld [vmem:[#allocation6 + $0x3e8] sm:$0xff]
    %v1288 = vld [vmem:[#allocation6 + $0x3f0] sm:$0xff]
    %v1289 = vld [vmem:[#allocation6 + $0x3f8] sm:$0xff]
    %v1418 = vunpack.c.l.b16 %v1162
    %v1419 = vunpack.c.h.b16 %v1162
    %v1420 = vunpack.c.l.b16 %v1163
    %v1421 = vunpack.c.h.b16 %v1163
    %v1422 = vunpack.c.l.b16 %v1164
    %v1423 = vunpack.c.h.b16 %v1164
    %v1424 = vunpack.c.l.b16 %v1165
    %v1425 = vunpack.c.h.b16 %v1165
    %v1426 = vunpack.c.l.b16 %v1166
    %v1427 = vunpack.c.h.b16 %v1166
    %v1428 = vunpack.c.l.b16 %v1167
    %v1429 = vunpack.c.h.b16 %v1167
    %v1430 = vunpack.c.l.b16 %v1168
    %v1431 = vunpack.c.h.b16 %v1168
    %v1432 = vunpack.c.l.b16 %v1169
    %v1433 = vunpack.c.h.b16 %v1169
    %v1434 = vunpack.c.l.b16 %v1170
    %v1435 = vunpack.c.h.b16 %v1170
    %v1436 = vunpack.c.l.b16 %v1171
    %v1437 = vunpack.c.h.b16 %v1171
    %v1438 = vunpack.c.l.b16 %v1172
    %v1439 = vunpack.c.h.b16 %v1172
    %v1440 = vunpack.c.l.b16 %v1173
    %v1441 = vunpack.c.h.b16 %v1173
    %v1442 = vunpack.c.l.b16 %v1174
    %v1443 = vunpack.c.h.b16 %v1174
    %v1444 = vunpack.c.l.b16 %v1175
    %v1445 = vunpack.c.h.b16 %v1175
    %v1446 = vunpack.c.l.b16 %v1176
    %v1447 = vunpack.c.h.b16 %v1176
    %v1448 = vunpack.c.l.b16 %v1177
    %v1449 = vunpack.c.h.b16 %v1177
    %v1450 = vunpack.c.l.b16 %v1178
    %v1451 = vunpack.c.h.b16 %v1178
    %v1452 = vunpack.c.l.b16 %v1179
    %v1453 = vunpack.c.h.b16 %v1179
    %v1454 = vunpack.c.l.b16 %v1180
    %v1455 = vunpack.c.h.b16 %v1180
    %v1456 = vunpack.c.l.b16 %v1181
    %v1457 = vunpack.c.h.b16 %v1181
    %v1458 = vunpack.c.l.b16 %v1182
    %v1459 = vunpack.c.h.b16 %v1182
    %v1460 = vunpack.c.l.b16 %v1183
    %v1461 = vunpack.c.h.b16 %v1183
    %v1462 = vunpack.c.l.b16 %v1184
    %v1463 = vunpack.c.h.b16 %v1184
    %v1464 = vunpack.c.l.b16 %v1185
    %v1465 = vunpack.c.h.b16 %v1185
    %v1466 = vunpack.c.l.b16 %v1186
    %v1467 = vunpack.c.h.b16 %v1186
    %v1468 = vunpack.c.l.b16 %v1187
    %v1469 = vunpack.c.h.b16 %v1187
    %v1470 = vunpack.c.l.b16 %v1188
    %v1471 = vunpack.c.h.b16 %v1188
    %v1472 = vunpack.c.l.b16 %v1189
    %v1473 = vunpack.c.h.b16 %v1189
    %v1474 = vunpack.c.l.b16 %v1190
    %v1475 = vunpack.c.h.b16 %v1190
    %v1476 = vunpack.c.l.b16 %v1191
    %v1477 = vunpack.c.h.b16 %v1191
    %v1478 = vunpack.c.l.b16 %v1192
    %v1479 = vunpack.c.h.b16 %v1192
    %v1480 = vunpack.c.l.b16 %v1193
    %v1481 = vunpack.c.h.b16 %v1193
    %v1482 = vunpack.c.l.b16 %v1194
    %v1483 = vunpack.c.h.b16 %v1194
    %v1484 = vunpack.c.l.b16 %v1195
    %v1485 = vunpack.c.h.b16 %v1195
    %v1486 = vunpack.c.l.b16 %v1196
    %v1487 = vunpack.c.h.b16 %v1196
    %v1488 = vunpack.c.l.b16 %v1197
    %v1489 = vunpack.c.h.b16 %v1197
    %v1490 = vunpack.c.l.b16 %v1198
    %v1491 = vunpack.c.h.b16 %v1198
    %v1492 = vunpack.c.l.b16 %v1199
    %v1493 = vunpack.c.h.b16 %v1199
    %v1494 = vunpack.c.l.b16 %v1200
    %v1495 = vunpack.c.h.b16 %v1200
    %v1496 = vunpack.c.l.b16 %v1201
    %v1497 = vunpack.c.h.b16 %v1201
    %v1498 = vunpack.c.l.b16 %v1202
    %v1499 = vunpack.c.h.b16 %v1202
    %v1500 = vunpack.c.l.b16 %v1203
    %v1501 = vunpack.c.h.b16 %v1203
    %v1502 = vunpack.c.l.b16 %v1204
    %v1503 = vunpack.c.h.b16 %v1204
    %v1504 = vunpack.c.l.b16 %v1205
    %v1505 = vunpack.c.h.b16 %v1205
    %v1506 = vunpack.c.l.b16 %v1206
    %v1507 = vunpack.c.h.b16 %v1206
    %v1508 = vunpack.c.l.b16 %v1207
    %v1509 = vunpack.c.h.b16 %v1207
    %v1510 = vunpack.c.l.b16 %v1208
    %v1511 = vunpack.c.h.b16 %v1208
    %v1512 = vunpack.c.l.b16 %v1209
    %v1513 = vunpack.c.h.b16 %v1209
    %v1514 = vunpack.c.l.b16 %v1210
    %v1515 = vunpack.c.h.b16 %v1210
    %v1516 = vunpack.c.l.b16 %v1211
    %v1517 = vunpack.c.h.b16 %v1211
    %v1518 = vunpack.c.l.b16 %v1212
    %v1519 = vunpack.c.h.b16 %v1212
    %v1520 = vunpack.c.l.b16 %v1213
    %v1521 = vunpack.c.h.b16 %v1213
    %v1522 = vunpack.c.l.b16 %v1214
    %v1523 = vunpack.c.h.b16 %v1214
    %v1524 = vunpack.c.l.b16 %v1215
    %v1525 = vunpack.c.h.b16 %v1215
    %v1526 = vunpack.c.l.b16 %v1216
    %v1527 = vunpack.c.h.b16 %v1216
    %v1528 = vunpack.c.l.b16 %v1217
    %v1529 = vunpack.c.h.b16 %v1217
    %v1530 = vunpack.c.l.b16 %v1218
    %v1531 = vunpack.c.h.b16 %v1218
    %v1532 = vunpack.c.l.b16 %v1219
    %v1533 = vunpack.c.h.b16 %v1219
    %v1534 = vunpack.c.l.b16 %v1220
    %v1535 = vunpack.c.h.b16 %v1220
    %v1536 = vunpack.c.l.b16 %v1221
    %v1537 = vunpack.c.h.b16 %v1221
    %v1538 = vunpack.c.l.b16 %v1222
    %v1539 = vunpack.c.h.b16 %v1222
    %v1540 = vunpack.c.l.b16 %v1223
    %v1541 = vunpack.c.h.b16 %v1223
    %v1542 = vunpack.c.l.b16 %v1224
    %v1543 = vunpack.c.h.b16 %v1224
    %v1544 = vunpack.c.l.b16 %v1225
    %v1545 = vunpack.c.h.b16 %v1225
    %v1546 = vunpack.c.l.b16 %v1226
    %v1547 = vunpack.c.h.b16 %v1226
    %v1548 = vunpack.c.l.b16 %v1227
    %v1549 = vunpack.c.h.b16 %v1227
    %v1550 = vunpack.c.l.b16 %v1228
    %v1551 = vunpack.c.h.b16 %v1228
    %v1552 = vunpack.c.l.b16 %v1229
    %v1553 = vunpack.c.h.b16 %v1229
    %v1554 = vunpack.c.l.b16 %v1230
    %v1555 = vunpack.c.h.b16 %v1230
    %v1556 = vunpack.c.l.b16 %v1231
    %v1557 = vunpack.c.h.b16 %v1231
    %v1558 = vunpack.c.l.b16 %v1232
    %v1559 = vunpack.c.h.b16 %v1232
    %v1560 = vunpack.c.l.b16 %v1233
    %v1561 = vunpack.c.h.b16 %v1233
    %v1562 = vunpack.c.l.b16 %v1234
    %v1563 = vunpack.c.h.b16 %v1234
    %v1564 = vunpack.c.l.b16 %v1235
    %v1565 = vunpack.c.h.b16 %v1235
    %v1566 = vunpack.c.l.b16 %v1236
    %v1567 = vunpack.c.h.b16 %v1236
    %v1568 = vunpack.c.l.b16 %v1237
    %v1569 = vunpack.c.h.b16 %v1237
    %v1570 = vunpack.c.l.b16 %v1238
    %v1571 = vunpack.c.h.b16 %v1238
    %v1572 = vunpack.c.l.b16 %v1239
    %v1573 = vunpack.c.h.b16 %v1239
    %v1574 = vunpack.c.l.b16 %v1240
    %v1575 = vunpack.c.h.b16 %v1240
    %v1576 = vunpack.c.l.b16 %v1241
    %v1577 = vunpack.c.h.b16 %v1241
    %v1578 = vunpack.c.l.b16 %v1242
    %v1579 = vunpack.c.h.b16 %v1242
    %v1580 = vunpack.c.l.b16 %v1243
    %v1581 = vunpack.c.h.b16 %v1243
    %v1582 = vunpack.c.l.b16 %v1244
    %v1583 = vunpack.c.h.b16 %v1244
    %v1584 = vunpack.c.l.b16 %v1245
    %v1585 = vunpack.c.h.b16 %v1245
    %v1586 = vunpack.c.l.b16 %v1246
    %v1587 = vunpack.c.h.b16 %v1246
    %v1588 = vunpack.c.l.b16 %v1247
    %v1589 = vunpack.c.h.b16 %v1247
    %v1590 = vunpack.c.l.b16 %v1248
    %v1591 = vunpack.c.h.b16 %v1248
    %v1592 = vunpack.c.l.b16 %v1249
    %v1593 = vunpack.c.h.b16 %v1249
    %v1594 = vunpack.c.l.b16 %v1250
    %v1595 = vunpack.c.h.b16 %v1250
    %v1596 = vunpack.c.l.b16 %v1251
    %v1597 = vunpack.c.h.b16 %v1251
    %v1598 = vunpack.c.l.b16 %v1252
    %v1599 = vunpack.c.h.b16 %v1252
    %v1600 = vunpack.c.l.b16 %v1253
    %v1601 = vunpack.c.h.b16 %v1253
    %v1602 = vunpack.c.l.b16 %v1254
    %v1603 = vunpack.c.h.b16 %v1254
    %v1604 = vunpack.c.l.b16 %v1255
    %v1605 = vunpack.c.h.b16 %v1255
    %v1606 = vunpack.c.l.b16 %v1256
    %v1607 = vunpack.c.h.b16 %v1256
    %v1608 = vunpack.c.l.b16 %v1257
    %v1609 = vunpack.c.h.b16 %v1257
    %v1610 = vunpack.c.l.b16 %v1258
    %v1611 = vunpack.c.h.b16 %v1258
    %v1612 = vunpack.c.l.b16 %v1259
    %v1613 = vunpack.c.h.b16 %v1259
    %v1614 = vunpack.c.l.b16 %v1260
    %v1615 = vunpack.c.h.b16 %v1260
    %v1616 = vunpack.c.l.b16 %v1261
    %v1617 = vunpack.c.h.b16 %v1261
    %v1618 = vunpack.c.l.b16 %v1262
    %v1619 = vunpack.c.h.b16 %v1262
    %v1620 = vunpack.c.l.b16 %v1263
    %v1621 = vunpack.c.h.b16 %v1263
    %v1622 = vunpack.c.l.b16 %v1264
    %v1623 = vunpack.c.h.b16 %v1264
    %v1624 = vunpack.c.l.b16 %v1265
    %v1625 = vunpack.c.h.b16 %v1265
    %v1626 = vunpack.c.l.b16 %v1266
    %v1627 = vunpack.c.h.b16 %v1266
    %v1628 = vunpack.c.l.b16 %v1267
    %v1629 = vunpack.c.h.b16 %v1267
    %v1630 = vunpack.c.l.b16 %v1268
    %v1631 = vunpack.c.h.b16 %v1268
    %v1632 = vunpack.c.l.b16 %v1269
    %v1633 = vunpack.c.h.b16 %v1269
    %v1634 = vunpack.c.l.b16 %v1270
    %v1635 = vunpack.c.h.b16 %v1270
    %v1636 = vunpack.c.l.b16 %v1271
    %v1637 = vunpack.c.h.b16 %v1271
    %v1638 = vunpack.c.l.b16 %v1272
    %v1639 = vunpack.c.h.b16 %v1272
    %v1640 = vunpack.c.l.b16 %v1273
    %v1641 = vunpack.c.h.b16 %v1273
    %v1642 = vunpack.c.l.b16 %v1274
    %v1643 = vunpack.c.h.b16 %v1274
    %v1644 = vunpack.c.l.b16 %v1275
    %v1645 = vunpack.c.h.b16 %v1275
    %v1646 = vunpack.c.l.b16 %v1276
    %v1647 = vunpack.c.h.b16 %v1276
    %v1648 = vunpack.c.l.b16 %v1277
    %v1649 = vunpack.c.h.b16 %v1277
    %v1650 = vunpack.c.l.b16 %v1278
    %v1651 = vunpack.c.h.b16 %v1278
    %v1652 = vunpack.c.l.b16 %v1279
    %v1653 = vunpack.c.h.b16 %v1279
    %v1654 = vunpack.c.l.b16 %v1280
    %v1655 = vunpack.c.h.b16 %v1280
    %v1656 = vunpack.c.l.b16 %v1281
    %v1657 = vunpack.c.h.b16 %v1281
    %v1658 = vunpack.c.l.b16 %v1282
    %v1659 = vunpack.c.h.b16 %v1282
    %v1660 = vunpack.c.l.b16 %v1283
    %v1661 = vunpack.c.h.b16 %v1283
    %v1662 = vunpack.c.l.b16 %v1284
    %v1663 = vunpack.c.h.b16 %v1284
    %v1664 = vunpack.c.l.b16 %v1285
    %v1665 = vunpack.c.h.b16 %v1285
    %v1666 = vunpack.c.l.b16 %v1286
    %v1667 = vunpack.c.h.b16 %v1286
    %v1668 = vunpack.c.l.b16 %v1287
    %v1669 = vunpack.c.h.b16 %v1287
    %v1670 = vunpack.c.l.b16 %v1288
    %v1671 = vunpack.c.h.b16 %v1288
    %v1672 = vunpack.c.l.b16 %v1289
    %v1673 = vunpack.c.h.b16 %v1289
    %v1674 = vpack.c.b16 %v1426, %v1418
    %v1675 = vpack.c.b16 %v1427, %v1419
    %v1676 = vpack.c.b16 %v1428, %v1420
    %v1677 = vpack.c.b16 %v1429, %v1421
    %v1678 = vpack.c.b16 %v1430, %v1422
    %v1679 = vpack.c.b16 %v1431, %v1423
    %v1680 = vpack.c.b16 %v1432, %v1424
    %v1681 = vpack.c.b16 %v1433, %v1425
    %v1682 = vpack.c.b16 %v1442, %v1434
    %v1683 = vpack.c.b16 %v1443, %v1435
    %v1684 = vpack.c.b16 %v1444, %v1436
    %v1685 = vpack.c.b16 %v1445, %v1437
    %v1686 = vpack.c.b16 %v1446, %v1438
    %v1687 = vpack.c.b16 %v1447, %v1439
    %v1688 = vpack.c.b16 %v1448, %v1440
    %v1689 = vpack.c.b16 %v1449, %v1441
    %v1690 = vpack.c.b16 %v1458, %v1450
    %v1691 = vpack.c.b16 %v1459, %v1451
    %v1692 = vpack.c.b16 %v1460, %v1452
    %v1693 = vpack.c.b16 %v1461, %v1453
    %v1694 = vpack.c.b16 %v1462, %v1454
    %v1695 = vpack.c.b16 %v1463, %v1455
    %v1696 = vpack.c.b16 %v1464, %v1456
    %v1697 = vpack.c.b16 %v1465, %v1457
    %v1698 = vpack.c.b16 %v1474, %v1466
    %v1699 = vpack.c.b16 %v1475, %v1467
    %v1700 = vpack.c.b16 %v1476, %v1468
    %v1701 = vpack.c.b16 %v1477, %v1469
    %v1702 = vpack.c.b16 %v1478, %v1470
    %v1703 = vpack.c.b16 %v1479, %v1471
    %v1704 = vpack.c.b16 %v1480, %v1472
    %v1705 = vpack.c.b16 %v1481, %v1473
    %v1706 = vpack.c.b16 %v1490, %v1482
    %v1707 = vpack.c.b16 %v1491, %v1483
    %v1708 = vpack.c.b16 %v1492, %v1484
    %v1709 = vpack.c.b16 %v1493, %v1485
    %v1710 = vpack.c.b16 %v1494, %v1486
    %v1711 = vpack.c.b16 %v1495, %v1487
    %v1712 = vpack.c.b16 %v1496, %v1488
    %v1713 = vpack.c.b16 %v1497, %v1489
    %v1714 = vpack.c.b16 %v1506, %v1498
    %v1715 = vpack.c.b16 %v1507, %v1499
    %v1716 = vpack.c.b16 %v1508, %v1500
    %v1717 = vpack.c.b16 %v1509, %v1501
    %v1718 = vpack.c.b16 %v1510, %v1502
    %v1719 = vpack.c.b16 %v1511, %v1503
    %v1720 = vpack.c.b16 %v1512, %v1504
    %v1721 = vpack.c.b16 %v1513, %v1505
    %v1722 = vpack.c.b16 %v1522, %v1514
    %v1723 = vpack.c.b16 %v1523, %v1515
    %v1724 = vpack.c.b16 %v1524, %v1516
    %v1725 = vpack.c.b16 %v1525, %v1517
    %v1726 = vpack.c.b16 %v1526, %v1518
    %v1727 = vpack.c.b16 %v1527, %v1519
    %v1728 = vpack.c.b16 %v1528, %v1520
    %v1729 = vpack.c.b16 %v1529, %v1521
    %v1730 = vpack.c.b16 %v1538, %v1530
    %v1731 = vpack.c.b16 %v1539, %v1531
    %v1732 = vpack.c.b16 %v1540, %v1532
    %v1733 = vpack.c.b16 %v1541, %v1533
    %v1734 = vpack.c.b16 %v1542, %v1534
    %v1735 = vpack.c.b16 %v1543, %v1535
    %v1736 = vpack.c.b16 %v1544, %v1536
    %v1737 = vpack.c.b16 %v1545, %v1537
    %v1738 = vpack.c.b16 %v1554, %v1546
    %v1739 = vpack.c.b16 %v1555, %v1547
    %v1740 = vpack.c.b16 %v1556, %v1548
    %v1741 = vpack.c.b16 %v1557, %v1549
    %v1742 = vpack.c.b16 %v1558, %v1550
    %v1743 = vpack.c.b16 %v1559, %v1551
    %v1744 = vpack.c.b16 %v1560, %v1552
    %v1745 = vpack.c.b16 %v1561, %v1553
    %v1746 = vpack.c.b16 %v1570, %v1562
    %v1747 = vpack.c.b16 %v1571, %v1563
    %v1748 = vpack.c.b16 %v1572, %v1564
    %v1749 = vpack.c.b16 %v1573, %v1565
    %v1750 = vpack.c.b16 %v1574, %v1566
    %v1751 = vpack.c.b16 %v1575, %v1567
    %v1752 = vpack.c.b16 %v1576, %v1568
    %v1753 = vpack.c.b16 %v1577, %v1569
    %v1754 = vpack.c.b16 %v1586, %v1578
    %v1755 = vpack.c.b16 %v1587, %v1579
    %v1756 = vpack.c.b16 %v1588, %v1580
    %v1757 = vpack.c.b16 %v1589, %v1581
    %v1758 = vpack.c.b16 %v1590, %v1582
    %v1759 = vpack.c.b16 %v1591, %v1583
    %v1760 = vpack.c.b16 %v1592, %v1584
    %v1761 = vpack.c.b16 %v1593, %v1585
    %v1762 = vpack.c.b16 %v1602, %v1594
    %v1763 = vpack.c.b16 %v1603, %v1595
    %v1764 = vpack.c.b16 %v1604, %v1596
    %v1765 = vpack.c.b16 %v1605, %v1597
    %v1766 = vpack.c.b16 %v1606, %v1598
    %v1767 = vpack.c.b16 %v1607, %v1599
    %v1768 = vpack.c.b16 %v1608, %v1600
    %v1769 = vpack.c.b16 %v1609, %v1601
    %v1770 = vpack.c.b16 %v1618, %v1610
    %v1771 = vpack.c.b16 %v1619, %v1611
    %v1772 = vpack.c.b16 %v1620, %v1612
    %v1773 = vpack.c.b16 %v1621, %v1613
    %v1774 = vpack.c.b16 %v1622, %v1614
    %v1775 = vpack.c.b16 %v1623, %v1615
    %v1776 = vpack.c.b16 %v1624, %v1616
    %v1777 = vpack.c.b16 %v1625, %v1617
    %v1778 = vpack.c.b16 %v1634, %v1626
    %v1779 = vpack.c.b16 %v1635, %v1627
    %v1780 = vpack.c.b16 %v1636, %v1628
    %v1781 = vpack.c.b16 %v1637, %v1629
    %v1782 = vpack.c.b16 %v1638, %v1630
    %v1783 = vpack.c.b16 %v1639, %v1631
    %v1784 = vpack.c.b16 %v1640, %v1632
    %v1785 = vpack.c.b16 %v1641, %v1633
    %v1786 = vpack.c.b16 %v1650, %v1642
    %v1787 = vpack.c.b16 %v1651, %v1643
    %v1788 = vpack.c.b16 %v1652, %v1644
    %v1789 = vpack.c.b16 %v1653, %v1645
    %v1790 = vpack.c.b16 %v1654, %v1646
    %v1791 = vpack.c.b16 %v1655, %v1647
    %v1792 = vpack.c.b16 %v1656, %v1648
    %v1793 = vpack.c.b16 %v1657, %v1649
    %v1794 = vpack.c.b16 %v1666, %v1658
    %v1795 = vpack.c.b16 %v1667, %v1659
    %v1796 = vpack.c.b16 %v1668, %v1660
    %v1797 = vpack.c.b16 %v1669, %v1661
    %v1798 = vpack.c.b16 %v1670, %v1662
    %v1799 = vpack.c.b16 %v1671, %v1663
    %v1800 = vpack.c.b16 %v1672, %v1664
    %v1801 = vpack.c.b16 %v1673, %v1665
    %1930 = vmatprep.subr.bf16.mxu0 %v1675
    %1931 = vmatpush1.bf16.msra.mxu0 %v1674
    %1932 = vmatprep.subr.bf16.mxu0 %v1683
    %1933 = vmatpush1.bf16.msra.mxu0 %v1682
    %1934 = vmatprep.subr.bf16.mxu0 %v1691
    %1935 = vmatpush1.bf16.msra.mxu0 %v1690
    %1936 = vmatprep.subr.bf16.mxu0 %v1699
    %1937 = vmatpush1.bf16.msra.mxu0 %v1698
    %1938 = vmatprep.subr.bf16.mxu0 %v1707
    %1939 = vmatpush1.bf16.msra.mxu0 %v1706
    %1940 = vmatprep.subr.bf16.mxu0 %v1715
    %1941 = vmatpush1.bf16.msra.mxu0 %v1714
    %1942 = vmatprep.subr.bf16.mxu0 %v1723
    %1943 = vmatpush1.bf16.msra.mxu0 %v1722
    %1944 = vmatprep.subr.bf16.mxu0 %v1731
    %1945 = vmatpush1.bf16.msra.mxu0 %v1730
    %1946 = vmatprep.subr.bf16.mxu0 %v1739
    %1947 = vmatpush1.bf16.msra.mxu0 %v1738
    %1948 = vmatprep.subr.bf16.mxu0 %v1747
    %1949 = vmatpush1.bf16.msra.mxu0 %v1746
    %1950 = vmatprep.subr.bf16.mxu0 %v1755
    %1951 = vmatpush1.bf16.msra.mxu0 %v1754
    %1952 = vmatprep.subr.bf16.mxu0 %v1763
    %1953 = vmatpush1.bf16.msra.mxu0 %v1762
    %1954 = vmatprep.subr.bf16.mxu0 %v1771
    %1955 = vmatpush1.bf16.msra.mxu0 %v1770
    %1956 = vmatprep.subr.bf16.mxu0 %v1779
    %1957 = vmatpush1.bf16.msra.mxu0 %v1778
    %1958 = vmatprep.subr.bf16.mxu0 %v1787
    %1959 = vmatpush1.bf16.msra.mxu0 %v1786
    %1960 = vmatprep.subr.bf16.mxu0 %v1795
    %1961 = vmatpush1.bf16.msra.mxu0 %v1794
    %1962 = vmatprep.mubr.bf16.mxu0 0
    %1963 = vmatmul.mubr.bf16.gmra.mrb[0].mxu0 0
    %v1964 = vpop.f32.mrb[0].mxu0
    %v1965 = vadd.f32 0.0, %v1964
    %v1966 = vpop.f32.mrb[0].mxu0
    %v1967 = vadd.f32 0.0, %v1966
    %v1968 = vpop.f32.mrb[0].mxu0
    %v1969 = vpop.f32.mrb[0].mxu0
    %1970 = vdwg.mxu0
    %1971 = vmatprep.subr.bf16.mxu0 %v1677
    %1972 = vmatpush1.bf16.msra.mxu0 %v1676
    %1973 = vmatprep.subr.bf16.mxu0 %v1685
    %1974 = vmatpush1.bf16.msra.mxu0 %v1684
    %1975 = vmatprep.subr.bf16.mxu0 %v1693
    %1976 = vmatpush1.bf16.msra.mxu0 %v1692
    %1977 = vmatprep.subr.bf16.mxu0 %v1701
    %1978 = vmatpush1.bf16.msra.mxu0 %v1700
    %1979 = vmatprep.subr.bf16.mxu0 %v1709
    %1980 = vmatpush1.bf16.msra.mxu0 %v1708
    %1981 = vmatprep.subr.bf16.mxu0 %v1717
    %1982 = vmatpush1.bf16.msra.mxu0 %v1716
    %1983 = vmatprep.subr.bf16.mxu0 %v1725
    %1984 = vmatpush1.bf16.msra.mxu0 %v1724
    %1985 = vmatprep.subr.bf16.mxu0 %v1733
    %1986 = vmatpush1.bf16.msra.mxu0 %v1732
    %1987 = vmatprep.subr.bf16.mxu0 %v1741
    %1988 = vmatpush1.bf16.msra.mxu0 %v1740
    %1989 = vmatprep.subr.bf16.mxu0 %v1749
    %1990 = vmatpush1.bf16.msra.mxu0 %v1748
    %1991 = vmatprep.subr.bf16.mxu0 %v1757
    %1992 = vmatpush1.bf16.msra.mxu0 %v1756
    %1993 = vmatprep.subr.bf16.mxu0 %v1765
    %1994 = vmatpush1.bf16.msra.mxu0 %v1764
    %1995 = vmatprep.subr.bf16.mxu0 %v1773
    %1996 = vmatpush1.bf16.msra.mxu0 %v1772
    %1997 = vmatprep.subr.bf16.mxu0 %v1781
    %1998 = vmatpush1.bf16.msra.mxu0 %v1780
    %1999 = vmatprep.subr.bf16.mxu0 %v1789
    %2000 = vmatpush1.bf16.msra.mxu0 %v1788
    %2001 = vmatprep.subr.bf16.mxu0 %v1797
    %2002 = vmatpush1.bf16.msra.mxu0 %v1796
    %2003 = vmatprep.mubr.bf16.mxu0 0
    %2004 = vmatmul.mubr.bf16.gmra.mrb[0].mxu0 0
    %v2005 = vpop.f32.mrb[0].mxu0
    %v2006 = vadd.f32 0.0, %v2005
    %v2007 = vpop.f32.mrb[0].mxu0
    %v2008 = vadd.f32 0.0, %v2007
    %v2009 = vpop.f32.mrb[0].mxu0
    %v2010 = vpop.f32.mrb[0].mxu0
    %2011 = vdwg.mxu0
    %2012 = vmatprep.subr.bf16.mxu0 %v1679
    %2013 = vmatpush1.bf16.msra.mxu0 %v1678
    %2014 = vmatprep.subr.bf16.mxu0 %v1687
    %2015 = vmatpush1.bf16.msra.mxu0 %v1686
    %2016 = vmatprep.subr.bf16.mxu0 %v1695
    %2017 = vmatpush1.bf16.msra.mxu0 %v1694
    %2018 = vmatprep.subr.bf16.mxu0 %v1703
    %2019 = vmatpush1.bf16.msra.mxu0 %v1702
    %2020 = vmatprep.subr.bf16.mxu0 %v1711
    %2021 = vmatpush1.bf16.msra.mxu0 %v1710
    %2022 = vmatprep.subr.bf16.mxu0 %v1719
    %2023 = vmatpush1.bf16.msra.mxu0 %v1718
    %2024 = vmatprep.subr.bf16.mxu0 %v1727
    %2025 = vmatpush1.bf16.msra.mxu0 %v1726
    %2026 = vmatprep.subr.bf16.mxu0 %v1735
    %2027 = vmatpush1.bf16.msra.mxu0 %v1734
    %2028 = vmatprep.subr.bf16.mxu0 %v1743
    %2029 = vmatpush1.bf16.msra.mxu0 %v1742
    %2030 = vmatprep.subr.bf16.mxu0 %v1751
    %2031 = vmatpush1.bf16.msra.mxu0 %v1750
    %2032 = vmatprep.subr.bf16.mxu0 %v1759
    %2033 = vmatpush1.bf16.msra.mxu0 %v1758
    %2034 = vmatprep.subr.bf16.mxu0 %v1767
    %2035 = vmatpush1.bf16.msra.mxu0 %v1766
    %2036 = vmatprep.subr.bf16.mxu0 %v1775
    %2037 = vmatpush1.bf16.msra.mxu0 %v1774
    %2038 = vmatprep.subr.bf16.mxu0 %v1783
    %2039 = vmatpush1.bf16.msra.mxu0 %v1782
    %2040 = vmatprep.subr.bf16.mxu0 %v1791
    %2041 = vmatpush1.bf16.msra.mxu0 %v1790
    %2042 = vmatprep.subr.bf16.mxu0 %v1799
    %2043 = vmatpush1.bf16.msra.mxu0 %v1798
    %2044 = vmatprep.mubr.bf16.mxu0 0
    %2045 = vmatmul.mubr.bf16.gmra.mrb[0].mxu0 0
    %v2046 = vpop.f32.mrb[0].mxu0
    %v2047 = vadd.f32 0.0, %v2046
    %v2048 = vpop.f32.mrb[0].mxu0
    %v2049 = vadd.f32 0.0, %v2048
    %v2050 = vpop.f32.mrb[0].mxu0
    %v2051 = vpop.f32.mrb[0].mxu0
    %2052 = vdwg.mxu0
    %2053 = vmatprep.subr.bf16.mxu0 %v1681
    %2054 = vmatpush1.bf16.msra.mxu0 %v1680
    %2055 = vmatprep.subr.bf16.mxu0 %v1689
    %2056 = vmatpush1.bf16.msra.mxu0 %v1688
    %2057 = vmatprep.subr.bf16.mxu0 %v1697
    %2058 = vmatpush1.bf16.msra.mxu0 %v1696
    %2059 = vmatprep.subr.bf16.mxu0 %v1705
    %2060 = vmatpush1.bf16.msra.mxu0 %v1704
    %2061 = vmatprep.subr.bf16.mxu0 %v1713
    %2062 = vmatpush1.bf16.msra.mxu0 %v1712
    %2063 = vmatprep.subr.bf16.mxu0 %v1721
    %2064 = vmatpush1.bf16.msra.mxu0 %v1720
    %2065 = vmatprep.subr.bf16.mxu0 %v1729
    %2066 = vmatpush1.bf16.msra.mxu0 %v1728
    %2067 = vmatprep.subr.bf16.mxu0 %v1737
    %2068 = vmatpush1.bf16.msra.mxu0 %v1736
    %2069 = vmatprep.subr.bf16.mxu0 %v1745
    %2070 = vmatpush1.bf16.msra.mxu0 %v1744
    %2071 = vmatprep.subr.bf16.mxu0 %v1753
    %2072 = vmatpush1.bf16.msra.mxu0 %v1752
    %2073 = vmatprep.subr.bf16.mxu0 %v1761
    %2074 = vmatpush1.bf16.msra.mxu0 %v1760
    %2075 = vmatprep.subr.bf16.mxu0 %v1769
    %2076 = vmatpush1.bf16.msra.mxu0 %v1768
    %2077 = vmatprep.subr.bf16.mxu0 %v1777
    %2078 = vmatpush1.bf16.msra.mxu0 %v1776
    %2079 = vmatprep.subr.bf16.mxu0 %v1785
    %2080 = vmatpush1.bf16.msra.mxu0 %v1784
    %2081 = vmatprep.subr.bf16.mxu0 %v1793
    %2082 = vmatpush1.bf16.msra.mxu0 %v1792
    %2083 = vmatprep.subr.bf16.mxu0 %v1801
    %2084 = vmatpush1.bf16.msra.mxu0 %v1800
    %2085 = vmatprep.mubr.bf16.mxu0 0
    %2086 = vmatmul.mubr.bf16.gmra.mrb[0].mxu0 0
    %v2087 = vpop.f32.mrb[0].mxu0
    %v2088 = vadd.f32 0.0, %v2087
    %v2089 = vpop.f32.mrb[0].mxu0
    %v2090 = vadd.f32 0.0, %v2089
    %v2091 = vpop.f32.mrb[0].mxu0
    %v2092 = vpop.f32.mrb[0].mxu0
    %2093 = vdwg.mxu0
    %v2094 = vld [vmem:[#allocation2] sm:$0xff]
    %v2095 = vld [vmem:[#allocation2 + $0x8] sm:$0xff]
    %v2096 = vld [vmem:[#allocation2 + $0x10] sm:$0xff]
    %v2097 = vld [vmem:[#allocation2 + $0x18] sm:$0xff]
    %v2098 = vadd.f32 %v2094, %v1965
    %v2099 = vadd.f32 %v2095, %v1967
    %v2100 = vadd.f32 %v2096, %v2006
    %v2101 = vadd.f32 %v2097, %v2008
    %s2102 = scalar_lea.vmem [#allocation2], 448
    %v2103 = vld [vmem:[%s2102 + $0x20] sm:$0xff]
    %v2104 = vld [vmem:[%s2102 + $0x28] sm:$0xff]
    %v2105 = vld [vmem:[%s2102 + $0x30] sm:$0xff]
    %v2106 = vld [vmem:[%s2102 + $0x38] sm:$0xff]
    %v2107 = vadd.f32 %v2103, %v2047
    %v2108 = vadd.f32 %v2104, %v2049
    %v2109 = vadd.f32 %v2105, %v2088
    %v2110 = vadd.f32 %v2106, %v2090
    %v2111 = vxor.u32 %v2098, 2147483648
    %v2112 = vxor.u32 %v2107, 2147483648
    %v2113 = vmul.f32 %v2111, 1.442695
    %v2114 = vpow.pop %v2113
    %v2115 = vmul.f32 %v2112, 1.442695
    %v2116 = vpow.pop %v2115
    %v2117 = vadd.f32 %v2114, 1.0
    %v2118 = vadd.f32 %v2116, 1.0
    %v2119 = vrcp.pop %v2117
    %v2120 = vmul.f32 1.0, %v2119
    %v2121 = vrcp.pop %v2118
    %v2122 = vmul.f32 1.0, %v2121
    %v2123 = vxor.u32 %v2099, 2147483648
    %v2124 = vxor.u32 %v2108, 2147483648
    %v2125 = vmul.f32 %v2123, 1.442695
    %v2126 = vpow.pop %v2125
    %v2127 = vmul.f32 %v2124, 1.442695
    %v2128 = vpow.pop %v2127
    %v2129 = vadd.f32 %v2126, 1.0
    %v2130 = vadd.f32 %v2128, 1.0
    %v2131 = vrcp.pop %v2129
    %v2132 = vmul.f32 1.0, %v2131
    %v2133 = vrcp.pop %v2130
    %v2134 = vmul.f32 1.0, %v2133
    %v2135 = vtanh.pop %v2100
    %v2136 = vtanh.pop %v2109
    %v2137 = vxor.u32 %v2101, 2147483648
    %v2138 = vxor.u32 %v2110, 2147483648
    %v2139 = vmul.f32 %v2137, 1.442695
    %v2140 = vpow.pop %v2139
    %v2141 = vmul.f32 %v2138, 1.442695
    %v2142 = vpow.pop %v2141
    %v2143 = vadd.f32 %v2140, 1.0
    %v2144 = vadd.f32 %v2142, 1.0
    %v2145 = vrcp.pop %v2143
    %v2146 = vmul.f32 1.0, %v2145
    %v2147 = vrcp.pop %v2144
    %v2148 = vmul.f32 1.0, %v2147
    %v2149 = vmul.f32 %v2132, 0.0
    %v2150 = vmul.f32 %v2134, 0.0
    %v2151 = vmul.f32 %v2120, %v2135
    %v2152 = vmul.f32 %v2122, %v2136
    %v2153 = vadd.f32 %v2149, %v2151
    %v2154 = vadd.f32 %v2150, %v2152
    %v2155 = vtanh.pop %v2153
    %v2156 = vtanh.pop %v2154
    %v2157 = vmul.f32 %v2146, %v2155
    %v2158 = vmul.f32 %v2148, %v2156
    %2159 = vst [vmem:[#allocation3] sm:$0xff] %v2157
    %s2160 = scalar_lea.vmem [#allocation3], 112
    %2161 = vst [vmem:[%s2160 + $0x8] sm:$0xff] %v2158
    %v2162 = vpack.c.bf16 %v2157, %v2157
    %v2163 = vpack.c.bf16 %v2158, %v2158
    %2164 = vmatprep.subr.bf16.mxu0 %v1675
    %2165 = vmatpush1.bf16.msra.mxu0 %v1674
    %2166 = vmatprep.subr.bf16.mxu0 %v1683
    %2167 = vmatpush1.bf16.msra.mxu0 %v1682
    %2168 = vmatprep.subr.bf16.mxu0 %v1691
    %2169 = vmatpush1.bf16.msra.mxu0 %v1690
    %2170 = vmatprep.subr.bf16.mxu0 %v1699
    %2171 = vmatpush1.bf16.msra.mxu0 %v1698
    %2172 = vmatprep.subr.bf16.mxu0 %v1707
    %2173 = vmatpush1.bf16.msra.mxu0 %v1706
    %2174 = vmatprep.subr.bf16.mxu0 %v1715
    %2175 = vmatpush1.bf16.msra.mxu0 %v1714
    %2176 = vmatprep.subr.bf16.mxu0 %v1723
    %2177 = vmatpush1.bf16.msra.mxu0 %v1722
    %2178 = vmatprep.subr.bf16.mxu0 %v1731
    %2179 = vmatpush1.bf16.msra.mxu0 %v1730
    %2180 = vmatprep.subr.bf16.mxu0 %v1739
    %2181 = vmatpush1.bf16.msra.mxu0 %v1738
    %2182 = vmatprep.subr.bf16.mxu0 %v1747
    %2183 = vmatpush1.bf16.msra.mxu0 %v1746
    %2184 = vmatprep.subr.bf16.mxu0 %v1755
    %2185 = vmatpush1.bf16.msra.mxu0 %v1754
    %2186 = vmatprep.subr.bf16.mxu0 %v1763
    %2187 = vmatpush1.bf16.msra.mxu0 %v1762
    %2188 = vmatprep.subr.bf16.mxu0 %v1771
    %2189 = vmatpush1.bf16.msra.mxu0 %v1770
    %2190 = vmatprep.subr.bf16.mxu0 %v1779
    %2191 = vmatpush1.bf16.msra.mxu0 %v1778
    %2192 = vmatprep.subr.bf16.mxu0 %v1787
    %2193 = vmatpush1.bf16.msra.mxu0 %v1786
    %2194 = vmatprep.subr.bf16.mxu0 %v1795
    %2195 = vmatpush1.bf16.msra.mxu0 %v1794
    %2196 = vmatprep.mubr.bf16.mxu0 %v2163
    %2197 = vmatmul.mubr.bf16.gmra.mrb[0].mxu0 %v2162
    %v2198 = vpop.f32.mrb[0].mxu0
    %v2199 = vadd.f32 0.0, %v2198
    %v2200 = vpop.f32.mrb[0].mxu0
    %v2201 = vadd.f32 0.0, %v2200
    %v2202 = vpop.f32.mrb[0].mxu0
    %v2203 = vpop.f32.mrb[0].mxu0
    %2204 = vdwg.mxu0
    %2205 = vmatprep.subr.bf16.mxu0 %v1677
    %2206 = vmatpush1.bf16.msra.mxu0 %v1676
    %2207 = vmatprep.subr.bf16.mxu0 %v1685
    %2208 = vmatpush1.bf16.msra.mxu0 %v1684
    %2209 = vmatprep.subr.bf16.mxu0 %v1693
    %2210 = vmatpush1.bf16.msra.mxu0 %v1692
    %2211 = vmatprep.subr.bf16.mxu0 %v1701
    %2212 = vmatpush1.bf16.msra.mxu0 %v1700
    %2213 = vmatprep.subr.bf16.mxu0 %v1709
    %2214 = vmatpush1.bf16.msra.mxu0 %v1708
    %2215 = vmatprep.subr.bf16.mxu0 %v1717
    %2216 = vmatpush1.bf16.msra.mxu0 %v1716
    %2217 = vmatprep.subr.bf16.mxu0 %v1725
    %2218 = vmatpush1.bf16.msra.mxu0 %v1724
    %2219 = vmatprep.subr.bf16.mxu0 %v1733
    %2220 = vmatpush1.bf16.msra.mxu0 %v1732
    %2221 = vmatprep.subr.bf16.mxu0 %v1741
    %2222 = vmatpush1.bf16.msra.mxu0 %v1740
    %2223 = vmatprep.subr.bf16.mxu0 %v1749
    %2224 = vmatpush1.bf16.msra.mxu0 %v1748
    %2225 = vmatprep.subr.bf16.mxu0 %v1757
    %2226 = vmatpush1.bf16.msra.mxu0 %v1756
    %2227 = vmatprep.subr.bf16.mxu0 %v1765
    %2228 = vmatpush1.bf16.msra.mxu0 %v1764
    %2229 = vmatprep.subr.bf16.mxu0 %v1773
    %2230 = vmatpush1.bf16.msra.mxu0 %v1772
    %2231 = vmatprep.subr.bf16.mxu0 %v1781
    %2232 = vmatpush1.bf16.msra.mxu0 %v1780
    %2233 = vmatprep.subr.bf16.mxu0 %v1789
    %2234 = vmatpush1.bf16.msra.mxu0 %v1788
    %2235 = vmatprep.subr.bf16.mxu0 %v1797
    %2236 = vmatpush1.bf16.msra.mxu0 %v1796
    %2237 = vmatprep.mubr.bf16.mxu0 %v2163
    %2238 = vmatmul.mubr.bf16.gmra.mrb[0].mxu0 %v2162
    %v2239 = vpop.f32.mrb[0].mxu0
    %v2240 = vadd.f32 0.0, %v2239
    %v2241 = vpop.f32.mrb[0].mxu0
    %v2242 = vadd.f32 0.0, %v2241
    %v2243 = vpop.f32.mrb[0].mxu0
    %v2244 = vpop.f32.mrb[0].mxu0
    %2245 = vdwg.mxu0
    %2246 = vmatprep.subr.bf16.mxu0 %v1679
    %2247 = vmatpush1.bf16.msra.mxu0 %v1678
    %2248 = vmatprep.subr.bf16.mxu0 %v1687
    %2249 = vmatpush1.bf16.msra.mxu0 %v1686
    %2250 = vmatprep.subr.bf16.mxu0 %v1695
    %2251 = vmatpush1.bf16.msra.mxu0 %v1694
    %2252 = vmatprep.subr.bf16.mxu0 %v1703
    %2253 = vmatpush1.bf16.msra.mxu0 %v1702
    %2254 = vmatprep.subr.bf16.mxu0 %v1711
    %2255 = vmatpush1.bf16.msra.mxu0 %v1710
    %2256 = vmatprep.subr.bf16.mxu0 %v1719
    %2257 = vmatpush1.bf16.msra.mxu0 %v1718
    %2258 = vmatprep.subr.bf16.mxu0 %v1727
    %2259 = vmatpush1.bf16.msra.mxu0 %v1726
    %2260 = vmatprep.subr.bf16.mxu0 %v1735
    %2261 = vmatpush1.bf16.msra.mxu0 %v1734
    %2262 = vmatprep.subr.bf16.mxu0 %v1743
    %2263 = vmatpush1.bf16.msra.mxu0 %v1742
    %2264 = vmatprep.subr.bf16.mxu0 %v1751
    %2265 = vmatpush1.bf16.msra.mxu0 %v1750
    %2266 = vmatprep.subr.bf16.mxu0 %v1759
    %2267 = vmatpush1.bf16.msra.mxu0 %v1758
    %2268 = vmatprep.subr.bf16.mxu0 %v1767
    %2269 = vmatpush1.bf16.msra.mxu0 %v1766
    %2270 = vmatprep.subr.bf16.mxu0 %v1775
    %2271 = vmatpush1.bf16.msra.mxu0 %v1774
    %2272 = vmatprep.subr.bf16.mxu0 %v1783
    %2273 = vmatpush1.bf16.msra.mxu0 %v1782
    %2274 = vmatprep.subr.bf16.mxu0 %v1791
    %2275 = vmatpush1.bf16.msra.mxu0 %v1790
    %2276 = vmatprep.subr.bf16.mxu0 %v1799
    %2277 = vmatpush1.bf16.msra.mxu0 %v1798
    %2278 = vmatprep.mubr.bf16.mxu0 %v2163
    %2279 = vmatmul.mubr.bf16.gmra.mrb[0].mxu0 %v2162
    %v2280 = vpop.f32.mrb[0].mxu0
    %v2281 = vadd.f32 0.0, %v2280
    %v2282 = vpop.f32.mrb[0].mxu0
    %v2283 = vadd.f32 0.0, %v2282
    %v2284 = vpop.f32.mrb[0].mxu0
    %v2285 = vpop.f32.mrb[0].mxu0
    %2286 = vdwg.mxu0
    %2287 = vmatprep.subr.bf16.mxu0 %v1681
    %2288 = vmatpush1.bf16.msra.mxu0 %v1680
    %2289 = vmatprep.subr.bf16.mxu0 %v1689
    %2290 = vmatpush1.bf16.msra.mxu0 %v1688
    %2291 = vmatprep.subr.bf16.mxu0 %v1697
    %2292 = vmatpush1.bf16.msra.mxu0 %v1696
    %2293 = vmatprep.subr.bf16.mxu0 %v1705
    %2294 = vmatpush1.bf16.msra.mxu0 %v1704
    %2295 = vmatprep.subr.bf16.mxu0 %v1713
    %2296 = vmatpush1.bf16.msra.mxu0 %v1712
    %2297 = vmatprep.subr.bf16.mxu0 %v1721
    %2298 = vmatpush1.bf16.msra.mxu0 %v1720
    %2299 = vmatprep.subr.bf16.mxu0 %v1729
    %2300 = vmatpush1.bf16.msra.mxu0 %v1728
    %2301 = vmatprep.subr.bf16.mxu0 %v1737
    %2302 = vmatpush1.bf16.msra.mxu0 %v1736
    %2303 = vmatprep.subr.bf16.mxu0 %v1745
    %2304 = vmatpush1.bf16.msra.mxu0 %v1744
    %2305 = vmatprep.subr.bf16.mxu0 %v1753
    %2306 = vmatpush1.bf16.msra.mxu0 %v1752
    %2307 = vmatprep.subr.bf16.mxu0 %v1761
    %2308 = vmatpush1.bf16.msra.mxu0 %v1760
    %2309 = vmatprep.subr.bf16.mxu0 %v1769
    %2310 = vmatpush1.bf16.msra.mxu0 %v1768
    %2311 = vmatprep.subr.bf16.mxu0 %v1777
    %2312 = vmatpush1.bf16.msra.mxu0 %v1776
    %2313 = vmatprep.subr.bf16.mxu0 %v1785
    %2314 = vmatpush1.bf16.msra.mxu0 %v1784
    %2315 = vmatprep.subr.bf16.mxu0 %v1793
    %2316 = vmatpush1.bf16.msra.mxu0 %v1792
    %2317 = vmatprep.subr.bf16.mxu0 %v1801
    %2318 = vmatpush1.bf16.msra.mxu0 %v1800
    %2319 = vmatprep.mubr.bf16.mxu0 %v2163
    %2320 = vmatmul.mubr.bf16.gmra.mrb[0].mxu0 %v2162
    %v2321 = vpop.f32.mrb[0].mxu0
    %v2322 = vadd.f32 0.0, %v2321
    %v2323 = vpop.f32.mrb[0].mxu0
    %v2324 = vadd.f32 0.0, %v2323
    %v2325 = vpop.f32.mrb[0].mxu0
    %v2326 = vpop.f32.mrb[0].mxu0
    %2327 = vdwg.mxu0
    %s2328 = scalar_lea.vmem [#allocation2], 64
    %v2329 = vld [vmem:[%s2328] sm:$0xff]
    %v2330 = vld [vmem:[%s2328 + $0x8] sm:$0xff]
    %v2331 = vld [vmem:[%s2328 + $0x10] sm:$0xff]
    %v2332 = vld [vmem:[%s2328 + $0x18] sm:$0xff]
    %v2333 = vadd.f32 %v2329, %v2199
    %v2334 = vadd.f32 %v2330, %v2201
    %v2335 = vadd.f32 %v2331, %v2240
    %v2336 = vadd.f32 %v2332, %v2242
    %s2337 = scalar_lea.vmem [#allocation2], 384
    %v2338 = vld [vmem:[%s2337 + $0x20] sm:$0xff]
    %v2339 = vld [vmem:[%s2337 + $0x28] sm:$0xff]
    %v2340 = vld [vmem:[%s2337 + $0x30] sm:$0xff]
    %v2341 = vld [vmem:[%s2337 + $0x38] sm:$0xff]
    %v2342 = vadd.f32 %v2338, %v2281
    %v2343 = vadd.f32 %v2339, %v2283
    %v2344 = vadd.f32 %v2340, %v2322
    %v2345 = vadd.f32 %v2341, %v2324
    %v2346 = vxor.u32 %v2333, 2147483648
    %v2347 = vxor.u32 %v2342, 2147483648
    %v2348 = vmul.f32 %v2346, 1.442695
    %v2349 = vpow.pop %v2348
    %v2350 = vmul.f32 %v2347, 1.442695
    %v2351 = vpow.pop %v2350
    %v2352 = vadd.f32 %v2349, 1.0
    %v2353 = vadd.f32 %v2351, 1.0
    %v2354 = vrcp.pop %v2352
    %v2355 = vmul.f32 1.0, %v2354
    %v2356 = vrcp.pop %v2353
    %v2357 = vmul.f32 1.0, %v2356
    %v2358 = vxor.u32 %v2334, 2147483648
    %v2359 = vxor.u32 %v2343, 2147483648
    %v2360 = vmul.f32 %v2358, 1.442695
    %v2361 = vpow.pop %v2360
    %v2362 = vmul.f32 %v2359, 1.442695
    %v2363 = vpow.pop %v2362
    %v2364 = vadd.f32 %v2361, 1.0
    %v2365 = vadd.f32 %v2363, 1.0
    %v2366 = vrcp.pop %v2364
    %v2367 = vmul.f32 1.0, %v2366
    %v2368 = vrcp.pop %v2365
    %v2369 = vmul.f32 1.0, %v2368
    %v2370 = vtanh.pop %v2335
    %v2371 = vtanh.pop %v2344
    %v2372 = vxor.u32 %v2336, 2147483648
    %v2373 = vxor.u32 %v2345, 2147483648
    %v2374 = vmul.f32 %v2372, 1.442695
    %v2375 = vpow.pop %v2374
    %v2376 = vmul.f32 %v2373, 1.442695
    %v2377 = vpow.pop %v2376
    %v2378 = vadd.f32 %v2375, 1.0
    %v2379 = vadd.f32 %v2377, 1.0
    %v2380 = vrcp.pop %v2378
    %v2381 = vmul.f32 1.0, %v2380
    %v2382 = vrcp.pop %v2379
    %v2383 = vmul.f32 1.0, %v2382
    %v2384 = vmul.f32 %v2367, %v2153
    %v2385 = vmul.f32 %v2369, %v2154
    %v2386 = vmul.f32 %v2355, %v2370
    %v2387 = vmul.f32 %v2357, %v2371
    %v2388 = vadd.f32 %v2384, %v2386
    %v2389 = vadd.f32 %v2385, %v2387
    %v2390 = vtanh.pop %v2388
    %v2391 = vtanh.pop %v2389
    %v2392 = vmul.f32 %v2381, %v2390
    %v2393 = vmul.f32 %v2383, %v2391
    %s2394 = scalar_lea.vmem [#allocation3], 16
    %2395 = vst [vmem:[%s2394] sm:$0xff] %v2392
    %s2396 = scalar_lea.vmem [#allocation3], 96
    %2397 = vst [vmem:[%s2396 + $0x8] sm:$0xff] %v2393
    %v2398 = vpack.c.bf16 %v2392, %v2392
    %v2399 = vpack.c.bf16 %v2393, %v2393
    %2400 = vmatprep.subr.bf16.mxu0 %v1675
    %2401 = vmatpush1.bf16.msra.mxu0 %v1674
    %2402 = vmatprep.subr.bf16.mxu0 %v1683
    %2403 = vmatpush1.bf16.msra.mxu0 %v1682
    %2404 = vmatprep.subr.bf16.mxu0 %v1691
    %2405 = vmatpush1.bf16.msra.mxu0 %v1690
    %2406 = vmatprep.subr.bf16.mxu0 %v1699
    %2407 = vmatpush1.bf16.msra.mxu0 %v1698
    %2408 = vmatprep.subr.bf16.mxu0 %v1707
    %2409 = vmatpush1.bf16.msra.mxu0 %v1706
    %2410 = vmatprep.subr.bf16.mxu0 %v1715
    %2411 = vmatpush1.bf16.msra.mxu0 %v1714
    %2412 = vmatprep.subr.bf16.mxu0 %v1723
    %2413 = vmatpush1.bf16.msra.mxu0 %v1722
    %2414 = vmatprep.subr.bf16.mxu0 %v1731
    %2415 = vmatpush1.bf16.msra.mxu0 %v1730
    %2416 = vmatprep.subr.bf16.mxu0 %v1739
    %2417 = vmatpush1.bf16.msra.mxu0 %v1738
    %2418 = vmatprep.subr.bf16.mxu0 %v1747
    %2419 = vmatpush1.bf16.msra.mxu0 %v1746
    %2420 = vmatprep.subr.bf16.mxu0 %v1755
    %2421 = vmatpush1.bf16.msra.mxu0 %v1754
    %2422 = vmatprep.subr.bf16.mxu0 %v1763
    %2423 = vmatpush1.bf16.msra.mxu0 %v1762
    %2424 = vmatprep.subr.bf16.mxu0 %v1771
    %2425 = vmatpush1.bf16.msra.mxu0 %v1770
    %2426 = vmatprep.subr.bf16.mxu0 %v1779
    %2427 = vmatpush1.bf16.msra.mxu0 %v1778
    %2428 = vmatprep.subr.bf16.mxu0 %v1787
    %2429 = vmatpush1.bf16.msra.mxu0 %v1786
    %2430 = vmatprep.subr.bf16.mxu0 %v1795
    %2431 = vmatpush1.bf16.msra.mxu0 %v1794
    %2432 = vmatprep.mubr.bf16.mxu0 %v2399
    %2433 = vmatmul.mubr.bf16.gmra.mrb[0].mxu0 %v2398
    %v2434 = vpop.f32.mrb[0].mxu0
    %v2435 = vadd.f32 0.0, %v2434
    %v2436 = vpop.f32.mrb[0].mxu0
    %v2437 = vadd.f32 0.0, %v2436
    %v2438 = vpop.f32.mrb[0].mxu0
    %v2439 = vpop.f32.mrb[0].mxu0
    %2440 = vdwg.mxu0
    %2441 = vmatprep.subr.bf16.mxu0 %v1677
    %2442 = vmatpush1.bf16.msra.mxu0 %v1676
    %2443 = vmatprep.subr.bf16.mxu0 %v1685
    %2444 = vmatpush1.bf16.msra.mxu0 %v1684
    %2445 = vmatprep.subr.bf16.mxu0 %v1693
    %2446 = vmatpush1.bf16.msra.mxu0 %v1692
    %2447 = vmatprep.subr.bf16.mxu0 %v1701
    %2448 = vmatpush1.bf16.msra.mxu0 %v1700
    %2449 = vmatprep.subr.bf16.mxu0 %v1709
    %2450 = vmatpush1.bf16.msra.mxu0 %v1708
    %2451 = vmatprep.subr.bf16.mxu0 %v1717
    %2452 = vmatpush1.bf16.msra.mxu0 %v1716
    %2453 = vmatprep.subr.bf16.mxu0 %v1725
    %2454 = vmatpush1.bf16.msra.mxu0 %v1724
    %2455 = vmatprep.subr.bf16.mxu0 %v1733
    %2456 = vmatpush1.bf16.msra.mxu0 %v1732
    %2457 = vmatprep.subr.bf16.mxu0 %v1741
    %2458 = vmatpush1.bf16.msra.mxu0 %v1740
    %2459 = vmatprep.subr.bf16.mxu0 %v1749
    %2460 = vmatpush1.bf16.msra.mxu0 %v1748
    %2461 = vmatprep.subr.bf16.mxu0 %v1757
    %2462 = vmatpush1.bf16.msra.mxu0 %v1756
    %2463 = vmatprep.subr.bf16.mxu0 %v1765
    %2464 = vmatpush1.bf16.msra.mxu0 %v1764
    %2465 = vmatprep.subr.bf16.mxu0 %v1773
    %2466 = vmatpush1.bf16.msra.mxu0 %v1772
    %2467 = vmatprep.subr.bf16.mxu0 %v1781
    %2468 = vmatpush1.bf16.msra.mxu0 %v1780
    %2469 = vmatprep.subr.bf16.mxu0 %v1789
    %2470 = vmatpush1.bf16.msra.mxu0 %v1788
    %2471 = vmatprep.subr.bf16.mxu0 %v1797
    %2472 = vmatpush1.bf16.msra.mxu0 %v1796
    %2473 = vmatprep.mubr.bf16.mxu0 %v2399
    %2474 = vmatmul.mubr.bf16.gmra.mrb[0].mxu0 %v2398
    %v2475 = vpop.f32.mrb[0].mxu0
    %v2476 = vadd.f32 0.0, %v2475
    %v2477 = vpop.f32.mrb[0].mxu0
    %v2478 = vadd.f32 0.0, %v2477
    %v2479 = vpop.f32.mrb[0].mxu0
    %v2480 = vpop.f32.mrb[0].mxu0
    %2481 = vdwg.mxu0
    %2482 = vmatprep.subr.bf16.mxu0 %v1679
    %2483 = vmatpush1.bf16.msra.mxu0 %v1678
    %2484 = vmatprep.subr.bf16.mxu0 %v1687
    %2485 = vmatpush1.bf16.msra.mxu0 %v1686
    %2486 = vmatprep.subr.bf16.mxu0 %v1695
    %2487 = vmatpush1.bf16.msra.mxu0 %v1694
    %2488 = vmatprep.subr.bf16.mxu0 %v1703
    %2489 = vmatpush1.bf16.msra.mxu0 %v1702
    %2490 = vmatprep.subr.bf16.mxu0 %v1711
    %2491 = vmatpush1.bf16.msra.mxu0 %v1710
    %2492 = vmatprep.subr.bf16.mxu0 %v1719
    %2493 = vmatpush1.bf16.msra.mxu0 %v1718
    %2494 = vmatprep.subr.bf16.mxu0 %v1727
    %2495 = vmatpush1.bf16.msra.mxu0 %v1726
    %2496 = vmatprep.subr.bf16.mxu0 %v1735
    %2497 = vmatpush1.bf16.msra.mxu0 %v1734
    %2498 = vmatprep.subr.bf16.mxu0 %v1743
    %2499 = vmatpush1.bf16.msra.mxu0 %v1742
    %2500 = vmatprep.subr.bf16.mxu0 %v1751
    %2501 = vmatpush1.bf16.msra.mxu0 %v1750
    %2502 = vmatprep.subr.bf16.mxu0 %v1759
    %2503 = vmatpush1.bf16.msra.mxu0 %v1758
    %2504 = vmatprep.subr.bf16.mxu0 %v1767
    %2505 = vmatpush1.bf16.msra.mxu0 %v1766
    %2506 = vmatprep.subr.bf16.mxu0 %v1775
    %2507 = vmatpush1.bf16.msra.mxu0 %v1774
    %2508 = vmatprep.subr.bf16.mxu0 %v1783
    %2509 = vmatpush1.bf16.msra.mxu0 %v1782
    %2510 = vmatprep.subr.bf16.mxu0 %v1791
    %2511 = vmatpush1.bf16.msra.mxu0 %v1790
    %2512 = vmatprep.subr.bf16.mxu0 %v1799
    %2513 = vmatpush1.bf16.msra.mxu0 %v1798
    %2514 = vmatprep.mubr.bf16.mxu0 %v2399
    %2515 = vmatmul.mubr.bf16.gmra.mrb[0].mxu0 %v2398
    %v2516 = vpop.f32.mrb[0].mxu0
    %v2517 = vadd.f32 0.0, %v2516
    %v2518 = vpop.f32.mrb[0].mxu0
    %v2519 = vadd.f32 0.0, %v2518
    %v2520 = vpop.f32.mrb[0].mxu0
    %v2521 = vpop.f32.mrb[0].mxu0
    %2522 = vdwg.mxu0
    %2523 = vmatprep.subr.bf16.mxu0 %v1681
    %2524 = vmatpush1.bf16.msra.mxu0 %v1680
    %2525 = vmatprep.subr.bf16.mxu0 %v1689
    %2526 = vmatpush1.bf16.msra.mxu0 %v1688
    %2527 = vmatprep.subr.bf16.mxu0 %v1697
    %2528 = vmatpush1.bf16.msra.mxu0 %v1696
    %2529 = vmatprep.subr.bf16.mxu0 %v1705
    %2530 = vmatpush1.bf16.msra.mxu0 %v1704
    %2531 = vmatprep.subr.bf16.mxu0 %v1713
    %2532 = vmatpush1.bf16.msra.mxu0 %v1712
    %2533 = vmatprep.subr.bf16.mxu0 %v1721
    %2534 = vmatpush1.bf16.msra.mxu0 %v1720
    %2535 = vmatprep.subr.bf16.mxu0 %v1729
    %2536 = vmatpush1.bf16.msra.mxu0 %v1728
    %2537 = vmatprep.subr.bf16.mxu0 %v1737
    %2538 = vmatpush1.bf16.msra.mxu0 %v1736
    %2539 = vmatprep.subr.bf16.mxu0 %v1745
    %2540 = vmatpush1.bf16.msra.mxu0 %v1744
    %2541 = vmatprep.subr.bf16.mxu0 %v1753
    %2542 = vmatpush1.bf16.msra.mxu0 %v1752
    %2543 = vmatprep.subr.bf16.mxu0 %v1761
    %2544 = vmatpush1.bf16.msra.mxu0 %v1760
    %2545 = vmatprep.subr.bf16.mxu0 %v1769
    %2546 = vmatpush1.bf16.msra.mxu0 %v1768
    %2547 = vmatprep.subr.bf16.mxu0 %v1777
    %2548 = vmatpush1.bf16.msra.mxu0 %v1776
    %2549 = vmatprep.subr.bf16.mxu0 %v1785
    %2550 = vmatpush1.bf16.msra.mxu0 %v1784
    %2551 = vmatprep.subr.bf16.mxu0 %v1793
    %2552 = vmatpush1.bf16.msra.mxu0 %v1792
    %2553 = vmatprep.subr.bf16.mxu0 %v1801
    %2554 = vmatpush1.bf16.msra.mxu0 %v1800
    %2555 = vmatprep.mubr.bf16.mxu0 %v2399
    %2556 = vmatmul.mubr.bf16.gmra.mrb[0].mxu0 %v2398
    %v2557 = vpop.f32.mrb[0].mxu0
    %v2558 = vadd.f32 0.0, %v2557
    %v2559 = vpop.f32.mrb[0].mxu0
    %v2560 = vadd.f32 0.0, %v2559
    %v2561 = vpop.f32.mrb[0].mxu0
    %v2562 = vpop.f32.mrb[0].mxu0
    %2563 = vdwg.mxu0
    %s2564 = scalar_lea.vmem [#allocation2], 128
    %v2565 = vld [vmem:[%s2564] sm:$0xff]
    %v2566 = vld [vmem:[%s2564 + $0x8] sm:$0xff]
    %v2567 = vld [vmem:[%s2564 + $0x10] sm:$0xff]
    %v2568 = vld [vmem:[%s2564 + $0x18] sm:$0xff]
    %v2569 = vadd.f32 %v2565, %v2435
    %v2570 = vadd.f32 %v2566, %v2437
    %v2571 = vadd.f32 %v2567, %v2476
    %v2572 = vadd.f32 %v2568, %v2478
    %s2573 = scalar_lea.vmem [#allocation2], 320
    %v2574 = vld [vmem:[%s2573 + $0x20] sm:$0xff]
    %v2575 = vld [vmem:[%s2573 + $0x28] sm:$0xff]
    %v2576 = vld [vmem:[%s2573 + $0x30] sm:$0xff]
    %v2577 = vld [vmem:[%s2573 + $0x38] sm:$0xff]
    %v2578 = vadd.f32 %v2574, %v2517
    %v2579 = vadd.f32 %v2575, %v2519
    %v2580 = vadd.f32 %v2576, %v2558
    %v2581 = vadd.f32 %v2577, %v2560
    %v2582 = vxor.u32 %v2569, 2147483648
    %v2583 = vxor.u32 %v2578, 2147483648
    %v2584 = vmul.f32 %v2582, 1.442695
    %v2585 = vpow.pop %v2584
    %v2586 = vmul.f32 %v2583, 1.442695
    %v2587 = vpow.pop %v2586
    %v2588 = vadd.f32 %v2585, 1.0
    %v2589 = vadd.f32 %v2587, 1.0
    %v2590 = vrcp.pop %v2588
    %v2591 = vmul.f32 1.0, %v2590
    %v2592 = vrcp.pop %v2589
    %v2593 = vmul.f32 1.0, %v2592
    %v2594 = vxor.u32 %v2570, 2147483648
    %v2595 = vxor.u32 %v2579, 2147483648
    %v2596 = vmul.f32 %v2594, 1.442695
    %v2597 = vpow.pop %v2596
    %v2598 = vmul.f32 %v2595, 1.442695
    %v2599 = vpow.pop %v2598
    %v2600 = vadd.f32 %v2597, 1.0
    %v2601 = vadd.f32 %v2599, 1.0
    %v2602 = vrcp.pop %v2600
    %v2603 = vmul.f32 1.0, %v2602
    %v2604 = vrcp.pop %v2601
    %v2605 = vmul.f32 1.0, %v2604
    %v2606 = vtanh.pop %v2571
    %v2607 = vtanh.pop %v2580
    %v2608 = vxor.u32 %v2572, 2147483648
    %v2609 = vxor.u32 %v2581, 2147483648
    %v2610 = vmul.f32 %v2608, 1.442695
    %v2611 = vpow.pop %v2610
    %v2612 = vmul.f32 %v2609, 1.442695
    %v2613 = vpow.pop %v2612
    %v2614 = vadd.f32 %v2611, 1.0
    %v2615 = vadd.f32 %v2613, 1.0
    %v2616 = vrcp.pop %v2614
    %v2617 = vmul.f32 1.0, %v2616
    %v2618 = vrcp.pop %v2615
    %v2619 = vmul.f32 1.0, %v2618
    %v2620 = vmul.f32 %v2603, %v2388
    %v2621 = vmul.f32 %v2605, %v2389
    %v2622 = vmul.f32 %v2591, %v2606
    %v2623 = vmul.f32 %v2593, %v2607
    %v2624 = vadd.f32 %v2620, %v2622
    %v2625 = vadd.f32 %v2621, %v2623
    %v2626 = vtanh.pop %v2624
    %v2627 = vtanh.pop %v2625
    %v2628 = vmul.f32 %v2617, %v2626
    %v2629 = vmul.f32 %v2619, %v2627
    %s2630 = scalar_lea.vmem [#allocation3], 32
    %2631 = vst [vmem:[%s2630] sm:$0xff] %v2628
    %s2632 = scalar_lea.vmem [#allocation3], 80
    %2633 = vst [vmem:[%s2632 + $0x8] sm:$0xff] %v2629
    %v2634 = vpack.c.bf16 %v2628, %v2628
    %v2635 = vpack.c.bf16 %v2629, %v2629
    %2636 = vmatprep.subr.bf16.mxu0 %v1675
    %2637 = vmatpush1.bf16.msra.mxu0 %v1674
    %2638 = vmatprep.subr.bf16.mxu0 %v1683
    %2639 = vmatpush1.bf16.msra.mxu0 %v1682
    %2640 = vmatprep.subr.bf16.mxu0 %v1691
    %2641 = vmatpush1.bf16.msra.mxu0 %v1690
    %2642 = vmatprep.subr.bf16.mxu0 %v1699
    %2643 = vmatpush1.bf16.msra.mxu0 %v1698
    %2644 = vmatprep.subr.bf16.mxu0 %v1707
    %2645 = vmatpush1.bf16.msra.mxu0 %v1706
    %2646 = vmatprep.subr.bf16.mxu0 %v1715
    %2647 = vmatpush1.bf16.msra.mxu0 %v1714
    %2648 = vmatprep.subr.bf16.mxu0 %v1723
    %2649 = vmatpush1.bf16.msra.mxu0 %v1722
    %2650 = vmatprep.subr.bf16.mxu0 %v1731
    %2651 = vmatpush1.bf16.msra.mxu0 %v1730
    %2652 = vmatprep.subr.bf16.mxu0 %v1739
    %2653 = vmatpush1.bf16.msra.mxu0 %v1738
    %2654 = vmatprep.subr.bf16.mxu0 %v1747
    %2655 = vmatpush1.bf16.msra.mxu0 %v1746
    %2656 = vmatprep.subr.bf16.mxu0 %v1755
    %2657 = vmatpush1.bf16.msra.mxu0 %v1754
    %2658 = vmatprep.subr.bf16.mxu0 %v1763
    %2659 = vmatpush1.bf16.msra.mxu0 %v1762
    %2660 = vmatprep.subr.bf16.mxu0 %v1771
    %2661 = vmatpush1.bf16.msra.mxu0 %v1770
    %2662 = vmatprep.subr.bf16.mxu0 %v1779
    %2663 = vmatpush1.bf16.msra.mxu0 %v1778
    %2664 = vmatprep.subr.bf16.mxu0 %v1787
    %2665 = vmatpush1.bf16.msra.mxu0 %v1786
    %2666 = vmatprep.subr.bf16.mxu0 %v1795
    %2667 = vmatpush1.bf16.msra.mxu0 %v1794
    %2668 = vmatprep.mubr.bf16.mxu0 %v2635
    %2669 = vmatmul.mubr.bf16.gmra.mrb[0].mxu0 %v2634
    %v2670 = vpop.f32.mrb[0].mxu0
    %v2671 = vadd.f32 0.0, %v2670
    %v2672 = vpop.f32.mrb[0].mxu0
    %v2673 = vadd.f32 0.0, %v2672
    %v2674 = vpop.f32.mrb[0].mxu0
    %v2675 = vpop.f32.mrb[0].mxu0
    %2676 = vdwg.mxu0
    %2677 = vmatprep.subr.bf16.mxu0 %v1677
    %2678 = vmatpush1.bf16.msra.mxu0 %v1676
    %2679 = vmatprep.subr.bf16.mxu0 %v1685
    %2680 = vmatpush1.bf16.msra.mxu0 %v1684
    %2681 = vmatprep.subr.bf16.mxu0 %v1693
    %2682 = vmatpush1.bf16.msra.mxu0 %v1692
    %2683 = vmatprep.subr.bf16.mxu0 %v1701
    %2684 = vmatpush1.bf16.msra.mxu0 %v1700
    %2685 = vmatprep.subr.bf16.mxu0 %v1709
    %2686 = vmatpush1.bf16.msra.mxu0 %v1708
    %2687 = vmatprep.subr.bf16.mxu0 %v1717
    %2688 = vmatpush1.bf16.msra.mxu0 %v1716
    %2689 = vmatprep.subr.bf16.mxu0 %v1725
    %2690 = vmatpush1.bf16.msra.mxu0 %v1724
    %2691 = vmatprep.subr.bf16.mxu0 %v1733
    %2692 = vmatpush1.bf16.msra.mxu0 %v1732
    %2693 = vmatprep.subr.bf16.mxu0 %v1741
    %2694 = vmatpush1.bf16.msra.mxu0 %v1740
    %2695 = vmatprep.subr.bf16.mxu0 %v1749
    %2696 = vmatpush1.bf16.msra.mxu0 %v1748
    %2697 = vmatprep.subr.bf16.mxu0 %v1757
    %2698 = vmatpush1.bf16.msra.mxu0 %v1756
    %2699 = vmatprep.subr.bf16.mxu0 %v1765
    %2700 = vmatpush1.bf16.msra.mxu0 %v1764
    %2701 = vmatprep.subr.bf16.mxu0 %v1773
    %2702 = vmatpush1.bf16.msra.mxu0 %v1772
    %2703 = vmatprep.subr.bf16.mxu0 %v1781
    %2704 = vmatpush1.bf16.msra.mxu0 %v1780
    %2705 = vmatprep.subr.bf16.mxu0 %v1789
    %2706 = vmatpush1.bf16.msra.mxu0 %v1788
    %2707 = vmatprep.subr.bf16.mxu0 %v1797
    %2708 = vmatpush1.bf16.msra.mxu0 %v1796
    %2709 = vmatprep.mubr.bf16.mxu0 %v2635
    %2710 = vmatmul.mubr.bf16.gmra.mrb[0].mxu0 %v2634
    %v2711 = vpop.f32.mrb[0].mxu0
    %v2712 = vadd.f32 0.0, %v2711
    %v2713 = vpop.f32.mrb[0].mxu0
    %v2714 = vadd.f32 0.0, %v2713
    %v2715 = vpop.f32.mrb[0].mxu0
    %v2716 = vpop.f32.mrb[0].mxu0
    %2717 = vdwg.mxu0
    %2718 = vmatprep.subr.bf16.mxu0 %v1679
    %2719 = vmatpush1.bf16.msra.mxu0 %v1678
    %2720 = vmatprep.subr.bf16.mxu0 %v1687
    %2721 = vmatpush1.bf16.msra.mxu0 %v1686
    %2722 = vmatprep.subr.bf16.mxu0 %v1695
    %2723 = vmatpush1.bf16.msra.mxu0 %v1694
    %2724 = vmatprep.subr.bf16.mxu0 %v1703
    %2725 = vmatpush1.bf16.msra.mxu0 %v1702
    %2726 = vmatprep.subr.bf16.mxu0 %v1711
    %2727 = vmatpush1.bf16.msra.mxu0 %v1710
    %2728 = vmatprep.subr.bf16.mxu0 %v1719
    %2729 = vmatpush1.bf16.msra.mxu0 %v1718
    %2730 = vmatprep.subr.bf16.mxu0 %v1727
    %2731 = vmatpush1.bf16.msra.mxu0 %v1726
    %2732 = vmatprep.subr.bf16.mxu0 %v1735
    %2733 = vmatpush1.bf16.msra.mxu0 %v1734
    %2734 = vmatprep.subr.bf16.mxu0 %v1743
    %2735 = vmatpush1.bf16.msra.mxu0 %v1742
    %2736 = vmatprep.subr.bf16.mxu0 %v1751
    %2737 = vmatpush1.bf16.msra.mxu0 %v1750
    %2738 = vmatprep.subr.bf16.mxu0 %v1759
    %2739 = vmatpush1.bf16.msra.mxu0 %v1758
    %2740 = vmatprep.subr.bf16.mxu0 %v1767
    %2741 = vmatpush1.bf16.msra.mxu0 %v1766
    %2742 = vmatprep.subr.bf16.mxu0 %v1775
    %2743 = vmatpush1.bf16.msra.mxu0 %v1774
    %2744 = vmatprep.subr.bf16.mxu0 %v1783
    %2745 = vmatpush1.bf16.msra.mxu0 %v1782
    %2746 = vmatprep.subr.bf16.mxu0 %v1791
    %2747 = vmatpush1.bf16.msra.mxu0 %v1790
    %2748 = vmatprep.subr.bf16.mxu0 %v1799
    %2749 = vmatpush1.bf16.msra.mxu0 %v1798
    %2750 = vmatprep.mubr.bf16.mxu0 %v2635
    %2751 = vmatmul.mubr.bf16.gmra.mrb[0].mxu0 %v2634
    %v2752 = vpop.f32.mrb[0].mxu0
    %v2753 = vadd.f32 0.0, %v2752
    %v2754 = vpop.f32.mrb[0].mxu0
    %v2755 = vadd.f32 0.0, %v2754
    %v2756 = vpop.f32.mrb[0].mxu0
    %v2757 = vpop.f32.mrb[0].mxu0
    %2758 = vdwg.mxu0
    %2759 = vmatprep.subr.bf16.mxu0 %v1681
    %2760 = vmatpush1.bf16.msra.mxu0 %v1680
    %2761 = vmatprep.subr.bf16.mxu0 %v1689
    %2762 = vmatpush1.bf16.msra.mxu0 %v1688
    %2763 = vmatprep.subr.bf16.mxu0 %v1697
    %2764 = vmatpush1.bf16.msra.mxu0 %v1696
    %2765 = vmatprep.subr.bf16.mxu0 %v1705
    %2766 = vmatpush1.bf16.msra.mxu0 %v1704
    %2767 = vmatprep.subr.bf16.mxu0 %v1713
    %2768 = vmatpush1.bf16.msra.mxu0 %v1712
    %2769 = vmatprep.subr.bf16.mxu0 %v1721
    %2770 = vmatpush1.bf16.msra.mxu0 %v1720
    %2771 = vmatprep.subr.bf16.mxu0 %v1729
    %2772 = vmatpush1.bf16.msra.mxu0 %v1728
    %2773 = vmatprep.subr.bf16.mxu0 %v1737
    %2774 = vmatpush1.bf16.msra.mxu0 %v1736
    %2775 = vmatprep.subr.bf16.mxu0 %v1745
    %2776 = vmatpush1.bf16.msra.mxu0 %v1744
    %2777 = vmatprep.subr.bf16.mxu0 %v1753
    %2778 = vmatpush1.bf16.msra.mxu0 %v1752
    %2779 = vmatprep.subr.bf16.mxu0 %v1761
    %2780 = vmatpush1.bf16.msra.mxu0 %v1760
    %2781 = vmatprep.subr.bf16.mxu0 %v1769
    %2782 = vmatpush1.bf16.msra.mxu0 %v1768
    %2783 = vmatprep.subr.bf16.mxu0 %v1777
    %2784 = vmatpush1.bf16.msra.mxu0 %v1776
    %2785 = vmatprep.subr.bf16.mxu0 %v1785
    %2786 = vmatpush1.bf16.msra.mxu0 %v1784
    %2787 = vmatprep.subr.bf16.mxu0 %v1793
    %2788 = vmatpush1.bf16.msra.mxu0 %v1792
    %2789 = vmatprep.subr.bf16.mxu0 %v1801
    %2790 = vmatpush1.bf16.msra.mxu0 %v1800
    %2791 = vmatprep.mubr.bf16.mxu0 %v2635
    %2792 = vmatmul.mubr.bf16.gmra.mrb[0].mxu0 %v2634
    %v2793 = vpop.f32.mrb[0].mxu0
    %v2794 = vadd.f32 0.0, %v2793
    %v2795 = vpop.f32.mrb[0].mxu0
    %v2796 = vadd.f32 0.0, %v2795
    %v2797 = vpop.f32.mrb[0].mxu0
    %v2798 = vpop.f32.mrb[0].mxu0
    %2799 = vdwg.mxu0
    %s2800 = scalar_lea.vmem [#allocation2], 192
    %v2801 = vld [vmem:[%s2800] sm:$0xff]
    %v2802 = vld [vmem:[%s2800 + $0x8] sm:$0xff]
    %v2803 = vld [vmem:[%s2800 + $0x10] sm:$0xff]
    %v2804 = vld [vmem:[%s2800 + $0x18] sm:$0xff]
    %v2805 = vadd.f32 %v2801, %v2671
    %v2806 = vadd.f32 %v2802, %v2673
    %v2807 = vadd.f32 %v2803, %v2712
    %v2808 = vadd.f32 %v2804, %v2714
    %s2809 = scalar_lea.vmem [#allocation2], 256
    %v2810 = vld [vmem:[%s2809 + $0x20] sm:$0xff]
    %v2811 = vld [vmem:[%s2809 + $0x28] sm:$0xff]
    %v2812 = vld [vmem:[%s2809 + $0x30] sm:$0xff]
    %v2813 = vld [vmem:[%s2809 + $0x38] sm:$0xff]
    %v2814 = vadd.f32 %v2810, %v2753
    %v2815 = vadd.f32 %v2811, %v2755
    %v2816 = vadd.f32 %v2812, %v2794
    %v2817 = vadd.f32 %v2813, %v2796
    %v2818 = vxor.u32 %v2805, 2147483648
    %v2819 = vxor.u32 %v2814, 2147483648
    %v2820 = vmul.f32 %v2818, 1.442695
    %v2821 = vpow.pop %v2820
    %v2822 = vmul.f32 %v2819, 1.442695
    %v2823 = vpow.pop %v2822
    %v2824 = vadd.f32 %v2821, 1.0
    %v2825 = vadd.f32 %v2823, 1.0
    %v2826 = vrcp.pop %v2824
    %v2827 = vmul.f32 1.0, %v2826
    %v2828 = vrcp.pop %v2825
    %v2829 = vmul.f32 1.0, %v2828
    %v2830 = vxor.u32 %v2806, 2147483648
    %v2831 = vxor.u32 %v2815, 2147483648
    %v2832 = vmul.f32 %v2830, 1.442695
    %v2833 = vpow.pop %v2832
    %v2834 = vmul.f32 %v2831, 1.442695
    %v2835 = vpow.pop %v2834
    %v2836 = vadd.f32 %v2833, 1.0
    %v2837 = vadd.f32 %v2835, 1.0
    %v2838 = vrcp.pop %v2836
    %v2839 = vmul.f32 1.0, %v2838
    %v2840 = vrcp.pop %v2837
    %v2841 = vmul.f32 1.0, %v2840
    %v2842 = vtanh.pop %v2807
    %v2843 = vtanh.pop %v2816
    %v2844 = vxor.u32 %v2808, 2147483648
    %v2845 = vxor.u32 %v2817, 2147483648
    %v2846 = vmul.f32 %v2844, 1.442695
    %v2847 = vpow.pop %v2846
    %v2848 = vmul.f32 %v2845, 1.442695
    %v2849 = vpow.pop %v2848
    %v2850 = vadd.f32 %v2847, 1.0
    %v2851 = vadd.f32 %v2849, 1.0
    %v2852 = vrcp.pop %v2850
    %v2853 = vmul.f32 1.0, %v2852
    %v2854 = vrcp.pop %v2851
    %v2855 = vmul.f32 1.0, %v2854
    %v2856 = vmul.f32 %v2839, %v2624
    %v2857 = vmul.f32 %v2841, %v2625
    %v2858 = vmul.f32 %v2827, %v2842
    %v2859 = vmul.f32 %v2829, %v2843
    %v2860 = vadd.f32 %v2856, %v2858
    %v2861 = vadd.f32 %v2857, %v2859
    %v2862 = vtanh.pop %v2860
    %v2863 = vtanh.pop %v2861
    %v2864 = vmul.f32 %v2853, %v2862
    %v2865 = vmul.f32 %v2855, %v2863
    %s2866 = scalar_lea.vmem [#allocation3], 48
    %2867 = vst [vmem:[%s2866] sm:$0xff] %v2864
    %s2868 = scalar_lea.vmem [#allocation3], 64
    %2869 = vst [vmem:[%s2868 + $0x8] sm:$0xff] %v2865
    %v2870 = vpack.c.bf16 %v2864, %v2864
    %v2871 = vpack.c.bf16 %v2865, %v2865
    %2872 = vmatprep.subr.bf16.mxu0 %v1675
    %2873 = vmatpush1.bf16.msra.mxu0 %v1674
    %2874 = vmatprep.subr.bf16.mxu0 %v1683
    %2875 = vmatpush1.bf16.msra.mxu0 %v1682
    %2876 = vmatprep.subr.bf16.mxu0 %v1691
    %2877 = vmatpush1.bf16.msra.mxu0 %v1690
    %2878 = vmatprep.subr.bf16.mxu0 %v1699
    %2879 = vmatpush1.bf16.msra.mxu0 %v1698
    %2880 = vmatprep.subr.bf16.mxu0 %v1707
    %2881 = vmatpush1.bf16.msra.mxu0 %v1706
    %2882 = vmatprep.subr.bf16.mxu0 %v1715
    %2883 = vmatpush1.bf16.msra.mxu0 %v1714
    %2884 = vmatprep.subr.bf16.mxu0 %v1723
    %2885 = vmatpush1.bf16.msra.mxu0 %v1722
    %2886 = vmatprep.subr.bf16.mxu0 %v1731
    %2887 = vmatpush1.bf16.msra.mxu0 %v1730
    %2888 = vmatprep.subr.bf16.mxu0 %v1739
    %2889 = vmatpush1.bf16.msra.mxu0 %v1738
    %2890 = vmatprep.subr.bf16.mxu0 %v1747
    %2891 = vmatpush1.bf16.msra.mxu0 %v1746
    %2892 = vmatprep.subr.bf16.mxu0 %v1755
    %2893 = vmatpush1.bf16.msra.mxu0 %v1754
    %2894 = vmatprep.subr.bf16.mxu0 %v1763
    %2895 = vmatpush1.bf16.msra.mxu0 %v1762
    %2896 = vmatprep.subr.bf16.mxu0 %v1771
    %2897 = vmatpush1.bf16.msra.mxu0 %v1770
    %2898 = vmatprep.subr.bf16.mxu0 %v1779
    %2899 = vmatpush1.bf16.msra.mxu0 %v1778
    %2900 = vmatprep.subr.bf16.mxu0 %v1787
    %2901 = vmatpush1.bf16.msra.mxu0 %v1786
    %2902 = vmatprep.subr.bf16.mxu0 %v1795
    %2903 = vmatpush1.bf16.msra.mxu0 %v1794
    %2904 = vmatprep.mubr.bf16.mxu0 %v2871
    %2905 = vmatmul.mubr.bf16.gmra.mrb[0].mxu0 %v2870
    %v2906 = vpop.f32.mrb[0].mxu0
    %v2907 = vadd.f32 0.0, %v2906
    %v2908 = vpop.f32.mrb[0].mxu0
    %v2909 = vadd.f32 0.0, %v2908
    %v2910 = vpop.f32.mrb[0].mxu0
    %v2911 = vpop.f32.mrb[0].mxu0
    %2912 = vdwg.mxu0
    %2913 = vmatprep.subr.bf16.mxu0 %v1677
    %2914 = vmatpush1.bf16.msra.mxu0 %v1676
    %2915 = vmatprep.subr.bf16.mxu0 %v1685
    %2916 = vmatpush1.bf16.msra.mxu0 %v1684
    %2917 = vmatprep.subr.bf16.mxu0 %v1693
    %2918 = vmatpush1.bf16.msra.mxu0 %v1692
    %2919 = vmatprep.subr.bf16.mxu0 %v1701
    %2920 = vmatpush1.bf16.msra.mxu0 %v1700
    %2921 = vmatprep.subr.bf16.mxu0 %v1709
    %2922 = vmatpush1.bf16.msra.mxu0 %v1708
    %2923 = vmatprep.subr.bf16.mxu0 %v1717
    %2924 = vmatpush1.bf16.msra.mxu0 %v1716
    %2925 = vmatprep.subr.bf16.mxu0 %v1725
    %2926 = vmatpush1.bf16.msra.mxu0 %v1724
    %2927 = vmatprep.subr.bf16.mxu0 %v1733
    %2928 = vmatpush1.bf16.msra.mxu0 %v1732
    %2929 = vmatprep.subr.bf16.mxu0 %v1741
    %2930 = vmatpush1.bf16.msra.mxu0 %v1740
    %2931 = vmatprep.subr.bf16.mxu0 %v1749
    %2932 = vmatpush1.bf16.msra.mxu0 %v1748
    %2933 = vmatprep.subr.bf16.mxu0 %v1757
    %2934 = vmatpush1.bf16.msra.mxu0 %v1756
    %2935 = vmatprep.subr.bf16.mxu0 %v1765
    %2936 = vmatpush1.bf16.msra.mxu0 %v1764
    %2937 = vmatprep.subr.bf16.mxu0 %v1773
    %2938 = vmatpush1.bf16.msra.mxu0 %v1772
    %2939 = vmatprep.subr.bf16.mxu0 %v1781
    %2940 = vmatpush1.bf16.msra.mxu0 %v1780
    %2941 = vmatprep.subr.bf16.mxu0 %v1789
    %2942 = vmatpush1.bf16.msra.mxu0 %v1788
    %2943 = vmatprep.subr.bf16.mxu0 %v1797
    %2944 = vmatpush1.bf16.msra.mxu0 %v1796
    %2945 = vmatprep.mubr.bf16.mxu0 %v2871
    %2946 = vmatmul.mubr.bf16.gmra.mrb[0].mxu0 %v2870
    %v2947 = vpop.f32.mrb[0].mxu0
    %v2948 = vadd.f32 0.0, %v2947
    %v2949 = vpop.f32.mrb[0].mxu0
    %v2950 = vadd.f32 0.0, %v2949
    %v2951 = vpop.f32.mrb[0].mxu0
    %v2952 = vpop.f32.mrb[0].mxu0
    %2953 = vdwg.mxu0
    %2954 = vmatprep.subr.bf16.mxu0 %v1679
    %2955 = vmatpush1.bf16.msra.mxu0 %v1678
    %2956 = vmatprep.subr.bf16.mxu0 %v1687
    %2957 = vmatpush1.bf16.msra.mxu0 %v1686
    %2958 = vmatprep.subr.bf16.mxu0 %v1695
    %2959 = vmatpush1.bf16.msra.mxu0 %v1694
    %2960 = vmatprep.subr.bf16.mxu0 %v1703
    %2961 = vmatpush1.bf16.msra.mxu0 %v1702
    %2962 = vmatprep.subr.bf16.mxu0 %v1711
    %2963 = vmatpush1.bf16.msra.mxu0 %v1710
    %2964 = vmatprep.subr.bf16.mxu0 %v1719
    %2965 = vmatpush1.bf16.msra.mxu0 %v1718
    %2966 = vmatprep.subr.bf16.mxu0 %v1727
    %2967 = vmatpush1.bf16.msra.mxu0 %v1726
    %2968 = vmatprep.subr.bf16.mxu0 %v1735
    %2969 = vmatpush1.bf16.msra.mxu0 %v1734
    %2970 = vmatprep.subr.bf16.mxu0 %v1743
    %2971 = vmatpush1.bf16.msra.mxu0 %v1742
    %2972 = vmatprep.subr.bf16.mxu0 %v1751
    %2973 = vmatpush1.bf16.msra.mxu0 %v1750
    %2974 = vmatprep.subr.bf16.mxu0 %v1759
    %2975 = vmatpush1.bf16.msra.mxu0 %v1758
    %2976 = vmatprep.subr.bf16.mxu0 %v1767
    %2977 = vmatpush1.bf16.msra.mxu0 %v1766
    %2978 = vmatprep.subr.bf16.mxu0 %v1775
    %2979 = vmatpush1.bf16.msra.mxu0 %v1774
    %2980 = vmatprep.subr.bf16.mxu0 %v1783
    %2981 = vmatpush1.bf16.msra.mxu0 %v1782
    %2982 = vmatprep.subr.bf16.mxu0 %v1791
    %2983 = vmatpush1.bf16.msra.mxu0 %v1790
    %2984 = vmatprep.subr.bf16.mxu0 %v1799
    %2985 = vmatpush1.bf16.msra.mxu0 %v1798
    %2986 = vmatprep.mubr.bf16.mxu0 %v2871
    %2987 = vmatmul.mubr.bf16.gmra.mrb[0].mxu0 %v2870
    %v2988 = vpop.f32.mrb[0].mxu0
    %v2989 = vadd.f32 0.0, %v2988
    %v2990 = vpop.f32.mrb[0].mxu0
    %v2991 = vadd.f32 0.0, %v2990
    %v2992 = vpop.f32.mrb[0].mxu0
    %v2993 = vpop.f32.mrb[0].mxu0
    %2994 = vdwg.mxu0
    %2995 = vmatprep.subr.bf16.mxu0 %v1681
    %2996 = vmatpush1.bf16.msra.mxu0 %v1680
    %2997 = vmatprep.subr.bf16.mxu0 %v1689
    %2998 = vmatpush1.bf16.msra.mxu0 %v1688
    %2999 = vmatprep.subr.bf16.mxu0 %v1697
    %3000 = vmatpush1.bf16.msra.mxu0 %v1696
    %3001 = vmatprep.subr.bf16.mxu0 %v1705
    %3002 = vmatpush1.bf16.msra.mxu0 %v1704
    %3003 = vmatprep.subr.bf16.mxu0 %v1713
    %3004 = vmatpush1.bf16.msra.mxu0 %v1712
    %3005 = vmatprep.subr.bf16.mxu0 %v1721
    %3006 = vmatpush1.bf16.msra.mxu0 %v1720
    %3007 = vmatprep.subr.bf16.mxu0 %v1729
    %3008 = vmatpush1.bf16.msra.mxu0 %v1728
    %3009 = vmatprep.subr.bf16.mxu0 %v1737
    %3010 = vmatpush1.bf16.msra.mxu0 %v1736
    %3011 = vmatprep.subr.bf16.mxu0 %v1745
    %3012 = vmatpush1.bf16.msra.mxu0 %v1744
    %3013 = vmatprep.subr.bf16.mxu0 %v1753
    %3014 = vmatpush1.bf16.msra.mxu0 %v1752
    %3015 = vmatprep.subr.bf16.mxu0 %v1761
    %3016 = vmatpush1.bf16.msra.mxu0 %v1760
    %3017 = vmatprep.subr.bf16.mxu0 %v1769
    %3018 = vmatpush1.bf16.msra.mxu0 %v1768
    %3019 = vmatprep.subr.bf16.mxu0 %v1777
    %3020 = vmatpush1.bf16.msra.mxu0 %v1776
    %3021 = vmatprep.subr.bf16.mxu0 %v1785
    %3022 = vmatpush1.bf16.msra.mxu0 %v1784
    %3023 = vmatprep.subr.bf16.mxu0 %v1793
    %3024 = vmatpush1.bf16.msra.mxu0 %v1792
    %3025 = vmatprep.subr.bf16.mxu0 %v1801
    %3026 = vmatpush1.bf16.msra.mxu0 %v1800
    %3027 = vmatprep.mubr.bf16.mxu0 %v2871
    %3028 = vmatmul.mubr.bf16.gmra.mrb[0].mxu0 %v2870
    %v3029 = vpop.f32.mrb[0].mxu0
    %v3030 = vadd.f32 0.0, %v3029
    %v3031 = vpop.f32.mrb[0].mxu0
    %v3032 = vadd.f32 0.0, %v3031
    %v3033 = vpop.f32.mrb[0].mxu0
    %v3034 = vpop.f32.mrb[0].mxu0
    %3035 = vdwg.mxu0
    %v3036 = vld [vmem:[%s2809] sm:$0xff]
    %v3037 = vld [vmem:[%s2809 + $0x8] sm:$0xff]
    %v3038 = vld [vmem:[%s2809 + $0x10] sm:$0xff]
    %v3039 = vld [vmem:[%s2809 + $0x18] sm:$0xff]
    %v3040 = vadd.f32 %v3036, %v2907
    %v3041 = vadd.f32 %v3037, %v2909
    %v3042 = vadd.f32 %v3038, %v2948
    %v3043 = vadd.f32 %v3039, %v2950
    %v3044 = vld [vmem:[%s2800 + $0x20] sm:$0xff]
    %v3045 = vld [vmem:[%s2800 + $0x28] sm:$0xff]
    %v3046 = vld [vmem:[%s2800 + $0x30] sm:$0xff]
    %v3047 = vld [vmem:[%s2800 + $0x38] sm:$0xff]
    %v3048 = vadd.f32 %v3044, %v2989
    %v3049 = vadd.f32 %v3045, %v2991
    %v3050 = vadd.f32 %v3046, %v3030
    %v3051 = vadd.f32 %v3047, %v3032
    %v3052 = vxor.u32 %v3040, 2147483648
    %v3053 = vxor.u32 %v3048, 2147483648
    %v3054 = vmul.f32 %v3052, 1.442695
    %v3055 = vpow.pop %v3054
    %v3056 = vmul.f32 %v3053, 1.442695
    %v3057 = vpow.pop %v3056
    %v3058 = vadd.f32 %v3055, 1.0
    %v3059 = vadd.f32 %v3057, 1.0
    %v3060 = vrcp.pop %v3058
    %v3061 = vmul.f32 1.0, %v3060
    %v3062 = vrcp.pop %v3059
    %v3063 = vmul.f32 1.0, %v3062
    %v3064 = vxor.u32 %v3041, 2147483648
    %v3065 = vxor.u32 %v3049, 2147483648
    %v3066 = vmul.f32 %v3064, 1.442695
    %v3067 = vpow.pop %v3066
    %v3068 = vmul.f32 %v3065, 1.442695
    %v3069 = vpow.pop %v3068
    %v3070 = vadd.f32 %v3067, 1.0
    %v3071 = vadd.f32 %v3069, 1.0
    %v3072 = vrcp.pop %v3070
    %v3073 = vmul.f32 1.0, %v3072
    %v3074 = vrcp.pop %v3071
    %v3075 = vmul.f32 1.0, %v3074
    %v3076 = vtanh.pop %v3042
    %v3077 = vtanh.pop %v3050
    %v3078 = vxor.u32 %v3043, 2147483648
    %v3079 = vxor.u32 %v3051, 2147483648
    %v3080 = vmul.f32 %v3078, 1.442695
    %v3081 = vpow.pop %v3080
    %v3082 = vmul.f32 %v3079, 1.442695
    %v3083 = vpow.pop %v3082
    %v3084 = vadd.f32 %v3081, 1.0
    %v3085 = vadd.f32 %v3083, 1.0
    %v3086 = vrcp.pop %v3084
    %v3087 = vmul.f32 1.0, %v3086
    %v3088 = vrcp.pop %v3085
    %v3089 = vmul.f32 1.0, %v3088
    %v3090 = vmul.f32 %v3073, %v2860
    %v3091 = vmul.f32 %v3075, %v2861
    %v3092 = vmul.f32 %v3061, %v3076
    %v3093 = vmul.f32 %v3063, %v3077
    %v3094 = vadd.f32 %v3090, %v3092
    %v3095 = vadd.f32 %v3091, %v3093
    %v3096 = vtanh.pop %v3094
    %v3097 = vtanh.pop %v3095
    %v3098 = vmul.f32 %v3087, %v3096
    %v3099 = vmul.f32 %v3089, %v3097
    %3100 = vst [vmem:[%s2868] sm:$0xff] %v3098
    %3101 = vst [vmem:[%s2866 + $0x8] sm:$0xff] %v3099
    %v3102 = vpack.c.bf16 %v3098, %v3098
    %v3103 = vpack.c.bf16 %v3099, %v3099
    %3104 = vmatprep.subr.bf16.mxu0 %v1675
    %3105 = vmatpush1.bf16.msra.mxu0 %v1674
    %3106 = vmatprep.subr.bf16.mxu0 %v1683
    %3107 = vmatpush1.bf16.msra.mxu0 %v1682
    %3108 = vmatprep.subr.bf16.mxu0 %v1691
    %3109 = vmatpush1.bf16.msra.mxu0 %v1690
    %3110 = vmatprep.subr.bf16.mxu0 %v1699
    %3111 = vmatpush1.bf16.msra.mxu0 %v1698
    %3112 = vmatprep.subr.bf16.mxu0 %v1707
    %3113 = vmatpush1.bf16.msra.mxu0 %v1706
    %3114 = vmatprep.subr.bf16.mxu0 %v1715
    %3115 = vmatpush1.bf16.msra.mxu0 %v1714
    %3116 = vmatprep.subr.bf16.mxu0 %v1723
    %3117 = vmatpush1.bf16.msra.mxu0 %v1722
    %3118 = vmatprep.subr.bf16.mxu0 %v1731
    %3119 = vmatpush1.bf16.msra.mxu0 %v1730
    %3120 = vmatprep.subr.bf16.mxu0 %v1739
    %3121 = vmatpush1.bf16.msra.mxu0 %v1738
    %3122 = vmatprep.subr.bf16.mxu0 %v1747
    %3123 = vmatpush1.bf16.msra.mxu0 %v1746
    %3124 = vmatprep.subr.bf16.mxu0 %v1755
    %3125 = vmatpush1.bf16.msra.mxu0 %v1754
    %3126 = vmatprep.subr.bf16.mxu0 %v1763
    %3127 = vmatpush1.bf16.msra.mxu0 %v1762
    %3128 = vmatprep.subr.bf16.mxu0 %v1771
    %3129 = vmatpush1.bf16.msra.mxu0 %v1770
    %3130 = vmatprep.subr.bf16.mxu0 %v1779
    %3131 = vmatpush1.bf16.msra.mxu0 %v1778
    %3132 = vmatprep.subr.bf16.mxu0 %v1787
    %3133 = vmatpush1.bf16.msra.mxu0 %v1786
    %3134 = vmatprep.subr.bf16.mxu0 %v1795
    %3135 = vmatpush1.bf16.msra.mxu0 %v1794
    %3136 = vmatprep.mubr.bf16.mxu0 %v3103
    %3137 = vmatmul.mubr.bf16.gmra.mrb[0].mxu0 %v3102
    %v3138 = vpop.f32.mrb[0].mxu0
    %v3139 = vadd.f32 0.0, %v3138
    %v3140 = vpop.f32.mrb[0].mxu0
    %v3141 = vadd.f32 0.0, %v3140
    %v3142 = vpop.f32.mrb[0].mxu0
    %v3143 = vpop.f32.mrb[0].mxu0
    %3144 = vdwg.mxu0
    %3145 = vmatprep.subr.bf16.mxu0 %v1677
    %3146 = vmatpush1.bf16.msra.mxu0 %v1676
    %3147 = vmatprep.subr.bf16.mxu0 %v1685
    %3148 = vmatpush1.bf16.msra.mxu0 %v1684
    %3149 = vmatprep.subr.bf16.mxu0 %v1693
    %3150 = vmatpush1.bf16.msra.mxu0 %v1692
    %3151 = vmatprep.subr.bf16.mxu0 %v1701
    %3152 = vmatpush1.bf16.msra.mxu0 %v1700
    %3153 = vmatprep.subr.bf16.mxu0 %v1709
    %3154 = vmatpush1.bf16.msra.mxu0 %v1708
    %3155 = vmatprep.subr.bf16.mxu0 %v1717
    %3156 = vmatpush1.bf16.msra.mxu0 %v1716
    %3157 = vmatprep.subr.bf16.mxu0 %v1725
    %3158 = vmatpush1.bf16.msra.mxu0 %v1724
    %3159 = vmatprep.subr.bf16.mxu0 %v1733
    %3160 = vmatpush1.bf16.msra.mxu0 %v1732
    %3161 = vmatprep.subr.bf16.mxu0 %v1741
    %3162 = vmatpush1.bf16.msra.mxu0 %v1740
    %3163 = vmatprep.subr.bf16.mxu0 %v1749
    %3164 = vmatpush1.bf16.msra.mxu0 %v1748
    %3165 = vmatprep.subr.bf16.mxu0 %v1757
    %3166 = vmatpush1.bf16.msra.mxu0 %v1756
    %3167 = vmatprep.subr.bf16.mxu0 %v1765
    %3168 = vmatpush1.bf16.msra.mxu0 %v1764
    %3169 = vmatprep.subr.bf16.mxu0 %v1773
    %3170 = vmatpush1.bf16.msra.mxu0 %v1772
    %3171 = vmatprep.subr.bf16.mxu0 %v1781
    %3172 = vmatpush1.bf16.msra.mxu0 %v1780
    %3173 = vmatprep.subr.bf16.mxu0 %v1789
    %3174 = vmatpush1.bf16.msra.mxu0 %v1788
    %3175 = vmatprep.subr.bf16.mxu0 %v1797
    %3176 = vmatpush1.bf16.msra.mxu0 %v1796
    %3177 = vmatprep.mubr.bf16.mxu0 %v3103
    %3178 = vmatmul.mubr.bf16.gmra.mrb[0].mxu0 %v3102
    %v3179 = vpop.f32.mrb[0].mxu0
    %v3180 = vadd.f32 0.0, %v3179
    %v3181 = vpop.f32.mrb[0].mxu0
    %v3182 = vadd.f32 0.0, %v3181
    %v3183 = vpop.f32.mrb[0].mxu0
    %v3184 = vpop.f32.mrb[0].mxu0
    %3185 = vdwg.mxu0
    %3186 = vmatprep.subr.bf16.mxu0 %v1679
    %3187 = vmatpush1.bf16.msra.mxu0 %v1678
    %3188 = vmatprep.subr.bf16.mxu0 %v1687
    %3189 = vmatpush1.bf16.msra.mxu0 %v1686
    %3190 = vmatprep.subr.bf16.mxu0 %v1695
    %3191 = vmatpush1.bf16.msra.mxu0 %v1694
    %3192 = vmatprep.subr.bf16.mxu0 %v1703
    %3193 = vmatpush1.bf16.msra.mxu0 %v1702
    %3194 = vmatprep.subr.bf16.mxu0 %v1711
    %3195 = vmatpush1.bf16.msra.mxu0 %v1710
    %3196 = vmatprep.subr.bf16.mxu0 %v1719
    %3197 = vmatpush1.bf16.msra.mxu0 %v1718
    %3198 = vmatprep.subr.bf16.mxu0 %v1727
    %3199 = vmatpush1.bf16.msra.mxu0 %v1726
    %3200 = vmatprep.subr.bf16.mxu0 %v1735
    %3201 = vmatpush1.bf16.msra.mxu0 %v1734
    %3202 = vmatprep.subr.bf16.mxu0 %v1743
    %3203 = vmatpush1.bf16.msra.mxu0 %v1742
    %3204 = vmatprep.subr.bf16.mxu0 %v1751
    %3205 = vmatpush1.bf16.msra.mxu0 %v1750
    %3206 = vmatprep.subr.bf16.mxu0 %v1759
    %3207 = vmatpush1.bf16.msra.mxu0 %v1758
    %3208 = vmatprep.subr.bf16.mxu0 %v1767
    %3209 = vmatpush1.bf16.msra.mxu0 %v1766
    %3210 = vmatprep.subr.bf16.mxu0 %v1775
    %3211 = vmatpush1.bf16.msra.mxu0 %v1774
    %3212 = vmatprep.subr.bf16.mxu0 %v1783
    %3213 = vmatpush1.bf16.msra.mxu0 %v1782
    %3214 = vmatprep.subr.bf16.mxu0 %v1791
    %3215 = vmatpush1.bf16.msra.mxu0 %v1790
    %3216 = vmatprep.subr.bf16.mxu0 %v1799
    %3217 = vmatpush1.bf16.msra.mxu0 %v1798
    %3218 = vmatprep.mubr.bf16.mxu0 %v3103
    %3219 = vmatmul.mubr.bf16.gmra.mrb[0].mxu0 %v3102
    %v3220 = vpop.f32.mrb[0].mxu0
    %v3221 = vadd.f32 0.0, %v3220
    %v3222 = vpop.f32.mrb[0].mxu0
    %v3223 = vadd.f32 0.0, %v3222
    %v3224 = vpop.f32.mrb[0].mxu0
    %v3225 = vpop.f32.mrb[0].mxu0
    %3226 = vdwg.mxu0
    %3227 = vmatprep.subr.bf16.mxu0 %v1681
    %3228 = vmatpush1.bf16.msra.mxu0 %v1680
    %3229 = vmatprep.subr.bf16.mxu0 %v1689
    %3230 = vmatpush1.bf16.msra.mxu0 %v1688
    %3231 = vmatprep.subr.bf16.mxu0 %v1697
    %3232 = vmatpush1.bf16.msra.mxu0 %v1696
    %3233 = vmatprep.subr.bf16.mxu0 %v1705
    %3234 = vmatpush1.bf16.msra.mxu0 %v1704
    %3235 = vmatprep.subr.bf16.mxu0 %v1713
    %3236 = vmatpush1.bf16.msra.mxu0 %v1712
    %3237 = vmatprep.subr.bf16.mxu0 %v1721
    %3238 = vmatpush1.bf16.msra.mxu0 %v1720
    %3239 = vmatprep.subr.bf16.mxu0 %v1729
    %3240 = vmatpush1.bf16.msra.mxu0 %v1728
    %3241 = vmatprep.subr.bf16.mxu0 %v1737
    %3242 = vmatpush1.bf16.msra.mxu0 %v1736
    %3243 = vmatprep.subr.bf16.mxu0 %v1745
    %3244 = vmatpush1.bf16.msra.mxu0 %v1744
    %3245 = vmatprep.subr.bf16.mxu0 %v1753
    %3246 = vmatpush1.bf16.msra.mxu0 %v1752
    %3247 = vmatprep.subr.bf16.mxu0 %v1761
    %3248 = vmatpush1.bf16.msra.mxu0 %v1760
    %3249 = vmatprep.subr.bf16.mxu0 %v1769
    %3250 = vmatpush1.bf16.msra.mxu0 %v1768
    %3251 = vmatprep.subr.bf16.mxu0 %v1777
    %3252 = vmatpush1.bf16.msra.mxu0 %v1776
    %3253 = vmatprep.subr.bf16.mxu0 %v1785
    %3254 = vmatpush1.bf16.msra.mxu0 %v1784
    %3255 = vmatprep.subr.bf16.mxu0 %v1793
    %3256 = vmatpush1.bf16.msra.mxu0 %v1792
    %3257 = vmatprep.subr.bf16.mxu0 %v1801
    %3258 = vmatpush1.bf16.msra.mxu0 %v1800
    %3259 = vmatprep.mubr.bf16.mxu0 %v3103
    %3260 = vmatmul.mubr.bf16.gmra.mrb[0].mxu0 %v3102
    %v3261 = vpop.f32.mrb[0].mxu0
    %v3262 = vadd.f32 0.0, %v3261
    %v3263 = vpop.f32.mrb[0].mxu0
    %v3264 = vadd.f32 0.0, %v3263
    %v3265 = vpop.f32.mrb[0].mxu0
    %v3266 = vpop.f32.mrb[0].mxu0
    %3267 = vdwg.mxu0
    %v3268 = vld [vmem:[%s2573] sm:$0xff]
    %v3269 = vld [vmem:[%s2573 + $0x8] sm:$0xff]
    %v3270 = vld [vmem:[%s2573 + $0x10] sm:$0xff]
    %v3271 = vld [vmem:[%s2573 + $0x18] sm:$0xff]
    %v3272 = vadd.f32 %v3268, %v3139
    %v3273 = vadd.f32 %v3269, %v3141
    %v3274 = vadd.f32 %v3270, %v3180
    %v3275 = vadd.f32 %v3271, %v3182
    %v3276 = vld [vmem:[%s2564 + $0x20] sm:$0xff]
    %v3277 = vld [vmem:[%s2564 + $0x28] sm:$0xff]
    %v3278 = vld [vmem:[%s2564 + $0x30] sm:$0xff]
    %v3279 = vld [vmem:[%s2564 + $0x38] sm:$0xff]
    %v3280 = vadd.f32 %v3276, %v3221
    %v3281 = vadd.f32 %v3277, %v3223
    %v3282 = vadd.f32 %v3278, %v3262
    %v3283 = vadd.f32 %v3279, %v3264
    %v3284 = vxor.u32 %v3272, 2147483648
    %v3285 = vxor.u32 %v3280, 2147483648
    %v3286 = vmul.f32 %v3284, 1.442695
    %v3287 = vpow.pop %v3286
    %v3288 = vmul.f32 %v3285, 1.442695
    %v3289 = vpow.pop %v3288
    %v3290 = vadd.f32 %v3287, 1.0
    %v3291 = vadd.f32 %v3289, 1.0
    %v3292 = vrcp.pop %v3290
    %v3293 = vmul.f32 1.0, %v3292
    %v3294 = vrcp.pop %v3291
    %v3295 = vmul.f32 1.0, %v3294
    %v3296 = vxor.u32 %v3273, 2147483648
    %v3297 = vxor.u32 %v3281, 2147483648
    %v3298 = vmul.f32 %v3296, 1.442695
    %v3299 = vpow.pop %v3298
    %v3300 = vmul.f32 %v3297, 1.442695
    %v3301 = vpow.pop %v3300
    %v3302 = vadd.f32 %v3299, 1.0
    %v3303 = vadd.f32 %v3301, 1.0
    %v3304 = vrcp.pop %v3302
    %v3305 = vmul.f32 1.0, %v3304
    %v3306 = vrcp.pop %v3303
    %v3307 = vmul.f32 1.0, %v3306
    %v3308 = vtanh.pop %v3274
    %v3309 = vtanh.pop %v3282
    %v3310 = vxor.u32 %v3275, 2147483648
    %v3311 = vxor.u32 %v3283, 2147483648
    %v3312 = vmul.f32 %v3310, 1.442695
    %v3313 = vpow.pop %v3312
    %v3314 = vmul.f32 %v3311, 1.442695
    %v3315 = vpow.pop %v3314
    %v3316 = vadd.f32 %v3313, 1.0
    %v3317 = vadd.f32 %v3315, 1.0
    %v3318 = vrcp.pop %v3316
    %v3319 = vmul.f32 1.0, %v3318
    %v3320 = vrcp.pop %v3317
    %v3321 = vmul.f32 1.0, %v3320
    %v3322 = vmul.f32 %v3305, %v3094
    %v3323 = vmul.f32 %v3307, %v3095
    %v3324 = vmul.f32 %v3293, %v3308
    %v3325 = vmul.f32 %v3295, %v3309
    %v3326 = vadd.f32 %v3322, %v3324
    %v3327 = vadd.f32 %v3323, %v3325
    %v3328 = vtanh.pop %v3326
    %v3329 = vtanh.pop %v3327
    %v3330 = vmul.f32 %v3319, %v3328
    %v3331 = vmul.f32 %v3321, %v3329
    %3332 = vst [vmem:[%s2632] sm:$0xff] %v3330
    %3333 = vst [vmem:[%s2630 + $0x8] sm:$0xff] %v3331
    %v3334 = vpack.c.bf16 %v3330, %v3330
    %v3335 = vpack.c.bf16 %v3331, %v3331
    %3336 = vmatprep.subr.bf16.mxu0 %v1675
    %3337 = vmatpush1.bf16.msra.mxu0 %v1674
    %3338 = vmatprep.subr.bf16.mxu0 %v1683
    %3339 = vmatpush1.bf16.msra.mxu0 %v1682
    %3340 = vmatprep.subr.bf16.mxu0 %v1691
    %3341 = vmatpush1.bf16.msra.mxu0 %v1690
    %3342 = vmatprep.subr.bf16.mxu0 %v1699
    %3343 = vmatpush1.bf16.msra.mxu0 %v1698
    %3344 = vmatprep.subr.bf16.mxu0 %v1707
    %3345 = vmatpush1.bf16.msra.mxu0 %v1706
    %3346 = vmatprep.subr.bf16.mxu0 %v1715
    %3347 = vmatpush1.bf16.msra.mxu0 %v1714
    %3348 = vmatprep.subr.bf16.mxu0 %v1723
    %3349 = vmatpush1.bf16.msra.mxu0 %v1722
    %3350 = vmatprep.subr.bf16.mxu0 %v1731
    %3351 = vmatpush1.bf16.msra.mxu0 %v1730
    %3352 = vmatprep.subr.bf16.mxu0 %v1739
    %3353 = vmatpush1.bf16.msra.mxu0 %v1738
    %3354 = vmatprep.subr.bf16.mxu0 %v1747
    %3355 = vmatpush1.bf16.msra.mxu0 %v1746
    %3356 = vmatprep.subr.bf16.mxu0 %v1755
    %3357 = vmatpush1.bf16.msra.mxu0 %v1754
    %3358 = vmatprep.subr.bf16.mxu0 %v1763
    %3359 = vmatpush1.bf16.msra.mxu0 %v1762
    %3360 = vmatprep.subr.bf16.mxu0 %v1771
    %3361 = vmatpush1.bf16.msra.mxu0 %v1770
    %3362 = vmatprep.subr.bf16.mxu0 %v1779
    %3363 = vmatpush1.bf16.msra.mxu0 %v1778
    %3364 = vmatprep.subr.bf16.mxu0 %v1787
    %3365 = vmatpush1.bf16.msra.mxu0 %v1786
    %3366 = vmatprep.subr.bf16.mxu0 %v1795
    %3367 = vmatpush1.bf16.msra.mxu0 %v1794
    %3368 = vmatprep.mubr.bf16.mxu0 %v3335
    %3369 = vmatmul.mubr.bf16.gmra.mrb[0].mxu0 %v3334
    %v3370 = vpop.f32.mrb[0].mxu0
    %v3371 = vadd.f32 0.0, %v3370
    %v3372 = vpop.f32.mrb[0].mxu0
    %v3373 = vadd.f32 0.0, %v3372
    %v3374 = vpop.f32.mrb[0].mxu0
    %v3375 = vpop.f32.mrb[0].mxu0
    %3376 = vdwg.mxu0
    %3377 = vmatprep.subr.bf16.mxu0 %v1677
    %3378 = vmatpush1.bf16.msra.mxu0 %v1676
    %3379 = vmatprep.subr.bf16.mxu0 %v1685
    %3380 = vmatpush1.bf16.msra.mxu0 %v1684
    %3381 = vmatprep.subr.bf16.mxu0 %v1693
    %3382 = vmatpush1.bf16.msra.mxu0 %v1692
    %3383 = vmatprep.subr.bf16.mxu0 %v1701
    %3384 = vmatpush1.bf16.msra.mxu0 %v1700
    %3385 = vmatprep.subr.bf16.mxu0 %v1709
    %3386 = vmatpush1.bf16.msra.mxu0 %v1708
    %3387 = vmatprep.subr.bf16.mxu0 %v1717
    %3388 = vmatpush1.bf16.msra.mxu0 %v1716
    %3389 = vmatprep.subr.bf16.mxu0 %v1725
    %3390 = vmatpush1.bf16.msra.mxu0 %v1724
    %3391 = vmatprep.subr.bf16.mxu0 %v1733
    %3392 = vmatpush1.bf16.msra.mxu0 %v1732
    %3393 = vmatprep.subr.bf16.mxu0 %v1741
    %3394 = vmatpush1.bf16.msra.mxu0 %v1740
    %3395 = vmatprep.subr.bf16.mxu0 %v1749
    %3396 = vmatpush1.bf16.msra.mxu0 %v1748
    %3397 = vmatprep.subr.bf16.mxu0 %v1757
    %3398 = vmatpush1.bf16.msra.mxu0 %v1756
    %3399 = vmatprep.subr.bf16.mxu0 %v1765
    %3400 = vmatpush1.bf16.msra.mxu0 %v1764
    %3401 = vmatprep.subr.bf16.mxu0 %v1773
    %3402 = vmatpush1.bf16.msra.mxu0 %v1772
    %3403 = vmatprep.subr.bf16.mxu0 %v1781
    %3404 = vmatpush1.bf16.msra.mxu0 %v1780
    %3405 = vmatprep.subr.bf16.mxu0 %v1789
    %3406 = vmatpush1.bf16.msra.mxu0 %v1788
    %3407 = vmatprep.subr.bf16.mxu0 %v1797
    %3408 = vmatpush1.bf16.msra.mxu0 %v1796
    %3409 = vmatprep.mubr.bf16.mxu0 %v3335
    %3410 = vmatmul.mubr.bf16.gmra.mrb[0].mxu0 %v3334
    %v3411 = vpop.f32.mrb[0].mxu0
    %v3412 = vadd.f32 0.0, %v3411
    %v3413 = vpop.f32.mrb[0].mxu0
    %v3414 = vadd.f32 0.0, %v3413
    %v3415 = vpop.f32.mrb[0].mxu0
    %v3416 = vpop.f32.mrb[0].mxu0
    %3417 = vdwg.mxu0
    %3418 = vmatprep.subr.bf16.mxu0 %v1679
    %3419 = vmatpush1.bf16.msra.mxu0 %v1678
    %3420 = vmatprep.subr.bf16.mxu0 %v1687
    %3421 = vmatpush1.bf16.msra.mxu0 %v1686
    %3422 = vmatprep.subr.bf16.mxu0 %v1695
    %3423 = vmatpush1.bf16.msra.mxu0 %v1694
    %3424 = vmatprep.subr.bf16.mxu0 %v1703
    %3425 = vmatpush1.bf16.msra.mxu0 %v1702
    %3426 = vmatprep.subr.bf16.mxu0 %v1711
    %3427 = vmatpush1.bf16.msra.mxu0 %v1710
    %3428 = vmatprep.subr.bf16.mxu0 %v1719
    %3429 = vmatpush1.bf16.msra.mxu0 %v1718
    %3430 = vmatprep.subr.bf16.mxu0 %v1727
    %3431 = vmatpush1.bf16.msra.mxu0 %v1726
    %3432 = vmatprep.subr.bf16.mxu0 %v1735
    %3433 = vmatpush1.bf16.msra.mxu0 %v1734
    %3434 = vmatprep.subr.bf16.mxu0 %v1743
    %3435 = vmatpush1.bf16.msra.mxu0 %v1742
    %3436 = vmatprep.subr.bf16.mxu0 %v1751
    %3437 = vmatpush1.bf16.msra.mxu0 %v1750
    %3438 = vmatprep.subr.bf16.mxu0 %v1759
    %3439 = vmatpush1.bf16.msra.mxu0 %v1758
    %3440 = vmatprep.subr.bf16.mxu0 %v1767
    %3441 = vmatpush1.bf16.msra.mxu0 %v1766
    %3442 = vmatprep.subr.bf16.mxu0 %v1775
    %3443 = vmatpush1.bf16.msra.mxu0 %v1774
    %3444 = vmatprep.subr.bf16.mxu0 %v1783
    %3445 = vmatpush1.bf16.msra.mxu0 %v1782
    %3446 = vmatprep.subr.bf16.mxu0 %v1791
    %3447 = vmatpush1.bf16.msra.mxu0 %v1790
    %3448 = vmatprep.subr.bf16.mxu0 %v1799
    %3449 = vmatpush1.bf16.msra.mxu0 %v1798
    %3450 = vmatprep.mubr.bf16.mxu0 %v3335
    %3451 = vmatmul.mubr.bf16.gmra.mrb[0].mxu0 %v3334
    %v3452 = vpop.f32.mrb[0].mxu0
    %v3453 = vadd.f32 0.0, %v3452
    %v3454 = vpop.f32.mrb[0].mxu0
    %v3455 = vadd.f32 0.0, %v3454
    %v3456 = vpop.f32.mrb[0].mxu0
    %v3457 = vpop.f32.mrb[0].mxu0
    %3458 = vdwg.mxu0
    %3459 = vmatprep.subr.bf16.mxu0 %v1681
    %3460 = vmatpush1.bf16.msra.mxu0 %v1680
    %3461 = vmatprep.subr.bf16.mxu0 %v1689
    %3462 = vmatpush1.bf16.msra.mxu0 %v1688
    %3463 = vmatprep.subr.bf16.mxu0 %v1697
    %3464 = vmatpush1.bf16.msra.mxu0 %v1696
    %3465 = vmatprep.subr.bf16.mxu0 %v1705
    %3466 = vmatpush1.bf16.msra.mxu0 %v1704
    %3467 = vmatprep.subr.bf16.mxu0 %v1713
    %3468 = vmatpush1.bf16.msra.mxu0 %v1712
    %3469 = vmatprep.subr.bf16.mxu0 %v1721
    %3470 = vmatpush1.bf16.msra.mxu0 %v1720
    %3471 = vmatprep.subr.bf16.mxu0 %v1729
    %3472 = vmatpush1.bf16.msra.mxu0 %v1728
    %3473 = vmatprep.subr.bf16.mxu0 %v1737
    %3474 = vmatpush1.bf16.msra.mxu0 %v1736
    %3475 = vmatprep.subr.bf16.mxu0 %v1745
    %3476 = vmatpush1.bf16.msra.mxu0 %v1744
    %3477 = vmatprep.subr.bf16.mxu0 %v1753
    %3478 = vmatpush1.bf16.msra.mxu0 %v1752
    %3479 = vmatprep.subr.bf16.mxu0 %v1761
    %3480 = vmatpush1.bf16.msra.mxu0 %v1760
    %3481 = vmatprep.subr.bf16.mxu0 %v1769
    %3482 = vmatpush1.bf16.msra.mxu0 %v1768
    %3483 = vmatprep.subr.bf16.mxu0 %v1777
    %3484 = vmatpush1.bf16.msra.mxu0 %v1776
    %3485 = vmatprep.subr.bf16.mxu0 %v1785
    %3486 = vmatpush1.bf16.msra.mxu0 %v1784
    %3487 = vmatprep.subr.bf16.mxu0 %v1793
    %3488 = vmatpush1.bf16.msra.mxu0 %v1792
    %3489 = vmatprep.subr.bf16.mxu0 %v1801
    %3490 = vmatpush1.bf16.msra.mxu0 %v1800
    %3491 = vmatprep.mubr.bf16.mxu0 %v3335
    %3492 = vmatmul.mubr.bf16.gmra.mrb[0].mxu0 %v3334
    %v3493 = vpop.f32.mrb[0].mxu0
    %v3494 = vadd.f32 0.0, %v3493
    %v3495 = vpop.f32.mrb[0].mxu0
    %v3496 = vadd.f32 0.0, %v3495
    %v3497 = vpop.f32.mrb[0].mxu0
    %v3498 = vpop.f32.mrb[0].mxu0
    %3499 = vdwg.mxu0
    %v3500 = vld [vmem:[%s2337] sm:$0xff]
    %v3501 = vld [vmem:[%s2337 + $0x8] sm:$0xff]
    %v3502 = vld [vmem:[%s2337 + $0x10] sm:$0xff]
    %v3503 = vld [vmem:[%s2337 + $0x18] sm:$0xff]
    %v3504 = vadd.f32 %v3500, %v3371
    %v3505 = vadd.f32 %v3501, %v3373
    %v3506 = vadd.f32 %v3502, %v3412
    %v3507 = vadd.f32 %v3503, %v3414
    %v3508 = vld [vmem:[%s2328 + $0x20] sm:$0xff]
    %v3509 = vld [vmem:[%s2328 + $0x28] sm:$0xff]
    %v3510 = vld [vmem:[%s2328 + $0x30] sm:$0xff]
    %v3511 = vld [vmem:[%s2328 + $0x38] sm:$0xff]
    %v3512 = vadd.f32 %v3508, %v3453
    %v3513 = vadd.f32 %v3509, %v3455
    %v3514 = vadd.f32 %v3510, %v3494
    %v3515 = vadd.f32 %v3511, %v3496
    %v3516 = vxor.u32 %v3504, 2147483648
    %v3517 = vxor.u32 %v3512, 2147483648
    %v3518 = vmul.f32 %v3516, 1.442695
    %v3519 = vpow.pop %v3518
    %v3520 = vmul.f32 %v3517, 1.442695
    %v3521 = vpow.pop %v3520
    %v3522 = vadd.f32 %v3519, 1.0
    %v3523 = vadd.f32 %v3521, 1.0
    %v3524 = vrcp.pop %v3522
    %v3525 = vmul.f32 1.0, %v3524
    %v3526 = vrcp.pop %v3523
    %v3527 = vmul.f32 1.0, %v3526
    %v3528 = vxor.u32 %v3505, 2147483648
    %v3529 = vxor.u32 %v3513, 2147483648
    %v3530 = vmul.f32 %v3528, 1.442695
    %v3531 = vpow.pop %v3530
    %v3532 = vmul.f32 %v3529, 1.442695
    %v3533 = vpow.pop %v3532
    %v3534 = vadd.f32 %v3531, 1.0
    %v3535 = vadd.f32 %v3533, 1.0
    %v3536 = vrcp.pop %v3534
    %v3537 = vmul.f32 1.0, %v3536
    %v3538 = vrcp.pop %v3535
    %v3539 = vmul.f32 1.0, %v3538
    %v3540 = vtanh.pop %v3506
    %v3541 = vtanh.pop %v3514
    %v3542 = vxor.u32 %v3507, 2147483648
    %v3543 = vxor.u32 %v3515, 2147483648
    %v3544 = vmul.f32 %v3542, 1.442695
    %v3545 = vpow.pop %v3544
    %v3546 = vmul.f32 %v3543, 1.442695
    %v3547 = vpow.pop %v3546
    %v3548 = vadd.f32 %v3545, 1.0
    %v3549 = vadd.f32 %v3547, 1.0
    %v3550 = vrcp.pop %v3548
    %v3551 = vmul.f32 1.0, %v3550
    %v3552 = vrcp.pop %v3549
    %v3553 = vmul.f32 1.0, %v3552
    %v3554 = vmul.f32 %v3537, %v3326
    %v3555 = vmul.f32 %v3539, %v3327
    %v3556 = vmul.f32 %v3525, %v3540
    %v3557 = vmul.f32 %v3527, %v3541
    %v3558 = vadd.f32 %v3554, %v3556
    %v3559 = vadd.f32 %v3555, %v3557
    %v3560 = vtanh.pop %v3558
    %v3561 = vtanh.pop %v3559
    %v3562 = vmul.f32 %v3551, %v3560
    %v3563 = vmul.f32 %v3553, %v3561
    %3564 = vst [vmem:[%s2396] sm:$0xff] %v3562
    %3565 = vst [vmem:[%s2394 + $0x8] sm:$0xff] %v3563
    %v3566 = vpack.c.bf16 %v3562, %v3562
    %v3567 = vpack.c.bf16 %v3563, %v3563
    %3568 = vmatprep.subr.bf16.mxu0 %v1675
    %3569 = vmatpush1.bf16.msra.mxu0 %v1674
    %3570 = vmatprep.subr.bf16.mxu0 %v1683
    %3571 = vmatpush1.bf16.msra.mxu0 %v1682
    %3572 = vmatprep.subr.bf16.mxu0 %v1691
    %3573 = vmatpush1.bf16.msra.mxu0 %v1690
    %3574 = vmatprep.subr.bf16.mxu0 %v1699
    %3575 = vmatpush1.bf16.msra.mxu0 %v1698
    %3576 = vmatprep.subr.bf16.mxu0 %v1707
    %3577 = vmatpush1.bf16.msra.mxu0 %v1706
    %3578 = vmatprep.subr.bf16.mxu0 %v1715
    %3579 = vmatpush1.bf16.msra.mxu0 %v1714
    %3580 = vmatprep.subr.bf16.mxu0 %v1723
    %3581 = vmatpush1.bf16.msra.mxu0 %v1722
    %3582 = vmatprep.subr.bf16.mxu0 %v1731
    %3583 = vmatpush1.bf16.msra.mxu0 %v1730
    %3584 = vmatprep.subr.bf16.mxu0 %v1739
    %3585 = vmatpush1.bf16.msra.mxu0 %v1738
    %3586 = vmatprep.subr.bf16.mxu0 %v1747
    %3587 = vmatpush1.bf16.msra.mxu0 %v1746
    %3588 = vmatprep.subr.bf16.mxu0 %v1755
    %3589 = vmatpush1.bf16.msra.mxu0 %v1754
    %3590 = vmatprep.subr.bf16.mxu0 %v1763
    %3591 = vmatpush1.bf16.msra.mxu0 %v1762
    %3592 = vmatprep.subr.bf16.mxu0 %v1771
    %3593 = vmatpush1.bf16.msra.mxu0 %v1770
    %3594 = vmatprep.subr.bf16.mxu0 %v1779
    %3595 = vmatpush1.bf16.msra.mxu0 %v1778
    %3596 = vmatprep.subr.bf16.mxu0 %v1787
    %3597 = vmatpush1.bf16.msra.mxu0 %v1786
    %3598 = vmatprep.subr.bf16.mxu0 %v1795
    %3599 = vmatpush1.bf16.msra.mxu0 %v1794
    %3600 = vmatprep.mubr.bf16.mxu0 %v3567
    %3601 = vmatmul.mubr.bf16.gmra.mrb[0].mxu0 %v3566
    %v3602 = vpop.f32.mrb[0].mxu0
    %v3603 = vadd.f32 0.0, %v3602
    %v3604 = vpop.f32.mrb[0].mxu0
    %v3605 = vadd.f32 0.0, %v3604
    %v3606 = vpop.f32.mrb[0].mxu0
    %v3607 = vpop.f32.mrb[0].mxu0
    %3608 = vdwg.mxu0
    %3609 = vmatprep.subr.bf16.mxu0 %v1677
    %3610 = vmatpush1.bf16.msra.mxu0 %v1676
    %3611 = vmatprep.subr.bf16.mxu0 %v1685
    %3612 = vmatpush1.bf16.msra.mxu0 %v1684
    %3613 = vmatprep.subr.bf16.mxu0 %v1693
    %3614 = vmatpush1.bf16.msra.mxu0 %v1692
    %3615 = vmatprep.subr.bf16.mxu0 %v1701
    %3616 = vmatpush1.bf16.msra.mxu0 %v1700
    %3617 = vmatprep.subr.bf16.mxu0 %v1709
    %3618 = vmatpush1.bf16.msra.mxu0 %v1708
    %3619 = vmatprep.subr.bf16.mxu0 %v1717
    %3620 = vmatpush1.bf16.msra.mxu0 %v1716
    %3621 = vmatprep.subr.bf16.mxu0 %v1725
    %3622 = vmatpush1.bf16.msra.mxu0 %v1724
    %3623 = vmatprep.subr.bf16.mxu0 %v1733
    %3624 = vmatpush1.bf16.msra.mxu0 %v1732
    %3625 = vmatprep.subr.bf16.mxu0 %v1741
    %3626 = vmatpush1.bf16.msra.mxu0 %v1740
    %3627 = vmatprep.subr.bf16.mxu0 %v1749
    %3628 = vmatpush1.bf16.msra.mxu0 %v1748
    %3629 = vmatprep.subr.bf16.mxu0 %v1757
    %3630 = vmatpush1.bf16.msra.mxu0 %v1756
    %3631 = vmatprep.subr.bf16.mxu0 %v1765
    %3632 = vmatpush1.bf16.msra.mxu0 %v1764
    %3633 = vmatprep.subr.bf16.mxu0 %v1773
    %3634 = vmatpush1.bf16.msra.mxu0 %v1772
    %3635 = vmatprep.subr.bf16.mxu0 %v1781
    %3636 = vmatpush1.bf16.msra.mxu0 %v1780
    %3637 = vmatprep.subr.bf16.mxu0 %v1789
    %3638 = vmatpush1.bf16.msra.mxu0 %v1788
    %3639 = vmatprep.subr.bf16.mxu0 %v1797
    %3640 = vmatpush1.bf16.msra.mxu0 %v1796
    %3641 = vmatprep.mubr.bf16.mxu0 %v3567
    %3642 = vmatmul.mubr.bf16.gmra.mrb[0].mxu0 %v3566
    %v3643 = vpop.f32.mrb[0].mxu0
    %v3644 = vadd.f32 0.0, %v3643
    %v3645 = vpop.f32.mrb[0].mxu0
    %v3646 = vadd.f32 0.0, %v3645
    %v3647 = vpop.f32.mrb[0].mxu0
    %v3648 = vpop.f32.mrb[0].mxu0
    %3649 = vdwg.mxu0
    %3650 = vmatprep.subr.bf16.mxu0 %v1679
    %3651 = vmatpush1.bf16.msra.mxu0 %v1678
    %3652 = vmatprep.subr.bf16.mxu0 %v1687
    %3653 = vmatpush1.bf16.msra.mxu0 %v1686
    %3654 = vmatprep.subr.bf16.mxu0 %v1695
    %3655 = vmatpush1.bf16.msra.mxu0 %v1694
    %3656 = vmatprep.subr.bf16.mxu0 %v1703
    %3657 = vmatpush1.bf16.msra.mxu0 %v1702
    %3658 = vmatprep.subr.bf16.mxu0 %v1711
    %3659 = vmatpush1.bf16.msra.mxu0 %v1710
    %3660 = vmatprep.subr.bf16.mxu0 %v1719
    %3661 = vmatpush1.bf16.msra.mxu0 %v1718
    %3662 = vmatprep.subr.bf16.mxu0 %v1727
    %3663 = vmatpush1.bf16.msra.mxu0 %v1726
    %3664 = vmatprep.subr.bf16.mxu0 %v1735
    %3665 = vmatpush1.bf16.msra.mxu0 %v1734
    %3666 = vmatprep.subr.bf16.mxu0 %v1743
    %3667 = vmatpush1.bf16.msra.mxu0 %v1742
    %3668 = vmatprep.subr.bf16.mxu0 %v1751
    %3669 = vmatpush1.bf16.msra.mxu0 %v1750
    %3670 = vmatprep.subr.bf16.mxu0 %v1759
    %3671 = vmatpush1.bf16.msra.mxu0 %v1758
    %3672 = vmatprep.subr.bf16.mxu0 %v1767
    %3673 = vmatpush1.bf16.msra.mxu0 %v1766
    %3674 = vmatprep.subr.bf16.mxu0 %v1775
    %3675 = vmatpush1.bf16.msra.mxu0 %v1774
    %3676 = vmatprep.subr.bf16.mxu0 %v1783
    %3677 = vmatpush1.bf16.msra.mxu0 %v1782
    %3678 = vmatprep.subr.bf16.mxu0 %v1791
    %3679 = vmatpush1.bf16.msra.mxu0 %v1790
    %3680 = vmatprep.subr.bf16.mxu0 %v1799
    %3681 = vmatpush1.bf16.msra.mxu0 %v1798
    %3682 = vmatprep.mubr.bf16.mxu0 %v3567
    %3683 = vmatmul.mubr.bf16.gmra.mrb[0].mxu0 %v3566
    %v3684 = vpop.f32.mrb[0].mxu0
    %v3685 = vadd.f32 0.0, %v3684
    %v3686 = vpop.f32.mrb[0].mxu0
    %v3687 = vadd.f32 0.0, %v3686
    %v3688 = vpop.f32.mrb[0].mxu0
    %v3689 = vpop.f32.mrb[0].mxu0
    %3690 = vdwg.mxu0
    %3691 = vmatprep.subr.bf16.mxu0 %v1681
    %3692 = vmatpush1.bf16.msra.mxu0 %v1680
    %3693 = vmatprep.subr.bf16.mxu0 %v1689
    %3694 = vmatpush1.bf16.msra.mxu0 %v1688
    %3695 = vmatprep.subr.bf16.mxu0 %v1697
    %3696 = vmatpush1.bf16.msra.mxu0 %v1696
    %3697 = vmatprep.subr.bf16.mxu0 %v1705
    %3698 = vmatpush1.bf16.msra.mxu0 %v1704
    %3699 = vmatprep.subr.bf16.mxu0 %v1713
    %3700 = vmatpush1.bf16.msra.mxu0 %v1712
    %3701 = vmatprep.subr.bf16.mxu0 %v1721
    %3702 = vmatpush1.bf16.msra.mxu0 %v1720
    %3703 = vmatprep.subr.bf16.mxu0 %v1729
    %3704 = vmatpush1.bf16.msra.mxu0 %v1728
    %3705 = vmatprep.subr.bf16.mxu0 %v1737
    %3706 = vmatpush1.bf16.msra.mxu0 %v1736
    %3707 = vmatprep.subr.bf16.mxu0 %v1745
    %3708 = vmatpush1.bf16.msra.mxu0 %v1744
    %3709 = vmatprep.subr.bf16.mxu0 %v1753
    %3710 = vmatpush1.bf16.msra.mxu0 %v1752
    %3711 = vmatprep.subr.bf16.mxu0 %v1761
    %3712 = vmatpush1.bf16.msra.mxu0 %v1760
    %3713 = vmatprep.subr.bf16.mxu0 %v1769
    %3714 = vmatpush1.bf16.msra.mxu0 %v1768
    %3715 = vmatprep.subr.bf16.mxu0 %v1777
    %3716 = vmatpush1.bf16.msra.mxu0 %v1776
    %3717 = vmatprep.subr.bf16.mxu0 %v1785
    %3718 = vmatpush1.bf16.msra.mxu0 %v1784
    %3719 = vmatprep.subr.bf16.mxu0 %v1793
    %3720 = vmatpush1.bf16.msra.mxu0 %v1792
    %3721 = vmatprep.subr.bf16.mxu0 %v1801
    %3722 = vmatpush1.bf16.msra.mxu0 %v1800
    %3723 = vmatprep.mubr.bf16.mxu0 %v3567
    %3724 = vmatmul.mubr.bf16.gmra.mrb[0].mxu0 %v3566
    %v3725 = vpop.f32.mrb[0].mxu0
    %v3726 = vadd.f32 0.0, %v3725
    %v3727 = vpop.f32.mrb[0].mxu0
    %v3728 = vadd.f32 0.0, %v3727
    %v3729 = vpop.f32.mrb[0].mxu0
    %v3730 = vpop.f32.mrb[0].mxu0
    %3731 = vdwg.mxu0
    %v3732 = vld [vmem:[%s2102] sm:$0xff]
    %v3733 = vld [vmem:[%s2102 + $0x8] sm:$0xff]
    %v3734 = vld [vmem:[%s2102 + $0x10] sm:$0xff]
    %v3735 = vld [vmem:[%s2102 + $0x18] sm:$0xff]
    %v3736 = vadd.f32 %v3732, %v3603
    %v3737 = vadd.f32 %v3733, %v3605
    %v3738 = vadd.f32 %v3734, %v3644
    %v3739 = vadd.f32 %v3735, %v3646
    %v3740 = vld [vmem:[#allocation2 + $0x20] sm:$0xff]
    %v3741 = vld [vmem:[#allocation2 + $0x28] sm:$0xff]
    %v3742 = vld [vmem:[#allocation2 + $0x30] sm:$0xff]
    %v3743 = vld [vmem:[#allocation2 + $0x38] sm:$0xff]
    %v3744 = vadd.f32 %v3740, %v3685
    %v3745 = vadd.f32 %v3741, %v3687
    %v3746 = vadd.f32 %v3742, %v3726
    %v3747 = vadd.f32 %v3743, %v3728
    %v3748 = vxor.u32 %v3736, 2147483648
    %v3749 = vxor.u32 %v3744, 2147483648
    %v3750 = vmul.f32 %v3748, 1.442695
    %v3751 = vpow.pop %v3750
    %v3752 = vmul.f32 %v3749, 1.442695
    %v3753 = vpow.pop %v3752
    %v3754 = vadd.f32 %v3751, 1.0
    %v3755 = vadd.f32 %v3753, 1.0
    %v3756 = vrcp.pop %v3754
    %v3757 = vmul.f32 1.0, %v3756
    %v3758 = vrcp.pop %v3755
    %v3759 = vmul.f32 1.0, %v3758
    %v3760 = vxor.u32 %v3737, 2147483648
    %v3761 = vxor.u32 %v3745, 2147483648
    %v3762 = vmul.f32 %v3760, 1.442695
    %v3763 = vpow.pop %v3762
    %v3764 = vmul.f32 %v3761, 1.442695
    %v3765 = vpow.pop %v3764
    %v3766 = vadd.f32 %v3763, 1.0
    %v3767 = vadd.f32 %v3765, 1.0
    %v3768 = vrcp.pop %v3766
    %v3769 = vmul.f32 1.0, %v3768
    %v3770 = vrcp.pop %v3767
    %v3771 = vmul.f32 1.0, %v3770
    %v3772 = vtanh.pop %v3738
    %v3773 = vtanh.pop %v3746
    %v3774 = vxor.u32 %v3739, 2147483648
    %v3775 = vxor.u32 %v3747, 2147483648
    %v3776 = vmul.f32 %v3774, 1.442695
    %v3777 = vpow.pop %v3776
    %v3778 = vmul.f32 %v3775, 1.442695
    %v3779 = vpow.pop %v3778
    %v3780 = vadd.f32 %v3777, 1.0
    %v3781 = vadd.f32 %v3779, 1.0
    %v3782 = vrcp.pop %v3780
    %v3783 = vmul.f32 1.0, %v3782
    %v3784 = vrcp.pop %v3781
    %v3785 = vmul.f32 1.0, %v3784
    %v3786 = vmul.f32 %v3769, %v3558
    %v3787 = vmul.f32 %v3771, %v3559
    %v3788 = vmul.f32 %v3757, %v3772
    %v3789 = vmul.f32 %v3759, %v3773
    %v3790 = vadd.f32 %v3786, %v3788
    %v3791 = vadd.f32 %v3787, %v3789
    %v3792 = vtanh.pop %v3790
    %v3793 = vtanh.pop %v3791
    %v3794 = vmul.f32 %v3783, %v3792
    %v3795 = vmul.f32 %v3785, %v3793
    %3796 = vst [vmem:[%s2160] sm:$0xff] %v3794
    %3797 = vst [vmem:[#allocation3 + $0x8] sm:$0xff] %v3795
    %v3798 = vld [vmem:[#allocation3] sm:$0xff]
    %v3799 = vld [vmem:[#allocation3 + $0x8] sm:$0xff]
    %v3800 = vld [vmem:[#allocation3 + $0x10] sm:$0xff]
    %v3801 = vld [vmem:[#allocation3 + $0x18] sm:$0xff]
    %v3802 = vld [vmem:[#allocation3 + $0x20] sm:$0xff]
    %v3803 = vld [vmem:[#allocation3 + $0x28] sm:$0xff]
    %v3804 = vld [vmem:[#allocation3 + $0x30] sm:$0xff]
    %v3805 = vld [vmem:[#allocation3 + $0x38] sm:$0xff]
    %v3806 = vld [vmem:[#allocation3 + $0x40] sm:$0xff]
    %v3807 = vld [vmem:[#allocation3 + $0x48] sm:$0xff]
    %v3808 = vld [vmem:[#allocation3 + $0x50] sm:$0xff]
    %v3809 = vld [vmem:[#allocation3 + $0x58] sm:$0xff]
    %v3810 = vld [vmem:[#allocation3 + $0x60] sm:$0xff]
    %v3811 = vld [vmem:[#allocation3 + $0x68] sm:$0xff]
    %v3812 = vld [vmem:[#allocation3 + $0x70] sm:$0xff]
    %v3813 = vld [vmem:[#allocation3 + $0x78] sm:$0xff]
    %v3814 = vpack.c.bf16 %v3800, %v3798
    %v3815 = vpack.c.bf16 %v3801, %v3799
    %v3816 = vpack.c.bf16 %v3804, %v3802
    %v3817 = vpack.c.bf16 %v3805, %v3803
    %v3818 = vpack.c.bf16 %v3808, %v3806
    %v3819 = vpack.c.bf16 %v3809, %v3807
    %v3820 = vpack.c.bf16 %v3812, %v3810
    %v3821 = vpack.c.bf16 %v3813, %v3811
    %v3822 = vld [vmem:[#allocation8] sm:$0xff]
    %v3823 = vld [vmem:[#allocation8 + $0x8] sm:$0xff]
    %v3824 = vld [vmem:[#allocation8 + $0x10] sm:$0xff]
    %v3825 = vld [vmem:[#allocation8 + $0x18] sm:$0xff]
    %v3826 = vld [vmem:[#allocation8 + $0x20] sm:$0xff]
    %v3827 = vld [vmem:[#allocation8 + $0x28] sm:$0xff]
    %v3828 = vld [vmem:[#allocation8 + $0x30] sm:$0xff]
    %v3829 = vld [vmem:[#allocation8 + $0x38] sm:$0xff]
    %v3830 = vld [vmem:[#allocation8 + $0x40] sm:$0xff]
    %v3831 = vld [vmem:[#allocation8 + $0x48] sm:$0xff]
    %v3832 = vld [vmem:[#allocation8 + $0x50] sm:$0xff]
    %v3833 = vld [vmem:[#allocation8 + $0x58] sm:$0xff]
    %v3834 = vld [vmem:[#allocation8 + $0x60] sm:$0xff]
    %v3835 = vld [vmem:[#allocation8 + $0x68] sm:$0xff]
    %v3836 = vld [vmem:[#allocation8 + $0x70] sm:$0xff]
    %v3837 = vld [vmem:[#allocation8 + $0x78] sm:$0xff]
    %v3838 = vld [vmem:[#allocation8 + $0x80] sm:$0xff]
    %v3839 = vld [vmem:[#allocation8 + $0x88] sm:$0xff]
    %v3840 = vld [vmem:[#allocation8 + $0x90] sm:$0xff]
    %v3841 = vld [vmem:[#allocation8 + $0x98] sm:$0xff]
    %v3842 = vld [vmem:[#allocation8 + $0xa0] sm:$0xff]
    %v3843 = vld [vmem:[#allocation8 + $0xa8] sm:$0xff]
    %v3844 = vld [vmem:[#allocation8 + $0xb0] sm:$0xff]
    %v3845 = vld [vmem:[#allocation8 + $0xb8] sm:$0xff]
    %v3846 = vld [vmem:[#allocation8 + $0xc0] sm:$0xff]
    %v3847 = vld [vmem:[#allocation8 + $0xc8] sm:$0xff]
    %v3848 = vld [vmem:[#allocation8 + $0xd0] sm:$0xff]
    %v3849 = vld [vmem:[#allocation8 + $0xd8] sm:$0xff]
    %v3850 = vld [vmem:[#allocation8 + $0xe0] sm:$0xff]
    %v3851 = vld [vmem:[#allocation8 + $0xe8] sm:$0xff]
    %v3852 = vld [vmem:[#allocation8 + $0xf0] sm:$0xff]
    %v3853 = vld [vmem:[#allocation8 + $0xf8] sm:$0xff]
    %v3854 = vld [vmem:[#allocation8 + $0x100] sm:$0xff]
    %v3855 = vld [vmem:[#allocation8 + $0x108] sm:$0xff]
    %v3856 = vld [vmem:[#allocation8 + $0x110] sm:$0xff]
    %v3857 = vld [vmem:[#allocation8 + $0x118] sm:$0xff]
    %v3858 = vld [vmem:[#allocation8 + $0x120] sm:$0xff]
    %v3859 = vld [vmem:[#allocation8 + $0x128] sm:$0xff]
    %v3860 = vld [vmem:[#allocation8 + $0x130] sm:$0xff]
    %v3861 = vld [vmem:[#allocation8 + $0x138] sm:$0xff]
    %v3862 = vld [vmem:[#allocation8 + $0x140] sm:$0xff]
    %v3863 = vld [vmem:[#allocation8 + $0x148] sm:$0xff]
    %v3864 = vld [vmem:[#allocation8 + $0x150] sm:$0xff]
    %v3865 = vld [vmem:[#allocation8 + $0x158] sm:$0xff]
    %v3866 = vld [vmem:[#allocation8 + $0x160] sm:$0xff]
    %v3867 = vld [vmem:[#allocation8 + $0x168] sm:$0xff]
    %v3868 = vld [vmem:[#allocation8 + $0x170] sm:$0xff]
    %v3869 = vld [vmem:[#allocation8 + $0x178] sm:$0xff]
    %v3870 = vld [vmem:[#allocation8 + $0x180] sm:$0xff]
    %v3871 = vld [vmem:[#allocation8 + $0x188] sm:$0xff]
    %v3872 = vld [vmem:[#allocation8 + $0x190] sm:$0xff]
    %v3873 = vld [vmem:[#allocation8 + $0x198] sm:$0xff]
    %v3874 = vld [vmem:[#allocation8 + $0x1a0] sm:$0xff]
    %v3875 = vld [vmem:[#allocation8 + $0x1a8] sm:$0xff]
    %v3876 = vld [vmem:[#allocation8 + $0x1b0] sm:$0xff]
    %v3877 = vld [vmem:[#allocation8 + $0x1b8] sm:$0xff]
    %v3878 = vld [vmem:[#allocation8 + $0x1c0] sm:$0xff]
    %v3879 = vld [vmem:[#allocation8 + $0x1c8] sm:$0xff]
    %v3880 = vld [vmem:[#allocation8 + $0x1d0] sm:$0xff]
    %v3881 = vld [vmem:[#allocation8 + $0x1d8] sm:$0xff]
    %v3882 = vld [vmem:[#allocation8 + $0x1e0] sm:$0xff]
    %v3883 = vld [vmem:[#allocation8 + $0x1e8] sm:$0xff]
    %v3884 = vld [vmem:[#allocation8 + $0x1f0] sm:$0xff]
    %v3885 = vld [vmem:[#allocation8 + $0x1f8] sm:$0xff]
    %v3886 = vld [vmem:[#allocation8 + $0x200] sm:$0xff]
    %v3887 = vld [vmem:[#allocation8 + $0x208] sm:$0xff]
    %v3888 = vld [vmem:[#allocation8 + $0x210] sm:$0xff]
    %v3889 = vld [vmem:[#allocation8 + $0x218] sm:$0xff]
    %v3890 = vld [vmem:[#allocation8 + $0x220] sm:$0xff]
    %v3891 = vld [vmem:[#allocation8 + $0x228] sm:$0xff]
    %v3892 = vld [vmem:[#allocation8 + $0x230] sm:$0xff]
    %v3893 = vld [vmem:[#allocation8 + $0x238] sm:$0xff]
    %v3894 = vld [vmem:[#allocation8 + $0x240] sm:$0xff]
    %v3895 = vld [vmem:[#allocation8 + $0x248] sm:$0xff]
    %v3896 = vld [vmem:[#allocation8 + $0x250] sm:$0xff]
    %v3897 = vld [vmem:[#allocation8 + $0x258] sm:$0xff]
    %v3898 = vld [vmem:[#allocation8 + $0x260] sm:$0xff]
    %v3899 = vld [vmem:[#allocation8 + $0x268] sm:$0xff]
    %v3900 = vld [vmem:[#allocation8 + $0x270] sm:$0xff]
    %v3901 = vld [vmem:[#allocation8 + $0x278] sm:$0xff]
    %v3902 = vld [vmem:[#allocation8 + $0x280] sm:$0xff]
    %v3903 = vld [vmem:[#allocation8 + $0x288] sm:$0xff]
    %v3904 = vld [vmem:[#allocation8 + $0x290] sm:$0xff]
    %v3905 = vld [vmem:[#allocation8 + $0x298] sm:$0xff]
    %v3906 = vld [vmem:[#allocation8 + $0x2a0] sm:$0xff]
    %v3907 = vld [vmem:[#allocation8 + $0x2a8] sm:$0xff]
    %v3908 = vld [vmem:[#allocation8 + $0x2b0] sm:$0xff]
    %v3909 = vld [vmem:[#allocation8 + $0x2b8] sm:$0xff]
    %v3910 = vld [vmem:[#allocation8 + $0x2c0] sm:$0xff]
    %v3911 = vld [vmem:[#allocation8 + $0x2c8] sm:$0xff]
    %v3912 = vld [vmem:[#allocation8 + $0x2d0] sm:$0xff]
    %v3913 = vld [vmem:[#allocation8 + $0x2d8] sm:$0xff]
    %v3914 = vld [vmem:[#allocation8 + $0x2e0] sm:$0xff]
    %v3915 = vld [vmem:[#allocation8 + $0x2e8] sm:$0xff]
    %v3916 = vld [vmem:[#allocation8 + $0x2f0] sm:$0xff]
    %v3917 = vld [vmem:[#allocation8 + $0x2f8] sm:$0xff]
    %v3918 = vld [vmem:[#allocation8 + $0x300] sm:$0xff]
    %v3919 = vld [vmem:[#allocation8 + $0x308] sm:$0xff]
    %v3920 = vld [vmem:[#allocation8 + $0x310] sm:$0xff]
    %v3921 = vld [vmem:[#allocation8 + $0x318] sm:$0xff]
    %v3922 = vld [vmem:[#allocation8 + $0x320] sm:$0xff]
    %v3923 = vld [vmem:[#allocation8 + $0x328] sm:$0xff]
    %v3924 = vld [vmem:[#allocation8 + $0x330] sm:$0xff]
    %v3925 = vld [vmem:[#allocation8 + $0x338] sm:$0xff]
    %v3926 = vld [vmem:[#allocation8 + $0x340] sm:$0xff]
    %v3927 = vld [vmem:[#allocation8 + $0x348] sm:$0xff]
    %v3928 = vld [vmem:[#allocation8 + $0x350] sm:$0xff]
    %v3929 = vld [vmem:[#allocation8 + $0x358] sm:$0xff]
    %v3930 = vld [vmem:[#allocation8 + $0x360] sm:$0xff]
    %v3931 = vld [vmem:[#allocation8 + $0x368] sm:$0xff]
    %v3932 = vld [vmem:[#allocation8 + $0x370] sm:$0xff]
    %v3933 = vld [vmem:[#allocation8 + $0x378] sm:$0xff]
    %v3934 = vld [vmem:[#allocation8 + $0x380] sm:$0xff]
    %v3935 = vld [vmem:[#allocation8 + $0x388] sm:$0xff]
    %v3936 = vld [vmem:[#allocation8 + $0x390] sm:$0xff]
    %v3937 = vld [vmem:[#allocation8 + $0x398] sm:$0xff]
    %v3938 = vld [vmem:[#allocation8 + $0x3a0] sm:$0xff]
    %v3939 = vld [vmem:[#allocation8 + $0x3a8] sm:$0xff]
    %v3940 = vld [vmem:[#allocation8 + $0x3b0] sm:$0xff]
    %v3941 = vld [vmem:[#allocation8 + $0x3b8] sm:$0xff]
    %v3942 = vld [vmem:[#allocation8 + $0x3c0] sm:$0xff]
    %v3943 = vld [vmem:[#allocation8 + $0x3c8] sm:$0xff]
    %v3944 = vld [vmem:[#allocation8 + $0x3d0] sm:$0xff]
    %v3945 = vld [vmem:[#allocation8 + $0x3d8] sm:$0xff]
    %v3946 = vld [vmem:[#allocation8 + $0x3e0] sm:$0xff]
    %v3947 = vld [vmem:[#allocation8 + $0x3e8] sm:$0xff]
    %v3948 = vld [vmem:[#allocation8 + $0x3f0] sm:$0xff]
    %v3949 = vld [vmem:[#allocation8 + $0x3f8] sm:$0xff]
    %v3950 = vld [vmem:[%s5] sm:$0xff]
    %v3952 = vlaneseq
    %v3953 = vshrl.u32 %v3952, 7
    %v3954 = vsub.s32 0, %v3953
    %v3955 = vrot.slane %v3950, %v3954
    %v3956 = vlaneseq
    %v3957 = vshrl.u32 %v3956, 7
    %v3958 = vsub.s32 1, %v3957
    %v3959 = vrot.slane %v3950, %v3958
    %v3960 = vlaneseq
    %v3961 = vshrl.u32 %v3960, 7
    %v3962 = vsub.s32 2, %v3961
    %v3963 = vrot.slane %v3950, %v3962
    %v3964 = vlaneseq
    %v3965 = vshrl.u32 %v3964, 7
    %v3966 = vsub.s32 3, %v3965
    %v3967 = vrot.slane %v3950, %v3966
    %v3968 = vlaneseq
    %v3969 = vshrl.u32 %v3968, 7
    %v3970 = vsub.s32 4, %v3969
    %v3971 = vrot.slane %v3950, %v3970
    %v3972 = vlaneseq
    %v3973 = vshrl.u32 %v3972, 7
    %v3974 = vsub.s32 5, %v3973
    %v3975 = vrot.slane %v3950, %v3974
    %v3976 = vlaneseq
    %v3977 = vshrl.u32 %v3976, 7
    %v3978 = vsub.s32 6, %v3977
    %v3979 = vrot.slane %v3950, %v3978
    %v3980 = vlaneseq
    %v3981 = vshrl.u32 %v3980, 7
    %v3982 = vsub.s32 7, %v3981
    %v3983 = vrot.slane %v3950, %v3982
    %v4120 = vunpack.c.l.b16 %v3822
    %v4121 = vunpack.c.h.b16 %v3822
    %v4122 = vunpack.c.l.b16 %v3823
    %v4123 = vunpack.c.h.b16 %v3823
    %v4124 = vunpack.c.l.b16 %v3824
    %v4125 = vunpack.c.h.b16 %v3824
    %v4126 = vunpack.c.l.b16 %v3825
    %v4127 = vunpack.c.h.b16 %v3825
    %v4128 = vunpack.c.l.b16 %v3826
    %v4129 = vunpack.c.h.b16 %v3826
    %v4130 = vunpack.c.l.b16 %v3827
    %v4131 = vunpack.c.h.b16 %v3827
    %v4132 = vunpack.c.l.b16 %v3828
    %v4133 = vunpack.c.h.b16 %v3828
    %v4134 = vunpack.c.l.b16 %v3829
    %v4135 = vunpack.c.h.b16 %v3829
    %v4136 = vunpack.c.l.b16 %v3830
    %v4137 = vunpack.c.h.b16 %v3830
    %v4138 = vunpack.c.l.b16 %v3831
    %v4139 = vunpack.c.h.b16 %v3831
    %v4140 = vunpack.c.l.b16 %v3832
    %v4141 = vunpack.c.h.b16 %v3832
    %v4142 = vunpack.c.l.b16 %v3833
    %v4143 = vunpack.c.h.b16 %v3833
    %v4144 = vunpack.c.l.b16 %v3834
    %v4145 = vunpack.c.h.b16 %v3834
    %v4146 = vunpack.c.l.b16 %v3835
    %v4147 = vunpack.c.h.b16 %v3835
    %v4148 = vunpack.c.l.b16 %v3836
    %v4149 = vunpack.c.h.b16 %v3836
    %v4150 = vunpack.c.l.b16 %v3837
    %v4151 = vunpack.c.h.b16 %v3837
    %v4152 = vunpack.c.l.b16 %v3838
    %v4153 = vunpack.c.h.b16 %v3838
    %v4154 = vunpack.c.l.b16 %v3839
    %v4155 = vunpack.c.h.b16 %v3839
    %v4156 = vunpack.c.l.b16 %v3840
    %v4157 = vunpack.c.h.b16 %v3840
    %v4158 = vunpack.c.l.b16 %v3841
    %v4159 = vunpack.c.h.b16 %v3841
    %v4160 = vunpack.c.l.b16 %v3842
    %v4161 = vunpack.c.h.b16 %v3842
    %v4162 = vunpack.c.l.b16 %v3843
    %v4163 = vunpack.c.h.b16 %v3843
    %v4164 = vunpack.c.l.b16 %v3844
    %v4165 = vunpack.c.h.b16 %v3844
    %v4166 = vunpack.c.l.b16 %v3845
    %v4167 = vunpack.c.h.b16 %v3845
    %v4168 = vunpack.c.l.b16 %v3846
    %v4169 = vunpack.c.h.b16 %v3846
    %v4170 = vunpack.c.l.b16 %v3847
    %v4171 = vunpack.c.h.b16 %v3847
    %v4172 = vunpack.c.l.b16 %v3848
    %v4173 = vunpack.c.h.b16 %v3848
    %v4174 = vunpack.c.l.b16 %v3849
    %v4175 = vunpack.c.h.b16 %v3849
    %v4176 = vunpack.c.l.b16 %v3850
    %v4177 = vunpack.c.h.b16 %v3850
    %v4178 = vunpack.c.l.b16 %v3851
    %v4179 = vunpack.c.h.b16 %v3851
    %v4180 = vunpack.c.l.b16 %v3852
    %v4181 = vunpack.c.h.b16 %v3852
    %v4182 = vunpack.c.l.b16 %v3853
    %v4183 = vunpack.c.h.b16 %v3853
    %v4184 = vunpack.c.l.b16 %v3854
    %v4185 = vunpack.c.h.b16 %v3854
    %v4186 = vunpack.c.l.b16 %v3855
    %v4187 = vunpack.c.h.b16 %v3855
    %v4188 = vunpack.c.l.b16 %v3856
    %v4189 = vunpack.c.h.b16 %v3856
    %v4190 = vunpack.c.l.b16 %v3857
    %v4191 = vunpack.c.h.b16 %v3857
    %v4192 = vunpack.c.l.b16 %v3858
    %v4193 = vunpack.c.h.b16 %v3858
    %v4194 = vunpack.c.l.b16 %v3859
    %v4195 = vunpack.c.h.b16 %v3859
    %v4196 = vunpack.c.l.b16 %v3860
    %v4197 = vunpack.c.h.b16 %v3860
    %v4198 = vunpack.c.l.b16 %v3861
    %v4199 = vunpack.c.h.b16 %v3861
    %v4200 = vunpack.c.l.b16 %v3862
    %v4201 = vunpack.c.h.b16 %v3862
    %v4202 = vunpack.c.l.b16 %v3863
    %v4203 = vunpack.c.h.b16 %v3863
    %v4204 = vunpack.c.l.b16 %v3864
    %v4205 = vunpack.c.h.b16 %v3864
    %v4206 = vunpack.c.l.b16 %v3865
    %v4207 = vunpack.c.h.b16 %v3865
    %v4208 = vunpack.c.l.b16 %v3866
    %v4209 = vunpack.c.h.b16 %v3866
    %v4210 = vunpack.c.l.b16 %v3867
    %v4211 = vunpack.c.h.b16 %v3867
    %v4212 = vunpack.c.l.b16 %v3868
    %v4213 = vunpack.c.h.b16 %v3868
    %v4214 = vunpack.c.l.b16 %v3869
    %v4215 = vunpack.c.h.b16 %v3869
    %v4216 = vunpack.c.l.b16 %v3870
    %v4217 = vunpack.c.h.b16 %v3870
    %v4218 = vunpack.c.l.b16 %v3871
    %v4219 = vunpack.c.h.b16 %v3871
    %v4220 = vunpack.c.l.b16 %v3872
    %v4221 = vunpack.c.h.b16 %v3872
    %v4222 = vunpack.c.l.b16 %v3873
    %v4223 = vunpack.c.h.b16 %v3873
    %v4224 = vunpack.c.l.b16 %v3874
    %v4225 = vunpack.c.h.b16 %v3874
    %v4226 = vunpack.c.l.b16 %v3875
    %v4227 = vunpack.c.h.b16 %v3875
    %v4228 = vunpack.c.l.b16 %v3876
    %v4229 = vunpack.c.h.b16 %v3876
    %v4230 = vunpack.c.l.b16 %v3877
    %v4231 = vunpack.c.h.b16 %v3877
    %v4232 = vunpack.c.l.b16 %v3878
    %v4233 = vunpack.c.h.b16 %v3878
    %v4234 = vunpack.c.l.b16 %v3879
    %v4235 = vunpack.c.h.b16 %v3879
    %v4236 = vunpack.c.l.b16 %v3880
    %v4237 = vunpack.c.h.b16 %v3880
    %v4238 = vunpack.c.l.b16 %v3881
    %v4239 = vunpack.c.h.b16 %v3881
    %v4240 = vunpack.c.l.b16 %v3882
    %v4241 = vunpack.c.h.b16 %v3882
    %v4242 = vunpack.c.l.b16 %v3883
    %v4243 = vunpack.c.h.b16 %v3883
    %v4244 = vunpack.c.l.b16 %v3884
    %v4245 = vunpack.c.h.b16 %v3884
    %v4246 = vunpack.c.l.b16 %v3885
    %v4247 = vunpack.c.h.b16 %v3885
    %v4248 = vunpack.c.l.b16 %v3886
    %v4249 = vunpack.c.h.b16 %v3886
    %v4250 = vunpack.c.l.b16 %v3887
    %v4251 = vunpack.c.h.b16 %v3887
    %v4252 = vunpack.c.l.b16 %v3888
    %v4253 = vunpack.c.h.b16 %v3888
    %v4254 = vunpack.c.l.b16 %v3889
    %v4255 = vunpack.c.h.b16 %v3889
    %v4256 = vunpack.c.l.b16 %v3890
    %v4257 = vunpack.c.h.b16 %v3890
    %v4258 = vunpack.c.l.b16 %v3891
    %v4259 = vunpack.c.h.b16 %v3891
    %v4260 = vunpack.c.l.b16 %v3892
    %v4261 = vunpack.c.h.b16 %v3892
    %v4262 = vunpack.c.l.b16 %v3893
    %v4263 = vunpack.c.h.b16 %v3893
    %v4264 = vunpack.c.l.b16 %v3894
    %v4265 = vunpack.c.h.b16 %v3894
    %v4266 = vunpack.c.l.b16 %v3895
    %v4267 = vunpack.c.h.b16 %v3895
    %v4268 = vunpack.c.l.b16 %v3896
    %v4269 = vunpack.c.h.b16 %v3896
    %v4270 = vunpack.c.l.b16 %v3897
    %v4271 = vunpack.c.h.b16 %v3897
    %v4272 = vunpack.c.l.b16 %v3898
    %v4273 = vunpack.c.h.b16 %v3898
    %v4274 = vunpack.c.l.b16 %v3899
    %v4275 = vunpack.c.h.b16 %v3899
    %v4276 = vunpack.c.l.b16 %v3900
    %v4277 = vunpack.c.h.b16 %v3900
    %v4278 = vunpack.c.l.b16 %v3901
    %v4279 = vunpack.c.h.b16 %v3901
    %v4280 = vunpack.c.l.b16 %v3902
    %v4281 = vunpack.c.h.b16 %v3902
    %v4282 = vunpack.c.l.b16 %v3903
    %v4283 = vunpack.c.h.b16 %v3903
    %v4284 = vunpack.c.l.b16 %v3904
    %v4285 = vunpack.c.h.b16 %v3904
    %v4286 = vunpack.c.l.b16 %v3905
    %v4287 = vunpack.c.h.b16 %v3905
    %v4288 = vunpack.c.l.b16 %v3906
    %v4289 = vunpack.c.h.b16 %v3906
    %v4290 = vunpack.c.l.b16 %v3907
    %v4291 = vunpack.c.h.b16 %v3907
    %v4292 = vunpack.c.l.b16 %v3908
    %v4293 = vunpack.c.h.b16 %v3908
    %v4294 = vunpack.c.l.b16 %v3909
    %v4295 = vunpack.c.h.b16 %v3909
    %v4296 = vunpack.c.l.b16 %v3910
    %v4297 = vunpack.c.h.b16 %v3910
    %v4298 = vunpack.c.l.b16 %v3911
    %v4299 = vunpack.c.h.b16 %v3911
    %v4300 = vunpack.c.l.b16 %v3912
    %v4301 = vunpack.c.h.b16 %v3912
    %v4302 = vunpack.c.l.b16 %v3913
    %v4303 = vunpack.c.h.b16 %v3913
    %v4304 = vunpack.c.l.b16 %v3914
    %v4305 = vunpack.c.h.b16 %v3914
    %v4306 = vunpack.c.l.b16 %v3915
    %v4307 = vunpack.c.h.b16 %v3915
    %v4308 = vunpack.c.l.b16 %v3916
    %v4309 = vunpack.c.h.b16 %v3916
    %v4310 = vunpack.c.l.b16 %v3917
    %v4311 = vunpack.c.h.b16 %v3917
    %v4312 = vunpack.c.l.b16 %v3918
    %v4313 = vunpack.c.h.b16 %v3918
    %v4314 = vunpack.c.l.b16 %v3919
    %v4315 = vunpack.c.h.b16 %v3919
    %v4316 = vunpack.c.l.b16 %v3920
    %v4317 = vunpack.c.h.b16 %v3920
    %v4318 = vunpack.c.l.b16 %v3921
    %v4319 = vunpack.c.h.b16 %v3921
    %v4320 = vunpack.c.l.b16 %v3922
    %v4321 = vunpack.c.h.b16 %v3922
    %v4322 = vunpack.c.l.b16 %v3923
    %v4323 = vunpack.c.h.b16 %v3923
    %v4324 = vunpack.c.l.b16 %v3924
    %v4325 = vunpack.c.h.b16 %v3924
    %v4326 = vunpack.c.l.b16 %v3925
    %v4327 = vunpack.c.h.b16 %v3925
    %v4328 = vunpack.c.l.b16 %v3926
    %v4329 = vunpack.c.h.b16 %v3926
    %v4330 = vunpack.c.l.b16 %v3927
    %v4331 = vunpack.c.h.b16 %v3927
    %v4332 = vunpack.c.l.b16 %v3928
    %v4333 = vunpack.c.h.b16 %v3928
    %v4334 = vunpack.c.l.b16 %v3929
    %v4335 = vunpack.c.h.b16 %v3929
    %v4336 = vunpack.c.l.b16 %v3930
    %v4337 = vunpack.c.h.b16 %v3930
    %v4338 = vunpack.c.l.b16 %v3931
    %v4339 = vunpack.c.h.b16 %v3931
    %v4340 = vunpack.c.l.b16 %v3932
    %v4341 = vunpack.c.h.b16 %v3932
    %v4342 = vunpack.c.l.b16 %v3933
    %v4343 = vunpack.c.h.b16 %v3933
    %v4344 = vunpack.c.l.b16 %v3934
    %v4345 = vunpack.c.h.b16 %v3934
    %v4346 = vunpack.c.l.b16 %v3935
    %v4347 = vunpack.c.h.b16 %v3935
    %v4348 = vunpack.c.l.b16 %v3936
    %v4349 = vunpack.c.h.b16 %v3936
    %v4350 = vunpack.c.l.b16 %v3937
    %v4351 = vunpack.c.h.b16 %v3937
    %v4352 = vunpack.c.l.b16 %v3938
    %v4353 = vunpack.c.h.b16 %v3938
    %v4354 = vunpack.c.l.b16 %v3939
    %v4355 = vunpack.c.h.b16 %v3939
    %v4356 = vunpack.c.l.b16 %v3940
    %v4357 = vunpack.c.h.b16 %v3940
    %v4358 = vunpack.c.l.b16 %v3941
    %v4359 = vunpack.c.h.b16 %v3941
    %v4360 = vunpack.c.l.b16 %v3942
    %v4361 = vunpack.c.h.b16 %v3942
    %v4362 = vunpack.c.l.b16 %v3943
    %v4363 = vunpack.c.h.b16 %v3943
    %v4364 = vunpack.c.l.b16 %v3944
    %v4365 = vunpack.c.h.b16 %v3944
    %v4366 = vunpack.c.l.b16 %v3945
    %v4367 = vunpack.c.h.b16 %v3945
    %v4368 = vunpack.c.l.b16 %v3946
    %v4369 = vunpack.c.h.b16 %v3946
    %v4370 = vunpack.c.l.b16 %v3947
    %v4371 = vunpack.c.h.b16 %v3947
    %v4372 = vunpack.c.l.b16 %v3948
    %v4373 = vunpack.c.h.b16 %v3948
    %v4374 = vunpack.c.l.b16 %v3949
    %v4375 = vunpack.c.h.b16 %v3949
    %v4376 = vpack.c.b16 %v4128, %v4120
    %v4377 = vpack.c.b16 %v4129, %v4121
    %v4378 = vpack.c.b16 %v4130, %v4122
    %v4379 = vpack.c.b16 %v4131, %v4123
    %v4380 = vpack.c.b16 %v4132, %v4124
    %v4381 = vpack.c.b16 %v4133, %v4125
    %v4382 = vpack.c.b16 %v4134, %v4126
    %v4383 = vpack.c.b16 %v4135, %v4127
    %v4384 = vpack.c.b16 %v4144, %v4136
    %v4385 = vpack.c.b16 %v4145, %v4137
    %v4386 = vpack.c.b16 %v4146, %v4138
    %v4387 = vpack.c.b16 %v4147, %v4139
    %v4388 = vpack.c.b16 %v4148, %v4140
    %v4389 = vpack.c.b16 %v4149, %v4141
    %v4390 = vpack.c.b16 %v4150, %v4142
    %v4391 = vpack.c.b16 %v4151, %v4143
    %v4392 = vpack.c.b16 %v4160, %v4152
    %v4393 = vpack.c.b16 %v4161, %v4153
    %v4394 = vpack.c.b16 %v4162, %v4154
    %v4395 = vpack.c.b16 %v4163, %v4155
    %v4396 = vpack.c.b16 %v4164, %v4156
    %v4397 = vpack.c.b16 %v4165, %v4157
    %v4398 = vpack.c.b16 %v4166, %v4158
    %v4399 = vpack.c.b16 %v4167, %v4159
    %v4400 = vpack.c.b16 %v4176, %v4168
    %v4401 = vpack.c.b16 %v4177, %v4169
    %v4402 = vpack.c.b16 %v4178, %v4170
    %v4403 = vpack.c.b16 %v4179, %v4171
    %v4404 = vpack.c.b16 %v4180, %v4172
    %v4405 = vpack.c.b16 %v4181, %v4173
    %v4406 = vpack.c.b16 %v4182, %v4174
    %v4407 = vpack.c.b16 %v4183, %v4175
    %v4408 = vpack.c.b16 %v4192, %v4184
    %v4409 = vpack.c.b16 %v4193, %v4185
    %v4410 = vpack.c.b16 %v4194, %v4186
    %v4411 = vpack.c.b16 %v4195, %v4187
    %v4412 = vpack.c.b16 %v4196, %v4188
    %v4413 = vpack.c.b16 %v4197, %v4189
    %v4414 = vpack.c.b16 %v4198, %v4190
    %v4415 = vpack.c.b16 %v4199, %v4191
    %v4416 = vpack.c.b16 %v4208, %v4200
    %v4417 = vpack.c.b16 %v4209, %v4201
    %v4418 = vpack.c.b16 %v4210, %v4202
    %v4419 = vpack.c.b16 %v4211, %v4203
    %v4420 = vpack.c.b16 %v4212, %v4204
    %v4421 = vpack.c.b16 %v4213, %v4205
    %v4422 = vpack.c.b16 %v4214, %v4206
    %v4423 = vpack.c.b16 %v4215, %v4207
    %v4424 = vpack.c.b16 %v4224, %v4216
    %v4425 = vpack.c.b16 %v4225, %v4217
    %v4426 = vpack.c.b16 %v4226, %v4218
    %v4427 = vpack.c.b16 %v4227, %v4219
    %v4428 = vpack.c.b16 %v4228, %v4220
    %v4429 = vpack.c.b16 %v4229, %v4221
    %v4430 = vpack.c.b16 %v4230, %v4222
    %v4431 = vpack.c.b16 %v4231, %v4223
    %v4432 = vpack.c.b16 %v4240, %v4232
    %v4433 = vpack.c.b16 %v4241, %v4233
    %v4434 = vpack.c.b16 %v4242, %v4234
    %v4435 = vpack.c.b16 %v4243, %v4235
    %v4436 = vpack.c.b16 %v4244, %v4236
    %v4437 = vpack.c.b16 %v4245, %v4237
    %v4438 = vpack.c.b16 %v4246, %v4238
    %v4439 = vpack.c.b16 %v4247, %v4239
    %v4440 = vpack.c.b16 %v4256, %v4248
    %v4441 = vpack.c.b16 %v4257, %v4249
    %v4442 = vpack.c.b16 %v4258, %v4250
    %v4443 = vpack.c.b16 %v4259, %v4251
    %v4444 = vpack.c.b16 %v4260, %v4252
    %v4445 = vpack.c.b16 %v4261, %v4253
    %v4446 = vpack.c.b16 %v4262, %v4254
    %v4447 = vpack.c.b16 %v4263, %v4255
    %v4448 = vpack.c.b16 %v4272, %v4264
    %v4449 = vpack.c.b16 %v4273, %v4265
    %v4450 = vpack.c.b16 %v4274, %v4266
    %v4451 = vpack.c.b16 %v4275, %v4267
    %v4452 = vpack.c.b16 %v4276, %v4268
    %v4453 = vpack.c.b16 %v4277, %v4269
    %v4454 = vpack.c.b16 %v4278, %v4270
    %v4455 = vpack.c.b16 %v4279, %v4271
    %v4456 = vpack.c.b16 %v4288, %v4280
    %v4457 = vpack.c.b16 %v4289, %v4281
    %v4458 = vpack.c.b16 %v4290, %v4282
    %v4459 = vpack.c.b16 %v4291, %v4283
    %v4460 = vpack.c.b16 %v4292, %v4284
    %v4461 = vpack.c.b16 %v4293, %v4285
    %v4462 = vpack.c.b16 %v4294, %v4286
    %v4463 = vpack.c.b16 %v4295, %v4287
    %v4464 = vpack.c.b16 %v4304, %v4296
    %v4465 = vpack.c.b16 %v4305, %v4297
    %v4466 = vpack.c.b16 %v4306, %v4298
    %v4467 = vpack.c.b16 %v4307, %v4299
    %v4468 = vpack.c.b16 %v4308, %v4300
    %v4469 = vpack.c.b16 %v4309, %v4301
    %v4470 = vpack.c.b16 %v4310, %v4302
    %v4471 = vpack.c.b16 %v4311, %v4303
    %v4472 = vpack.c.b16 %v4320, %v4312
    %v4473 = vpack.c.b16 %v4321, %v4313
    %v4474 = vpack.c.b16 %v4322, %v4314
    %v4475 = vpack.c.b16 %v4323, %v4315
    %v4476 = vpack.c.b16 %v4324, %v4316
    %v4477 = vpack.c.b16 %v4325, %v4317
    %v4478 = vpack.c.b16 %v4326, %v4318
    %v4479 = vpack.c.b16 %v4327, %v4319
    %v4480 = vpack.c.b16 %v4336, %v4328
    %v4481 = vpack.c.b16 %v4337, %v4329
    %v4482 = vpack.c.b16 %v4338, %v4330
    %v4483 = vpack.c.b16 %v4339, %v4331
    %v4484 = vpack.c.b16 %v4340, %v4332
    %v4485 = vpack.c.b16 %v4341, %v4333
    %v4486 = vpack.c.b16 %v4342, %v4334
    %v4487 = vpack.c.b16 %v4343, %v4335
    %v4488 = vpack.c.b16 %v4352, %v4344
    %v4489 = vpack.c.b16 %v4353, %v4345
    %v4490 = vpack.c.b16 %v4354, %v4346
    %v4491 = vpack.c.b16 %v4355, %v4347
    %v4492 = vpack.c.b16 %v4356, %v4348
    %v4493 = vpack.c.b16 %v4357, %v4349
    %v4494 = vpack.c.b16 %v4358, %v4350
    %v4495 = vpack.c.b16 %v4359, %v4351
    %v4496 = vpack.c.b16 %v4368, %v4360
    %v4497 = vpack.c.b16 %v4369, %v4361
    %v4498 = vpack.c.b16 %v4370, %v4362
    %v4499 = vpack.c.b16 %v4371, %v4363
    %v4500 = vpack.c.b16 %v4372, %v4364
    %v4501 = vpack.c.b16 %v4373, %v4365
    %v4502 = vpack.c.b16 %v4374, %v4366
    %v4503 = vpack.c.b16 %v4375, %v4367
    %4632 = vmatprep.subr.bf16.mxu0 %v4377
    %4633 = vmatpush1.bf16.msra.mxu0 %v4376
    %4634 = vmatprep.subr.bf16.mxu0 %v4385
    %4635 = vmatpush1.bf16.msra.mxu0 %v4384
    %4636 = vmatprep.subr.bf16.mxu0 %v4393
    %4637 = vmatpush1.bf16.msra.mxu0 %v4392
    %4638 = vmatprep.subr.bf16.mxu0 %v4401
    %4639 = vmatpush1.bf16.msra.mxu0 %v4400
    %4640 = vmatprep.subr.bf16.mxu0 %v4409
    %4641 = vmatpush1.bf16.msra.mxu0 %v4408
    %4642 = vmatprep.subr.bf16.mxu0 %v4417
    %4643 = vmatpush1.bf16.msra.mxu0 %v4416
    %4644 = vmatprep.subr.bf16.mxu0 %v4425
    %4645 = vmatpush1.bf16.msra.mxu0 %v4424
    %4646 = vmatprep.subr.bf16.mxu0 %v4433
    %4647 = vmatpush1.bf16.msra.mxu0 %v4432
    %4648 = vmatprep.subr.bf16.mxu0 %v4441
    %4649 = vmatpush1.bf16.msra.mxu0 %v4440
    %4650 = vmatprep.subr.bf16.mxu0 %v4449
    %4651 = vmatpush1.bf16.msra.mxu0 %v4448
    %4652 = vmatprep.subr.bf16.mxu0 %v4457
    %4653 = vmatpush1.bf16.msra.mxu0 %v4456
    %4654 = vmatprep.subr.bf16.mxu0 %v4465
    %4655 = vmatpush1.bf16.msra.mxu0 %v4464
    %4656 = vmatprep.subr.bf16.mxu0 %v4473
    %4657 = vmatpush1.bf16.msra.mxu0 %v4472
    %4658 = vmatprep.subr.bf16.mxu0 %v4481
    %4659 = vmatpush1.bf16.msra.mxu0 %v4480
    %4660 = vmatprep.subr.bf16.mxu0 %v4489
    %4661 = vmatpush1.bf16.msra.mxu0 %v4488
    %4662 = vmatprep.subr.bf16.mxu0 %v4497
    %4663 = vmatpush1.bf16.msra.mxu0 %v4496
    %4664 = vmatprep.mubr.bf16.mxu0 %v3815
    %4665 = vmatmul.mubr.bf16.gmra.mrb[0].mxu0 %v3814
    %v4666 = vpop.f32.mrb[0].mxu0
    %v4667 = vadd.f32 %v3955, %v4666
    %v4668 = vpop.f32.mrb[0].mxu0
    %v4669 = vadd.f32 %v3959, %v4668
    %v4670 = vpop.f32.mrb[0].mxu0
    %v4671 = vadd.f32 %v3955, %v4670
    %v4672 = vpop.f32.mrb[0].mxu0
    %v4673 = vadd.f32 %v3959, %v4672
    %4674 = vmatprep.mubr.bf16.mxu0 %v3817
    %4675 = vmatmul.mubr.bf16.gmra.mrb[0].mxu0 %v3816
    %v4676 = vpop.f32.mrb[0].mxu0
    %v4677 = vadd.f32 %v3955, %v4676
    %v4678 = vpop.f32.mrb[0].mxu0
    %v4679 = vadd.f32 %v3959, %v4678
    %v4680 = vpop.f32.mrb[0].mxu0
    %v4681 = vadd.f32 %v3955, %v4680
    %v4682 = vpop.f32.mrb[0].mxu0
    %v4683 = vadd.f32 %v3959, %v4682
    %4684 = vmatprep.mubr.bf16.mxu0 %v3819
    %4685 = vmatmul.mubr.bf16.gmra.mrb[0].mxu0 %v3818
    %v4686 = vpop.f32.mrb[0].mxu0
    %v4687 = vadd.f32 %v3955, %v4686
    %v4688 = vpop.f32.mrb[0].mxu0
    %v4689 = vadd.f32 %v3959, %v4688
    %v4690 = vpop.f32.mrb[0].mxu0
    %v4691 = vadd.f32 %v3955, %v4690
    %v4692 = vpop.f32.mrb[0].mxu0
    %v4693 = vadd.f32 %v3959, %v4692
    %4694 = vmatprep.mubr.bf16.mxu0 %v3821
    %4695 = vmatmul.mubr.bf16.gmra.mrb[0].mxu0 %v3820
    %v4696 = vpop.f32.mrb[0].mxu0
    %v4697 = vadd.f32 %v3955, %v4696
    %v4698 = vpop.f32.mrb[0].mxu0
    %v4699 = vadd.f32 %v3959, %v4698
    %v4700 = vpop.f32.mrb[0].mxu0
    %v4701 = vadd.f32 %v3955, %v4700
    %v4702 = vpop.f32.mrb[0].mxu0
    %v4703 = vadd.f32 %v3959, %v4702
    %4704 = vdwg.mxu0
    %4705 = vmatprep.subr.bf16.mxu0 %v4379
    %4706 = vmatpush1.bf16.msra.mxu0 %v4378
    %4707 = vmatprep.subr.bf16.mxu0 %v4387
    %4708 = vmatpush1.bf16.msra.mxu0 %v4386
    %4709 = vmatprep.subr.bf16.mxu0 %v4395
    %4710 = vmatpush1.bf16.msra.mxu0 %v4394
    %4711 = vmatprep.subr.bf16.mxu0 %v4403
    %4712 = vmatpush1.bf16.msra.mxu0 %v4402
    %4713 = vmatprep.subr.bf16.mxu0 %v4411
    %4714 = vmatpush1.bf16.msra.mxu0 %v4410
    %4715 = vmatprep.subr.bf16.mxu0 %v4419
    %4716 = vmatpush1.bf16.msra.mxu0 %v4418
    %4717 = vmatprep.subr.bf16.mxu0 %v4427
    %4718 = vmatpush1.bf16.msra.mxu0 %v4426
    %4719 = vmatprep.subr.bf16.mxu0 %v4435
    %4720 = vmatpush1.bf16.msra.mxu0 %v4434
    %4721 = vmatprep.subr.bf16.mxu0 %v4443
    %4722 = vmatpush1.bf16.msra.mxu0 %v4442
    %4723 = vmatprep.subr.bf16.mxu0 %v4451
    %4724 = vmatpush1.bf16.msra.mxu0 %v4450
    %4725 = vmatprep.subr.bf16.mxu0 %v4459
    %4726 = vmatpush1.bf16.msra.mxu0 %v4458
    %4727 = vmatprep.subr.bf16.mxu0 %v4467
    %4728 = vmatpush1.bf16.msra.mxu0 %v4466
    %4729 = vmatprep.subr.bf16.mxu0 %v4475
    %4730 = vmatpush1.bf16.msra.mxu0 %v4474
    %4731 = vmatprep.subr.bf16.mxu0 %v4483
    %4732 = vmatpush1.bf16.msra.mxu0 %v4482
    %4733 = vmatprep.subr.bf16.mxu0 %v4491
    %4734 = vmatpush1.bf16.msra.mxu0 %v4490
    %4735 = vmatprep.subr.bf16.mxu0 %v4499
    %4736 = vmatpush1.bf16.msra.mxu0 %v4498
    %4737 = vmatprep.mubr.bf16.mxu0 %v3815
    %4738 = vmatmul.mubr.bf16.gmra.mrb[0].mxu0 %v3814
    %v4739 = vpop.f32.mrb[0].mxu0
    %v4740 = vadd.f32 %v3963, %v4739
    %v4741 = vpop.f32.mrb[0].mxu0
    %v4742 = vadd.f32 %v3967, %v4741
    %v4743 = vpop.f32.mrb[0].mxu0
    %v4744 = vadd.f32 %v3963, %v4743
    %v4745 = vpop.f32.mrb[0].mxu0
    %v4746 = vadd.f32 %v3967, %v4745
    %4747 = vmatprep.mubr.bf16.mxu0 %v3817
    %4748 = vmatmul.mubr.bf16.gmra.mrb[0].mxu0 %v3816
    %v4749 = vpop.f32.mrb[0].mxu0
    %v4750 = vadd.f32 %v3963, %v4749
    %v4751 = vpop.f32.mrb[0].mxu0
    %v4752 = vadd.f32 %v3967, %v4751
    %v4753 = vpop.f32.mrb[0].mxu0
    %v4754 = vadd.f32 %v3963, %v4753
    %v4755 = vpop.f32.mrb[0].mxu0
    %v4756 = vadd.f32 %v3967, %v4755
    %4757 = vmatprep.mubr.bf16.mxu0 %v3819
    %4758 = vmatmul.mubr.bf16.gmra.mrb[0].mxu0 %v3818
    %v4759 = vpop.f32.mrb[0].mxu0
    %v4760 = vadd.f32 %v3963, %v4759
    %v4761 = vpop.f32.mrb[0].mxu0
    %v4762 = vadd.f32 %v3967, %v4761
    %v4763 = vpop.f32.mrb[0].mxu0
    %v4764 = vadd.f32 %v3963, %v4763
    %v4765 = vpop.f32.mrb[0].mxu0
    %v4766 = vadd.f32 %v3967, %v4765
    %4767 = vmatprep.mubr.bf16.mxu0 %v3821
    %4768 = vmatmul.mubr.bf16.gmra.mrb[0].mxu0 %v3820
    %v4769 = vpop.f32.mrb[0].mxu0
    %v4770 = vadd.f32 %v3963, %v4769
    %v4771 = vpop.f32.mrb[0].mxu0
    %v4772 = vadd.f32 %v3967, %v4771
    %v4773 = vpop.f32.mrb[0].mxu0
    %v4774 = vadd.f32 %v3963, %v4773
    %v4775 = vpop.f32.mrb[0].mxu0
    %v4776 = vadd.f32 %v3967, %v4775
    %4777 = vdwg.mxu0
    %4778 = vmatprep.subr.bf16.mxu0 %v4381
    %4779 = vmatpush1.bf16.msra.mxu0 %v4380
    %4780 = vmatprep.subr.bf16.mxu0 %v4389
    %4781 = vmatpush1.bf16.msra.mxu0 %v4388
    %4782 = vmatprep.subr.bf16.mxu0 %v4397
    %4783 = vmatpush1.bf16.msra.mxu0 %v4396
    %4784 = vmatprep.subr.bf16.mxu0 %v4405
    %4785 = vmatpush1.bf16.msra.mxu0 %v4404
    %4786 = vmatprep.subr.bf16.mxu0 %v4413
    %4787 = vmatpush1.bf16.msra.mxu0 %v4412
    %4788 = vmatprep.subr.bf16.mxu0 %v4421
    %4789 = vmatpush1.bf16.msra.mxu0 %v4420
    %4790 = vmatprep.subr.bf16.mxu0 %v4429
    %4791 = vmatpush1.bf16.msra.mxu0 %v4428
    %4792 = vmatprep.subr.bf16.mxu0 %v4437
    %4793 = vmatpush1.bf16.msra.mxu0 %v4436
    %4794 = vmatprep.subr.bf16.mxu0 %v4445
    %4795 = vmatpush1.bf16.msra.mxu0 %v4444
    %4796 = vmatprep.subr.bf16.mxu0 %v4453
    %4797 = vmatpush1.bf16.msra.mxu0 %v4452
    %4798 = vmatprep.subr.bf16.mxu0 %v4461
    %4799 = vmatpush1.bf16.msra.mxu0 %v4460
    %4800 = vmatprep.subr.bf16.mxu0 %v4469
    %4801 = vmatpush1.bf16.msra.mxu0 %v4468
    %4802 = vmatprep.subr.bf16.mxu0 %v4477
    %4803 = vmatpush1.bf16.msra.mxu0 %v4476
    %4804 = vmatprep.subr.bf16.mxu0 %v4485
    %4805 = vmatpush1.bf16.msra.mxu0 %v4484
    %4806 = vmatprep.subr.bf16.mxu0 %v4493
    %4807 = vmatpush1.bf16.msra.mxu0 %v4492
    %4808 = vmatprep.subr.bf16.mxu0 %v4501
    %4809 = vmatpush1.bf16.msra.mxu0 %v4500
    %4810 = vmatprep.mubr.bf16.mxu0 %v3815
    %4811 = vmatmul.mubr.bf16.gmra.mrb[0].mxu0 %v3814
    %v4812 = vpop.f32.mrb[0].mxu0
    %v4813 = vadd.f32 %v3971, %v4812
    %v4814 = vpop.f32.mrb[0].mxu0
    %v4815 = vadd.f32 %v3975, %v4814
    %v4816 = vpop.f32.mrb[0].mxu0
    %v4817 = vadd.f32 %v3971, %v4816
    %v4818 = vpop.f32.mrb[0].mxu0
    %v4819 = vadd.f32 %v3975, %v4818
    %4820 = vmatprep.mubr.bf16.mxu0 %v3817
    %4821 = vmatmul.mubr.bf16.gmra.mrb[0].mxu0 %v3816
    %v4822 = vpop.f32.mrb[0].mxu0
    %v4823 = vadd.f32 %v3971, %v4822
    %v4824 = vpop.f32.mrb[0].mxu0
    %v4825 = vadd.f32 %v3975, %v4824
    %v4826 = vpop.f32.mrb[0].mxu0
    %v4827 = vadd.f32 %v3971, %v4826
    %v4828 = vpop.f32.mrb[0].mxu0
    %v4829 = vadd.f32 %v3975, %v4828
    %4830 = vmatprep.mubr.bf16.mxu0 %v3819
    %4831 = vmatmul.mubr.bf16.gmra.mrb[0].mxu0 %v3818
    %v4832 = vpop.f32.mrb[0].mxu0
    %v4833 = vadd.f32 %v3971, %v4832
    %v4834 = vpop.f32.mrb[0].mxu0
    %v4835 = vadd.f32 %v3975, %v4834
    %v4836 = vpop.f32.mrb[0].mxu0
    %v4837 = vadd.f32 %v3971, %v4836
    %v4838 = vpop.f32.mrb[0].mxu0
    %v4839 = vadd.f32 %v3975, %v4838
    %4840 = vmatprep.mubr.bf16.mxu0 %v3821
    %4841 = vmatmul.mubr.bf16.gmra.mrb[0].mxu0 %v3820
    %v4842 = vpop.f32.mrb[0].mxu0
    %v4843 = vadd.f32 %v3971, %v4842
    %v4844 = vpop.f32.mrb[0].mxu0
    %v4845 = vadd.f32 %v3975, %v4844
    %v4846 = vpop.f32.mrb[0].mxu0
    %v4847 = vadd.f32 %v3971, %v4846
    %v4848 = vpop.f32.mrb[0].mxu0
    %v4849 = vadd.f32 %v3975, %v4848
    %4850 = vdwg.mxu0
    %4851 = vmatprep.subr.bf16.mxu0 %v4383
    %4852 = vmatpush1.bf16.msra.mxu0 %v4382
    %4853 = vmatprep.subr.bf16.mxu0 %v4391
    %4854 = vmatpush1.bf16.msra.mxu0 %v4390
    %4855 = vmatprep.subr.bf16.mxu0 %v4399
    %4856 = vmatpush1.bf16.msra.mxu0 %v4398
    %4857 = vmatprep.subr.bf16.mxu0 %v4407
    %4858 = vmatpush1.bf16.msra.mxu0 %v4406
    %4859 = vmatprep.subr.bf16.mxu0 %v4415
    %4860 = vmatpush1.bf16.msra.mxu0 %v4414
    %4861 = vmatprep.subr.bf16.mxu0 %v4423
    %4862 = vmatpush1.bf16.msra.mxu0 %v4422
    %4863 = vmatprep.subr.bf16.mxu0 %v4431
    %4864 = vmatpush1.bf16.msra.mxu0 %v4430
    %4865 = vmatprep.subr.bf16.mxu0 %v4439
    %4866 = vmatpush1.bf16.msra.mxu0 %v4438
    %4867 = vmatprep.subr.bf16.mxu0 %v4447
    %4868 = vmatpush1.bf16.msra.mxu0 %v4446
    %4869 = vmatprep.subr.bf16.mxu0 %v4455
    %4870 = vmatpush1.bf16.msra.mxu0 %v4454
    %4871 = vmatprep.subr.bf16.mxu0 %v4463
    %4872 = vmatpush1.bf16.msra.mxu0 %v4462
    %4873 = vmatprep.subr.bf16.mxu0 %v4471
    %4874 = vmatpush1.bf16.msra.mxu0 %v4470
    %4875 = vmatprep.subr.bf16.mxu0 %v4479
    %4876 = vmatpush1.bf16.msra.mxu0 %v4478
    %4877 = vmatprep.subr.bf16.mxu0 %v4487
    %4878 = vmatpush1.bf16.msra.mxu0 %v4486
    %4879 = vmatprep.subr.bf16.mxu0 %v4495
    %4880 = vmatpush1.bf16.msra.mxu0 %v4494
    %4881 = vmatprep.subr.bf16.mxu0 %v4503
    %4882 = vmatpush1.bf16.msra.mxu0 %v4502
    %4883 = vmatprep.mubr.bf16.mxu0 %v3815
    %4884 = vmatmul.mubr.bf16.gmra.mrb[0].mxu0 %v3814
    %v4885 = vpop.f32.mrb[0].mxu0
    %v4886 = vadd.f32 %v3979, %v4885
    %v4887 = vpop.f32.mrb[0].mxu0
    %v4888 = vadd.f32 %v3983, %v4887
    %v4889 = vpop.f32.mrb[0].mxu0
    %v4890 = vadd.f32 %v3979, %v4889
    %v4891 = vpop.f32.mrb[0].mxu0
    %v4892 = vadd.f32 %v3983, %v4891
    %4893 = vmatprep.mubr.bf16.mxu0 %v3817
    %4894 = vmatmul.mubr.bf16.gmra.mrb[0].mxu0 %v3816
    %v4895 = vpop.f32.mrb[0].mxu0
    %v4896 = vadd.f32 %v3979, %v4895
    %v4897 = vpop.f32.mrb[0].mxu0
    %v4898 = vadd.f32 %v3983, %v4897
    %v4899 = vpop.f32.mrb[0].mxu0
    %v4900 = vadd.f32 %v3979, %v4899
    %v4901 = vpop.f32.mrb[0].mxu0
    %v4902 = vadd.f32 %v3983, %v4901
    %4903 = vmatprep.mubr.bf16.mxu0 %v3819
    %4904 = vmatmul.mubr.bf16.gmra.mrb[0].mxu0 %v3818
    %v4905 = vpop.f32.mrb[0].mxu0
    %v4906 = vadd.f32 %v3979, %v4905
    %v4907 = vpop.f32.mrb[0].mxu0
    %v4908 = vadd.f32 %v3983, %v4907
    %v4909 = vpop.f32.mrb[0].mxu0
    %v4910 = vadd.f32 %v3979, %v4909
    %v4911 = vpop.f32.mrb[0].mxu0
    %v4912 = vadd.f32 %v3983, %v4911
    %4913 = vmatprep.mubr.bf16.mxu0 %v3821
    %4914 = vmatmul.mubr.bf16.gmra.mrb[0].mxu0 %v3820
    %v4915 = vpop.f32.mrb[0].mxu0
    %v4916 = vadd.f32 %v3979, %v4915
    %v4917 = vpop.f32.mrb[0].mxu0
    %v4918 = vadd.f32 %v3983, %v4917
    %v4919 = vpop.f32.mrb[0].mxu0
    %v4920 = vadd.f32 %v3979, %v4919
    %v4921 = vpop.f32.mrb[0].mxu0
    %v4922 = vadd.f32 %v3983, %v4921
    %4923 = vdwg.mxu0
    %4924 = vst [vmem:[#allocation2] sm:$0xff] %v4667
    %4925 = vst [vmem:[#allocation2 + $0x8] sm:$0xff] %v4669
    %4926 = vst [vmem:[#allocation2 + $0x10] sm:$0xff] %v4740
    %4927 = vst [vmem:[#allocation2 + $0x18] sm:$0xff] %v4742
    %4928 = vst [vmem:[#allocation2 + $0x20] sm:$0xff] %v4813
    %4929 = vst [vmem:[#allocation2 + $0x28] sm:$0xff] %v4815
    %4930 = vst [vmem:[#allocation2 + $0x30] sm:$0xff] %v4886
    %4931 = vst [vmem:[#allocation2 + $0x38] sm:$0xff] %v4888
    %4932 = vst [vmem:[#allocation2 + $0x40] sm:$0xff] %v4671
    %4933 = vst [vmem:[#allocation2 + $0x48] sm:$0xff] %v4673
    %4934 = vst [vmem:[#allocation2 + $0x50] sm:$0xff] %v4744
    %4935 = vst [vmem:[#allocation2 + $0x58] sm:$0xff] %v4746
    %4936 = vst [vmem:[#allocation2 + $0x60] sm:$0xff] %v4817
    %4937 = vst [vmem:[#allocation2 + $0x68] sm:$0xff] %v4819
    %4938 = vst [vmem:[#allocation2 + $0x70] sm:$0xff] %v4890
    %4939 = vst [vmem:[#allocation2 + $0x78] sm:$0xff] %v4892
    %4940 = vst [vmem:[#allocation2 + $0x80] sm:$0xff] %v4677
    %4941 = vst [vmem:[#allocation2 + $0x88] sm:$0xff] %v4679
    %4942 = vst [vmem:[#allocation2 + $0x90] sm:$0xff] %v4750
    %4943 = vst [vmem:[#allocation2 + $0x98] sm:$0xff] %v4752
    %4944 = vst [vmem:[#allocation2 + $0xa0] sm:$0xff] %v4823
    %4945 = vst [vmem:[#allocation2 + $0xa8] sm:$0xff] %v4825
    %4946 = vst [vmem:[#allocation2 + $0xb0] sm:$0xff] %v4896
    %4947 = vst [vmem:[#allocation2 + $0xb8] sm:$0xff] %v4898
    %4948 = vst [vmem:[#allocation2 + $0xc0] sm:$0xff] %v4681
    %4949 = vst [vmem:[#allocation2 + $0xc8] sm:$0xff] %v4683
    %4950 = vst [vmem:[#allocation2 + $0xd0] sm:$0xff] %v4754
    %4951 = vst [vmem:[#allocation2 + $0xd8] sm:$0xff] %v4756
    %4952 = vst [vmem:[#allocation2 + $0xe0] sm:$0xff] %v4827
    %4953 = vst [vmem:[#allocation2 + $0xe8] sm:$0xff] %v4829
    %4954 = vst [vmem:[#allocation2 + $0xf0] sm:$0xff] %v4900
    %4955 = vst [vmem:[#allocation2 + $0xf8] sm:$0xff] %v4902
    %4956 = vst [vmem:[#allocation2 + $0x100] sm:$0xff] %v4687
    %4957 = vst [vmem:[#allocation2 + $0x108] sm:$0xff] %v4689
    %4958 = vst [vmem:[#allocation2 + $0x110] sm:$0xff] %v4760
    %4959 = vst [vmem:[#allocation2 + $0x118] sm:$0xff] %v4762
    %4960 = vst [vmem:[#allocation2 + $0x120] sm:$0xff] %v4833
    %4961 = vst [vmem:[#allocation2 + $0x128] sm:$0xff] %v4835
    %4962 = vst [vmem:[#allocation2 + $0x130] sm:$0xff] %v4906
    %4963 = vst [vmem:[#allocation2 + $0x138] sm:$0xff] %v4908
    %4964 = vst [vmem:[#allocation2 + $0x140] sm:$0xff] %v4691
    %4965 = vst [vmem:[#allocation2 + $0x148] sm:$0xff] %v4693
    %4966 = vst [vmem:[#allocation2 + $0x150] sm:$0xff] %v4764
    %4967 = vst [vmem:[#allocation2 + $0x158] sm:$0xff] %v4766
    %4968 = vst [vmem:[#allocation2 + $0x160] sm:$0xff] %v4837
    %4969 = vst [vmem:[#allocation2 + $0x168] sm:$0xff] %v4839
    %4970 = vst [vmem:[#allocation2 + $0x170] sm:$0xff] %v4910
    %4971 = vst [vmem:[#allocation2 + $0x178] sm:$0xff] %v4912
    %4972 = vst [vmem:[#allocation2 + $0x180] sm:$0xff] %v4697
    %4973 = vst [vmem:[#allocation2 + $0x188] sm:$0xff] %v4699
    %4974 = vst [vmem:[#allocation2 + $0x190] sm:$0xff] %v4770
    %4975 = vst [vmem:[#allocation2 + $0x198] sm:$0xff] %v4772
    %4976 = vst [vmem:[#allocation2 + $0x1a0] sm:$0xff] %v4843
    %4977 = vst [vmem:[#allocation2 + $0x1a8] sm:$0xff] %v4845
    %4978 = vst [vmem:[#allocation2 + $0x1b0] sm:$0xff] %v4916
    %4979 = vst [vmem:[#allocation2 + $0x1b8] sm:$0xff] %v4918
    %4980 = vst [vmem:[#allocation2 + $0x1c0] sm:$0xff] %v4701
    %4981 = vst [vmem:[#allocation2 + $0x1c8] sm:$0xff] %v4703
    %4982 = vst [vmem:[#allocation2 + $0x1d0] sm:$0xff] %v4774
    %4983 = vst [vmem:[#allocation2 + $0x1d8] sm:$0xff] %v4776
    %4984 = vst [vmem:[#allocation2 + $0x1e0] sm:$0xff] %v4847
    %4985 = vst [vmem:[#allocation2 + $0x1e8] sm:$0xff] %v4849
    %4986 = vst [vmem:[#allocation2 + $0x1f0] sm:$0xff] %v4920
    %4987 = vst [vmem:[#allocation2 + $0x1f8] sm:$0xff] %v4922
    %v4988 = vld [vmem:[#allocation9] sm:$0xff]
    %v4989 = vld [vmem:[#allocation9 + $0x8] sm:$0xff]
    %v4990 = vld [vmem:[#allocation9 + $0x10] sm:$0xff]
    %v4991 = vld [vmem:[#allocation9 + $0x18] sm:$0xff]
    %v4992 = vld [vmem:[#allocation9 + $0x20] sm:$0xff]
    %v4993 = vld [vmem:[#allocation9 + $0x28] sm:$0xff]
    %v4994 = vld [vmem:[#allocation9 + $0x30] sm:$0xff]
    %v4995 = vld [vmem:[#allocation9 + $0x38] sm:$0xff]
    %v4996 = vld [vmem:[#allocation9 + $0x40] sm:$0xff]
    %v4997 = vld [vmem:[#allocation9 + $0x48] sm:$0xff]
    %v4998 = vld [vmem:[#allocation9 + $0x50] sm:$0xff]
    %v4999 = vld [vmem:[#allocation9 + $0x58] sm:$0xff]
    %v5000 = vld [vmem:[#allocation9 + $0x60] sm:$0xff]
    %v5001 = vld [vmem:[#allocation9 + $0x68] sm:$0xff]
    %v5002 = vld [vmem:[#allocation9 + $0x70] sm:$0xff]
    %v5003 = vld [vmem:[#allocation9 + $0x78] sm:$0xff]
    %v5004 = vld [vmem:[#allocation9 + $0x80] sm:$0xff]
    %v5005 = vld [vmem:[#allocation9 + $0x88] sm:$0xff]
    %v5006 = vld [vmem:[#allocation9 + $0x90] sm:$0xff]
    %v5007 = vld [vmem:[#allocation9 + $0x98] sm:$0xff]
    %v5008 = vld [vmem:[#allocation9 + $0xa0] sm:$0xff]
    %v5009 = vld [vmem:[#allocation9 + $0xa8] sm:$0xff]
    %v5010 = vld [vmem:[#allocation9 + $0xb0] sm:$0xff]
    %v5011 = vld [vmem:[#allocation9 + $0xb8] sm:$0xff]
    %v5012 = vld [vmem:[#allocation9 + $0xc0] sm:$0xff]
    %v5013 = vld [vmem:[#allocation9 + $0xc8] sm:$0xff]
    %v5014 = vld [vmem:[#allocation9 + $0xd0] sm:$0xff]
    %v5015 = vld [vmem:[#allocation9 + $0xd8] sm:$0xff]
    %v5016 = vld [vmem:[#allocation9 + $0xe0] sm:$0xff]
    %v5017 = vld [vmem:[#allocation9 + $0xe8] sm:$0xff]
    %v5018 = vld [vmem:[#allocation9 + $0xf0] sm:$0xff]
    %v5019 = vld [vmem:[#allocation9 + $0xf8] sm:$0xff]
    %v5020 = vld [vmem:[#allocation9 + $0x100] sm:$0xff]
    %v5021 = vld [vmem:[#allocation9 + $0x108] sm:$0xff]
    %v5022 = vld [vmem:[#allocation9 + $0x110] sm:$0xff]
    %v5023 = vld [vmem:[#allocation9 + $0x118] sm:$0xff]
    %v5024 = vld [vmem:[#allocation9 + $0x120] sm:$0xff]
    %v5025 = vld [vmem:[#allocation9 + $0x128] sm:$0xff]
    %v5026 = vld [vmem:[#allocation9 + $0x130] sm:$0xff]
    %v5027 = vld [vmem:[#allocation9 + $0x138] sm:$0xff]
    %v5028 = vld [vmem:[#allocation9 + $0x140] sm:$0xff]
    %v5029 = vld [vmem:[#allocation9 + $0x148] sm:$0xff]
    %v5030 = vld [vmem:[#allocation9 + $0x150] sm:$0xff]
    %v5031 = vld [vmem:[#allocation9 + $0x158] sm:$0xff]
    %v5032 = vld [vmem:[#allocation9 + $0x160] sm:$0xff]
    %v5033 = vld [vmem:[#allocation9 + $0x168] sm:$0xff]
    %v5034 = vld [vmem:[#allocation9 + $0x170] sm:$0xff]
    %v5035 = vld [vmem:[#allocation9 + $0x178] sm:$0xff]
    %v5036 = vld [vmem:[#allocation9 + $0x180] sm:$0xff]
    %v5037 = vld [vmem:[#allocation9 + $0x188] sm:$0xff]
    %v5038 = vld [vmem:[#allocation9 + $0x190] sm:$0xff]
    %v5039 = vld [vmem:[#allocation9 + $0x198] sm:$0xff]
    %v5040 = vld [vmem:[#allocation9 + $0x1a0] sm:$0xff]
    %v5041 = vld [vmem:[#allocation9 + $0x1a8] sm:$0xff]
    %v5042 = vld [vmem:[#allocation9 + $0x1b0] sm:$0xff]
    %v5043 = vld [vmem:[#allocation9 + $0x1b8] sm:$0xff]
    %v5044 = vld [vmem:[#allocation9 + $0x1c0] sm:$0xff]
    %v5045 = vld [vmem:[#allocation9 + $0x1c8] sm:$0xff]
    %v5046 = vld [vmem:[#allocation9 + $0x1d0] sm:$0xff]
    %v5047 = vld [vmem:[#allocation9 + $0x1d8] sm:$0xff]
    %v5048 = vld [vmem:[#allocation9 + $0x1e0] sm:$0xff]
    %v5049 = vld [vmem:[#allocation9 + $0x1e8] sm:$0xff]
    %v5050 = vld [vmem:[#allocation9 + $0x1f0] sm:$0xff]
    %v5051 = vld [vmem:[#allocation9 + $0x1f8] sm:$0xff]
    %v5052 = vld [vmem:[#allocation9 + $0x200] sm:$0xff]
    %v5053 = vld [vmem:[#allocation9 + $0x208] sm:$0xff]
    %v5054 = vld [vmem:[#allocation9 + $0x210] sm:$0xff]
    %v5055 = vld [vmem:[#allocation9 + $0x218] sm:$0xff]
    %v5056 = vld [vmem:[#allocation9 + $0x220] sm:$0xff]
    %v5057 = vld [vmem:[#allocation9 + $0x228] sm:$0xff]
    %v5058 = vld [vmem:[#allocation9 + $0x230] sm:$0xff]
    %v5059 = vld [vmem:[#allocation9 + $0x238] sm:$0xff]
    %v5060 = vld [vmem:[#allocation9 + $0x240] sm:$0xff]
    %v5061 = vld [vmem:[#allocation9 + $0x248] sm:$0xff]
    %v5062 = vld [vmem:[#allocation9 + $0x250] sm:$0xff]
    %v5063 = vld [vmem:[#allocation9 + $0x258] sm:$0xff]
    %v5064 = vld [vmem:[#allocation9 + $0x260] sm:$0xff]
    %v5065 = vld [vmem:[#allocation9 + $0x268] sm:$0xff]
    %v5066 = vld [vmem:[#allocation9 + $0x270] sm:$0xff]
    %v5067 = vld [vmem:[#allocation9 + $0x278] sm:$0xff]
    %v5068 = vld [vmem:[#allocation9 + $0x280] sm:$0xff]
    %v5069 = vld [vmem:[#allocation9 + $0x288] sm:$0xff]
    %v5070 = vld [vmem:[#allocation9 + $0x290] sm:$0xff]
    %v5071 = vld [vmem:[#allocation9 + $0x298] sm:$0xff]
    %v5072 = vld [vmem:[#allocation9 + $0x2a0] sm:$0xff]
    %v5073 = vld [vmem:[#allocation9 + $0x2a8] sm:$0xff]
    %v5074 = vld [vmem:[#allocation9 + $0x2b0] sm:$0xff]
    %v5075 = vld [vmem:[#allocation9 + $0x2b8] sm:$0xff]
    %v5076 = vld [vmem:[#allocation9 + $0x2c0] sm:$0xff]
    %v5077 = vld [vmem:[#allocation9 + $0x2c8] sm:$0xff]
    %v5078 = vld [vmem:[#allocation9 + $0x2d0] sm:$0xff]
    %v5079 = vld [vmem:[#allocation9 + $0x2d8] sm:$0xff]
    %v5080 = vld [vmem:[#allocation9 + $0x2e0] sm:$0xff]
    %v5081 = vld [vmem:[#allocation9 + $0x2e8] sm:$0xff]
    %v5082 = vld [vmem:[#allocation9 + $0x2f0] sm:$0xff]
    %v5083 = vld [vmem:[#allocation9 + $0x2f8] sm:$0xff]
    %v5084 = vld [vmem:[#allocation9 + $0x300] sm:$0xff]
    %v5085 = vld [vmem:[#allocation9 + $0x308] sm:$0xff]
    %v5086 = vld [vmem:[#allocation9 + $0x310] sm:$0xff]
    %v5087 = vld [vmem:[#allocation9 + $0x318] sm:$0xff]
    %v5088 = vld [vmem:[#allocation9 + $0x320] sm:$0xff]
    %v5089 = vld [vmem:[#allocation9 + $0x328] sm:$0xff]
    %v5090 = vld [vmem:[#allocation9 + $0x330] sm:$0xff]
    %v5091 = vld [vmem:[#allocation9 + $0x338] sm:$0xff]
    %v5092 = vld [vmem:[#allocation9 + $0x340] sm:$0xff]
    %v5093 = vld [vmem:[#allocation9 + $0x348] sm:$0xff]
    %v5094 = vld [vmem:[#allocation9 + $0x350] sm:$0xff]
    %v5095 = vld [vmem:[#allocation9 + $0x358] sm:$0xff]
    %v5096 = vld [vmem:[#allocation9 + $0x360] sm:$0xff]
    %v5097 = vld [vmem:[#allocation9 + $0x368] sm:$0xff]
    %v5098 = vld [vmem:[#allocation9 + $0x370] sm:$0xff]
    %v5099 = vld [vmem:[#allocation9 + $0x378] sm:$0xff]
    %v5100 = vld [vmem:[#allocation9 + $0x380] sm:$0xff]
    %v5101 = vld [vmem:[#allocation9 + $0x388] sm:$0xff]
    %v5102 = vld [vmem:[#allocation9 + $0x390] sm:$0xff]
    %v5103 = vld [vmem:[#allocation9 + $0x398] sm:$0xff]
    %v5104 = vld [vmem:[#allocation9 + $0x3a0] sm:$0xff]
    %v5105 = vld [vmem:[#allocation9 + $0x3a8] sm:$0xff]
    %v5106 = vld [vmem:[#allocation9 + $0x3b0] sm:$0xff]
    %v5107 = vld [vmem:[#allocation9 + $0x3b8] sm:$0xff]
    %v5108 = vld [vmem:[#allocation9 + $0x3c0] sm:$0xff]
    %v5109 = vld [vmem:[#allocation9 + $0x3c8] sm:$0xff]
    %v5110 = vld [vmem:[#allocation9 + $0x3d0] sm:$0xff]
    %v5111 = vld [vmem:[#allocation9 + $0x3d8] sm:$0xff]
    %v5112 = vld [vmem:[#allocation9 + $0x3e0] sm:$0xff]
    %v5113 = vld [vmem:[#allocation9 + $0x3e8] sm:$0xff]
    %v5114 = vld [vmem:[#allocation9 + $0x3f0] sm:$0xff]
    %v5115 = vld [vmem:[#allocation9 + $0x3f8] sm:$0xff]
    %v5244 = vunpack.c.l.b16 %v4988
    %v5245 = vunpack.c.h.b16 %v4988
    %v5246 = vunpack.c.l.b16 %v4989
    %v5247 = vunpack.c.h.b16 %v4989
    %v5248 = vunpack.c.l.b16 %v4990
    %v5249 = vunpack.c.h.b16 %v4990
    %v5250 = vunpack.c.l.b16 %v4991
    %v5251 = vunpack.c.h.b16 %v4991
    %v5252 = vunpack.c.l.b16 %v4992
    %v5253 = vunpack.c.h.b16 %v4992
    %v5254 = vunpack.c.l.b16 %v4993
    %v5255 = vunpack.c.h.b16 %v4993
    %v5256 = vunpack.c.l.b16 %v4994
    %v5257 = vunpack.c.h.b16 %v4994
    %v5258 = vunpack.c.l.b16 %v4995
    %v5259 = vunpack.c.h.b16 %v4995
    %v5260 = vunpack.c.l.b16 %v4996
    %v5261 = vunpack.c.h.b16 %v4996
    %v5262 = vunpack.c.l.b16 %v4997
    %v5263 = vunpack.c.h.b16 %v4997
    %v5264 = vunpack.c.l.b16 %v4998
    %v5265 = vunpack.c.h.b16 %v4998
    %v5266 = vunpack.c.l.b16 %v4999
    %v5267 = vunpack.c.h.b16 %v4999
    %v5268 = vunpack.c.l.b16 %v5000
    %v5269 = vunpack.c.h.b16 %v5000
    %v5270 = vunpack.c.l.b16 %v5001
    %v5271 = vunpack.c.h.b16 %v5001
    %v5272 = vunpack.c.l.b16 %v5002
    %v5273 = vunpack.c.h.b16 %v5002
    %v5274 = vunpack.c.l.b16 %v5003
    %v5275 = vunpack.c.h.b16 %v5003
    %v5276 = vunpack.c.l.b16 %v5004
    %v5277 = vunpack.c.h.b16 %v5004
    %v5278 = vunpack.c.l.b16 %v5005
    %v5279 = vunpack.c.h.b16 %v5005
    %v5280 = vunpack.c.l.b16 %v5006
    %v5281 = vunpack.c.h.b16 %v5006
    %v5282 = vunpack.c.l.b16 %v5007
    %v5283 = vunpack.c.h.b16 %v5007
    %v5284 = vunpack.c.l.b16 %v5008
    %v5285 = vunpack.c.h.b16 %v5008
    %v5286 = vunpack.c.l.b16 %v5009
    %v5287 = vunpack.c.h.b16 %v5009
    %v5288 = vunpack.c.l.b16 %v5010
    %v5289 = vunpack.c.h.b16 %v5010
    %v5290 = vunpack.c.l.b16 %v5011
    %v5291 = vunpack.c.h.b16 %v5011
    %v5292 = vunpack.c.l.b16 %v5012
    %v5293 = vunpack.c.h.b16 %v5012
    %v5294 = vunpack.c.l.b16 %v5013
    %v5295 = vunpack.c.h.b16 %v5013
    %v5296 = vunpack.c.l.b16 %v5014
    %v5297 = vunpack.c.h.b16 %v5014
    %v5298 = vunpack.c.l.b16 %v5015
    %v5299 = vunpack.c.h.b16 %v5015
    %v5300 = vunpack.c.l.b16 %v5016
    %v5301 = vunpack.c.h.b16 %v5016
    %v5302 = vunpack.c.l.b16 %v5017
    %v5303 = vunpack.c.h.b16 %v5017
    %v5304 = vunpack.c.l.b16 %v5018
    %v5305 = vunpack.c.h.b16 %v5018
    %v5306 = vunpack.c.l.b16 %v5019
    %v5307 = vunpack.c.h.b16 %v5019
    %v5308 = vunpack.c.l.b16 %v5020
    %v5309 = vunpack.c.h.b16 %v5020
    %v5310 = vunpack.c.l.b16 %v5021
    %v5311 = vunpack.c.h.b16 %v5021
    %v5312 = vunpack.c.l.b16 %v5022
    %v5313 = vunpack.c.h.b16 %v5022
    %v5314 = vunpack.c.l.b16 %v5023
    %v5315 = vunpack.c.h.b16 %v5023
    %v5316 = vunpack.c.l.b16 %v5024
    %v5317 = vunpack.c.h.b16 %v5024
    %v5318 = vunpack.c.l.b16 %v5025
    %v5319 = vunpack.c.h.b16 %v5025
    %v5320 = vunpack.c.l.b16 %v5026
    %v5321 = vunpack.c.h.b16 %v5026
    %v5322 = vunpack.c.l.b16 %v5027
    %v5323 = vunpack.c.h.b16 %v5027
    %v5324 = vunpack.c.l.b16 %v5028
    %v5325 = vunpack.c.h.b16 %v5028
    %v5326 = vunpack.c.l.b16 %v5029
    %v5327 = vunpack.c.h.b16 %v5029
    %v5328 = vunpack.c.l.b16 %v5030
    %v5329 = vunpack.c.h.b16 %v5030
    %v5330 = vunpack.c.l.b16 %v5031
    %v5331 = vunpack.c.h.b16 %v5031
    %v5332 = vunpack.c.l.b16 %v5032
    %v5333 = vunpack.c.h.b16 %v5032
    %v5334 = vunpack.c.l.b16 %v5033
    %v5335 = vunpack.c.h.b16 %v5033
    %v5336 = vunpack.c.l.b16 %v5034
    %v5337 = vunpack.c.h.b16 %v5034
    %v5338 = vunpack.c.l.b16 %v5035
    %v5339 = vunpack.c.h.b16 %v5035
    %v5340 = vunpack.c.l.b16 %v5036
    %v5341 = vunpack.c.h.b16 %v5036
    %v5342 = vunpack.c.l.b16 %v5037
    %v5343 = vunpack.c.h.b16 %v5037
    %v5344 = vunpack.c.l.b16 %v5038
    %v5345 = vunpack.c.h.b16 %v5038
    %v5346 = vunpack.c.l.b16 %v5039
    %v5347 = vunpack.c.h.b16 %v5039
    %v5348 = vunpack.c.l.b16 %v5040
    %v5349 = vunpack.c.h.b16 %v5040
    %v5350 = vunpack.c.l.b16 %v5041
    %v5351 = vunpack.c.h.b16 %v5041
    %v5352 = vunpack.c.l.b16 %v5042
    %v5353 = vunpack.c.h.b16 %v5042
    %v5354 = vunpack.c.l.b16 %v5043
    %v5355 = vunpack.c.h.b16 %v5043
    %v5356 = vunpack.c.l.b16 %v5044
    %v5357 = vunpack.c.h.b16 %v5044
    %v5358 = vunpack.c.l.b16 %v5045
    %v5359 = vunpack.c.h.b16 %v5045
    %v5360 = vunpack.c.l.b16 %v5046
    %v5361 = vunpack.c.h.b16 %v5046
    %v5362 = vunpack.c.l.b16 %v5047
    %v5363 = vunpack.c.h.b16 %v5047
    %v5364 = vunpack.c.l.b16 %v5048
    %v5365 = vunpack.c.h.b16 %v5048
    %v5366 = vunpack.c.l.b16 %v5049
    %v5367 = vunpack.c.h.b16 %v5049
    %v5368 = vunpack.c.l.b16 %v5050
    %v5369 = vunpack.c.h.b16 %v5050
    %v5370 = vunpack.c.l.b16 %v5051
    %v5371 = vunpack.c.h.b16 %v5051
    %v5372 = vunpack.c.l.b16 %v5052
    %v5373 = vunpack.c.h.b16 %v5052
    %v5374 = vunpack.c.l.b16 %v5053
    %v5375 = vunpack.c.h.b16 %v5053
    %v5376 = vunpack.c.l.b16 %v5054
    %v5377 = vunpack.c.h.b16 %v5054
    %v5378 = vunpack.c.l.b16 %v5055
    %v5379 = vunpack.c.h.b16 %v5055
    %v5380 = vunpack.c.l.b16 %v5056
    %v5381 = vunpack.c.h.b16 %v5056
    %v5382 = vunpack.c.l.b16 %v5057
    %v5383 = vunpack.c.h.b16 %v5057
    %v5384 = vunpack.c.l.b16 %v5058
    %v5385 = vunpack.c.h.b16 %v5058
    %v5386 = vunpack.c.l.b16 %v5059
    %v5387 = vunpack.c.h.b16 %v5059
    %v5388 = vunpack.c.l.b16 %v5060
    %v5389 = vunpack.c.h.b16 %v5060
    %v5390 = vunpack.c.l.b16 %v5061
    %v5391 = vunpack.c.h.b16 %v5061
    %v5392 = vunpack.c.l.b16 %v5062
    %v5393 = vunpack.c.h.b16 %v5062
    %v5394 = vunpack.c.l.b16 %v5063
    %v5395 = vunpack.c.h.b16 %v5063
    %v5396 = vunpack.c.l.b16 %v5064
    %v5397 = vunpack.c.h.b16 %v5064
    %v5398 = vunpack.c.l.b16 %v5065
    %v5399 = vunpack.c.h.b16 %v5065
    %v5400 = vunpack.c.l.b16 %v5066
    %v5401 = vunpack.c.h.b16 %v5066
    %v5402 = vunpack.c.l.b16 %v5067
    %v5403 = vunpack.c.h.b16 %v5067
    %v5404 = vunpack.c.l.b16 %v5068
    %v5405 = vunpack.c.h.b16 %v5068
    %v5406 = vunpack.c.l.b16 %v5069
    %v5407 = vunpack.c.h.b16 %v5069
    %v5408 = vunpack.c.l.b16 %v5070
    %v5409 = vunpack.c.h.b16 %v5070
    %v5410 = vunpack.c.l.b16 %v5071
    %v5411 = vunpack.c.h.b16 %v5071
    %v5412 = vunpack.c.l.b16 %v5072
    %v5413 = vunpack.c.h.b16 %v5072
    %v5414 = vunpack.c.l.b16 %v5073
    %v5415 = vunpack.c.h.b16 %v5073
    %v5416 = vunpack.c.l.b16 %v5074
    %v5417 = vunpack.c.h.b16 %v5074
    %v5418 = vunpack.c.l.b16 %v5075
    %v5419 = vunpack.c.h.b16 %v5075
    %v5420 = vunpack.c.l.b16 %v5076
    %v5421 = vunpack.c.h.b16 %v5076
    %v5422 = vunpack.c.l.b16 %v5077
    %v5423 = vunpack.c.h.b16 %v5077
    %v5424 = vunpack.c.l.b16 %v5078
    %v5425 = vunpack.c.h.b16 %v5078
    %v5426 = vunpack.c.l.b16 %v5079
    %v5427 = vunpack.c.h.b16 %v5079
    %v5428 = vunpack.c.l.b16 %v5080
    %v5429 = vunpack.c.h.b16 %v5080
    %v5430 = vunpack.c.l.b16 %v5081
    %v5431 = vunpack.c.h.b16 %v5081
    %v5432 = vunpack.c.l.b16 %v5082
    %v5433 = vunpack.c.h.b16 %v5082
    %v5434 = vunpack.c.l.b16 %v5083
    %v5435 = vunpack.c.h.b16 %v5083
    %v5436 = vunpack.c.l.b16 %v5084
    %v5437 = vunpack.c.h.b16 %v5084
    %v5438 = vunpack.c.l.b16 %v5085
    %v5439 = vunpack.c.h.b16 %v5085
    %v5440 = vunpack.c.l.b16 %v5086
    %v5441 = vunpack.c.h.b16 %v5086
    %v5442 = vunpack.c.l.b16 %v5087
    %v5443 = vunpack.c.h.b16 %v5087
    %v5444 = vunpack.c.l.b16 %v5088
    %v5445 = vunpack.c.h.b16 %v5088
    %v5446 = vunpack.c.l.b16 %v5089
    %v5447 = vunpack.c.h.b16 %v5089
    %v5448 = vunpack.c.l.b16 %v5090
    %v5449 = vunpack.c.h.b16 %v5090
    %v5450 = vunpack.c.l.b16 %v5091
    %v5451 = vunpack.c.h.b16 %v5091
    %v5452 = vunpack.c.l.b16 %v5092
    %v5453 = vunpack.c.h.b16 %v5092
    %v5454 = vunpack.c.l.b16 %v5093
    %v5455 = vunpack.c.h.b16 %v5093
    %v5456 = vunpack.c.l.b16 %v5094
    %v5457 = vunpack.c.h.b16 %v5094
    %v5458 = vunpack.c.l.b16 %v5095
    %v5459 = vunpack.c.h.b16 %v5095
    %v5460 = vunpack.c.l.b16 %v5096
    %v5461 = vunpack.c.h.b16 %v5096
    %v5462 = vunpack.c.l.b16 %v5097
    %v5463 = vunpack.c.h.b16 %v5097
    %v5464 = vunpack.c.l.b16 %v5098
    %v5465 = vunpack.c.h.b16 %v5098
    %v5466 = vunpack.c.l.b16 %v5099
    %v5467 = vunpack.c.h.b16 %v5099
    %v5468 = vunpack.c.l.b16 %v5100
    %v5469 = vunpack.c.h.b16 %v5100
    %v5470 = vunpack.c.l.b16 %v5101
    %v5471 = vunpack.c.h.b16 %v5101
    %v5472 = vunpack.c.l.b16 %v5102
    %v5473 = vunpack.c.h.b16 %v5102
    %v5474 = vunpack.c.l.b16 %v5103
    %v5475 = vunpack.c.h.b16 %v5103
    %v5476 = vunpack.c.l.b16 %v5104
    %v5477 = vunpack.c.h.b16 %v5104
    %v5478 = vunpack.c.l.b16 %v5105
    %v5479 = vunpack.c.h.b16 %v5105
    %v5480 = vunpack.c.l.b16 %v5106
    %v5481 = vunpack.c.h.b16 %v5106
    %v5482 = vunpack.c.l.b16 %v5107
    %v5483 = vunpack.c.h.b16 %v5107
    %v5484 = vunpack.c.l.b16 %v5108
    %v5485 = vunpack.c.h.b16 %v5108
    %v5486 = vunpack.c.l.b16 %v5109
    %v5487 = vunpack.c.h.b16 %v5109
    %v5488 = vunpack.c.l.b16 %v5110
    %v5489 = vunpack.c.h.b16 %v5110
    %v5490 = vunpack.c.l.b16 %v5111
    %v5491 = vunpack.c.h.b16 %v5111
    %v5492 = vunpack.c.l.b16 %v5112
    %v5493 = vunpack.c.h.b16 %v5112
    %v5494 = vunpack.c.l.b16 %v5113
    %v5495 = vunpack.c.h.b16 %v5113
    %v5496 = vunpack.c.l.b16 %v5114
    %v5497 = vunpack.c.h.b16 %v5114
    %v5498 = vunpack.c.l.b16 %v5115
    %v5499 = vunpack.c.h.b16 %v5115
    %v5500 = vpack.c.b16 %v5252, %v5244
    %v5501 = vpack.c.b16 %v5253, %v5245
    %v5502 = vpack.c.b16 %v5254, %v5246
    %v5503 = vpack.c.b16 %v5255, %v5247
    %v5504 = vpack.c.b16 %v5256, %v5248
    %v5505 = vpack.c.b16 %v5257, %v5249
    %v5506 = vpack.c.b16 %v5258, %v5250
    %v5507 = vpack.c.b16 %v5259, %v5251
    %v5508 = vpack.c.b16 %v5268, %v5260
    %v5509 = vpack.c.b16 %v5269, %v5261
    %v5510 = vpack.c.b16 %v5270, %v5262
    %v5511 = vpack.c.b16 %v5271, %v5263
    %v5512 = vpack.c.b16 %v5272, %v5264
    %v5513 = vpack.c.b16 %v5273, %v5265
    %v5514 = vpack.c.b16 %v5274, %v5266
    %v5515 = vpack.c.b16 %v5275, %v5267
    %v5516 = vpack.c.b16 %v5284, %v5276
    %v5517 = vpack.c.b16 %v5285, %v5277
    %v5518 = vpack.c.b16 %v5286, %v5278
    %v5519 = vpack.c.b16 %v5287, %v5279
    %v5520 = vpack.c.b16 %v5288, %v5280
    %v5521 = vpack.c.b16 %v5289, %v5281
    %v5522 = vpack.c.b16 %v5290, %v5282
    %v5523 = vpack.c.b16 %v5291, %v5283
    %v5524 = vpack.c.b16 %v5300, %v5292
    %v5525 = vpack.c.b16 %v5301, %v5293
    %v5526 = vpack.c.b16 %v5302, %v5294
    %v5527 = vpack.c.b16 %v5303, %v5295
    %v5528 = vpack.c.b16 %v5304, %v5296
    %v5529 = vpack.c.b16 %v5305, %v5297
    %v5530 = vpack.c.b16 %v5306, %v5298
    %v5531 = vpack.c.b16 %v5307, %v5299
    %v5532 = vpack.c.b16 %v5316, %v5308
    %v5533 = vpack.c.b16 %v5317, %v5309
    %v5534 = vpack.c.b16 %v5318, %v5310
    %v5535 = vpack.c.b16 %v5319, %v5311
    %v5536 = vpack.c.b16 %v5320, %v5312
    %v5537 = vpack.c.b16 %v5321, %v5313
    %v5538 = vpack.c.b16 %v5322, %v5314
    %v5539 = vpack.c.b16 %v5323, %v5315
    %v5540 = vpack.c.b16 %v5332, %v5324
    %v5541 = vpack.c.b16 %v5333, %v5325
    %v5542 = vpack.c.b16 %v5334, %v5326
    %v5543 = vpack.c.b16 %v5335, %v5327
    %v5544 = vpack.c.b16 %v5336, %v5328
    %v5545 = vpack.c.b16 %v5337, %v5329
    %v5546 = vpack.c.b16 %v5338, %v5330
    %v5547 = vpack.c.b16 %v5339, %v5331
    %v5548 = vpack.c.b16 %v5348, %v5340
    %v5549 = vpack.c.b16 %v5349, %v5341
    %v5550 = vpack.c.b16 %v5350, %v5342
    %v5551 = vpack.c.b16 %v5351, %v5343
    %v5552 = vpack.c.b16 %v5352, %v5344
    %v5553 = vpack.c.b16 %v5353, %v5345
    %v5554 = vpack.c.b16 %v5354, %v5346
    %v5555 = vpack.c.b16 %v5355, %v5347
    %v5556 = vpack.c.b16 %v5364, %v5356
    %v5557 = vpack.c.b16 %v5365, %v5357
    %v5558 = vpack.c.b16 %v5366, %v5358
    %v5559 = vpack.c.b16 %v5367, %v5359
    %v5560 = vpack.c.b16 %v5368, %v5360
    %v5561 = vpack.c.b16 %v5369, %v5361
    %v5562 = vpack.c.b16 %v5370, %v5362
    %v5563 = vpack.c.b16 %v5371, %v5363
    %v5564 = vpack.c.b16 %v5380, %v5372
    %v5565 = vpack.c.b16 %v5381, %v5373
    %v5566 = vpack.c.b16 %v5382, %v5374
    %v5567 = vpack.c.b16 %v5383, %v5375
    %v5568 = vpack.c.b16 %v5384, %v5376
    %v5569 = vpack.c.b16 %v5385, %v5377
    %v5570 = vpack.c.b16 %v5386, %v5378
    %v5571 = vpack.c.b16 %v5387, %v5379
    %v5572 = vpack.c.b16 %v5396, %v5388
    %v5573 = vpack.c.b16 %v5397, %v5389
    %v5574 = vpack.c.b16 %v5398, %v5390
    %v5575 = vpack.c.b16 %v5399, %v5391
    %v5576 = vpack.c.b16 %v5400, %v5392
    %v5577 = vpack.c.b16 %v5401, %v5393
    %v5578 = vpack.c.b16 %v5402, %v5394
    %v5579 = vpack.c.b16 %v5403, %v5395
    %v5580 = vpack.c.b16 %v5412, %v5404
    %v5581 = vpack.c.b16 %v5413, %v5405
    %v5582 = vpack.c.b16 %v5414, %v5406
    %v5583 = vpack.c.b16 %v5415, %v5407
    %v5584 = vpack.c.b16 %v5416, %v5408
    %v5585 = vpack.c.b16 %v5417, %v5409
    %v5586 = vpack.c.b16 %v5418, %v5410
    %v5587 = vpack.c.b16 %v5419, %v5411
    %v5588 = vpack.c.b16 %v5428, %v5420
    %v5589 = vpack.c.b16 %v5429, %v5421
    %v5590 = vpack.c.b16 %v5430, %v5422
    %v5591 = vpack.c.b16 %v5431, %v5423
    %v5592 = vpack.c.b16 %v5432, %v5424
    %v5593 = vpack.c.b16 %v5433, %v5425
    %v5594 = vpack.c.b16 %v5434, %v5426
    %v5595 = vpack.c.b16 %v5435, %v5427
    %v5596 = vpack.c.b16 %v5444, %v5436
    %v5597 = vpack.c.b16 %v5445, %v5437
    %v5598 = vpack.c.b16 %v5446, %v5438
    %v5599 = vpack.c.b16 %v5447, %v5439
    %v5600 = vpack.c.b16 %v5448, %v5440
    %v5601 = vpack.c.b16 %v5449, %v5441
    %v5602 = vpack.c.b16 %v5450, %v5442
    %v5603 = vpack.c.b16 %v5451, %v5443
    %v5604 = vpack.c.b16 %v5460, %v5452
    %v5605 = vpack.c.b16 %v5461, %v5453
    %v5606 = vpack.c.b16 %v5462, %v5454
    %v5607 = vpack.c.b16 %v5463, %v5455
    %v5608 = vpack.c.b16 %v5464, %v5456
    %v5609 = vpack.c.b16 %v5465, %v5457
    %v5610 = vpack.c.b16 %v5466, %v5458
    %v5611 = vpack.c.b16 %v5467, %v5459
    %v5612 = vpack.c.b16 %v5476, %v5468
    %v5613 = vpack.c.b16 %v5477, %v5469
    %v5614 = vpack.c.b16 %v5478, %v5470
    %v5615 = vpack.c.b16 %v5479, %v5471
    %v5616 = vpack.c.b16 %v5480, %v5472
    %v5617 = vpack.c.b16 %v5481, %v5473
    %v5618 = vpack.c.b16 %v5482, %v5474
    %v5619 = vpack.c.b16 %v5483, %v5475
    %v5620 = vpack.c.b16 %v5492, %v5484
    %v5621 = vpack.c.b16 %v5493, %v5485
    %v5622 = vpack.c.b16 %v5494, %v5486
    %v5623 = vpack.c.b16 %v5495, %v5487
    %v5624 = vpack.c.b16 %v5496, %v5488
    %v5625 = vpack.c.b16 %v5497, %v5489
    %v5626 = vpack.c.b16 %v5498, %v5490
    %v5627 = vpack.c.b16 %v5499, %v5491
    %5756 = vmatprep.subr.bf16.mxu0 %v5501
    %5757 = vmatpush1.bf16.msra.mxu0 %v5500
    %5758 = vmatprep.subr.bf16.mxu0 %v5509
    %5759 = vmatpush1.bf16.msra.mxu0 %v5508
    %5760 = vmatprep.subr.bf16.mxu0 %v5517
    %5761 = vmatpush1.bf16.msra.mxu0 %v5516
    %5762 = vmatprep.subr.bf16.mxu0 %v5525
    %5763 = vmatpush1.bf16.msra.mxu0 %v5524
    %5764 = vmatprep.subr.bf16.mxu0 %v5533
    %5765 = vmatpush1.bf16.msra.mxu0 %v5532
    %5766 = vmatprep.subr.bf16.mxu0 %v5541
    %5767 = vmatpush1.bf16.msra.mxu0 %v5540
    %5768 = vmatprep.subr.bf16.mxu0 %v5549
    %5769 = vmatpush1.bf16.msra.mxu0 %v5548
    %5770 = vmatprep.subr.bf16.mxu0 %v5557
    %5771 = vmatpush1.bf16.msra.mxu0 %v5556
    %5772 = vmatprep.subr.bf16.mxu0 %v5565
    %5773 = vmatpush1.bf16.msra.mxu0 %v5564
    %5774 = vmatprep.subr.bf16.mxu0 %v5573
    %5775 = vmatpush1.bf16.msra.mxu0 %v5572
    %5776 = vmatprep.subr.bf16.mxu0 %v5581
    %5777 = vmatpush1.bf16.msra.mxu0 %v5580
    %5778 = vmatprep.subr.bf16.mxu0 %v5589
    %5779 = vmatpush1.bf16.msra.mxu0 %v5588
    %5780 = vmatprep.subr.bf16.mxu0 %v5597
    %5781 = vmatpush1.bf16.msra.mxu0 %v5596
    %5782 = vmatprep.subr.bf16.mxu0 %v5605
    %5783 = vmatpush1.bf16.msra.mxu0 %v5604
    %5784 = vmatprep.subr.bf16.mxu0 %v5613
    %5785 = vmatpush1.bf16.msra.mxu0 %v5612
    %5786 = vmatprep.subr.bf16.mxu0 %v5621
    %5787 = vmatpush1.bf16.msra.mxu0 %v5620
    %5788 = vmatprep.mubr.bf16.mxu0 0
    %5789 = vmatmul.mubr.bf16.gmra.mrb[0].mxu0 0
    %v5790 = vpop.f32.mrb[0].mxu0
    %v5791 = vadd.f32 0.0, %v5790
    %v5792 = vpop.f32.mrb[0].mxu0
    %v5793 = vadd.f32 0.0, %v5792
    %v5794 = vpop.f32.mrb[0].mxu0
    %v5795 = vpop.f32.mrb[0].mxu0
    %5796 = vdwg.mxu0
    %5797 = vmatprep.subr.bf16.mxu0 %v5503
    %5798 = vmatpush1.bf16.msra.mxu0 %v5502
    %5799 = vmatprep.subr.bf16.mxu0 %v5511
    %5800 = vmatpush1.bf16.msra.mxu0 %v5510
    %5801 = vmatprep.subr.bf16.mxu0 %v5519
    %5802 = vmatpush1.bf16.msra.mxu0 %v5518
    %5803 = vmatprep.subr.bf16.mxu0 %v5527
    %5804 = vmatpush1.bf16.msra.mxu0 %v5526
    %5805 = vmatprep.subr.bf16.mxu0 %v5535
    %5806 = vmatpush1.bf16.msra.mxu0 %v5534
    %5807 = vmatprep.subr.bf16.mxu0 %v5543
    %5808 = vmatpush1.bf16.msra.mxu0 %v5542
    %5809 = vmatprep.subr.bf16.mxu0 %v5551
    %5810 = vmatpush1.bf16.msra.mxu0 %v5550
    %5811 = vmatprep.subr.bf16.mxu0 %v5559
    %5812 = vmatpush1.bf16.msra.mxu0 %v5558
    %5813 = vmatprep.subr.bf16.mxu0 %v5567
    %5814 = vmatpush1.bf16.msra.mxu0 %v5566
    %5815 = vmatprep.subr.bf16.mxu0 %v5575
    %5816 = vmatpush1.bf16.msra.mxu0 %v5574
    %5817 = vmatprep.subr.bf16.mxu0 %v5583
    %5818 = vmatpush1.bf16.msra.mxu0 %v5582
    %5819 = vmatprep.subr.bf16.mxu0 %v5591
    %5820 = vmatpush1.bf16.msra.mxu0 %v5590
    %5821 = vmatprep.subr.bf16.mxu0 %v5599
    %5822 = vmatpush1.bf16.msra.mxu0 %v5598
    %5823 = vmatprep.subr.bf16.mxu0 %v5607
    %5824 = vmatpush1.bf16.msra.mxu0 %v5606
    %5825 = vmatprep.subr.bf16.mxu0 %v5615
    %5826 = vmatpush1.bf16.msra.mxu0 %v5614
    %5827 = vmatprep.subr.bf16.mxu0 %v5623
    %5828 = vmatpush1.bf16.msra.mxu0 %v5622
    %5829 = vmatprep.mubr.bf16.mxu0 0
    %5830 = vmatmul.mubr.bf16.gmra.mrb[0].mxu0 0
    %v5831 = vpop.f32.mrb[0].mxu0
    %v5832 = vadd.f32 0.0, %v5831
    %v5833 = vpop.f32.mrb[0].mxu0
    %v5834 = vadd.f32 0.0, %v5833
    %v5835 = vpop.f32.mrb[0].mxu0
    %v5836 = vpop.f32.mrb[0].mxu0
    %5837 = vdwg.mxu0
    %5838 = vmatprep.subr.bf16.mxu0 %v5505
    %5839 = vmatpush1.bf16.msra.mxu0 %v5504
    %5840 = vmatprep.subr.bf16.mxu0 %v5513
    %5841 = vmatpush1.bf16.msra.mxu0 %v5512
    %5842 = vmatprep.subr.bf16.mxu0 %v5521
    %5843 = vmatpush1.bf16.msra.mxu0 %v5520
    %5844 = vmatprep.subr.bf16.mxu0 %v5529
    %5845 = vmatpush1.bf16.msra.mxu0 %v5528
    %5846 = vmatprep.subr.bf16.mxu0 %v5537
    %5847 = vmatpush1.bf16.msra.mxu0 %v5536
    %5848 = vmatprep.subr.bf16.mxu0 %v5545
    %5849 = vmatpush1.bf16.msra.mxu0 %v5544
    %5850 = vmatprep.subr.bf16.mxu0 %v5553
    %5851 = vmatpush1.bf16.msra.mxu0 %v5552
    %5852 = vmatprep.subr.bf16.mxu0 %v5561
    %5853 = vmatpush1.bf16.msra.mxu0 %v5560
    %5854 = vmatprep.subr.bf16.mxu0 %v5569
    %5855 = vmatpush1.bf16.msra.mxu0 %v5568
    %5856 = vmatprep.subr.bf16.mxu0 %v5577
    %5857 = vmatpush1.bf16.msra.mxu0 %v5576
    %5858 = vmatprep.subr.bf16.mxu0 %v5585
    %5859 = vmatpush1.bf16.msra.mxu0 %v5584
    %5860 = vmatprep.subr.bf16.mxu0 %v5593
    %5861 = vmatpush1.bf16.msra.mxu0 %v5592
    %5862 = vmatprep.subr.bf16.mxu0 %v5601
    %5863 = vmatpush1.bf16.msra.mxu0 %v5600
    %5864 = vmatprep.subr.bf16.mxu0 %v5609
    %5865 = vmatpush1.bf16.msra.mxu0 %v5608
    %5866 = vmatprep.subr.bf16.mxu0 %v5617
    %5867 = vmatpush1.bf16.msra.mxu0 %v5616
    %5868 = vmatprep.subr.bf16.mxu0 %v5625
    %5869 = vmatpush1.bf16.msra.mxu0 %v5624
    %5870 = vmatprep.mubr.bf16.mxu0 0
    %5871 = vmatmul.mubr.bf16.gmra.mrb[0].mxu0 0
    %v5872 = vpop.f32.mrb[0].mxu0
    %v5873 = vadd.f32 0.0, %v5872
    %v5874 = vpop.f32.mrb[0].mxu0
    %v5875 = vadd.f32 0.0, %v5874
    %v5876 = vpop.f32.mrb[0].mxu0
    %v5877 = vpop.f32.mrb[0].mxu0
    %5878 = vdwg.mxu0
    %5879 = vmatprep.subr.bf16.mxu0 %v5507
    %5880 = vmatpush1.bf16.msra.mxu0 %v5506
    %5881 = vmatprep.subr.bf16.mxu0 %v5515
    %5882 = vmatpush1.bf16.msra.mxu0 %v5514
    %5883 = vmatprep.subr.bf16.mxu0 %v5523
    %5884 = vmatpush1.bf16.msra.mxu0 %v5522
    %5885 = vmatprep.subr.bf16.mxu0 %v5531
    %5886 = vmatpush1.bf16.msra.mxu0 %v5530
    %5887 = vmatprep.subr.bf16.mxu0 %v5539
    %5888 = vmatpush1.bf16.msra.mxu0 %v5538
    %5889 = vmatprep.subr.bf16.mxu0 %v5547
    %5890 = vmatpush1.bf16.msra.mxu0 %v5546
    %5891 = vmatprep.subr.bf16.mxu0 %v5555
    %5892 = vmatpush1.bf16.msra.mxu0 %v5554
    %5893 = vmatprep.subr.bf16.mxu0 %v5563
    %5894 = vmatpush1.bf16.msra.mxu0 %v5562
    %5895 = vmatprep.subr.bf16.mxu0 %v5571
    %5896 = vmatpush1.bf16.msra.mxu0 %v5570
    %5897 = vmatprep.subr.bf16.mxu0 %v5579
    %5898 = vmatpush1.bf16.msra.mxu0 %v5578
    %5899 = vmatprep.subr.bf16.mxu0 %v5587
    %5900 = vmatpush1.bf16.msra.mxu0 %v5586
    %5901 = vmatprep.subr.bf16.mxu0 %v5595
    %5902 = vmatpush1.bf16.msra.mxu0 %v5594
    %5903 = vmatprep.subr.bf16.mxu0 %v5603
    %5904 = vmatpush1.bf16.msra.mxu0 %v5602
    %5905 = vmatprep.subr.bf16.mxu0 %v5611
    %5906 = vmatpush1.bf16.msra.mxu0 %v5610
    %5907 = vmatprep.subr.bf16.mxu0 %v5619
    %5908 = vmatpush1.bf16.msra.mxu0 %v5618
    %5909 = vmatprep.subr.bf16.mxu0 %v5627
    %5910 = vmatpush1.bf16.msra.mxu0 %v5626
    %5911 = vmatprep.mubr.bf16.mxu0 0
    %5912 = vmatmul.mubr.bf16.gmra.mrb[0].mxu0 0
    %v5913 = vpop.f32.mrb[0].mxu0
    %v5914 = vadd.f32 0.0, %v5913
    %v5915 = vpop.f32.mrb[0].mxu0
    %v5916 = vadd.f32 0.0, %v5915
    %v5917 = vpop.f32.mrb[0].mxu0
    %v5918 = vpop.f32.mrb[0].mxu0
    %5919 = vdwg.mxu0
    %v5920 = vld [vmem:[#allocation2] sm:$0xff]
    %v5921 = vld [vmem:[#allocation2 + $0x8] sm:$0xff]
    %v5922 = vld [vmem:[#allocation2 + $0x10] sm:$0xff]
    %v5923 = vld [vmem:[#allocation2 + $0x18] sm:$0xff]
    %v5924 = vadd.f32 %v5920, %v5791
    %v5925 = vadd.f32 %v5921, %v5793
    %v5926 = vadd.f32 %v5922, %v5832
    %v5927 = vadd.f32 %v5923, %v5834
    %v5928 = vld [vmem:[%s2102 + $0x20] sm:$0xff]
    %v5929 = vld [vmem:[%s2102 + $0x28] sm:$0xff]
    %v5930 = vld [vmem:[%s2102 + $0x30] sm:$0xff]
    %v5931 = vld [vmem:[%s2102 + $0x38] sm:$0xff]
    %v5932 = vadd.f32 %v5928, %v5873
    %v5933 = vadd.f32 %v5929, %v5875
    %v5934 = vadd.f32 %v5930, %v5914
    %v5935 = vadd.f32 %v5931, %v5916
    %v5936 = vxor.u32 %v5924, 2147483648
    %v5937 = vxor.u32 %v5932, 2147483648
    %v5938 = vmul.f32 %v5936, 1.442695
    %v5939 = vpow.pop %v5938
    %v5940 = vmul.f32 %v5937, 1.442695
    %v5941 = vpow.pop %v5940
    %v5942 = vadd.f32 %v5939, 1.0
    %v5943 = vadd.f32 %v5941, 1.0
    %v5944 = vrcp.pop %v5942
    %v5945 = vmul.f32 1.0, %v5944
    %v5946 = vrcp.pop %v5943
    %v5947 = vmul.f32 1.0, %v5946
    %v5948 = vxor.u32 %v5925, 2147483648
    %v5949 = vxor.u32 %v5933, 2147483648
    %v5950 = vmul.f32 %v5948, 1.442695
    %v5951 = vpow.pop %v5950
    %v5952 = vmul.f32 %v5949, 1.442695
    %v5953 = vpow.pop %v5952
    %v5954 = vadd.f32 %v5951, 1.0
    %v5955 = vadd.f32 %v5953, 1.0
    %v5956 = vrcp.pop %v5954
    %v5957 = vmul.f32 1.0, %v5956
    %v5958 = vrcp.pop %v5955
    %v5959 = vmul.f32 1.0, %v5958
    %v5960 = vtanh.pop %v5926
    %v5961 = vtanh.pop %v5934
    %v5962 = vxor.u32 %v5927, 2147483648
    %v5963 = vxor.u32 %v5935, 2147483648
    %v5964 = vmul.f32 %v5962, 1.442695
    %v5965 = vpow.pop %v5964
    %v5966 = vmul.f32 %v5963, 1.442695
    %v5967 = vpow.pop %v5966
    %v5968 = vadd.f32 %v5965, 1.0
    %v5969 = vadd.f32 %v5967, 1.0
    %v5970 = vrcp.pop %v5968
    %v5971 = vmul.f32 1.0, %v5970
    %v5972 = vrcp.pop %v5969
    %v5973 = vmul.f32 1.0, %v5972
    %v5974 = vmul.f32 %v5957, 0.0
    %v5975 = vmul.f32 %v5959, 0.0
    %v5976 = vmul.f32 %v5945, %v5960
    %v5977 = vmul.f32 %v5947, %v5961
    %v5978 = vadd.f32 %v5974, %v5976
    %v5979 = vadd.f32 %v5975, %v5977
    %v5980 = vtanh.pop %v5978
    %v5981 = vtanh.pop %v5979
    %v5982 = vmul.f32 %v5971, %v5980
    %v5983 = vmul.f32 %v5973, %v5981
    %5984 = vst [vmem:[%s7] sm:$0xff] %v5982
    %s5985 = scalar_lea.vmem %s7, 112
    %5986 = vst [vmem:[%s5985 + $0x8] sm:$0xff] %v5983
    %v5987 = vpack.c.bf16 %v5982, %v5982
    %v5988 = vpack.c.bf16 %v5983, %v5983
    %5989 = vmatprep.subr.bf16.mxu0 %v5501
    %5990 = vmatpush1.bf16.msra.mxu0 %v5500
    %5991 = vmatprep.subr.bf16.mxu0 %v5509
    %5992 = vmatpush1.bf16.msra.mxu0 %v5508
    %5993 = vmatprep.subr.bf16.mxu0 %v5517
    %5994 = vmatpush1.bf16.msra.mxu0 %v5516
    %5995 = vmatprep.subr.bf16.mxu0 %v5525
    %5996 = vmatpush1.bf16.msra.mxu0 %v5524
    %5997 = vmatprep.subr.bf16.mxu0 %v5533
    %5998 = vmatpush1.bf16.msra.mxu0 %v5532
    %5999 = vmatprep.subr.bf16.mxu0 %v5541
    %6000 = vmatpush1.bf16.msra.mxu0 %v5540
    %6001 = vmatprep.subr.bf16.mxu0 %v5549
    %6002 = vmatpush1.bf16.msra.mxu0 %v5548
    %6003 = vmatprep.subr.bf16.mxu0 %v5557
    %6004 = vmatpush1.bf16.msra.mxu0 %v5556
    %6005 = vmatprep.subr.bf16.mxu0 %v5565
    %6006 = vmatpush1.bf16.msra.mxu0 %v5564
    %6007 = vmatprep.subr.bf16.mxu0 %v5573
    %6008 = vmatpush1.bf16.msra.mxu0 %v5572
    %6009 = vmatprep.subr.bf16.mxu0 %v5581
    %6010 = vmatpush1.bf16.msra.mxu0 %v5580
    %6011 = vmatprep.subr.bf16.mxu0 %v5589
    %6012 = vmatpush1.bf16.msra.mxu0 %v5588
    %6013 = vmatprep.subr.bf16.mxu0 %v5597
    %6014 = vmatpush1.bf16.msra.mxu0 %v5596
    %6015 = vmatprep.subr.bf16.mxu0 %v5605
    %6016 = vmatpush1.bf16.msra.mxu0 %v5604
    %6017 = vmatprep.subr.bf16.mxu0 %v5613
    %6018 = vmatpush1.bf16.msra.mxu0 %v5612
    %6019 = vmatprep.subr.bf16.mxu0 %v5621
    %6020 = vmatpush1.bf16.msra.mxu0 %v5620
    %6021 = vmatprep.mubr.bf16.mxu0 %v5988
    %6022 = vmatmul.mubr.bf16.gmra.mrb[0].mxu0 %v5987
    %v6023 = vpop.f32.mrb[0].mxu0
    %v6024 = vadd.f32 0.0, %v6023
    %v6025 = vpop.f32.mrb[0].mxu0
    %v6026 = vadd.f32 0.0, %v6025
    %v6027 = vpop.f32.mrb[0].mxu0
    %v6028 = vpop.f32.mrb[0].mxu0
    %6029 = vdwg.mxu0
    %6030 = vmatprep.subr.bf16.mxu0 %v5503
    %6031 = vmatpush1.bf16.msra.mxu0 %v5502
    %6032 = vmatprep.subr.bf16.mxu0 %v5511
    %6033 = vmatpush1.bf16.msra.mxu0 %v5510
    %6034 = vmatprep.subr.bf16.mxu0 %v5519
    %6035 = vmatpush1.bf16.msra.mxu0 %v5518
    %6036 = vmatprep.subr.bf16.mxu0 %v5527
    %6037 = vmatpush1.bf16.msra.mxu0 %v5526
    %6038 = vmatprep.subr.bf16.mxu0 %v5535
    %6039 = vmatpush1.bf16.msra.mxu0 %v5534
    %6040 = vmatprep.subr.bf16.mxu0 %v5543
    %6041 = vmatpush1.bf16.msra.mxu0 %v5542
    %6042 = vmatprep.subr.bf16.mxu0 %v5551
    %6043 = vmatpush1.bf16.msra.mxu0 %v5550
    %6044 = vmatprep.subr.bf16.mxu0 %v5559
    %6045 = vmatpush1.bf16.msra.mxu0 %v5558
    %6046 = vmatprep.subr.bf16.mxu0 %v5567
    %6047 = vmatpush1.bf16.msra.mxu0 %v5566
    %6048 = vmatprep.subr.bf16.mxu0 %v5575
    %6049 = vmatpush1.bf16.msra.mxu0 %v5574
    %6050 = vmatprep.subr.bf16.mxu0 %v5583
    %6051 = vmatpush1.bf16.msra.mxu0 %v5582
    %6052 = vmatprep.subr.bf16.mxu0 %v5591
    %6053 = vmatpush1.bf16.msra.mxu0 %v5590
    %6054 = vmatprep.subr.bf16.mxu0 %v5599
    %6055 = vmatpush1.bf16.msra.mxu0 %v5598
    %6056 = vmatprep.subr.bf16.mxu0 %v5607
    %6057 = vmatpush1.bf16.msra.mxu0 %v5606
    %6058 = vmatprep.subr.bf16.mxu0 %v5615
    %6059 = vmatpush1.bf16.msra.mxu0 %v5614
    %6060 = vmatprep.subr.bf16.mxu0 %v5623
    %6061 = vmatpush1.bf16.msra.mxu0 %v5622
    %6062 = vmatprep.mubr.bf16.mxu0 %v5988
    %6063 = vmatmul.mubr.bf16.gmra.mrb[0].mxu0 %v5987
    %v6064 = vpop.f32.mrb[0].mxu0
    %v6065 = vadd.f32 0.0, %v6064
    %v6066 = vpop.f32.mrb[0].mxu0
    %v6067 = vadd.f32 0.0, %v6066
    %v6068 = vpop.f32.mrb[0].mxu0
    %v6069 = vpop.f32.mrb[0].mxu0
    %6070 = vdwg.mxu0
    %6071 = vmatprep.subr.bf16.mxu0 %v5505
    %6072 = vmatpush1.bf16.msra.mxu0 %v5504
    %6073 = vmatprep.subr.bf16.mxu0 %v5513
    %6074 = vmatpush1.bf16.msra.mxu0 %v5512
    %6075 = vmatprep.subr.bf16.mxu0 %v5521
    %6076 = vmatpush1.bf16.msra.mxu0 %v5520
    %6077 = vmatprep.subr.bf16.mxu0 %v5529
    %6078 = vmatpush1.bf16.msra.mxu0 %v5528
    %6079 = vmatprep.subr.bf16.mxu0 %v5537
    %6080 = vmatpush1.bf16.msra.mxu0 %v5536
    %6081 = vmatprep.subr.bf16.mxu0 %v5545
    %6082 = vmatpush1.bf16.msra.mxu0 %v5544
    %6083 = vmatprep.subr.bf16.mxu0 %v5553
    %6084 = vmatpush1.bf16.msra.mxu0 %v5552
    %6085 = vmatprep.subr.bf16.mxu0 %v5561
    %6086 = vmatpush1.bf16.msra.mxu0 %v5560
    %6087 = vmatprep.subr.bf16.mxu0 %v5569
    %6088 = vmatpush1.bf16.msra.mxu0 %v5568
    %6089 = vmatprep.subr.bf16.mxu0 %v5577
    %6090 = vmatpush1.bf16.msra.mxu0 %v5576
    %6091 = vmatprep.subr.bf16.mxu0 %v5585
    %6092 = vmatpush1.bf16.msra.mxu0 %v5584
    %6093 = vmatprep.subr.bf16.mxu0 %v5593
    %6094 = vmatpush1.bf16.msra.mxu0 %v5592
    %6095 = vmatprep.subr.bf16.mxu0 %v5601
    %6096 = vmatpush1.bf16.msra.mxu0 %v5600
    %6097 = vmatprep.subr.bf16.mxu0 %v5609
    %6098 = vmatpush1.bf16.msra.mxu0 %v5608
    %6099 = vmatprep.subr.bf16.mxu0 %v5617
    %6100 = vmatpush1.bf16.msra.mxu0 %v5616
    %6101 = vmatprep.subr.bf16.mxu0 %v5625
    %6102 = vmatpush1.bf16.msra.mxu0 %v5624
    %6103 = vmatprep.mubr.bf16.mxu0 %v5988
    %6104 = vmatmul.mubr.bf16.gmra.mrb[0].mxu0 %v5987
    %v6105 = vpop.f32.mrb[0].mxu0
    %v6106 = vadd.f32 0.0, %v6105
    %v6107 = vpop.f32.mrb[0].mxu0
    %v6108 = vadd.f32 0.0, %v6107
    %v6109 = vpop.f32.mrb[0].mxu0
    %v6110 = vpop.f32.mrb[0].mxu0
    %6111 = vdwg.mxu0
    %6112 = vmatprep.subr.bf16.mxu0 %v5507
    %6113 = vmatpush1.bf16.msra.mxu0 %v5506
    %6114 = vmatprep.subr.bf16.mxu0 %v5515
    %6115 = vmatpush1.bf16.msra.mxu0 %v5514
    %6116 = vmatprep.subr.bf16.mxu0 %v5523
    %6117 = vmatpush1.bf16.msra.mxu0 %v5522
    %6118 = vmatprep.subr.bf16.mxu0 %v5531
    %6119 = vmatpush1.bf16.msra.mxu0 %v5530
    %6120 = vmatprep.subr.bf16.mxu0 %v5539
    %6121 = vmatpush1.bf16.msra.mxu0 %v5538
    %6122 = vmatprep.subr.bf16.mxu0 %v5547
    %6123 = vmatpush1.bf16.msra.mxu0 %v5546
    %6124 = vmatprep.subr.bf16.mxu0 %v5555
    %6125 = vmatpush1.bf16.msra.mxu0 %v5554
    %6126 = vmatprep.subr.bf16.mxu0 %v5563
    %6127 = vmatpush1.bf16.msra.mxu0 %v5562
    %6128 = vmatprep.subr.bf16.mxu0 %v5571
    %6129 = vmatpush1.bf16.msra.mxu0 %v5570
    %6130 = vmatprep.subr.bf16.mxu0 %v5579
    %6131 = vmatpush1.bf16.msra.mxu0 %v5578
    %6132 = vmatprep.subr.bf16.mxu0 %v5587
    %6133 = vmatpush1.bf16.msra.mxu0 %v5586
    %6134 = vmatprep.subr.bf16.mxu0 %v5595
    %6135 = vmatpush1.bf16.msra.mxu0 %v5594
    %6136 = vmatprep.subr.bf16.mxu0 %v5603
    %6137 = vmatpush1.bf16.msra.mxu0 %v5602
    %6138 = vmatprep.subr.bf16.mxu0 %v5611
    %6139 = vmatpush1.bf16.msra.mxu0 %v5610
    %6140 = vmatprep.subr.bf16.mxu0 %v5619
    %6141 = vmatpush1.bf16.msra.mxu0 %v5618
    %6142 = vmatprep.subr.bf16.mxu0 %v5627
    %6143 = vmatpush1.bf16.msra.mxu0 %v5626
    %6144 = vmatprep.mubr.bf16.mxu0 %v5988
    %6145 = vmatmul.mubr.bf16.gmra.mrb[0].mxu0 %v5987
    %v6146 = vpop.f32.mrb[0].mxu0
    %v6147 = vadd.f32 0.0, %v6146
    %v6148 = vpop.f32.mrb[0].mxu0
    %v6149 = vadd.f32 0.0, %v6148
    %v6150 = vpop.f32.mrb[0].mxu0
    %v6151 = vpop.f32.mrb[0].mxu0
    %6152 = vdwg.mxu0
    %v6153 = vld [vmem:[%s2328] sm:$0xff]
    %v6154 = vld [vmem:[%s2328 + $0x8] sm:$0xff]
    %v6155 = vld [vmem:[%s2328 + $0x10] sm:$0xff]
    %v6156 = vld [vmem:[%s2328 + $0x18] sm:$0xff]
    %v6157 = vadd.f32 %v6153, %v6024
    %v6158 = vadd.f32 %v6154, %v6026
    %v6159 = vadd.f32 %v6155, %v6065
    %v6160 = vadd.f32 %v6156, %v6067
    %v6161 = vld [vmem:[%s2337 + $0x20] sm:$0xff]
    %v6162 = vld [vmem:[%s2337 + $0x28] sm:$0xff]
    %v6163 = vld [vmem:[%s2337 + $0x30] sm:$0xff]
    %v6164 = vld [vmem:[%s2337 + $0x38] sm:$0xff]
    %v6165 = vadd.f32 %v6161, %v6106
    %v6166 = vadd.f32 %v6162, %v6108
    %v6167 = vadd.f32 %v6163, %v6147
    %v6168 = vadd.f32 %v6164, %v6149
    %v6169 = vxor.u32 %v6157, 2147483648
    %v6170 = vxor.u32 %v6165, 2147483648
    %v6171 = vmul.f32 %v6169, 1.442695
    %v6172 = vpow.pop %v6171
    %v6173 = vmul.f32 %v6170, 1.442695
    %v6174 = vpow.pop %v6173
    %v6175 = vadd.f32 %v6172, 1.0
    %v6176 = vadd.f32 %v6174, 1.0
    %v6177 = vrcp.pop %v6175
    %v6178 = vmul.f32 1.0, %v6177
    %v6179 = vrcp.pop %v6176
    %v6180 = vmul.f32 1.0, %v6179
    %v6181 = vxor.u32 %v6158, 2147483648
    %v6182 = vxor.u32 %v6166, 2147483648
    %v6183 = vmul.f32 %v6181, 1.442695
    %v6184 = vpow.pop %v6183
    %v6185 = vmul.f32 %v6182, 1.442695
    %v6186 = vpow.pop %v6185
    %v6187 = vadd.f32 %v6184, 1.0
    %v6188 = vadd.f32 %v6186, 1.0
    %v6189 = vrcp.pop %v6187
    %v6190 = vmul.f32 1.0, %v6189
    %v6191 = vrcp.pop %v6188
    %v6192 = vmul.f32 1.0, %v6191
    %v6193 = vtanh.pop %v6159
    %v6194 = vtanh.pop %v6167
    %v6195 = vxor.u32 %v6160, 2147483648
    %v6196 = vxor.u32 %v6168, 2147483648
    %v6197 = vmul.f32 %v6195, 1.442695
    %v6198 = vpow.pop %v6197
    %v6199 = vmul.f32 %v6196, 1.442695
    %v6200 = vpow.pop %v6199
    %v6201 = vadd.f32 %v6198, 1.0
    %v6202 = vadd.f32 %v6200, 1.0
    %v6203 = vrcp.pop %v6201
    %v6204 = vmul.f32 1.0, %v6203
    %v6205 = vrcp.pop %v6202
    %v6206 = vmul.f32 1.0, %v6205
    %v6207 = vmul.f32 %v6190, %v5978
    %v6208 = vmul.f32 %v6192, %v5979
    %v6209 = vmul.f32 %v6178, %v6193
    %v6210 = vmul.f32 %v6180, %v6194
    %v6211 = vadd.f32 %v6207, %v6209
    %v6212 = vadd.f32 %v6208, %v6210
    %v6213 = vtanh.pop %v6211
    %v6214 = vtanh.pop %v6212
    %v6215 = vmul.f32 %v6204, %v6213
    %v6216 = vmul.f32 %v6206, %v6214
    %s6217 = scalar_lea.vmem %s7, 16
    %6218 = vst [vmem:[%s6217] sm:$0xff] %v6215
    %s6219 = scalar_lea.vmem %s7, 96
    %6220 = vst [vmem:[%s6219 + $0x8] sm:$0xff] %v6216
    %v6221 = vpack.c.bf16 %v6215, %v6215
    %v6222 = vpack.c.bf16 %v6216, %v6216
    %6223 = vmatprep.subr.bf16.mxu0 %v5501
    %6224 = vmatpush1.bf16.msra.mxu0 %v5500
    %6225 = vmatprep.subr.bf16.mxu0 %v5509
    %6226 = vmatpush1.bf16.msra.mxu0 %v5508
    %6227 = vmatprep.subr.bf16.mxu0 %v5517
    %6228 = vmatpush1.bf16.msra.mxu0 %v5516
    %6229 = vmatprep.subr.bf16.mxu0 %v5525
    %6230 = vmatpush1.bf16.msra.mxu0 %v5524
    %6231 = vmatprep.subr.bf16.mxu0 %v5533
    %6232 = vmatpush1.bf16.msra.mxu0 %v5532
    %6233 = vmatprep.subr.bf16.mxu0 %v5541
    %6234 = vmatpush1.bf16.msra.mxu0 %v5540
    %6235 = vmatprep.subr.bf16.mxu0 %v5549
    %6236 = vmatpush1.bf16.msra.mxu0 %v5548
    %6237 = vmatprep.subr.bf16.mxu0 %v5557
    %6238 = vmatpush1.bf16.msra.mxu0 %v5556
    %6239 = vmatprep.subr.bf16.mxu0 %v5565
    %6240 = vmatpush1.bf16.msra.mxu0 %v5564
    %6241 = vmatprep.subr.bf16.mxu0 %v5573
    %6242 = vmatpush1.bf16.msra.mxu0 %v5572
    %6243 = vmatprep.subr.bf16.mxu0 %v5581
    %6244 = vmatpush1.bf16.msra.mxu0 %v5580
    %6245 = vmatprep.subr.bf16.mxu0 %v5589
    %6246 = vmatpush1.bf16.msra.mxu0 %v5588
    %6247 = vmatprep.subr.bf16.mxu0 %v5597
    %6248 = vmatpush1.bf16.msra.mxu0 %v5596
    %6249 = vmatprep.subr.bf16.mxu0 %v5605
    %6250 = vmatpush1.bf16.msra.mxu0 %v5604
    %6251 = vmatprep.subr.bf16.mxu0 %v5613
    %6252 = vmatpush1.bf16.msra.mxu0 %v5612
    %6253 = vmatprep.subr.bf16.mxu0 %v5621
    %6254 = vmatpush1.bf16.msra.mxu0 %v5620
    %6255 = vmatprep.mubr.bf16.mxu0 %v6222
    %6256 = vmatmul.mubr.bf16.gmra.mrb[0].mxu0 %v6221
    %v6257 = vpop.f32.mrb[0].mxu0
    %v6258 = vadd.f32 0.0, %v6257
    %v6259 = vpop.f32.mrb[0].mxu0
    %v6260 = vadd.f32 0.0, %v6259
    %v6261 = vpop.f32.mrb[0].mxu0
    %v6262 = vpop.f32.mrb[0].mxu0
    %6263 = vdwg.mxu0
    %6264 = vmatprep.subr.bf16.mxu0 %v5503
    %6265 = vmatpush1.bf16.msra.mxu0 %v5502
    %6266 = vmatprep.subr.bf16.mxu0 %v5511
    %6267 = vmatpush1.bf16.msra.mxu0 %v5510
    %6268 = vmatprep.subr.bf16.mxu0 %v5519
    %6269 = vmatpush1.bf16.msra.mxu0 %v5518
    %6270 = vmatprep.subr.bf16.mxu0 %v5527
    %6271 = vmatpush1.bf16.msra.mxu0 %v5526
    %6272 = vmatprep.subr.bf16.mxu0 %v5535
    %6273 = vmatpush1.bf16.msra.mxu0 %v5534
    %6274 = vmatprep.subr.bf16.mxu0 %v5543
    %6275 = vmatpush1.bf16.msra.mxu0 %v5542
    %6276 = vmatprep.subr.bf16.mxu0 %v5551
    %6277 = vmatpush1.bf16.msra.mxu0 %v5550
    %6278 = vmatprep.subr.bf16.mxu0 %v5559
    %6279 = vmatpush1.bf16.msra.mxu0 %v5558
    %6280 = vmatprep.subr.bf16.mxu0 %v5567
    %6281 = vmatpush1.bf16.msra.mxu0 %v5566
    %6282 = vmatprep.subr.bf16.mxu0 %v5575
    %6283 = vmatpush1.bf16.msra.mxu0 %v5574
    %6284 = vmatprep.subr.bf16.mxu0 %v5583
    %6285 = vmatpush1.bf16.msra.mxu0 %v5582
    %6286 = vmatprep.subr.bf16.mxu0 %v5591
    %6287 = vmatpush1.bf16.msra.mxu0 %v5590
    %6288 = vmatprep.subr.bf16.mxu0 %v5599
    %6289 = vmatpush1.bf16.msra.mxu0 %v5598
    %6290 = vmatprep.subr.bf16.mxu0 %v5607
    %6291 = vmatpush1.bf16.msra.mxu0 %v5606
    %6292 = vmatprep.subr.bf16.mxu0 %v5615
    %6293 = vmatpush1.bf16.msra.mxu0 %v5614
    %6294 = vmatprep.subr.bf16.mxu0 %v5623
    %6295 = vmatpush1.bf16.msra.mxu0 %v5622
    %6296 = vmatprep.mubr.bf16.mxu0 %v6222
    %6297 = vmatmul.mubr.bf16.gmra.mrb[0].mxu0 %v6221
    %v6298 = vpop.f32.mrb[0].mxu0
    %v6299 = vadd.f32 0.0, %v6298
    %v6300 = vpop.f32.mrb[0].mxu0
    %v6301 = vadd.f32 0.0, %v6300
    %v6302 = vpop.f32.mrb[0].mxu0
    %v6303 = vpop.f32.mrb[0].mxu0
    %6304 = vdwg.mxu0
    %6305 = vmatprep.subr.bf16.mxu0 %v5505
    %6306 = vmatpush1.bf16.msra.mxu0 %v5504
    %6307 = vmatprep.subr.bf16.mxu0 %v5513
    %6308 = vmatpush1.bf16.msra.mxu0 %v5512
    %6309 = vmatprep.subr.bf16.mxu0 %v5521
    %6310 = vmatpush1.bf16.msra.mxu0 %v5520
    %6311 = vmatprep.subr.bf16.mxu0 %v5529
    %6312 = vmatpush1.bf16.msra.mxu0 %v5528
    %6313 = vmatprep.subr.bf16.mxu0 %v5537
    %6314 = vmatpush1.bf16.msra.mxu0 %v5536
    %6315 = vmatprep.subr.bf16.mxu0 %v5545
    %6316 = vmatpush1.bf16.msra.mxu0 %v5544
    %6317 = vmatprep.subr.bf16.mxu0 %v5553
    %6318 = vmatpush1.bf16.msra.mxu0 %v5552
    %6319 = vmatprep.subr.bf16.mxu0 %v5561
    %6320 = vmatpush1.bf16.msra.mxu0 %v5560
    %6321 = vmatprep.subr.bf16.mxu0 %v5569
    %6322 = vmatpush1.bf16.msra.mxu0 %v5568
    %6323 = vmatprep.subr.bf16.mxu0 %v5577
    %6324 = vmatpush1.bf16.msra.mxu0 %v5576
    %6325 = vmatprep.subr.bf16.mxu0 %v5585
    %6326 = vmatpush1.bf16.msra.mxu0 %v5584
    %6327 = vmatprep.subr.bf16.mxu0 %v5593
    %6328 = vmatpush1.bf16.msra.mxu0 %v5592
    %6329 = vmatprep.subr.bf16.mxu0 %v5601
    %6330 = vmatpush1.bf16.msra.mxu0 %v5600
    %6331 = vmatprep.subr.bf16.mxu0 %v5609
    %6332 = vmatpush1.bf16.msra.mxu0 %v5608
    %6333 = vmatprep.subr.bf16.mxu0 %v5617
    %6334 = vmatpush1.bf16.msra.mxu0 %v5616
    %6335 = vmatprep.subr.bf16.mxu0 %v5625
    %6336 = vmatpush1.bf16.msra.mxu0 %v5624
    %6337 = vmatprep.mubr.bf16.mxu0 %v6222
    %6338 = vmatmul.mubr.bf16.gmra.mrb[0].mxu0 %v6221
    %v6339 = vpop.f32.mrb[0].mxu0
    %v6340 = vadd.f32 0.0, %v6339
    %v6341 = vpop.f32.mrb[0].mxu0
    %v6342 = vadd.f32 0.0, %v6341
    %v6343 = vpop.f32.mrb[0].mxu0
    %v6344 = vpop.f32.mrb[0].mxu0
    %6345 = vdwg.mxu0
    %6346 = vmatprep.subr.bf16.mxu0 %v5507
    %6347 = vmatpush1.bf16.msra.mxu0 %v5506
    %6348 = vmatprep.subr.bf16.mxu0 %v5515
    %6349 = vmatpush1.bf16.msra.mxu0 %v5514
    %6350 = vmatprep.subr.bf16.mxu0 %v5523
    %6351 = vmatpush1.bf16.msra.mxu0 %v5522
    %6352 = vmatprep.subr.bf16.mxu0 %v5531
    %6353 = vmatpush1.bf16.msra.mxu0 %v5530
    %6354 = vmatprep.subr.bf16.mxu0 %v5539
    %6355 = vmatpush1.bf16.msra.mxu0 %v5538
    %6356 = vmatprep.subr.bf16.mxu0 %v5547
    %6357 = vmatpush1.bf16.msra.mxu0 %v5546
    %6358 = vmatprep.subr.bf16.mxu0 %v5555
    %6359 = vmatpush1.bf16.msra.mxu0 %v5554
    %6360 = vmatprep.subr.bf16.mxu0 %v5563
    %6361 = vmatpush1.bf16.msra.mxu0 %v5562
    %6362 = vmatprep.subr.bf16.mxu0 %v5571
    %6363 = vmatpush1.bf16.msra.mxu0 %v5570
    %6364 = vmatprep.subr.bf16.mxu0 %v5579
    %6365 = vmatpush1.bf16.msra.mxu0 %v5578
    %6366 = vmatprep.subr.bf16.mxu0 %v5587
    %6367 = vmatpush1.bf16.msra.mxu0 %v5586
    %6368 = vmatprep.subr.bf16.mxu0 %v5595
    %6369 = vmatpush1.bf16.msra.mxu0 %v5594
    %6370 = vmatprep.subr.bf16.mxu0 %v5603
    %6371 = vmatpush1.bf16.msra.mxu0 %v5602
    %6372 = vmatprep.subr.bf16.mxu0 %v5611
    %6373 = vmatpush1.bf16.msra.mxu0 %v5610
    %6374 = vmatprep.subr.bf16.mxu0 %v5619
    %6375 = vmatpush1.bf16.msra.mxu0 %v5618
    %6376 = vmatprep.subr.bf16.mxu0 %v5627
    %6377 = vmatpush1.bf16.msra.mxu0 %v5626
    %6378 = vmatprep.mubr.bf16.mxu0 %v6222
    %6379 = vmatmul.mubr.bf16.gmra.mrb[0].mxu0 %v6221
    %v6380 = vpop.f32.mrb[0].mxu0
    %v6381 = vadd.f32 0.0, %v6380
    %v6382 = vpop.f32.mrb[0].mxu0
    %v6383 = vadd.f32 0.0, %v6382
    %v6384 = vpop.f32.mrb[0].mxu0
    %v6385 = vpop.f32.mrb[0].mxu0
    %6386 = vdwg.mxu0
    %v6387 = vld [vmem:[%s2564] sm:$0xff]
    %v6388 = vld [vmem:[%s2564 + $0x8] sm:$0xff]
    %v6389 = vld [vmem:[%s2564 + $0x10] sm:$0xff]
    %v6390 = vld [vmem:[%s2564 + $0x18] sm:$0xff]
    %v6391 = vadd.f32 %v6387, %v6258
    %v6392 = vadd.f32 %v6388, %v6260
    %v6393 = vadd.f32 %v6389, %v6299
    %v6394 = vadd.f32 %v6390, %v6301
    %v6395 = vld [vmem:[%s2573 + $0x20] sm:$0xff]
    %v6396 = vld [vmem:[%s2573 + $0x28] sm:$0xff]
    %v6397 = vld [vmem:[%s2573 + $0x30] sm:$0xff]
    %v6398 = vld [vmem:[%s2573 + $0x38] sm:$0xff]
    %v6399 = vadd.f32 %v6395, %v6340
    %v6400 = vadd.f32 %v6396, %v6342
    %v6401 = vadd.f32 %v6397, %v6381
    %v6402 = vadd.f32 %v6398, %v6383
    %v6403 = vxor.u32 %v6391, 2147483648
    %v6404 = vxor.u32 %v6399, 2147483648
    %v6405 = vmul.f32 %v6403, 1.442695
    %v6406 = vpow.pop %v6405
    %v6407 = vmul.f32 %v6404, 1.442695
    %v6408 = vpow.pop %v6407
    %v6409 = vadd.f32 %v6406, 1.0
    %v6410 = vadd.f32 %v6408, 1.0
    %v6411 = vrcp.pop %v6409
    %v6412 = vmul.f32 1.0, %v6411
    %v6413 = vrcp.pop %v6410
    %v6414 = vmul.f32 1.0, %v6413
    %v6415 = vxor.u32 %v6392, 2147483648
    %v6416 = vxor.u32 %v6400, 2147483648
    %v6417 = vmul.f32 %v6415, 1.442695
    %v6418 = vpow.pop %v6417
    %v6419 = vmul.f32 %v6416, 1.442695
    %v6420 = vpow.pop %v6419
    %v6421 = vadd.f32 %v6418, 1.0
    %v6422 = vadd.f32 %v6420, 1.0
    %v6423 = vrcp.pop %v6421
    %v6424 = vmul.f32 1.0, %v6423
    %v6425 = vrcp.pop %v6422
    %v6426 = vmul.f32 1.0, %v6425
    %v6427 = vtanh.pop %v6393
    %v6428 = vtanh.pop %v6401
    %v6429 = vxor.u32 %v6394, 2147483648
    %v6430 = vxor.u32 %v6402, 2147483648
    %v6431 = vmul.f32 %v6429, 1.442695
    %v6432 = vpow.pop %v6431
    %v6433 = vmul.f32 %v6430, 1.442695
    %v6434 = vpow.pop %v6433
    %v6435 = vadd.f32 %v6432, 1.0
    %v6436 = vadd.f32 %v6434, 1.0
    %v6437 = vrcp.pop %v6435
    %v6438 = vmul.f32 1.0, %v6437
    %v6439 = vrcp.pop %v6436
    %v6440 = vmul.f32 1.0, %v6439
    %v6441 = vmul.f32 %v6424, %v6211
    %v6442 = vmul.f32 %v6426, %v6212
    %v6443 = vmul.f32 %v6412, %v6427
    %v6444 = vmul.f32 %v6414, %v6428
    %v6445 = vadd.f32 %v6441, %v6443
    %v6446 = vadd.f32 %v6442, %v6444
    %v6447 = vtanh.pop %v6445
    %v6448 = vtanh.pop %v6446
    %v6449 = vmul.f32 %v6438, %v6447
    %v6450 = vmul.f32 %v6440, %v6448
    %s6451 = scalar_lea.vmem %s7, 32
    %6452 = vst [vmem:[%s6451] sm:$0xff] %v6449
    %s6453 = scalar_lea.vmem %s7, 80
    %6454 = vst [vmem:[%s6453 + $0x8] sm:$0xff] %v6450
    %v6455 = vpack.c.bf16 %v6449, %v6449
    %v6456 = vpack.c.bf16 %v6450, %v6450
    %6457 = vmatprep.subr.bf16.mxu0 %v5501
    %6458 = vmatpush1.bf16.msra.mxu0 %v5500
    %6459 = vmatprep.subr.bf16.mxu0 %v5509
    %6460 = vmatpush1.bf16.msra.mxu0 %v5508
    %6461 = vmatprep.subr.bf16.mxu0 %v5517
    %6462 = vmatpush1.bf16.msra.mxu0 %v5516
    %6463 = vmatprep.subr.bf16.mxu0 %v5525
    %6464 = vmatpush1.bf16.msra.mxu0 %v5524
    %6465 = vmatprep.subr.bf16.mxu0 %v5533
    %6466 = vmatpush1.bf16.msra.mxu0 %v5532
    %6467 = vmatprep.subr.bf16.mxu0 %v5541
    %6468 = vmatpush1.bf16.msra.mxu0 %v5540
    %6469 = vmatprep.subr.bf16.mxu0 %v5549
    %6470 = vmatpush1.bf16.msra.mxu0 %v5548
    %6471 = vmatprep.subr.bf16.mxu0 %v5557
    %6472 = vmatpush1.bf16.msra.mxu0 %v5556
    %6473 = vmatprep.subr.bf16.mxu0 %v5565
    %6474 = vmatpush1.bf16.msra.mxu0 %v5564
    %6475 = vmatprep.subr.bf16.mxu0 %v5573
    %6476 = vmatpush1.bf16.msra.mxu0 %v5572
    %6477 = vmatprep.subr.bf16.mxu0 %v5581
    %6478 = vmatpush1.bf16.msra.mxu0 %v5580
    %6479 = vmatprep.subr.bf16.mxu0 %v5589
    %6480 = vmatpush1.bf16.msra.mxu0 %v5588
    %6481 = vmatprep.subr.bf16.mxu0 %v5597
    %6482 = vmatpush1.bf16.msra.mxu0 %v5596
    %6483 = vmatprep.subr.bf16.mxu0 %v5605
    %6484 = vmatpush1.bf16.msra.mxu0 %v5604
    %6485 = vmatprep.subr.bf16.mxu0 %v5613
    %6486 = vmatpush1.bf16.msra.mxu0 %v5612
    %6487 = vmatprep.subr.bf16.mxu0 %v5621
    %6488 = vmatpush1.bf16.msra.mxu0 %v5620
    %6489 = vmatprep.mubr.bf16.mxu0 %v6456
    %6490 = vmatmul.mubr.bf16.gmra.mrb[0].mxu0 %v6455
    %v6491 = vpop.f32.mrb[0].mxu0
    %v6492 = vadd.f32 0.0, %v6491
    %v6493 = vpop.f32.mrb[0].mxu0
    %v6494 = vadd.f32 0.0, %v6493
    %v6495 = vpop.f32.mrb[0].mxu0
    %v6496 = vpop.f32.mrb[0].mxu0
    %6497 = vdwg.mxu0
    %6498 = vmatprep.subr.bf16.mxu0 %v5503
    %6499 = vmatpush1.bf16.msra.mxu0 %v5502
    %6500 = vmatprep.subr.bf16.mxu0 %v5511
    %6501 = vmatpush1.bf16.msra.mxu0 %v5510
    %6502 = vmatprep.subr.bf16.mxu0 %v5519
    %6503 = vmatpush1.bf16.msra.mxu0 %v5518
    %6504 = vmatprep.subr.bf16.mxu0 %v5527
    %6505 = vmatpush1.bf16.msra.mxu0 %v5526
    %6506 = vmatprep.subr.bf16.mxu0 %v5535
    %6507 = vmatpush1.bf16.msra.mxu0 %v5534
    %6508 = vmatprep.subr.bf16.mxu0 %v5543
    %6509 = vmatpush1.bf16.msra.mxu0 %v5542
    %6510 = vmatprep.subr.bf16.mxu0 %v5551
    %6511 = vmatpush1.bf16.msra.mxu0 %v5550
    %6512 = vmatprep.subr.bf16.mxu0 %v5559
    %6513 = vmatpush1.bf16.msra.mxu0 %v5558
    %6514 = vmatprep.subr.bf16.mxu0 %v5567
    %6515 = vmatpush1.bf16.msra.mxu0 %v5566
    %6516 = vmatprep.subr.bf16.mxu0 %v5575
    %6517 = vmatpush1.bf16.msra.mxu0 %v5574
    %6518 = vmatprep.subr.bf16.mxu0 %v5583
    %6519 = vmatpush1.bf16.msra.mxu0 %v5582
    %6520 = vmatprep.subr.bf16.mxu0 %v5591
    %6521 = vmatpush1.bf16.msra.mxu0 %v5590
    %6522 = vmatprep.subr.bf16.mxu0 %v5599
    %6523 = vmatpush1.bf16.msra.mxu0 %v5598
    %6524 = vmatprep.subr.bf16.mxu0 %v5607
    %6525 = vmatpush1.bf16.msra.mxu0 %v5606
    %6526 = vmatprep.subr.bf16.mxu0 %v5615
    %6527 = vmatpush1.bf16.msra.mxu0 %v5614
    %6528 = vmatprep.subr.bf16.mxu0 %v5623
    %6529 = vmatpush1.bf16.msra.mxu0 %v5622
    %6530 = vmatprep.mubr.bf16.mxu0 %v6456
    %6531 = vmatmul.mubr.bf16.gmra.mrb[0].mxu0 %v6455
    %v6532 = vpop.f32.mrb[0].mxu0
    %v6533 = vadd.f32 0.0, %v6532
    %v6534 = vpop.f32.mrb[0].mxu0
    %v6535 = vadd.f32 0.0, %v6534
    %v6536 = vpop.f32.mrb[0].mxu0
    %v6537 = vpop.f32.mrb[0].mxu0
    %6538 = vdwg.mxu0
    %6539 = vmatprep.subr.bf16.mxu0 %v5505
    %6540 = vmatpush1.bf16.msra.mxu0 %v5504
    %6541 = vmatprep.subr.bf16.mxu0 %v5513
    %6542 = vmatpush1.bf16.msra.mxu0 %v5512
    %6543 = vmatprep.subr.bf16.mxu0 %v5521
    %6544 = vmatpush1.bf16.msra.mxu0 %v5520
    %6545 = vmatprep.subr.bf16.mxu0 %v5529
    %6546 = vmatpush1.bf16.msra.mxu0 %v5528
    %6547 = vmatprep.subr.bf16.mxu0 %v5537
    %6548 = vmatpush1.bf16.msra.mxu0 %v5536
    %6549 = vmatprep.subr.bf16.mxu0 %v5545
    %6550 = vmatpush1.bf16.msra.mxu0 %v5544
    %6551 = vmatprep.subr.bf16.mxu0 %v5553
    %6552 = vmatpush1.bf16.msra.mxu0 %v5552
    %6553 = vmatprep.subr.bf16.mxu0 %v5561
    %6554 = vmatpush1.bf16.msra.mxu0 %v5560
    %6555 = vmatprep.subr.bf16.mxu0 %v5569
    %6556 = vmatpush1.bf16.msra.mxu0 %v5568
    %6557 = vmatprep.subr.bf16.mxu0 %v5577
    %6558 = vmatpush1.bf16.msra.mxu0 %v5576
    %6559 = vmatprep.subr.bf16.mxu0 %v5585
    %6560 = vmatpush1.bf16.msra.mxu0 %v5584
    %6561 = vmatprep.subr.bf16.mxu0 %v5593
    %6562 = vmatpush1.bf16.msra.mxu0 %v5592
    %6563 = vmatprep.subr.bf16.mxu0 %v5601
    %6564 = vmatpush1.bf16.msra.mxu0 %v5600
    %6565 = vmatprep.subr.bf16.mxu0 %v5609
    %6566 = vmatpush1.bf16.msra.mxu0 %v5608
    %6567 = vmatprep.subr.bf16.mxu0 %v5617
    %6568 = vmatpush1.bf16.msra.mxu0 %v5616
    %6569 = vmatprep.subr.bf16.mxu0 %v5625
    %6570 = vmatpush1.bf16.msra.mxu0 %v5624
    %6571 = vmatprep.mubr.bf16.mxu0 %v6456
    %6572 = vmatmul.mubr.bf16.gmra.mrb[0].mxu0 %v6455
    %v6573 = vpop.f32.mrb[0].mxu0
    %v6574 = vadd.f32 0.0, %v6573
    %v6575 = vpop.f32.mrb[0].mxu0
    %v6576 = vadd.f32 0.0, %v6575
    %v6577 = vpop.f32.mrb[0].mxu0
    %v6578 = vpop.f32.mrb[0].mxu0
    %6579 = vdwg.mxu0
    %6580 = vmatprep.subr.bf16.mxu0 %v5507
    %6581 = vmatpush1.bf16.msra.mxu0 %v5506
    %6582 = vmatprep.subr.bf16.mxu0 %v5515
    %6583 = vmatpush1.bf16.msra.mxu0 %v5514
    %6584 = vmatprep.subr.bf16.mxu0 %v5523
    %6585 = vmatpush1.bf16.msra.mxu0 %v5522
    %6586 = vmatprep.subr.bf16.mxu0 %v5531
    %6587 = vmatpush1.bf16.msra.mxu0 %v5530
    %6588 = vmatprep.subr.bf16.mxu0 %v5539
    %6589 = vmatpush1.bf16.msra.mxu0 %v5538
    %6590 = vmatprep.subr.bf16.mxu0 %v5547
    %6591 = vmatpush1.bf16.msra.mxu0 %v5546
    %6592 = vmatprep.subr.bf16.mxu0 %v5555
    %6593 = vmatpush1.bf16.msra.mxu0 %v5554
    %6594 = vmatprep.subr.bf16.mxu0 %v5563
    %6595 = vmatpush1.bf16.msra.mxu0 %v5562
    %6596 = vmatprep.subr.bf16.mxu0 %v5571
    %6597 = vmatpush1.bf16.msra.mxu0 %v5570
    %6598 = vmatprep.subr.bf16.mxu0 %v5579
    %6599 = vmatpush1.bf16.msra.mxu0 %v5578
    %6600 = vmatprep.subr.bf16.mxu0 %v5587
    %6601 = vmatpush1.bf16.msra.mxu0 %v5586
    %6602 = vmatprep.subr.bf16.mxu0 %v5595
    %6603 = vmatpush1.bf16.msra.mxu0 %v5594
    %6604 = vmatprep.subr.bf16.mxu0 %v5603
    %6605 = vmatpush1.bf16.msra.mxu0 %v5602
    %6606 = vmatprep.subr.bf16.mxu0 %v5611
    %6607 = vmatpush1.bf16.msra.mxu0 %v5610
    %6608 = vmatprep.subr.bf16.mxu0 %v5619
    %6609 = vmatpush1.bf16.msra.mxu0 %v5618
    %6610 = vmatprep.subr.bf16.mxu0 %v5627
    %6611 = vmatpush1.bf16.msra.mxu0 %v5626
    %6612 = vmatprep.mubr.bf16.mxu0 %v6456
    %6613 = vmatmul.mubr.bf16.gmra.mrb[0].mxu0 %v6455
    %v6614 = vpop.f32.mrb[0].mxu0
    %v6615 = vadd.f32 0.0, %v6614
    %v6616 = vpop.f32.mrb[0].mxu0
    %v6617 = vadd.f32 0.0, %v6616
    %v6618 = vpop.f32.mrb[0].mxu0
    %v6619 = vpop.f32.mrb[0].mxu0
    %6620 = vdwg.mxu0
    %v6621 = vld [vmem:[%s2800] sm:$0xff]
    %v6622 = vld [vmem:[%s2800 + $0x8] sm:$0xff]
    %v6623 = vld [vmem:[%s2800 + $0x10] sm:$0xff]
    %v6624 = vld [vmem:[%s2800 + $0x18] sm:$0xff]
    %v6625 = vadd.f32 %v6621, %v6492
    %v6626 = vadd.f32 %v6622, %v6494
    %v6627 = vadd.f32 %v6623, %v6533
    %v6628 = vadd.f32 %v6624, %v6535
    %v6629 = vld [vmem:[%s2809 + $0x20] sm:$0xff]
    %v6630 = vld [vmem:[%s2809 + $0x28] sm:$0xff]
    %v6631 = vld [vmem:[%s2809 + $0x30] sm:$0xff]
    %v6632 = vld [vmem:[%s2809 + $0x38] sm:$0xff]
    %v6633 = vadd.f32 %v6629, %v6574
    %v6634 = vadd.f32 %v6630, %v6576
    %v6635 = vadd.f32 %v6631, %v6615
    %v6636 = vadd.f32 %v6632, %v6617
    %v6637 = vxor.u32 %v6625, 2147483648
    %v6638 = vxor.u32 %v6633, 2147483648
    %v6639 = vmul.f32 %v6637, 1.442695
    %v6640 = vpow.pop %v6639
    %v6641 = vmul.f32 %v6638, 1.442695
    %v6642 = vpow.pop %v6641
    %v6643 = vadd.f32 %v6640, 1.0
    %v6644 = vadd.f32 %v6642, 1.0
    %v6645 = vrcp.pop %v6643
    %v6646 = vmul.f32 1.0, %v6645
    %v6647 = vrcp.pop %v6644
    %v6648 = vmul.f32 1.0, %v6647
    %v6649 = vxor.u32 %v6626, 2147483648
    %v6650 = vxor.u32 %v6634, 2147483648
    %v6651 = vmul.f32 %v6649, 1.442695
    %v6652 = vpow.pop %v6651
    %v6653 = vmul.f32 %v6650, 1.442695
    %v6654 = vpow.pop %v6653
    %v6655 = vadd.f32 %v6652, 1.0
    %v6656 = vadd.f32 %v6654, 1.0
    %v6657 = vrcp.pop %v6655
    %v6658 = vmul.f32 1.0, %v6657
    %v6659 = vrcp.pop %v6656
    %v6660 = vmul.f32 1.0, %v6659
    %v6661 = vtanh.pop %v6627
    %v6662 = vtanh.pop %v6635
    %v6663 = vxor.u32 %v6628, 2147483648
    %v6664 = vxor.u32 %v6636, 2147483648
    %v6665 = vmul.f32 %v6663, 1.442695
    %v6666 = vpow.pop %v6665
    %v6667 = vmul.f32 %v6664, 1.442695
    %v6668 = vpow.pop %v6667
    %v6669 = vadd.f32 %v6666, 1.0
    %v6670 = vadd.f32 %v6668, 1.0
    %v6671 = vrcp.pop %v6669
    %v6672 = vmul.f32 1.0, %v6671
    %v6673 = vrcp.pop %v6670
    %v6674 = vmul.f32 1.0, %v6673
    %v6675 = vmul.f32 %v6658, %v6445
    %v6676 = vmul.f32 %v6660, %v6446
    %v6677 = vmul.f32 %v6646, %v6661
    %v6678 = vmul.f32 %v6648, %v6662
    %v6679 = vadd.f32 %v6675, %v6677
    %v6680 = vadd.f32 %v6676, %v6678
    %v6681 = vtanh.pop %v6679
    %v6682 = vtanh.pop %v6680
    %v6683 = vmul.f32 %v6672, %v6681
    %v6684 = vmul.f32 %v6674, %v6682
    %s6685 = scalar_lea.vmem %s7, 48
    %6686 = vst [vmem:[%s6685] sm:$0xff] %v6683
    %s6687 = scalar_lea.vmem %s7, 64
    %6688 = vst [vmem:[%s6687 + $0x8] sm:$0xff] %v6684
    %v6689 = vpack.c.bf16 %v6683, %v6683
    %v6690 = vpack.c.bf16 %v6684, %v6684
    %6691 = vmatprep.subr.bf16.mxu0 %v5501
    %6692 = vmatpush1.bf16.msra.mxu0 %v5500
    %6693 = vmatprep.subr.bf16.mxu0 %v5509
    %6694 = vmatpush1.bf16.msra.mxu0 %v5508
    %6695 = vmatprep.subr.bf16.mxu0 %v5517
    %6696 = vmatpush1.bf16.msra.mxu0 %v5516
    %6697 = vmatprep.subr.bf16.mxu0 %v5525
    %6698 = vmatpush1.bf16.msra.mxu0 %v5524
    %6699 = vmatprep.subr.bf16.mxu0 %v5533
    %6700 = vmatpush1.bf16.msra.mxu0 %v5532
    %6701 = vmatprep.subr.bf16.mxu0 %v5541
    %6702 = vmatpush1.bf16.msra.mxu0 %v5540
    %6703 = vmatprep.subr.bf16.mxu0 %v5549
    %6704 = vmatpush1.bf16.msra.mxu0 %v5548
    %6705 = vmatprep.subr.bf16.mxu0 %v5557
    %6706 = vmatpush1.bf16.msra.mxu0 %v5556
    %6707 = vmatprep.subr.bf16.mxu0 %v5565
    %6708 = vmatpush1.bf16.msra.mxu0 %v5564
    %6709 = vmatprep.subr.bf16.mxu0 %v5573
    %6710 = vmatpush1.bf16.msra.mxu0 %v5572
    %6711 = vmatprep.subr.bf16.mxu0 %v5581
    %6712 = vmatpush1.bf16.msra.mxu0 %v5580
    %6713 = vmatprep.subr.bf16.mxu0 %v5589
    %6714 = vmatpush1.bf16.msra.mxu0 %v5588
    %6715 = vmatprep.subr.bf16.mxu0 %v5597
    %6716 = vmatpush1.bf16.msra.mxu0 %v5596
    %6717 = vmatprep.subr.bf16.mxu0 %v5605
    %6718 = vmatpush1.bf16.msra.mxu0 %v5604
    %6719 = vmatprep.subr.bf16.mxu0 %v5613
    %6720 = vmatpush1.bf16.msra.mxu0 %v5612
    %6721 = vmatprep.subr.bf16.mxu0 %v5621
    %6722 = vmatpush1.bf16.msra.mxu0 %v5620
    %6723 = vmatprep.mubr.bf16.mxu0 %v6690
    %6724 = vmatmul.mubr.bf16.gmra.mrb[0].mxu0 %v6689
    %v6725 = vpop.f32.mrb[0].mxu0
    %v6726 = vadd.f32 0.0, %v6725
    %v6727 = vpop.f32.mrb[0].mxu0
    %v6728 = vadd.f32 0.0, %v6727
    %v6729 = vpop.f32.mrb[0].mxu0
    %v6730 = vpop.f32.mrb[0].mxu0
    %6731 = vdwg.mxu0
    %6732 = vmatprep.subr.bf16.mxu0 %v5503
    %6733 = vmatpush1.bf16.msra.mxu0 %v5502
    %6734 = vmatprep.subr.bf16.mxu0 %v5511
    %6735 = vmatpush1.bf16.msra.mxu0 %v5510
    %6736 = vmatprep.subr.bf16.mxu0 %v5519
    %6737 = vmatpush1.bf16.msra.mxu0 %v5518
    %6738 = vmatprep.subr.bf16.mxu0 %v5527
    %6739 = vmatpush1.bf16.msra.mxu0 %v5526
    %6740 = vmatprep.subr.bf16.mxu0 %v5535
    %6741 = vmatpush1.bf16.msra.mxu0 %v5534
    %6742 = vmatprep.subr.bf16.mxu0 %v5543
    %6743 = vmatpush1.bf16.msra.mxu0 %v5542
    %6744 = vmatprep.subr.bf16.mxu0 %v5551
    %6745 = vmatpush1.bf16.msra.mxu0 %v5550
    %6746 = vmatprep.subr.bf16.mxu0 %v5559
    %6747 = vmatpush1.bf16.msra.mxu0 %v5558
    %6748 = vmatprep.subr.bf16.mxu0 %v5567
    %6749 = vmatpush1.bf16.msra.mxu0 %v5566
    %6750 = vmatprep.subr.bf16.mxu0 %v5575
    %6751 = vmatpush1.bf16.msra.mxu0 %v5574
    %6752 = vmatprep.subr.bf16.mxu0 %v5583
    %6753 = vmatpush1.bf16.msra.mxu0 %v5582
    %6754 = vmatprep.subr.bf16.mxu0 %v5591
    %6755 = vmatpush1.bf16.msra.mxu0 %v5590
    %6756 = vmatprep.subr.bf16.mxu0 %v5599
    %6757 = vmatpush1.bf16.msra.mxu0 %v5598
    %6758 = vmatprep.subr.bf16.mxu0 %v5607
    %6759 = vmatpush1.bf16.msra.mxu0 %v5606
    %6760 = vmatprep.subr.bf16.mxu0 %v5615
    %6761 = vmatpush1.bf16.msra.mxu0 %v5614
    %6762 = vmatprep.subr.bf16.mxu0 %v5623
    %6763 = vmatpush1.bf16.msra.mxu0 %v5622
    %6764 = vmatprep.mubr.bf16.mxu0 %v6690
    %6765 = vmatmul.mubr.bf16.gmra.mrb[0].mxu0 %v6689
    %v6766 = vpop.f32.mrb[0].mxu0
    %v6767 = vadd.f32 0.0, %v6766
    %v6768 = vpop.f32.mrb[0].mxu0
    %v6769 = vadd.f32 0.0, %v6768
    %v6770 = vpop.f32.mrb[0].mxu0
    %v6771 = vpop.f32.mrb[0].mxu0
    %6772 = vdwg.mxu0
    %6773 = vmatprep.subr.bf16.mxu0 %v5505
    %6774 = vmatpush1.bf16.msra.mxu0 %v5504
    %6775 = vmatprep.subr.bf16.mxu0 %v5513
    %6776 = vmatpush1.bf16.msra.mxu0 %v5512
    %6777 = vmatprep.subr.bf16.mxu0 %v5521
    %6778 = vmatpush1.bf16.msra.mxu0 %v5520
    %6779 = vmatprep.subr.bf16.mxu0 %v5529
    %6780 = vmatpush1.bf16.msra.mxu0 %v5528
    %6781 = vmatprep.subr.bf16.mxu0 %v5537
    %6782 = vmatpush1.bf16.msra.mxu0 %v5536
    %6783 = vmatprep.subr.bf16.mxu0 %v5545
    %6784 = vmatpush1.bf16.msra.mxu0 %v5544
    %6785 = vmatprep.subr.bf16.mxu0 %v5553
    %6786 = vmatpush1.bf16.msra.mxu0 %v5552
    %6787 = vmatprep.subr.bf16.mxu0 %v5561
    %6788 = vmatpush1.bf16.msra.mxu0 %v5560
    %6789 = vmatprep.subr.bf16.mxu0 %v5569
    %6790 = vmatpush1.bf16.msra.mxu0 %v5568
    %6791 = vmatprep.subr.bf16.mxu0 %v5577
    %6792 = vmatpush1.bf16.msra.mxu0 %v5576
    %6793 = vmatprep.subr.bf16.mxu0 %v5585
    %6794 = vmatpush1.bf16.msra.mxu0 %v5584
    %6795 = vmatprep.subr.bf16.mxu0 %v5593
    %6796 = vmatpush1.bf16.msra.mxu0 %v5592
    %6797 = vmatprep.subr.bf16.mxu0 %v5601
    %6798 = vmatpush1.bf16.msra.mxu0 %v5600
    %6799 = vmatprep.subr.bf16.mxu0 %v5609
    %6800 = vmatpush1.bf16.msra.mxu0 %v5608
    %6801 = vmatprep.subr.bf16.mxu0 %v5617
    %6802 = vmatpush1.bf16.msra.mxu0 %v5616
    %6803 = vmatprep.subr.bf16.mxu0 %v5625
    %6804 = vmatpush1.bf16.msra.mxu0 %v5624
    %6805 = vmatprep.mubr.bf16.mxu0 %v6690
    %6806 = vmatmul.mubr.bf16.gmra.mrb[0].mxu0 %v6689
    %v6807 = vpop.f32.mrb[0].mxu0
    %v6808 = vadd.f32 0.0, %v6807
    %v6809 = vpop.f32.mrb[0].mxu0
    %v6810 = vadd.f32 0.0, %v6809
    %v6811 = vpop.f32.mrb[0].mxu0
    %v6812 = vpop.f32.mrb[0].mxu0
    %6813 = vdwg.mxu0
    %6814 = vmatprep.subr.bf16.mxu0 %v5507
    %6815 = vmatpush1.bf16.msra.mxu0 %v5506
    %6816 = vmatprep.subr.bf16.mxu0 %v5515
    %6817 = vmatpush1.bf16.msra.mxu0 %v5514
    %6818 = vmatprep.subr.bf16.mxu0 %v5523
    %6819 = vmatpush1.bf16.msra.mxu0 %v5522
    %6820 = vmatprep.subr.bf16.mxu0 %v5531
    %6821 = vmatpush1.bf16.msra.mxu0 %v5530
    %6822 = vmatprep.subr.bf16.mxu0 %v5539
    %6823 = vmatpush1.bf16.msra.mxu0 %v5538
    %6824 = vmatprep.subr.bf16.mxu0 %v5547
    %6825 = vmatpush1.bf16.msra.mxu0 %v5546
    %6826 = vmatprep.subr.bf16.mxu0 %v5555
    %6827 = vmatpush1.bf16.msra.mxu0 %v5554
    %6828 = vmatprep.subr.bf16.mxu0 %v5563
    %6829 = vmatpush1.bf16.msra.mxu0 %v5562
    %6830 = vmatprep.subr.bf16.mxu0 %v5571
    %6831 = vmatpush1.bf16.msra.mxu0 %v5570
    %6832 = vmatprep.subr.bf16.mxu0 %v5579
    %6833 = vmatpush1.bf16.msra.mxu0 %v5578
    %6834 = vmatprep.subr.bf16.mxu0 %v5587
    %6835 = vmatpush1.bf16.msra.mxu0 %v5586
    %6836 = vmatprep.subr.bf16.mxu0 %v5595
    %6837 = vmatpush1.bf16.msra.mxu0 %v5594
    %6838 = vmatprep.subr.bf16.mxu0 %v5603
    %6839 = vmatpush1.bf16.msra.mxu0 %v5602
    %6840 = vmatprep.subr.bf16.mxu0 %v5611
    %6841 = vmatpush1.bf16.msra.mxu0 %v5610
    %6842 = vmatprep.subr.bf16.mxu0 %v5619
    %6843 = vmatpush1.bf16.msra.mxu0 %v5618
    %6844 = vmatprep.subr.bf16.mxu0 %v5627
    %6845 = vmatpush1.bf16.msra.mxu0 %v5626
    %6846 = vmatprep.mubr.bf16.mxu0 %v6690
    %6847 = vmatmul.mubr.bf16.gmra.mrb[0].mxu0 %v6689
    %v6848 = vpop.f32.mrb[0].mxu0
    %v6849 = vadd.f32 0.0, %v6848
    %v6850 = vpop.f32.mrb[0].mxu0
    %v6851 = vadd.f32 0.0, %v6850
    %v6852 = vpop.f32.mrb[0].mxu0
    %v6853 = vpop.f32.mrb[0].mxu0
    %6854 = vdwg.mxu0
    %v6855 = vld [vmem:[%s2809] sm:$0xff]
    %v6856 = vld [vmem:[%s2809 + $0x8] sm:$0xff]
    %v6857 = vld [vmem:[%s2809 + $0x10] sm:$0xff]
    %v6858 = vld [vmem:[%s2809 + $0x18] sm:$0xff]
    %v6859 = vadd.f32 %v6855, %v6726
    %v6860 = vadd.f32 %v6856, %v6728
    %v6861 = vadd.f32 %v6857, %v6767
    %v6862 = vadd.f32 %v6858, %v6769
    %v6863 = vld [vmem:[%s2800 + $0x20] sm:$0xff]
    %v6864 = vld [vmem:[%s2800 + $0x28] sm:$0xff]
    %v6865 = vld [vmem:[%s2800 + $0x30] sm:$0xff]
    %v6866 = vld [vmem:[%s2800 + $0x38] sm:$0xff]
    %v6867 = vadd.f32 %v6863, %v6808
    %v6868 = vadd.f32 %v6864, %v6810
    %v6869 = vadd.f32 %v6865, %v6849
    %v6870 = vadd.f32 %v6866, %v6851
    %v6871 = vxor.u32 %v6859, 2147483648
    %v6872 = vxor.u32 %v6867, 2147483648
    %v6873 = vmul.f32 %v6871, 1.442695
    %v6874 = vpow.pop %v6873
    %v6875 = vmul.f32 %v6872, 1.442695
    %v6876 = vpow.pop %v6875
    %v6877 = vadd.f32 %v6874, 1.0
    %v6878 = vadd.f32 %v6876, 1.0
    %v6879 = vrcp.pop %v6877
    %v6880 = vmul.f32 1.0, %v6879
    %v6881 = vrcp.pop %v6878
    %v6882 = vmul.f32 1.0, %v6881
    %v6883 = vxor.u32 %v6860, 2147483648
    %v6884 = vxor.u32 %v6868, 2147483648
    %v6885 = vmul.f32 %v6883, 1.442695
    %v6886 = vpow.pop %v6885
    %v6887 = vmul.f32 %v6884, 1.442695
    %v6888 = vpow.pop %v6887
    %v6889 = vadd.f32 %v6886, 1.0
    %v6890 = vadd.f32 %v6888, 1.0
    %v6891 = vrcp.pop %v6889
    %v6892 = vmul.f32 1.0, %v6891
    %v6893 = vrcp.pop %v6890
    %v6894 = vmul.f32 1.0, %v6893
    %v6895 = vtanh.pop %v6861
    %v6896 = vtanh.pop %v6869
    %v6897 = vxor.u32 %v6862, 2147483648
    %v6898 = vxor.u32 %v6870, 2147483648
    %v6899 = vmul.f32 %v6897, 1.442695
    %v6900 = vpow.pop %v6899
    %v6901 = vmul.f32 %v6898, 1.442695
    %v6902 = vpow.pop %v6901
    %v6903 = vadd.f32 %v6900, 1.0
    %v6904 = vadd.f32 %v6902, 1.0
    %v6905 = vrcp.pop %v6903
    %v6906 = vmul.f32 1.0, %v6905
    %v6907 = vrcp.pop %v6904
    %v6908 = vmul.f32 1.0, %v6907
    %v6909 = vmul.f32 %v6892, %v6679
    %v6910 = vmul.f32 %v6894, %v6680
    %v6911 = vmul.f32 %v6880, %v6895
    %v6912 = vmul.f32 %v6882, %v6896
    %v6913 = vadd.f32 %v6909, %v6911
    %v6914 = vadd.f32 %v6910, %v6912
    %v6915 = vtanh.pop %v6913
    %v6916 = vtanh.pop %v6914
    %v6917 = vmul.f32 %v6906, %v6915
    %v6918 = vmul.f32 %v6908, %v6916
    %6919 = vst [vmem:[%s6687] sm:$0xff] %v6917
    %6920 = vst [vmem:[%s6685 + $0x8] sm:$0xff] %v6918
    %v6921 = vpack.c.bf16 %v6917, %v6917
    %v6922 = vpack.c.bf16 %v6918, %v6918
    %6923 = vmatprep.subr.bf16.mxu0 %v5501
    %6924 = vmatpush1.bf16.msra.mxu0 %v5500
    %6925 = vmatprep.subr.bf16.mxu0 %v5509
    %6926 = vmatpush1.bf16.msra.mxu0 %v5508
    %6927 = vmatprep.subr.bf16.mxu0 %v5517
    %6928 = vmatpush1.bf16.msra.mxu0 %v5516
    %6929 = vmatprep.subr.bf16.mxu0 %v5525
    %6930 = vmatpush1.bf16.msra.mxu0 %v5524
    %6931 = vmatprep.subr.bf16.mxu0 %v5533
    %6932 = vmatpush1.bf16.msra.mxu0 %v5532
    %6933 = vmatprep.subr.bf16.mxu0 %v5541
    %6934 = vmatpush1.bf16.msra.mxu0 %v5540
    %6935 = vmatprep.subr.bf16.mxu0 %v5549
    %6936 = vmatpush1.bf16.msra.mxu0 %v5548
    %6937 = vmatprep.subr.bf16.mxu0 %v5557
    %6938 = vmatpush1.bf16.msra.mxu0 %v5556
    %6939 = vmatprep.subr.bf16.mxu0 %v5565
    %6940 = vmatpush1.bf16.msra.mxu0 %v5564
    %6941 = vmatprep.subr.bf16.mxu0 %v5573
    %6942 = vmatpush1.bf16.msra.mxu0 %v5572
    %6943 = vmatprep.subr.bf16.mxu0 %v5581
    %6944 = vmatpush1.bf16.msra.mxu0 %v5580
    %6945 = vmatprep.subr.bf16.mxu0 %v5589
    %6946 = vmatpush1.bf16.msra.mxu0 %v5588
    %6947 = vmatprep.subr.bf16.mxu0 %v5597
    %6948 = vmatpush1.bf16.msra.mxu0 %v5596
    %6949 = vmatprep.subr.bf16.mxu0 %v5605
    %6950 = vmatpush1.bf16.msra.mxu0 %v5604
    %6951 = vmatprep.subr.bf16.mxu0 %v5613
    %6952 = vmatpush1.bf16.msra.mxu0 %v5612
    %6953 = vmatprep.subr.bf16.mxu0 %v5621
    %6954 = vmatpush1.bf16.msra.mxu0 %v5620
    %6955 = vmatprep.mubr.bf16.mxu0 %v6922
    %6956 = vmatmul.mubr.bf16.gmra.mrb[0].mxu0 %v6921
    %v6957 = vpop.f32.mrb[0].mxu0
    %v6958 = vadd.f32 0.0, %v6957
    %v6959 = vpop.f32.mrb[0].mxu0
    %v6960 = vadd.f32 0.0, %v6959
    %v6961 = vpop.f32.mrb[0].mxu0
    %v6962 = vpop.f32.mrb[0].mxu0
    %6963 = vdwg.mxu0
    %6964 = vmatprep.subr.bf16.mxu0 %v5503
    %6965 = vmatpush1.bf16.msra.mxu0 %v5502
    %6966 = vmatprep.subr.bf16.mxu0 %v5511
    %6967 = vmatpush1.bf16.msra.mxu0 %v5510
    %6968 = vmatprep.subr.bf16.mxu0 %v5519
    %6969 = vmatpush1.bf16.msra.mxu0 %v5518
    %6970 = vmatprep.subr.bf16.mxu0 %v5527
    %6971 = vmatpush1.bf16.msra.mxu0 %v5526
    %6972 = vmatprep.subr.bf16.mxu0 %v5535
    %6973 = vmatpush1.bf16.msra.mxu0 %v5534
    %6974 = vmatprep.subr.bf16.mxu0 %v5543
    %6975 = vmatpush1.bf16.msra.mxu0 %v5542
    %6976 = vmatprep.subr.bf16.mxu0 %v5551
    %6977 = vmatpush1.bf16.msra.mxu0 %v5550
    %6978 = vmatprep.subr.bf16.mxu0 %v5559
    %6979 = vmatpush1.bf16.msra.mxu0 %v5558
    %6980 = vmatprep.subr.bf16.mxu0 %v5567
    %6981 = vmatpush1.bf16.msra.mxu0 %v5566
    %6982 = vmatprep.subr.bf16.mxu0 %v5575
    %6983 = vmatpush1.bf16.msra.mxu0 %v5574
    %6984 = vmatprep.subr.bf16.mxu0 %v5583
    %6985 = vmatpush1.bf16.msra.mxu0 %v5582
    %6986 = vmatprep.subr.bf16.mxu0 %v5591
    %6987 = vmatpush1.bf16.msra.mxu0 %v5590
    %6988 = vmatprep.subr.bf16.mxu0 %v5599
    %6989 = vmatpush1.bf16.msra.mxu0 %v5598
    %6990 = vmatprep.subr.bf16.mxu0 %v5607
    %6991 = vmatpush1.bf16.msra.mxu0 %v5606
    %6992 = vmatprep.subr.bf16.mxu0 %v5615
    %6993 = vmatpush1.bf16.msra.mxu0 %v5614
    %6994 = vmatprep.subr.bf16.mxu0 %v5623
    %6995 = vmatpush1.bf16.msra.mxu0 %v5622
    %6996 = vmatprep.mubr.bf16.mxu0 %v6922
    %6997 = vmatmul.mubr.bf16.gmra.mrb[0].mxu0 %v6921
    %v6998 = vpop.f32.mrb[0].mxu0
    %v6999 = vadd.f32 0.0, %v6998
    %v7000 = vpop.f32.mrb[0].mxu0
    %v7001 = vadd.f32 0.0, %v7000
    %v7002 = vpop.f32.mrb[0].mxu0
    %v7003 = vpop.f32.mrb[0].mxu0
    %7004 = vdwg.mxu0
    %7005 = vmatprep.subr.bf16.mxu0 %v5505
    %7006 = vmatpush1.bf16.msra.mxu0 %v5504
    %7007 = vmatprep.subr.bf16.mxu0 %v5513
    %7008 = vmatpush1.bf16.msra.mxu0 %v5512
    %7009 = vmatprep.subr.bf16.mxu0 %v5521
    %7010 = vmatpush1.bf16.msra.mxu0 %v5520
    %7011 = vmatprep.subr.bf16.mxu0 %v5529
    %7012 = vmatpush1.bf16.msra.mxu0 %v5528
    %7013 = vmatprep.subr.bf16.mxu0 %v5537
    %7014 = vmatpush1.bf16.msra.mxu0 %v5536
    %7015 = vmatprep.subr.bf16.mxu0 %v5545
    %7016 = vmatpush1.bf16.msra.mxu0 %v5544
    %7017 = vmatprep.subr.bf16.mxu0 %v5553
    %7018 = vmatpush1.bf16.msra.mxu0 %v5552
    %7019 = vmatprep.subr.bf16.mxu0 %v5561
    %7020 = vmatpush1.bf16.msra.mxu0 %v5560
    %7021 = vmatprep.subr.bf16.mxu0 %v5569
    %7022 = vmatpush1.bf16.msra.mxu0 %v5568
    %7023 = vmatprep.subr.bf16.mxu0 %v5577
    %7024 = vmatpush1.bf16.msra.mxu0 %v5576
    %7025 = vmatprep.subr.bf16.mxu0 %v5585
    %7026 = vmatpush1.bf16.msra.mxu0 %v5584
    %7027 = vmatprep.subr.bf16.mxu0 %v5593
    %7028 = vmatpush1.bf16.msra.mxu0 %v5592
    %7029 = vmatprep.subr.bf16.mxu0 %v5601
    %7030 = vmatpush1.bf16.msra.mxu0 %v5600
    %7031 = vmatprep.subr.bf16.mxu0 %v5609
    %7032 = vmatpush1.bf16.msra.mxu0 %v5608
    %7033 = vmatprep.subr.bf16.mxu0 %v5617
    %7034 = vmatpush1.bf16.msra.mxu0 %v5616
    %7035 = vmatprep.subr.bf16.mxu0 %v5625
    %7036 = vmatpush1.bf16.msra.mxu0 %v5624
    %7037 = vmatprep.mubr.bf16.mxu0 %v6922
    %7038 = vmatmul.mubr.bf16.gmra.mrb[0].mxu0 %v6921
    %v7039 = vpop.f32.mrb[0].mxu0
    %v7040 = vadd.f32 0.0, %v7039
    %v7041 = vpop.f32.mrb[0].mxu0
    %v7042 = vadd.f32 0.0, %v7041
    %v7043 = vpop.f32.mrb[0].mxu0
    %v7044 = vpop.f32.mrb[0].mxu0
    %7045 = vdwg.mxu0
    %7046 = vmatprep.subr.bf16.mxu0 %v5507
    %7047 = vmatpush1.bf16.msra.mxu0 %v5506
    %7048 = vmatprep.subr.bf16.mxu0 %v5515
    %7049 = vmatpush1.bf16.msra.mxu0 %v5514
    %7050 = vmatprep.subr.bf16.mxu0 %v5523
    %7051 = vmatpush1.bf16.msra.mxu0 %v5522
    %7052 = vmatprep.subr.bf16.mxu0 %v5531
    %7053 = vmatpush1.bf16.msra.mxu0 %v5530
    %7054 = vmatprep.subr.bf16.mxu0 %v5539
    %7055 = vmatpush1.bf16.msra.mxu0 %v5538
    %7056 = vmatprep.subr.bf16.mxu0 %v5547
    %7057 = vmatpush1.bf16.msra.mxu0 %v5546
    %7058 = vmatprep.subr.bf16.mxu0 %v5555
    %7059 = vmatpush1.bf16.msra.mxu0 %v5554
    %7060 = vmatprep.subr.bf16.mxu0 %v5563
    %7061 = vmatpush1.bf16.msra.mxu0 %v5562
    %7062 = vmatprep.subr.bf16.mxu0 %v5571
    %7063 = vmatpush1.bf16.msra.mxu0 %v5570
    %7064 = vmatprep.subr.bf16.mxu0 %v5579
    %7065 = vmatpush1.bf16.msra.mxu0 %v5578
    %7066 = vmatprep.subr.bf16.mxu0 %v5587
    %7067 = vmatpush1.bf16.msra.mxu0 %v5586
    %7068 = vmatprep.subr.bf16.mxu0 %v5595
    %7069 = vmatpush1.bf16.msra.mxu0 %v5594
    %7070 = vmatprep.subr.bf16.mxu0 %v5603
    %7071 = vmatpush1.bf16.msra.mxu0 %v5602
    %7072 = vmatprep.subr.bf16.mxu0 %v5611
    %7073 = vmatpush1.bf16.msra.mxu0 %v5610
    %7074 = vmatprep.subr.bf16.mxu0 %v5619
    %7075 = vmatpush1.bf16.msra.mxu0 %v5618
    %7076 = vmatprep.subr.bf16.mxu0 %v5627
    %7077 = vmatpush1.bf16.msra.mxu0 %v5626
    %7078 = vmatprep.mubr.bf16.mxu0 %v6922
    %7079 = vmatmul.mubr.bf16.gmra.mrb[0].mxu0 %v6921
    %v7080 = vpop.f32.mrb[0].mxu0
    %v7081 = vadd.f32 0.0, %v7080
    %v7082 = vpop.f32.mrb[0].mxu0
    %v7083 = vadd.f32 0.0, %v7082
    %v7084 = vpop.f32.mrb[0].mxu0
    %v7085 = vpop.f32.mrb[0].mxu0
    %7086 = vdwg.mxu0
    %v7087 = vld [vmem:[%s2573] sm:$0xff]
    %v7088 = vld [vmem:[%s2573 + $0x8] sm:$0xff]
    %v7089 = vld [vmem:[%s2573 + $0x10] sm:$0xff]
    %v7090 = vld [vmem:[%s2573 + $0x18] sm:$0xff]
    %v7091 = vadd.f32 %v7087, %v6958
    %v7092 = vadd.f32 %v7088, %v6960
    %v7093 = vadd.f32 %v7089, %v6999
    %v7094 = vadd.f32 %v7090, %v7001
    %v7095 = vld [vmem:[%s2564 + $0x20] sm:$0xff]
    %v7096 = vld [vmem:[%s2564 + $0x28] sm:$0xff]
    %v7097 = vld [vmem:[%s2564 + $0x30] sm:$0xff]
    %v7098 = vld [vmem:[%s2564 + $0x38] sm:$0xff]
    %v7099 = vadd.f32 %v7095, %v7040
    %v7100 = vadd.f32 %v7096, %v7042
    %v7101 = vadd.f32 %v7097, %v7081
    %v7102 = vadd.f32 %v7098, %v7083
    %v7103 = vxor.u32 %v7091, 2147483648
    %v7104 = vxor.u32 %v7099, 2147483648
    %v7105 = vmul.f32 %v7103, 1.442695
    %v7106 = vpow.pop %v7105
    %v7107 = vmul.f32 %v7104, 1.442695
    %v7108 = vpow.pop %v7107
    %v7109 = vadd.f32 %v7106, 1.0
    %v7110 = vadd.f32 %v7108, 1.0
    %v7111 = vrcp.pop %v7109
    %v7112 = vmul.f32 1.0, %v7111
    %v7113 = vrcp.pop %v7110
    %v7114 = vmul.f32 1.0, %v7113
    %v7115 = vxor.u32 %v7092, 2147483648
    %v7116 = vxor.u32 %v7100, 2147483648
    %v7117 = vmul.f32 %v7115, 1.442695
    %v7118 = vpow.pop %v7117
    %v7119 = vmul.f32 %v7116, 1.442695
    %v7120 = vpow.pop %v7119
    %v7121 = vadd.f32 %v7118, 1.0
    %v7122 = vadd.f32 %v7120, 1.0
    %v7123 = vrcp.pop %v7121
    %v7124 = vmul.f32 1.0, %v7123
    %v7125 = vrcp.pop %v7122
    %v7126 = vmul.f32 1.0, %v7125
    %v7127 = vtanh.pop %v7093
    %v7128 = vtanh.pop %v7101
    %v7129 = vxor.u32 %v7094, 2147483648
    %v7130 = vxor.u32 %v7102, 2147483648
    %v7131 = vmul.f32 %v7129, 1.442695
    %v7132 = vpow.pop %v7131
    %v7133 = vmul.f32 %v7130, 1.442695
    %v7134 = vpow.pop %v7133
    %v7135 = vadd.f32 %v7132, 1.0
    %v7136 = vadd.f32 %v7134, 1.0
    %v7137 = vrcp.pop %v7135
    %v7138 = vmul.f32 1.0, %v7137
    %v7139 = vrcp.pop %v7136
    %v7140 = vmul.f32 1.0, %v7139
    %v7141 = vmul.f32 %v7124, %v6913
    %v7142 = vmul.f32 %v7126, %v6914
    %v7143 = vmul.f32 %v7112, %v7127
    %v7144 = vmul.f32 %v7114, %v7128
    %v7145 = vadd.f32 %v7141, %v7143
    %v7146 = vadd.f32 %v7142, %v7144
    %v7147 = vtanh.pop %v7145
    %v7148 = vtanh.pop %v7146
    %v7149 = vmul.f32 %v7138, %v7147
    %v7150 = vmul.f32 %v7140, %v7148
    %7151 = vst [vmem:[%s6453] sm:$0xff] %v7149
    %7152 = vst [vmem:[%s6451 + $0x8] sm:$0xff] %v7150
    %v7153 = vpack.c.bf16 %v7149, %v7149
    %v7154 = vpack.c.bf16 %v7150, %v7150
    %7155 = vmatprep.subr.bf16.mxu0 %v5501
    %7156 = vmatpush1.bf16.msra.mxu0 %v5500
    %7157 = vmatprep.subr.bf16.mxu0 %v5509
    %7158 = vmatpush1.bf16.msra.mxu0 %v5508
    %7159 = vmatprep.subr.bf16.mxu0 %v5517
    %7160 = vmatpush1.bf16.msra.mxu0 %v5516
    %7161 = vmatprep.subr.bf16.mxu0 %v5525
    %7162 = vmatpush1.bf16.msra.mxu0 %v5524
    %7163 = vmatprep.subr.bf16.mxu0 %v5533
    %7164 = vmatpush1.bf16.msra.mxu0 %v5532
    %7165 = vmatprep.subr.bf16.mxu0 %v5541
    %7166 = vmatpush1.bf16.msra.mxu0 %v5540
    %7167 = vmatprep.subr.bf16.mxu0 %v5549
    %7168 = vmatpush1.bf16.msra.mxu0 %v5548
    %7169 = vmatprep.subr.bf16.mxu0 %v5557
    %7170 = vmatpush1.bf16.msra.mxu0 %v5556
    %7171 = vmatprep.subr.bf16.mxu0 %v5565
    %7172 = vmatpush1.bf16.msra.mxu0 %v5564
    %7173 = vmatprep.subr.bf16.mxu0 %v5573
    %7174 = vmatpush1.bf16.msra.mxu0 %v5572
    %7175 = vmatprep.subr.bf16.mxu0 %v5581
    %7176 = vmatpush1.bf16.msra.mxu0 %v5580
    %7177 = vmatprep.subr.bf16.mxu0 %v5589
    %7178 = vmatpush1.bf16.msra.mxu0 %v5588
    %7179 = vmatprep.subr.bf16.mxu0 %v5597
    %7180 = vmatpush1.bf16.msra.mxu0 %v5596
    %7181 = vmatprep.subr.bf16.mxu0 %v5605
    %7182 = vmatpush1.bf16.msra.mxu0 %v5604
    %7183 = vmatprep.subr.bf16.mxu0 %v5613
    %7184 = vmatpush1.bf16.msra.mxu0 %v5612
    %7185 = vmatprep.subr.bf16.mxu0 %v5621
    %7186 = vmatpush1.bf16.msra.mxu0 %v5620
    %7187 = vmatprep.mubr.bf16.mxu0 %v7154
    %7188 = vmatmul.mubr.bf16.gmra.mrb[0].mxu0 %v7153
    %v7189 = vpop.f32.mrb[0].mxu0
    %v7190 = vadd.f32 0.0, %v7189
    %v7191 = vpop.f32.mrb[0].mxu0
    %v7192 = vadd.f32 0.0, %v7191
    %v7193 = vpop.f32.mrb[0].mxu0
    %v7194 = vpop.f32.mrb[0].mxu0
    %7195 = vdwg.mxu0
    %7196 = vmatprep.subr.bf16.mxu0 %v5503
    %7197 = vmatpush1.bf16.msra.mxu0 %v5502
    %7198 = vmatprep.subr.bf16.mxu0 %v5511
    %7199 = vmatpush1.bf16.msra.mxu0 %v5510
    %7200 = vmatprep.subr.bf16.mxu0 %v5519
    %7201 = vmatpush1.bf16.msra.mxu0 %v5518
    %7202 = vmatprep.subr.bf16.mxu0 %v5527
    %7203 = vmatpush1.bf16.msra.mxu0 %v5526
    %7204 = vmatprep.subr.bf16.mxu0 %v5535
    %7205 = vmatpush1.bf16.msra.mxu0 %v5534
    %7206 = vmatprep.subr.bf16.mxu0 %v5543
    %7207 = vmatpush1.bf16.msra.mxu0 %v5542
    %7208 = vmatprep.subr.bf16.mxu0 %v5551
    %7209 = vmatpush1.bf16.msra.mxu0 %v5550
    %7210 = vmatprep.subr.bf16.mxu0 %v5559
    %7211 = vmatpush1.bf16.msra.mxu0 %v5558
    %7212 = vmatprep.subr.bf16.mxu0 %v5567
    %7213 = vmatpush1.bf16.msra.mxu0 %v5566
    %7214 = vmatprep.subr.bf16.mxu0 %v5575
    %7215 = vmatpush1.bf16.msra.mxu0 %v5574
    %7216 = vmatprep.subr.bf16.mxu0 %v5583
    %7217 = vmatpush1.bf16.msra.mxu0 %v5582
    %7218 = vmatprep.subr.bf16.mxu0 %v5591
    %7219 = vmatpush1.bf16.msra.mxu0 %v5590
    %7220 = vmatprep.subr.bf16.mxu0 %v5599
    %7221 = vmatpush1.bf16.msra.mxu0 %v5598
    %7222 = vmatprep.subr.bf16.mxu0 %v5607
    %7223 = vmatpush1.bf16.msra.mxu0 %v5606
    %7224 = vmatprep.subr.bf16.mxu0 %v5615
    %7225 = vmatpush1.bf16.msra.mxu0 %v5614
    %7226 = vmatprep.subr.bf16.mxu0 %v5623
    %7227 = vmatpush1.bf16.msra.mxu0 %v5622
    %7228 = vmatprep.mubr.bf16.mxu0 %v7154
    %7229 = vmatmul.mubr.bf16.gmra.mrb[0].mxu0 %v7153
    %v7230 = vpop.f32.mrb[0].mxu0
    %v7231 = vadd.f32 0.0, %v7230
    %v7232 = vpop.f32.mrb[0].mxu0
    %v7233 = vadd.f32 0.0, %v7232
    %v7234 = vpop.f32.mrb[0].mxu0
    %v7235 = vpop.f32.mrb[0].mxu0
    %7236 = vdwg.mxu0
    %7237 = vmatprep.subr.bf16.mxu0 %v5505
    %7238 = vmatpush1.bf16.msra.mxu0 %v5504
    %7239 = vmatprep.subr.bf16.mxu0 %v5513
    %7240 = vmatpush1.bf16.msra.mxu0 %v5512
    %7241 = vmatprep.subr.bf16.mxu0 %v5521
    %7242 = vmatpush1.bf16.msra.mxu0 %v5520
    %7243 = vmatprep.subr.bf16.mxu0 %v5529
    %7244 = vmatpush1.bf16.msra.mxu0 %v5528
    %7245 = vmatprep.subr.bf16.mxu0 %v5537
    %7246 = vmatpush1.bf16.msra.mxu0 %v5536
    %7247 = vmatprep.subr.bf16.mxu0 %v5545
    %7248 = vmatpush1.bf16.msra.mxu0 %v5544
    %7249 = vmatprep.subr.bf16.mxu0 %v5553
    %7250 = vmatpush1.bf16.msra.mxu0 %v5552
    %7251 = vmatprep.subr.bf16.mxu0 %v5561
    %7252 = vmatpush1.bf16.msra.mxu0 %v5560
    %7253 = vmatprep.subr.bf16.mxu0 %v5569
    %7254 = vmatpush1.bf16.msra.mxu0 %v5568
    %7255 = vmatprep.subr.bf16.mxu0 %v5577
    %7256 = vmatpush1.bf16.msra.mxu0 %v5576
    %7257 = vmatprep.subr.bf16.mxu0 %v5585
    %7258 = vmatpush1.bf16.msra.mxu0 %v5584
    %7259 = vmatprep.subr.bf16.mxu0 %v5593
    %7260 = vmatpush1.bf16.msra.mxu0 %v5592
    %7261 = vmatprep.subr.bf16.mxu0 %v5601
    %7262 = vmatpush1.bf16.msra.mxu0 %v5600
    %7263 = vmatprep.subr.bf16.mxu0 %v5609
    %7264 = vmatpush1.bf16.msra.mxu0 %v5608
    %7265 = vmatprep.subr.bf16.mxu0 %v5617
    %7266 = vmatpush1.bf16.msra.mxu0 %v5616
    %7267 = vmatprep.subr.bf16.mxu0 %v5625
    %7268 = vmatpush1.bf16.msra.mxu0 %v5624
    %7269 = vmatprep.mubr.bf16.mxu0 %v7154
    %7270 = vmatmul.mubr.bf16.gmra.mrb[0].mxu0 %v7153
    %v7271 = vpop.f32.mrb[0].mxu0
    %v7272 = vadd.f32 0.0, %v7271
    %v7273 = vpop.f32.mrb[0].mxu0
    %v7274 = vadd.f32 0.0, %v7273
    %v7275 = vpop.f32.mrb[0].mxu0
    %v7276 = vpop.f32.mrb[0].mxu0
    %7277 = vdwg.mxu0
    %7278 = vmatprep.subr.bf16.mxu0 %v5507
    %7279 = vmatpush1.bf16.msra.mxu0 %v5506
    %7280 = vmatprep.subr.bf16.mxu0 %v5515
    %7281 = vmatpush1.bf16.msra.mxu0 %v5514
    %7282 = vmatprep.subr.bf16.mxu0 %v5523
    %7283 = vmatpush1.bf16.msra.mxu0 %v5522
    %7284 = vmatprep.subr.bf16.mxu0 %v5531
    %7285 = vmatpush1.bf16.msra.mxu0 %v5530
    %7286 = vmatprep.subr.bf16.mxu0 %v5539
    %7287 = vmatpush1.bf16.msra.mxu0 %v5538
    %7288 = vmatprep.subr.bf16.mxu0 %v5547
    %7289 = vmatpush1.bf16.msra.mxu0 %v5546
    %7290 = vmatprep.subr.bf16.mxu0 %v5555
    %7291 = vmatpush1.bf16.msra.mxu0 %v5554
    %7292 = vmatprep.subr.bf16.mxu0 %v5563
    %7293 = vmatpush1.bf16.msra.mxu0 %v5562
    %7294 = vmatprep.subr.bf16.mxu0 %v5571
    %7295 = vmatpush1.bf16.msra.mxu0 %v5570
    %7296 = vmatprep.subr.bf16.mxu0 %v5579
    %7297 = vmatpush1.bf16.msra.mxu0 %v5578
    %7298 = vmatprep.subr.bf16.mxu0 %v5587
    %7299 = vmatpush1.bf16.msra.mxu0 %v5586
    %7300 = vmatprep.subr.bf16.mxu0 %v5595
    %7301 = vmatpush1.bf16.msra.mxu0 %v5594
    %7302 = vmatprep.subr.bf16.mxu0 %v5603
    %7303 = vmatpush1.bf16.msra.mxu0 %v5602
    %7304 = vmatprep.subr.bf16.mxu0 %v5611
    %7305 = vmatpush1.bf16.msra.mxu0 %v5610
    %7306 = vmatprep.subr.bf16.mxu0 %v5619
    %7307 = vmatpush1.bf16.msra.mxu0 %v5618
    %7308 = vmatprep.subr.bf16.mxu0 %v5627
    %7309 = vmatpush1.bf16.msra.mxu0 %v5626
    %7310 = vmatprep.mubr.bf16.mxu0 %v7154
    %7311 = vmatmul.mubr.bf16.gmra.mrb[0].mxu0 %v7153
    %v7312 = vpop.f32.mrb[0].mxu0
    %v7313 = vadd.f32 0.0, %v7312
    %v7314 = vpop.f32.mrb[0].mxu0
    %v7315 = vadd.f32 0.0, %v7314
    %v7316 = vpop.f32.mrb[0].mxu0
    %v7317 = vpop.f32.mrb[0].mxu0
    %7318 = vdwg.mxu0
    %v7319 = vld [vmem:[%s2337] sm:$0xff]
    %v7320 = vld [vmem:[%s2337 + $0x8] sm:$0xff]
    %v7321 = vld [vmem:[%s2337 + $0x10] sm:$0xff]
    %v7322 = vld [vmem:[%s2337 + $0x18] sm:$0xff]
    %v7323 = vadd.f32 %v7319, %v7190
    %v7324 = vadd.f32 %v7320, %v7192
    %v7325 = vadd.f32 %v7321, %v7231
    %v7326 = vadd.f32 %v7322, %v7233
    %v7327 = vld [vmem:[%s2328 + $0x20] sm:$0xff]
    %v7328 = vld [vmem:[%s2328 + $0x28] sm:$0xff]
    %v7329 = vld [vmem:[%s2328 + $0x30] sm:$0xff]
    %v7330 = vld [vmem:[%s2328 + $0x38] sm:$0xff]
    %v7331 = vadd.f32 %v7327, %v7272
    %v7332 = vadd.f32 %v7328, %v7274
    %v7333 = vadd.f32 %v7329, %v7313
    %v7334 = vadd.f32 %v7330, %v7315
    %v7335 = vxor.u32 %v7323, 2147483648
    %v7336 = vxor.u32 %v7331, 2147483648
    %v7337 = vmul.f32 %v7335, 1.442695
    %v7338 = vpow.pop %v7337
    %v7339 = vmul.f32 %v7336, 1.442695
    %v7340 = vpow.pop %v7339
    %v7341 = vadd.f32 %v7338, 1.0
    %v7342 = vadd.f32 %v7340, 1.0
    %v7343 = vrcp.pop %v7341
    %v7344 = vmul.f32 1.0, %v7343
    %v7345 = vrcp.pop %v7342
    %v7346 = vmul.f32 1.0, %v7345
    %v7347 = vxor.u32 %v7324, 2147483648
    %v7348 = vxor.u32 %v7332, 2147483648
    %v7349 = vmul.f32 %v7347, 1.442695
    %v7350 = vpow.pop %v7349
    %v7351 = vmul.f32 %v7348, 1.442695
    %v7352 = vpow.pop %v7351
    %v7353 = vadd.f32 %v7350, 1.0
    %v7354 = vadd.f32 %v7352, 1.0
    %v7355 = vrcp.pop %v7353
    %v7356 = vmul.f32 1.0, %v7355
    %v7357 = vrcp.pop %v7354
    %v7358 = vmul.f32 1.0, %v7357
    %v7359 = vtanh.pop %v7325
    %v7360 = vtanh.pop %v7333
    %v7361 = vxor.u32 %v7326, 2147483648
    %v7362 = vxor.u32 %v7334, 2147483648
    %v7363 = vmul.f32 %v7361, 1.442695
    %v7364 = vpow.pop %v7363
    %v7365 = vmul.f32 %v7362, 1.442695
    %v7366 = vpow.pop %v7365
    %v7367 = vadd.f32 %v7364, 1.0
    %v7368 = vadd.f32 %v7366, 1.0
    %v7369 = vrcp.pop %v7367
    %v7370 = vmul.f32 1.0, %v7369
    %v7371 = vrcp.pop %v7368
    %v7372 = vmul.f32 1.0, %v7371
    %v7373 = vmul.f32 %v7356, %v7145
    %v7374 = vmul.f32 %v7358, %v7146
    %v7375 = vmul.f32 %v7344, %v7359
    %v7376 = vmul.f32 %v7346, %v7360
    %v7377 = vadd.f32 %v7373, %v7375
    %v7378 = vadd.f32 %v7374, %v7376
    %v7379 = vtanh.pop %v7377
    %v7380 = vtanh.pop %v7378
    %v7381 = vmul.f32 %v7370, %v7379
    %v7382 = vmul.f32 %v7372, %v7380
    %7383 = vst [vmem:[%s6219] sm:$0xff] %v7381
    %7384 = vst [vmem:[%s6217 + $0x8] sm:$0xff] %v7382
    %v7385 = vpack.c.bf16 %v7381, %v7381
    %v7386 = vpack.c.bf16 %v7382, %v7382
    %7387 = vmatprep.subr.bf16.mxu0 %v5501
    %7388 = vmatpush1.bf16.msra.mxu0 %v5500
    %7389 = vmatprep.subr.bf16.mxu0 %v5509
    %7390 = vmatpush1.bf16.msra.mxu0 %v5508
    %7391 = vmatprep.subr.bf16.mxu0 %v5517
    %7392 = vmatpush1.bf16.msra.mxu0 %v5516
    %7393 = vmatprep.subr.bf16.mxu0 %v5525
    %7394 = vmatpush1.bf16.msra.mxu0 %v5524
    %7395 = vmatprep.subr.bf16.mxu0 %v5533
    %7396 = vmatpush1.bf16.msra.mxu0 %v5532
    %7397 = vmatprep.subr.bf16.mxu0 %v5541
    %7398 = vmatpush1.bf16.msra.mxu0 %v5540
    %7399 = vmatprep.subr.bf16.mxu0 %v5549
    %7400 = vmatpush1.bf16.msra.mxu0 %v5548
    %7401 = vmatprep.subr.bf16.mxu0 %v5557
    %7402 = vmatpush1.bf16.msra.mxu0 %v5556
    %7403 = vmatprep.subr.bf16.mxu0 %v5565
    %7404 = vmatpush1.bf16.msra.mxu0 %v5564
    %7405 = vmatprep.subr.bf16.mxu0 %v5573
    %7406 = vmatpush1.bf16.msra.mxu0 %v5572
    %7407 = vmatprep.subr.bf16.mxu0 %v5581
    %7408 = vmatpush1.bf16.msra.mxu0 %v5580
    %7409 = vmatprep.subr.bf16.mxu0 %v5589
    %7410 = vmatpush1.bf16.msra.mxu0 %v5588
    %7411 = vmatprep.subr.bf16.mxu0 %v5597
    %7412 = vmatpush1.bf16.msra.mxu0 %v5596
    %7413 = vmatprep.subr.bf16.mxu0 %v5605
    %7414 = vmatpush1.bf16.msra.mxu0 %v5604
    %7415 = vmatprep.subr.bf16.mxu0 %v5613
    %7416 = vmatpush1.bf16.msra.mxu0 %v5612
    %7417 = vmatprep.subr.bf16.mxu0 %v5621
    %7418 = vmatpush1.bf16.msra.mxu0 %v5620
    %7419 = vmatprep.mubr.bf16.mxu0 %v7386
    %7420 = vmatmul.mubr.bf16.gmra.mrb[0].mxu0 %v7385
    %v7421 = vpop.f32.mrb[0].mxu0
    %v7422 = vadd.f32 0.0, %v7421
    %v7423 = vpop.f32.mrb[0].mxu0
    %v7424 = vadd.f32 0.0, %v7423
    %v7425 = vpop.f32.mrb[0].mxu0
    %v7426 = vpop.f32.mrb[0].mxu0
    %7427 = vdwg.mxu0
    %7428 = vmatprep.subr.bf16.mxu0 %v5503
    %7429 = vmatpush1.bf16.msra.mxu0 %v5502
    %7430 = vmatprep.subr.bf16.mxu0 %v5511
    %7431 = vmatpush1.bf16.msra.mxu0 %v5510
    %7432 = vmatprep.subr.bf16.mxu0 %v5519
    %7433 = vmatpush1.bf16.msra.mxu0 %v5518
    %7434 = vmatprep.subr.bf16.mxu0 %v5527
    %7435 = vmatpush1.bf16.msra.mxu0 %v5526
    %7436 = vmatprep.subr.bf16.mxu0 %v5535
    %7437 = vmatpush1.bf16.msra.mxu0 %v5534
    %7438 = vmatprep.subr.bf16.mxu0 %v5543
    %7439 = vmatpush1.bf16.msra.mxu0 %v5542
    %7440 = vmatprep.subr.bf16.mxu0 %v5551
    %7441 = vmatpush1.bf16.msra.mxu0 %v5550
    %7442 = vmatprep.subr.bf16.mxu0 %v5559
    %7443 = vmatpush1.bf16.msra.mxu0 %v5558
    %7444 = vmatprep.subr.bf16.mxu0 %v5567
    %7445 = vmatpush1.bf16.msra.mxu0 %v5566
    %7446 = vmatprep.subr.bf16.mxu0 %v5575
    %7447 = vmatpush1.bf16.msra.mxu0 %v5574
    %7448 = vmatprep.subr.bf16.mxu0 %v5583
    %7449 = vmatpush1.bf16.msra.mxu0 %v5582
    %7450 = vmatprep.subr.bf16.mxu0 %v5591
    %7451 = vmatpush1.bf16.msra.mxu0 %v5590
    %7452 = vmatprep.subr.bf16.mxu0 %v5599
    %7453 = vmatpush1.bf16.msra.mxu0 %v5598
    %7454 = vmatprep.subr.bf16.mxu0 %v5607
    %7455 = vmatpush1.bf16.msra.mxu0 %v5606
    %7456 = vmatprep.subr.bf16.mxu0 %v5615
    %7457 = vmatpush1.bf16.msra.mxu0 %v5614
    %7458 = vmatprep.subr.bf16.mxu0 %v5623
    %7459 = vmatpush1.bf16.msra.mxu0 %v5622
    %7460 = vmatprep.mubr.bf16.mxu0 %v7386
    %7461 = vmatmul.mubr.bf16.gmra.mrb[0].mxu0 %v7385
    %v7462 = vpop.f32.mrb[0].mxu0
    %v7463 = vadd.f32 0.0, %v7462
    %v7464 = vpop.f32.mrb[0].mxu0
    %v7465 = vadd.f32 0.0, %v7464
    %v7466 = vpop.f32.mrb[0].mxu0
    %v7467 = vpop.f32.mrb[0].mxu0
    %7468 = vdwg.mxu0
    %7469 = vmatprep.subr.bf16.mxu0 %v5505
    %7470 = vmatpush1.bf16.msra.mxu0 %v5504
    %7471 = vmatprep.subr.bf16.mxu0 %v5513
    %7472 = vmatpush1.bf16.msra.mxu0 %v5512
    %7473 = vmatprep.subr.bf16.mxu0 %v5521
    %7474 = vmatpush1.bf16.msra.mxu0 %v5520
    %7475 = vmatprep.subr.bf16.mxu0 %v5529
    %7476 = vmatpush1.bf16.msra.mxu0 %v5528
    %7477 = vmatprep.subr.bf16.mxu0 %v5537
    %7478 = vmatpush1.bf16.msra.mxu0 %v5536
    %7479 = vmatprep.subr.bf16.mxu0 %v5545
    %7480 = vmatpush1.bf16.msra.mxu0 %v5544
    %7481 = vmatprep.subr.bf16.mxu0 %v5553
    %7482 = vmatpush1.bf16.msra.mxu0 %v5552
    %7483 = vmatprep.subr.bf16.mxu0 %v5561
    %7484 = vmatpush1.bf16.msra.mxu0 %v5560
    %7485 = vmatprep.subr.bf16.mxu0 %v5569
    %7486 = vmatpush1.bf16.msra.mxu0 %v5568
    %7487 = vmatprep.subr.bf16.mxu0 %v5577
    %7488 = vmatpush1.bf16.msra.mxu0 %v5576
    %7489 = vmatprep.subr.bf16.mxu0 %v5585
    %7490 = vmatpush1.bf16.msra.mxu0 %v5584
    %7491 = vmatprep.subr.bf16.mxu0 %v5593
    %7492 = vmatpush1.bf16.msra.mxu0 %v5592
    %7493 = vmatprep.subr.bf16.mxu0 %v5601
    %7494 = vmatpush1.bf16.msra.mxu0 %v5600
    %7495 = vmatprep.subr.bf16.mxu0 %v5609
    %7496 = vmatpush1.bf16.msra.mxu0 %v5608
    %7497 = vmatprep.subr.bf16.mxu0 %v5617
    %7498 = vmatpush1.bf16.msra.mxu0 %v5616
    %7499 = vmatprep.subr.bf16.mxu0 %v5625
    %7500 = vmatpush1.bf16.msra.mxu0 %v5624
    %7501 = vmatprep.mubr.bf16.mxu0 %v7386
    %7502 = vmatmul.mubr.bf16.gmra.mrb[0].mxu0 %v7385
    %v7503 = vpop.f32.mrb[0].mxu0
    %v7504 = vadd.f32 0.0, %v7503
    %v7505 = vpop.f32.mrb[0].mxu0
    %v7506 = vadd.f32 0.0, %v7505
    %v7507 = vpop.f32.mrb[0].mxu0
    %v7508 = vpop.f32.mrb[0].mxu0
    %7509 = vdwg.mxu0
    %7510 = vmatprep.subr.bf16.mxu0 %v5507
    %7511 = vmatpush1.bf16.msra.mxu0 %v5506
    %7512 = vmatprep.subr.bf16.mxu0 %v5515
    %7513 = vmatpush1.bf16.msra.mxu0 %v5514
    %7514 = vmatprep.subr.bf16.mxu0 %v5523
    %7515 = vmatpush1.bf16.msra.mxu0 %v5522
    %7516 = vmatprep.subr.bf16.mxu0 %v5531
    %7517 = vmatpush1.bf16.msra.mxu0 %v5530
    %7518 = vmatprep.subr.bf16.mxu0 %v5539
    %7519 = vmatpush1.bf16.msra.mxu0 %v5538
    %7520 = vmatprep.subr.bf16.mxu0 %v5547
    %7521 = vmatpush1.bf16.msra.mxu0 %v5546
    %7522 = vmatprep.subr.bf16.mxu0 %v5555
    %7523 = vmatpush1.bf16.msra.mxu0 %v5554
    %7524 = vmatprep.subr.bf16.mxu0 %v5563
    %7525 = vmatpush1.bf16.msra.mxu0 %v5562
    %7526 = vmatprep.subr.bf16.mxu0 %v5571
    %7527 = vmatpush1.bf16.msra.mxu0 %v5570
    %7528 = vmatprep.subr.bf16.mxu0 %v5579
    %7529 = vmatpush1.bf16.msra.mxu0 %v5578
    %7530 = vmatprep.subr.bf16.mxu0 %v5587
    %7531 = vmatpush1.bf16.msra.mxu0 %v5586
    %7532 = vmatprep.subr.bf16.mxu0 %v5595
    %7533 = vmatpush1.bf16.msra.mxu0 %v5594
    %7534 = vmatprep.subr.bf16.mxu0 %v5603
    %7535 = vmatpush1.bf16.msra.mxu0 %v5602
    %7536 = vmatprep.subr.bf16.mxu0 %v5611
    %7537 = vmatpush1.bf16.msra.mxu0 %v5610
    %7538 = vmatprep.subr.bf16.mxu0 %v5619
    %7539 = vmatpush1.bf16.msra.mxu0 %v5618
    %7540 = vmatprep.subr.bf16.mxu0 %v5627
    %7541 = vmatpush1.bf16.msra.mxu0 %v5626
    %7542 = vmatprep.mubr.bf16.mxu0 %v7386
    %7543 = vmatmul.mubr.bf16.gmra.mrb[0].mxu0 %v7385
    %v7544 = vpop.f32.mrb[0].mxu0
    %v7545 = vadd.f32 0.0, %v7544
    %v7546 = vpop.f32.mrb[0].mxu0
    %v7547 = vadd.f32 0.0, %v7546
    %v7548 = vpop.f32.mrb[0].mxu0
    %v7549 = vpop.f32.mrb[0].mxu0
    %7550 = vdwg.mxu0
    %v7551 = vld [vmem:[%s2102] sm:$0xff]
    %v7552 = vld [vmem:[%s2102 + $0x8] sm:$0xff]
    %v7553 = vld [vmem:[%s2102 + $0x10] sm:$0xff]
    %v7554 = vld [vmem:[%s2102 + $0x18] sm:$0xff]
    %v7555 = vadd.f32 %v7551, %v7422
    %v7556 = vadd.f32 %v7552, %v7424
    %v7557 = vadd.f32 %v7553, %v7463
    %v7558 = vadd.f32 %v7554, %v7465
    %v7559 = vld [vmem:[#allocation2 + $0x20] sm:$0xff]
    %v7560 = vld [vmem:[#allocation2 + $0x28] sm:$0xff]
    %v7561 = vld [vmem:[#allocation2 + $0x30] sm:$0xff]
    %v7562 = vld [vmem:[#allocation2 + $0x38] sm:$0xff]
    %v7563 = vadd.f32 %v7559, %v7504
    %v7564 = vadd.f32 %v7560, %v7506
    %v7565 = vadd.f32 %v7561, %v7545
    %v7566 = vadd.f32 %v7562, %v7547
    %v7567 = vxor.u32 %v7555, 2147483648
    %v7568 = vxor.u32 %v7563, 2147483648
    %v7569 = vmul.f32 %v7567, 1.442695
    %v7570 = vpow.pop %v7569
    %v7571 = vmul.f32 %v7568, 1.442695
    %v7572 = vpow.pop %v7571
    %v7573 = vadd.f32 %v7570, 1.0
    %v7574 = vadd.f32 %v7572, 1.0
    %v7575 = vrcp.pop %v7573
    %v7576 = vmul.f32 1.0, %v7575
    %v7577 = vrcp.pop %v7574
    %v7578 = vmul.f32 1.0, %v7577
    %v7579 = vxor.u32 %v7556, 2147483648
    %v7580 = vxor.u32 %v7564, 2147483648
    %v7581 = vmul.f32 %v7579, 1.442695
    %v7582 = vpow.pop %v7581
    %v7583 = vmul.f32 %v7580, 1.442695
    %v7584 = vpow.pop %v7583
    %v7585 = vadd.f32 %v7582, 1.0
    %v7586 = vadd.f32 %v7584, 1.0
    %v7587 = vrcp.pop %v7585
    %v7588 = vmul.f32 1.0, %v7587
    %v7589 = vrcp.pop %v7586
    %v7590 = vmul.f32 1.0, %v7589
    %v7591 = vtanh.pop %v7557
    %v7592 = vtanh.pop %v7565
    %v7593 = vxor.u32 %v7558, 2147483648
    %v7594 = vxor.u32 %v7566, 2147483648
    %v7595 = vmul.f32 %v7593, 1.442695
    %v7596 = vpow.pop %v7595
    %v7597 = vmul.f32 %v7594, 1.442695
    %v7598 = vpow.pop %v7597
    %v7599 = vadd.f32 %v7596, 1.0
    %v7600 = vadd.f32 %v7598, 1.0
    %v7601 = vrcp.pop %v7599
    %v7602 = vmul.f32 1.0, %v7601
    %v7603 = vrcp.pop %v7600
    %v7604 = vmul.f32 1.0, %v7603
    %v7605 = vmul.f32 %v7588, %v7377
    %v7606 = vmul.f32 %v7590, %v7378
    %v7607 = vmul.f32 %v7576, %v7591
    %v7608 = vmul.f32 %v7578, %v7592
    %v7609 = vadd.f32 %v7605, %v7607
    %v7610 = vadd.f32 %v7606, %v7608
    %v7611 = vtanh.pop %v7609
    %v7612 = vtanh.pop %v7610
    %v7613 = vmul.f32 %v7602, %v7611
    %v7614 = vmul.f32 %v7604, %v7612
    %7615 = vst [vmem:[%s5985] sm:$0xff] %v7613
    %7616 = vst [vmem:[%s7 + $0x8] sm:$0xff] %v7614
    // Predicated region
    $region46: #{word_extract_forward.1} parent=1 // pred_check
      _
    $region47: #{word_extract_forward.1} parent=1 // pred_check_branch
      %7618 = sbr.rel (0) target = $region49
    $region48: #{word_extract_forward.1} parent=1 // pred_region
      _
    $region49: #{word_extract_forward.1} parent=1 // pred_fallthru
      _
    // Predicated region
    $region50: #{word_extract_forward.1} parent=1 // pred_check
      _
    $region51: #{word_extract_forward.1} parent=1 // pred_check_branch
      %7620 = sbr.rel (0) target = $region53
    $region52: #{word_extract_forward.1} parent=1 // pred_region
      _
    $region53: #{word_extract_forward.1} parent=1 // pred_fallthru
      _
    %7621 = vsyncpa [#allocation5], 1
    %7622 = vsyncpa [#allocation7], 1
    %7623 = vsyncpa [#allocation10], 1

</llo_original>
